<compile_context>
chip_gen: v5e
topology: v5e:2x2
jax: 0.10.0
libtpu: 0.0.40
codegen_flags: <defaults>
</compile_context>

<pallas_src>
import functools

import jax
import jax.numpy as jnp
import numpy as np
from jax import lax
from jax.experimental import pallas as pl
from jax.experimental.pallas import tpu as pltpu

V_THRESHOLD = 1.0   # IFNode defaults (v_threshold=1.0, v_reset=0.0)
BN_EPS = 1e-5
_LANE = 128


def _sew_block_kernel(connect_f, L, unroll,
                      x_ref, w1_ref, b1_ref, w2_ref, b2_ref,
                      o_ref, v1_ref, v2_ref, y1_ref):
    """Grid = (batch_blocks, time_blocks).

    x_ref / o_ref : [TB, M, Cp]   M = NB * L (batch block flattened with length), Cp lane-dense
    w*_ref        : [3, Cp, Cp]   bf16 tap matrices (tap 0 -> x[l-1], 1 -> x[l], 2 -> x[l+1]),
                                  BN scale pre-folded
    b*_ref        : [1, Cp]       float32 folded BN bias
    v1_ref/v2_ref : [M, Cp]       float32 membrane potentials, persist across time blocks
    y1_ref        : [TB, M, Cp]   float32 scratch holding conv1+bn1 for all TB steps
    """
    TB, M, C = x_ref.shape
    rows = TB * M

    # Reset membrane potentials at the first time block of every batch block.
    @pl.when(pl.program_id(1) == 0)
    def _():
        v1_ref[...] = jnp.zeros_like(v1_ref)
        v2_ref[...] = jnp.zeros_like(v2_ref)

    # Loop-invariant loads (JAX does not CSE broadcasts; hoist once per grid step).
    w1a, w1b, w1c = w1_ref[0], w1_ref[1], w1_ref[2]
    w2a, w2b, w2c = w2_ref[0], w2_ref[1], w2_ref[2]
    b1 = b1_ref[...]
    b2 = b2_ref[...]

    def shifts(x2d, n_rows, first_mask, last_mask):
        # +-1 shifts along the flattened row axis via XLU sublane rotation; rows where the
        # shift would leak across an (l==0 / l==L-1) boundary are zero-masked, so wrap-around
        # across batch / time-step boundaries inside the block is harmless.
        xm1 = jnp.where(first_mask, 0.0, pltpu.roll(x2d, 1, 0))            # x[l-1]
        xp1 = jnp.where(last_mask, 0.0, pltpu.roll(x2d, n_rows - 1, 0))    # x[l+1]
        return xm1, xp1

    def conv3(xc, xm1, xp1, wa, wb, wc, b):
        # Conv1d(k=3, pad=1, stride=1, bias=False) + folded BN as three accumulated tap matmuls
        # (no im2col concat); bf16 operands, f32 MXU accumulation.
        dt = wa.dtype
        y = jnp.dot(xm1.astype(dt), wa, preferred_element_type=jnp.float32)
        y = y + jnp.dot(xc.astype(dt), wb, preferred_element_type=jnp.float32)
        y = y + jnp.dot(xp1.astype(dt), wc, preferred_element_type=jnp.float32)
        return y + b

    # ---- conv1 + bn1: time-independent -> one big batched matmul over all TB steps. ----
    lpos_all = lax.broadcasted_iota(jnp.int32, (rows, 1), 0) % L
    x_all = x_ref[...].reshape(rows, C)          # lane dim preserved -> free relabel
    xm1, xp1 = shifts(x_all, rows, lpos_all == 0, lpos_all == L - 1)
    y1_ref[...] = conv3(x_all, xm1, xp1, w1a, w1b, w1c, b1).reshape(TB, M, C)

    # Per-time-step boundary masks for conv2 (spk1 lives at [M, Cp]); loop-invariant.
    lpos = lax.broadcasted_iota(jnp.int32, (M, 1), 0) % L
    first_m = lpos == 0
    last_m = lpos == L - 1

    def step(tt, carry):
        # IF neuron 1 (hard reset to 0, threshold 1); membrane math stays f32.
        v1 = v1_ref[...] + y1_ref[tt]
        fire1 = v1 >= V_THRESHOLD
        spk1 = jnp.where(fire1, 1.0, 0.0)
        v1_ref[...] = jnp.where(fire1, 0.0, v1)

        # conv2 + bn2 + IF neuron 2 (spikes are exact 0/1 -> lossless bf16 cast).
        sm1, sp1 = shifts(spk1, M, first_m, last_m)
        v2 = v2_ref[...] + conv3(spk1, sm1, sp1, w2a, w2b, w2c, b2)
        fire2 = v2 >= V_THRESHOLD
        spk2 = jnp.where(fire2, 1.0, 0.0)
        v2_ref[...] = jnp.where(fire2, 0.0, v2)

        # SEW connect function (static python branch -> single compiled path).
        xt = x_ref[tt]
        if connect_f == "ADD":
            res = spk2 + xt
        elif connect_f == "AND":
            res = spk2 * xt
        else:  # "IAND"
            res = xt * (1.0 - spk2)

        o_ref[tt] = res
        return carry

    lax.fori_loop(0, TB, step, 0, unroll=unroll)


def _tpu_defaults():
    """Per-generation knobs: VMEM capacity and whether the chip has 2 TensorCores."""
    vmem_cap = 64 << 20
    dual_core = False
    try:
        vmem_cap = int(pltpu.get_tpu_info().vmem_capacity_bytes)
    except Exception:
        pass
    try:
        kind = jax.devices()[0].device_kind.lower()
        dual_core = ("v7" in kind) or ("tpu7" in kind)
    except Exception:
        pass
    return vmem_cap, dual_core


def sew_basic_block_1d(x, W1, b1, W2, b2, *, connect_f="ADD",
                       time_block=None, batch_block=None):
    """x: [T, N, L, C] float32 (channels-last).
    W*: [3*C, C] conv weights with BN scale folded (tap k multiplies x[l+k-1]).
    b*: [1, C] folded BN bias.  Returns [T, N, L, C] float32.
    """
    if connect_f not in ("ADD", "AND", "IAND"):
        raise NotImplementedError(connect_f)
    T, N, L, C = x.shape
    assert W1.shape == (3 * C, C) and W2.shape == (3 * C, C)
    assert b1.shape == (1, C) and b2.shape == (1, C)
    assert L % 8 == 0, "length must be a multiple of 8 (sublane alignment of the M axis)"

    vmem_cap, dual_core = _tpu_defaults()

    # >=2 batch blocks on dual-TensorCore chips (v7x) so the "parallel" axis feeds both cores;
    # single maximal block on 1-TC chips (v5e/v6e) to maximize the MXU M dimension.
    if batch_block is None:
        NB = N // 2 if (dual_core and N % 2 == 0) else N
    else:
        NB = batch_block
    if time_block is None:
        TB = max(d for d in range(1, min(T, 8) + 1) if T % d == 0)
    else:
        TB = time_block
    assert N % NB == 0 and T % TB == 0
    M = NB * L                         # rows fed to the MXU per time step

    # Lane-dense channels: pad C up to a multiple of 128 (exact no-op math: pad weights/bias 0).
    Cp = max(_LANE, ((C + _LANE - 1) // _LANE) * _LANE)

    def split_pad_w(W):
        W = jnp.asarray(W, jnp.float32)
        taps = [W[k * C:(k + 1) * C] for k in range(3)]                    # each [C, C]
        taps = [jnp.pad(t, ((0, Cp - C), (0, Cp - C))) for t in taps]      # each [Cp, Cp]
        return jnp.stack(taps, axis=0).astype(jnp.bfloat16)                # [3, Cp, Cp]

    W1s = split_pad_w(W1)
    W2s = split_pad_w(W2)
    b1p = jnp.pad(jnp.asarray(b1, jnp.float32), ((0, 0), (0, Cp - C)))
    b2p = jnp.pad(jnp.asarray(b2, jnp.float32), ((0, 0), (0, Cp - C)))

    x_flat = x.reshape(T, N * L, C)
    if Cp != C:
        x_flat = jnp.pad(x_flat, ((0, 0), (0, 0), (0, Cp - C)))

    # VMEM budget (generation-aware cap: ~96 MiB on v5e/v6e, ~48 MiB on v7x).
    f32b = 4
    blk = TB * M * Cp * f32b
    est = (2 * 2 * blk                              # double-buffered input + output blocks
           + blk                                    # y1 (hoisted conv1) scratch
           + 2 * M * Cp * f32b                      # v1 / v2 membrane scratch
           + 2 * (2 * 3 * Cp * Cp * 2 + 2 * Cp * f32b)   # bf16 tap weights + f32 biases (x2 buf)
           + 8 * blk                                # hoisted-conv1 temporaries (shifts, casts)
           + 8 * M * Cp * f32b)                     # per-step conv2 temporaries
    cap = int(vmem_cap * 0.75)
    assert est <= cap, f"block too large for VMEM ({est} > {cap}); lower time_block/batch_block"
    vmem_limit = int(min(max(est, 32 << 20), cap))

    # Full unroll for short time blocks (LLO visibility); bounded partial unroll otherwise.
    if TB <= 8:
        unroll = True
    else:
        unroll = next(u for u in (8, 4, 2, 1) if TB % u == 0)

    kernel = functools.partial(_sew_block_kernel, connect_f, L, unroll)

    out_flat = pl.pallas_call(
        kernel,
        out_shape=jax.ShapeDtypeStruct((T, N * L, Cp), jnp.float32),
        grid_spec=pltpu.PrefetchScalarGridSpec(
            num_scalar_prefetch=0,
            grid=(N // NB, T // TB),              # time axis last => sequential IF state
            in_specs=[
                pl.BlockSpec((TB, M, Cp), lambda n, t: (t, n, 0)),
                pl.BlockSpec((3, Cp, Cp), lambda n, t: (0, 0, 0)),
                pl.BlockSpec((1, Cp), lambda n, t: (0, 0)),
                pl.BlockSpec((3, Cp, Cp), lambda n, t: (0, 0, 0)),
                pl.BlockSpec((1, Cp), lambda n, t: (0, 0)),
            ],
            out_specs=pl.BlockSpec((TB, M, Cp), lambda n, t: (t, n, 0)),
            scratch_shapes=[pltpu.VMEM((M, Cp), jnp.float32),
                            pltpu.VMEM((M, Cp), jnp.float32),
                            pltpu.VMEM((TB, M, Cp), jnp.float32)],
        ),
        compiler_params=pltpu.CompilerParams(
            # Batch blocks are independent -> "parallel" (uses both v7x TensorCores);
            # time carries the membrane state -> "arbitrary" (sequential).
            dimension_semantics=("parallel", "arbitrary"),
            vmem_limit_bytes=vmem_limit,
        ),
    )(x_flat, W1s, b1p, W2s, b2p)

    return out_flat[..., :C].reshape(T, N, L, C)


def fold_conv_bn(w_pt, gamma, beta, mean, var, eps=BN_EPS):
    """Fold inference-mode BatchNorm1d into a Conv1d(k=3, bias=False) weight.

    w_pt: [Cout, Cin, 3] (PyTorch layout).  Returns:
      W: [3*Cin, Cout] float32 — taps stacked along the input axis (tap k multiplies x[l+k-1])
         with the BN scale folded in.
      b: [1, Cout] float32 — folded BN bias.
    """
    scale = gamma / jnp.sqrt(var + eps)                            # [Cout]
    bias = beta - mean * scale                                     # [Cout]
    taps = [w_pt[:, :, k].T * scale[None, :] for k in range(3)]    # each [Cin, Cout]
    W = jnp.concatenate(taps, axis=0).astype(jnp.float32)          # [3*Cin, Cout]
    return W, bias.reshape(1, -1).astype(jnp.float32)


def reference(x, W1, b1, W2, b2, connect_f="ADD"):
    """Pure-JAX reference with identical math (3 bf16 tap matmuls, f32 accumulation)."""
    T, N, L, C = x.shape

    def conv3_bn(inp, W, b):                               # inp: [N, L, C] float32
        wa = W[:C].astype(jnp.bfloat16)
        wb = W[C:2 * C].astype(jnp.bfloat16)
        wc = W[2 * C:].astype(jnp.bfloat16)
        zero = jnp.zeros((N, 1, C), inp.dtype)
        x_m1 = jnp.concatenate([zero, inp[:, :-1]], axis=1)
        x_p1 = jnp.concatenate([inp[:, 1:], zero], axis=1)
        y = jnp.dot(x_m1.astype(jnp.bfloat16), wa, preferred_element_type=jnp.float32)
        y = y + jnp.dot(inp.astype(jnp.bfloat16), wb, preferred_element_type=jnp.float32)
        y = y + jnp.dot(x_p1.astype(jnp.bfloat16), wc, preferred_element_type=jnp.float32)
        return y + b

    v1 = jnp.zeros((N, L, C), jnp.float32)
    v2 = jnp.zeros((N, L, C), jnp.float32)
    outs = []
    for t in range(T):
        v1 = v1 + conv3_bn(x[t], W1, b1)
        spk1 = jnp.where(v1 >= V_THRESHOLD, 1.0, 0.0)
        v1 = jnp.where(v1 >= V_THRESHOLD, 0.0, v1)
        v2 = v2 + conv3_bn(spk1, W2, b2)
        spk2 = jnp.where(v2 >= V_THRESHOLD, 1.0, 0.0)
        v2 = jnp.where(v2 >= V_THRESHOLD, 0.0, v2)
        if connect_f == "ADD":
            out = spk2 + x[t]
        elif connect_f == "AND":
            out = spk2 * x[t]
        else:
            out = x[t] * (1.0 - spk2)
        outs.append(out)
    return jnp.stack(outs, axis=0)


if __name__ == "__main__":
    # Small shapes consistent with the module: T time steps, batch N, channels C, length L.
    T, N, C, L = 8, 4, 32, 64        # inplanes = planes = C, stride = 1, no downsample
    connect_f = "ADD"

    key = jax.random.PRNGKey(0)
    (kx, kw1, kw2,
     kg1, kb1, km1, kv1,
     kg2, kb2, km2, kv2) = jax.random.split(key, 11)

    # Input in kernel layout [T, N, L, C]  (PyTorch layout would be [T, N, C, L]).
    x = jax.random.normal(kx, (T, N, L, C), dtype=jnp.float32)

    def make_conv_weight(k, cin, cout):
        # PyTorch Conv1d weight layout [Cout, Cin, 3].
        return jax.random.normal(k, (cout, cin, 3), dtype=jnp.float32) / np.sqrt(3 * cin)

    def make_bn(kg, kb, km, kv, c):
        gamma = 1.0 + 0.1 * jax.random.normal(kg, (c,), dtype=jnp.float32)
        beta = 0.1 * jax.random.normal(kb, (c,), dtype=jnp.float32)
        mean = 0.1 * jax.random.normal(km, (c,), dtype=jnp.float32)
        var = jax.random.uniform(kv, (c,), dtype=jnp.float32, minval=0.5, maxval=1.5)
        return gamma, beta, mean, var

    W1, b1 = fold_conv_bn(make_conv_weight(kw1, C, C), *make_bn(kg1, kb1, km1, kv1, C))
    W2, b2 = fold_conv_bn(make_conv_weight(kw2, C, C), *make_bn(kg2, kb2, km2, kv2, C))

    # batch_block=2 / time_block=4 exercises a (2, 2) grid: state carried across time
    # blocks, per-batch-block reset, and interior batch-boundary masking.
    out = sew_basic_block_1d(x, W1, b1, W2, b2, connect_f=connect_f,
                             time_block=4, batch_block=2)
    out = jax.block_until_ready(out)

    ref = reference(x, W1, b1, W2, b2, connect_f)
    assert out.shape == (T, N, L, C)
    assert bool(jnp.all(jnp.isfinite(out)))
    # Kernel and reference use the same math; tolerate a vanishing number of
    # threshold-boundary spike flips from MXU accumulation-order differences.
    mismatch_frac = float(jnp.mean((jnp.abs(out - ref) > 1e-3).astype(jnp.float32)))
    assert mismatch_frac < 5e-3, f"mismatch fraction {mismatch_frac}"

    print("KERNEL_OK")
</pallas_src>

<mosaic_0001>
module attributes {stable_mosaic.version = 11 : i64} {
  func.func @_sew_block_kernel(%arg0: i32, %arg1: i32, %arg2: memref<4x128x128xf32, #tpu.memory_space<vmem>>, %arg3: memref<3x128x128xbf16, #tpu.memory_space<vmem>>, %arg4: memref<1x128xf32, #tpu.memory_space<vmem>>, %arg5: memref<3x128x128xbf16, #tpu.memory_space<vmem>>, %arg6: memref<1x128xf32, #tpu.memory_space<vmem>>, %arg7: memref<4x128x128xf32, #tpu.memory_space<vmem>>, %arg8: memref<128x128xf32, #tpu.memory_space<vmem>>, %arg9: memref<128x128xf32, #tpu.memory_space<vmem>>, %arg10: memref<4x128x128xf32, #tpu.memory_space<vmem>>) attributes {dimension_semantics = [#tpu.dimension_semantics<parallel>, #tpu.dimension_semantics<arbitrary>], iteration_bounds = array<i64: 2, 2>, scalar_prefetch = 0 : i64, scratch_operands = 3 : i64, tpu.core_type = #tpu.core_type<tc>, window_params = [{transform_indices = @transform_0, window_bounds = array<i64: 4, 128, 128>}, {pipeline_mode = #tpu.pipeline_mode<synchronous>, transform_indices = @transform_1, window_bounds = array<i64: 3, 128, 128>}, {pipeline_mode = #tpu.pipeline_mode<synchronous>, transform_indices = @transform_2, window_bounds = array<i64: 1, 128>}, {pipeline_mode = #tpu.pipeline_mode<synchronous>, transform_indices = @transform_3, window_bounds = array<i64: 3, 128, 128>}, {pipeline_mode = #tpu.pipeline_mode<synchronous>, transform_indices = @transform_4, window_bounds = array<i64: 1, 128>}, {transform_indices = @transform_5, window_bounds = array<i64: 4, 128, 128>}]} {
    %c0_i32 = arith.constant 0 : i32
    %0 = arith.cmpi eq, %arg1, %c0_i32 : i32
    %1 = arith.extui %0 : i1 to i32
    %c0_i32_0 = arith.constant 0 : i32
    %2 = arith.cmpi ne, %1, %c0_i32_0 : i32
    scf.if %2 {
      %cst_161 = arith.constant 0.000000e+00 : f32
      %287 = vector.broadcast %cst_161 : f32 to vector<128x128xf32>
      %c0_162 = arith.constant 0 : index
      %c0_163 = arith.constant 0 : index
      %288 = vector.load %arg8[%c0_162, %c0_163] : memref<128x128xf32, #tpu.memory_space<vmem>>, vector<128x128xf32>
      tpu.vector_store %arg8[%c0_162, %c0_163], %287 {strides = array<i32>} : memref<128x128xf32, #tpu.memory_space<vmem>>, vector<128x128xf32>,
      %cst_164 = arith.constant 0.000000e+00 : f32
      %289 = vector.broadcast %cst_164 : f32 to vector<128x128xf32>
      %c0_165 = arith.constant 0 : index
      %c0_166 = arith.constant 0 : index
      %290 = vector.load %arg9[%c0_165, %c0_166] : memref<128x128xf32, #tpu.memory_space<vmem>>, vector<128x128xf32>
      tpu.vector_store %arg9[%c0_165, %c0_166], %289 {strides = array<i32>} : memref<128x128xf32, #tpu.memory_space<vmem>>, vector<128x128xf32>,
    } else {
    }
    %c0 = arith.constant 0 : index
    %c0_1 = arith.constant 0 : index
    %c0_2 = arith.constant 0 : index
    %3 = vector.load %arg3[%c0, %c0_1, %c0_2] : memref<3x128x128xbf16, #tpu.memory_space<vmem>>, vector<1x128x128xbf16>
    %4 = vector.shape_cast %3 : vector<1x128x128xbf16> to vector<128x128xbf16>
    %c1 = arith.constant 1 : index
    %c0_3 = arith.constant 0 : index
    %c0_4 = arith.constant 0 : index
    %5 = vector.load %arg3[%c1, %c0_3, %c0_4] : memref<3x128x128xbf16, #tpu.memory_space<vmem>>, vector<1x128x128xbf16>
    %6 = vector.shape_cast %5 : vector<1x128x128xbf16> to vector<128x128xbf16>
    %c2 = arith.constant 2 : index
    %c0_5 = arith.constant 0 : index
    %c0_6 = arith.constant 0 : index
    %7 = vector.load %arg3[%c2, %c0_5, %c0_6] : memref<3x128x128xbf16, #tpu.memory_space<vmem>>, vector<1x128x128xbf16>
    %8 = vector.shape_cast %7 : vector<1x128x128xbf16> to vector<128x128xbf16>
    %c0_7 = arith.constant 0 : index
    %c0_8 = arith.constant 0 : index
    %c0_9 = arith.constant 0 : index
    %9 = vector.load %arg5[%c0_7, %c0_8, %c0_9] : memref<3x128x128xbf16, #tpu.memory_space<vmem>>, vector<1x128x128xbf16>
    %10 = vector.shape_cast %9 : vector<1x128x128xbf16> to vector<128x128xbf16>
    %c1_10 = arith.constant 1 : index
    %c0_11 = arith.constant 0 : index
    %c0_12 = arith.constant 0 : index
    %11 = vector.load %arg5[%c1_10, %c0_11, %c0_12] : memref<3x128x128xbf16, #tpu.memory_space<vmem>>, vector<1x128x128xbf16>
    %12 = vector.shape_cast %11 : vector<1x128x128xbf16> to vector<128x128xbf16>
    %c2_13 = arith.constant 2 : index
    %c0_14 = arith.constant 0 : index
    %c0_15 = arith.constant 0 : index
    %13 = vector.load %arg5[%c2_13, %c0_14, %c0_15] : memref<3x128x128xbf16, #tpu.memory_space<vmem>>, vector<1x128x128xbf16>
    %14 = vector.shape_cast %13 : vector<1x128x128xbf16> to vector<128x128xbf16>
    %c0_16 = arith.constant 0 : index
    %c0_17 = arith.constant 0 : index
    %15 = vector.load %arg4[%c0_16, %c0_17] : memref<1x128xf32, #tpu.memory_space<vmem>>, vector<1x128xf32>
    %c0_18 = arith.constant 0 : index
    %c0_19 = arith.constant 0 : index
    %16 = vector.load %arg6[%c0_18, %c0_19] : memref<1x128xf32, #tpu.memory_space<vmem>>, vector<1x128xf32>
    %17 = tpu.iota {dimensions = array<i32: 0>} : vector<512x1xi32>
    %c64_i32 = arith.constant 64 : i32
    %c0_i32_20 = arith.constant 0 : i32
    %18 = arith.cmpi eq, %c64_i32, %c0_i32_20 : i32
    %c1_i32 = arith.constant 1 : i32
    %19 = arith.select %18, %c1_i32, %c64_i32 : i32
    %20 = vector.broadcast %19 : i32 to vector<512x1xi32>
    %21 = arith.remsi %17, %20 : vector<512x1xi32>
    %c0_i32_21 = arith.constant 0 : i32
    %22 = vector.broadcast %c0_i32_21 : i32 to vector<512x1xi32>
    %23 = arith.cmpi ne, %21, %22 : vector<512x1xi32>
    %c0_i32_22 = arith.constant 0 : i32
    %24 = vector.broadcast %c0_i32_22 : i32 to vector<512x1xi32>
    %25 = arith.cmpi slt, %21, %24 : vector<512x1xi32>
    %c0_i32_23 = arith.constant 0 : i32
    %26 = arith.cmpi slt, %19, %c0_i32_23 : i32
    %27 = vector.broadcast %26 : i1 to vector<512x1xi1>
    %28 = vector.broadcast %27 : vector<512x1xi1> to vector<512x1xi1>
    %29 = arith.xori %25, %28 : vector<512x1xi1>
    %30 = arith.andi %29, %23 : vector<512x1xi1>
    %31 = vector.broadcast %19 : i32 to vector<512x1xi32>
    %32 = arith.addi %21, %31 : vector<512x1xi32>
    %33 = arith.select %30, %32, %21 : vector<512x1xi1>, vector<512x1xi32>
    %c0_24 = arith.constant 0 : index
    %c0_25 = arith.constant 0 : index
    %c0_26 = arith.constant 0 : index
    %34 = vector.load %arg2[%c0_24, %c0_25, %c0_26] : memref<4x128x128xf32, #tpu.memory_space<vmem>>, vector<4x128x128xf32>
    %35 = vector.shape_cast %34 : vector<4x128x128xf32> to vector<512x128xf32>
    %c0_i32_27 = arith.constant 0 : i32
    %36 = vector.broadcast %c0_i32_27 : i32 to vector<512x1xi32>
    %37 = arith.cmpi eq, %33, %36 : vector<512x1xi32>
    %c63_i32 = arith.constant 63 : i32
    %38 = vector.broadcast %c63_i32 : i32 to vector<512x1xi32>
    %39 = arith.cmpi eq, %33, %38 : vector<512x1xi32>
    %c1_i32_28 = arith.constant 1 : i32
    %40 = tpu.dynamic_rotate %35 by %c1_i32_28 dim 0 : vector<512x128xf32>, i32 -> vector<512x128xf32>
    %cst = arith.constant 0.000000e+00 : f32
    %41 = vector.shape_cast %37 : vector<512x1xi1> to vector<512x1xi1>
    %42 = vector.broadcast %41 : vector<512x1xi1> to vector<512x128xi1>
    %43 = vector.broadcast %cst : f32 to vector<512x128xf32>
    %44 = arith.select %42, %43, %40 : vector<512x128xi1>, vector<512x128xf32>
    %c511_i32 = arith.constant 511 : i32
    %45 = tpu.dynamic_rotate %35 by %c511_i32 dim 0 : vector<512x128xf32>, i32 -> vector<512x128xf32>
    %cst_29 = arith.constant 0.000000e+00 : f32
    %46 = vector.shape_cast %39 : vector<512x1xi1> to vector<512x1xi1>
    %47 = vector.broadcast %46 : vector<512x1xi1> to vector<512x128xi1>
    %48 = vector.broadcast %cst_29 : f32 to vector<512x128xf32>
    %49 = arith.select %47, %48, %45 : vector<512x128xi1>, vector<512x128xf32>
    %50 = arith.truncf %44 : vector<512x128xf32> to vector<512x128xbf16>
    %cst_30 = arith.constant dense<0.000000e+00> : vector<512x128xf32>
    %51 = tpu.matmul %50, %4, %cst_30 {dimension_numbers = #tpu.dot_dimension_numbers<[1], [0], [0], [1], [0, 0, 1, 1], [], []>} : vector<512x128xbf16>, vector<128x128xbf16>, vector<512x128xf32> -> vector<512x128xf32>
    %52 = arith.truncf %35 : vector<512x128xf32> to vector<512x128xbf16>
    %cst_31 = arith.constant dense<0.000000e+00> : vector<512x128xf32>
    %53 = tpu.matmul %52, %6, %cst_31 {dimension_numbers = #tpu.dot_dimension_numbers<[1], [0], [0], [1], [0, 0, 1, 1], [], []>} : vector<512x128xbf16>, vector<128x128xbf16>, vector<512x128xf32> -> vector<512x128xf32>
    %54 = arith.addf %51, %53 : vector<512x128xf32>
    %55 = arith.truncf %49 : vector<512x128xf32> to vector<512x128xbf16>
    %cst_32 = arith.constant dense<0.000000e+00> : vector<512x128xf32>
    %56 = tpu.matmul %55, %8, %cst_32 {dimension_numbers = #tpu.dot_dimension_numbers<[1], [0], [0], [1], [0, 0, 1, 1], [], []>} : vector<512x128xbf16>, vector<128x128xbf16>, vector<512x128xf32> -> vector<512x128xf32>
    %57 = arith.addf %54, %56 : vector<512x128xf32>
    %58 = vector.broadcast %15 : vector<1x128xf32> to vector<512x128xf32>
    %59 = arith.addf %57, %58 : vector<512x128xf32>
    %60 = vector.shape_cast %59 : vector<512x128xf32> to vector<4x128x128xf32>
    %c0_33 = arith.constant 0 : index
    %c0_34 = arith.constant 0 : index
    %c0_35 = arith.constant 0 : index
    %61 = vector.load %arg10[%c0_33, %c0_34, %c0_35] : memref<4x128x128xf32, #tpu.memory_space<vmem>>, vector<4x128x128xf32>
    tpu.vector_store %arg10[%c0_33, %c0_34, %c0_35], %60 {strides = array<i32>} : memref<4x128x128xf32, #tpu.memory_space<vmem>>, vector<4x128x128xf32>,
    %62 = tpu.iota {dimensions = array<i32: 0>} : vector<128x1xi32>
    %c64_i32_36 = arith.constant 64 : i32
    %c0_i32_37 = arith.constant 0 : i32
    %63 = arith.cmpi eq, %c64_i32_36, %c0_i32_37 : i32
    %c1_i32_38 = arith.constant 1 : i32
    %64 = arith.select %63, %c1_i32_38, %c64_i32_36 : i32
    %65 = vector.broadcast %64 : i32 to vector<128x1xi32>
    %66 = arith.remsi %62, %65 : vector<128x1xi32>
    %c0_i32_39 = arith.constant 0 : i32
    %67 = vector.broadcast %c0_i32_39 : i32 to vector<128x1xi32>
    %68 = arith.cmpi ne, %66, %67 : vector<128x1xi32>
    %c0_i32_40 = arith.constant 0 : i32
    %69 = vector.broadcast %c0_i32_40 : i32 to vector<128x1xi32>
    %70 = arith.cmpi slt, %66, %69 : vector<128x1xi32>
    %c0_i32_41 = arith.constant 0 : i32
    %71 = arith.cmpi slt, %64, %c0_i32_41 : i32
    %72 = vector.broadcast %71 : i1 to vector<128x1xi1>
    %73 = vector.broadcast %72 : vector<128x1xi1> to vector<128x1xi1>
    %74 = arith.xori %70, %73 : vector<128x1xi1>
    %75 = arith.andi %74, %68 : vector<128x1xi1>
    %76 = vector.broadcast %64 : i32 to vector<128x1xi32>
    %77 = arith.addi %66, %76 : vector<128x1xi32>
    %78 = arith.select %75, %77, %66 : vector<128x1xi1>, vector<128x1xi32>
    %c0_i32_42 = arith.constant 0 : i32
    %79 = vector.broadcast %c0_i32_42 : i32 to vector<128x1xi32>
    %80 = arith.cmpi eq, %78, %79 : vector<128x1xi32>
    %c63_i32_43 = arith.constant 63 : i32
    %81 = vector.broadcast %c63_i32_43 : i32 to vector<128x1xi32>
    %82 = arith.cmpi eq, %78, %81 : vector<128x1xi32>
    %c0_i32_44 = arith.constant 0 : i32
    %c0_45 = arith.constant 0 : index
    %c0_46 = arith.constant 0 : index
    %83 = vector.load %arg8[%c0_45, %c0_46] : memref<128x128xf32, #tpu.memory_space<vmem>>, vector<128x128xf32>
    %84 = arith.index_cast %c0_i32_44 : i32 to index
    %c0_47 = arith.constant 0 : index
    %c0_48 = arith.constant 0 : index
    %85 = vector.load %arg10[%84, %c0_47, %c0_48] : memref<4x128x128xf32, #tpu.memory_space<vmem>>, vector<1x128x128xf32>
    %86 = vector.shape_cast %85 : vector<1x128x128xf32> to vector<128x128xf32>
    %87 = arith.addf %83, %86 : vector<128x128xf32>
    %cst_49 = arith.constant 1.000000e+00 : f32
    %88 = vector.broadcast %cst_49 : f32 to vector<128x128xf32>
    %89 = arith.cmpf oge, %87, %88 : vector<128x128xf32>
    %cst_50 = arith.constant 1.000000e+00 : f32
    %cst_51 = arith.constant 0.000000e+00 : f32
    %90 = vector.broadcast %cst_50 : f32 to vector<128x128xf32>
    %91 = vector.broadcast %cst_51 : f32 to vector<128x128xf32>
    %92 = arith.select %89, %90, %91 : vector<128x128xi1>, vector<128x128xf32>
    %cst_52 = arith.constant 0.000000e+00 : f32
    %93 = vector.broadcast %cst_52 : f32 to vector<128x128xf32>
    %94 = arith.select %89, %93, %87 : vector<128x128xi1>, vector<128x128xf32>
    %c0_53 = arith.constant 0 : index
    %c0_54 = arith.constant 0 : index
    %95 = vector.load %arg8[%c0_53, %c0_54] : memref<128x128xf32, #tpu.memory_space<vmem>>, vector<128x128xf32>
    tpu.vector_store %arg8[%c0_53, %c0_54], %94 {strides = array<i32>} : memref<128x128xf32, #tpu.memory_space<vmem>>, vector<128x128xf32>,
    %c1_i32_55 = arith.constant 1 : i32
    %96 = tpu.dynamic_rotate %92 by %c1_i32_55 dim 0 : vector<128x128xf32>, i32 -> vector<128x128xf32>
    %cst_56 = arith.constant 0.000000e+00 : f32
    %97 = vector.shape_cast %80 : vector<128x1xi1> to vector<128x1xi1>
    %98 = vector.broadcast %97 : vector<128x1xi1> to vector<128x128xi1>
    %99 = vector.broadcast %cst_56 : f32 to vector<128x128xf32>
    %100 = arith.select %98, %99, %96 : vector<128x128xi1>, vector<128x128xf32>
    %c127_i32 = arith.constant 127 : i32
    %101 = tpu.dynamic_rotate %92 by %c127_i32 dim 0 : vector<128x128xf32>, i32 -> vector<128x128xf32>
    %cst_57 = arith.constant 0.000000e+00 : f32
    %102 = vector.shape_cast %82 : vector<128x1xi1> to vector<128x1xi1>
    %103 = vector.broadcast %102 : vector<128x1xi1> to vector<128x128xi1>
    %104 = vector.broadcast %cst_57 : f32 to vector<128x128xf32>
    %105 = arith.select %103, %104, %101 : vector<128x128xi1>, vector<128x128xf32>
    %c0_58 = arith.constant 0 : index
    %c0_59 = arith.constant 0 : index
    %106 = vector.load %arg9[%c0_58, %c0_59] : memref<128x128xf32, #tpu.memory_space<vmem>>, vector<128x128xf32>
    %107 = arith.truncf %100 : vector<128x128xf32> to vector<128x128xbf16>
    %cst_60 = arith.constant dense<0.000000e+00> : vector<128x128xf32>
    %108 = tpu.matmul %107, %10, %cst_60 {dimension_numbers = #tpu.dot_dimension_numbers<[1], [0], [0], [1], [0, 0, 1, 1], [], []>} : vector<128x128xbf16>, vector<128x128xbf16>, vector<128x128xf32> -> vector<128x128xf32>
    %109 = arith.truncf %92 : vector<128x128xf32> to vector<128x128xbf16>
    %cst_61 = arith.constant dense<0.000000e+00> : vector<128x128xf32>
    %110 = tpu.matmul %109, %12, %cst_61 {dimension_numbers = #tpu.dot_dimension_numbers<[1], [0], [0], [1], [0, 0, 1, 1], [], []>} : vector<128x128xbf16>, vector<128x128xbf16>, vector<128x128xf32> -> vector<128x128xf32>
    %111 = arith.addf %108, %110 : vector<128x128xf32>
    %112 = arith.truncf %105 : vector<128x128xf32> to vector<128x128xbf16>
    %cst_62 = arith.constant dense<0.000000e+00> : vector<128x128xf32>
    %113 = tpu.matmul %112, %14, %cst_62 {dimension_numbers = #tpu.dot_dimension_numbers<[1], [0], [0], [1], [0, 0, 1, 1], [], []>} : vector<128x128xbf16>, vector<128x128xbf16>, vector<128x128xf32> -> vector<128x128xf32>
    %114 = arith.addf %111, %113 : vector<128x128xf32>
    %115 = vector.broadcast %16 : vector<1x128xf32> to vector<128x128xf32>
    %116 = arith.addf %114, %115 : vector<128x128xf32>
    %117 = arith.addf %106, %116 : vector<128x128xf32>
    %cst_63 = arith.constant 1.000000e+00 : f32
    %118 = vector.broadcast %cst_63 : f32 to vector<128x128xf32>
    %119 = arith.cmpf oge, %117, %118 : vector<128x128xf32>
    %cst_64 = arith.constant 1.000000e+00 : f32
    %cst_65 = arith.constant 0.000000e+00 : f32
    %120 = vector.broadcast %cst_64 : f32 to vector<128x128xf32>
    %121 = vector.broadcast %cst_65 : f32 to vector<128x128xf32>
    %122 = arith.select %119, %120, %121 : vector<128x128xi1>, vector<128x128xf32>
    %cst_66 = arith.constant 0.000000e+00 : f32
    %123 = vector.broadcast %cst_66 : f32 to vector<128x128xf32>
    %124 = arith.select %119, %123, %117 : vector<128x128xi1>, vector<128x128xf32>
    %c0_67 = arith.constant 0 : index
    %c0_68 = arith.constant 0 : index
    %125 = vector.load %arg9[%c0_67, %c0_68] : memref<128x128xf32, #tpu.memory_space<vmem>>, vector<128x128xf32>
    tpu.vector_store %arg9[%c0_67, %c0_68], %124 {strides = array<i32>} : memref<128x128xf32, #tpu.memory_space<vmem>>, vector<128x128xf32>,
    %126 = arith.index_cast %c0_i32_44 : i32 to index
    %c0_69 = arith.constant 0 : index
    %c0_70 = arith.constant 0 : index
    %127 = vector.load %arg2[%126, %c0_69, %c0_70] : memref<4x128x128xf32, #tpu.memory_space<vmem>>, vector<1x128x128xf32>
    %128 = vector.shape_cast %127 : vector<1x128x128xf32> to vector<128x128xf32>
    %129 = arith.addf %122, %128 : vector<128x128xf32>
    %130 = arith.index_cast %c0_i32_44 : i32 to index
    %c0_71 = arith.constant 0 : index
    %c0_72 = arith.constant 0 : index
    %131 = vector.load %arg7[%130, %c0_71, %c0_72] : memref<4x128x128xf32, #tpu.memory_space<vmem>>, vector<1x128x128xf32>
    %132 = vector.shape_cast %131 : vector<1x128x128xf32> to vector<128x128xf32>
    %133 = vector.shape_cast %129 : vector<128x128xf32> to vector<1x128x128xf32>
    tpu.vector_store %arg7[%130, %c0_71, %c0_72], %133 {strides = array<i32>} : memref<4x128x128xf32, #tpu.memory_space<vmem>>, vector<1x128x128xf32>,
    %c1_i32_73 = arith.constant 1 : i32
    %c0_74 = arith.constant 0 : index
    %c0_75 = arith.constant 0 : index
    %134 = vector.load %arg8[%c0_74, %c0_75] : memref<128x128xf32, #tpu.memory_space<vmem>>, vector<128x128xf32>
    %135 = arith.index_cast %c1_i32_73 : i32 to index
    %c0_76 = arith.constant 0 : index
    %c0_77 = arith.constant 0 : index
    %136 = vector.load %arg10[%135, %c0_76, %c0_77] : memref<4x128x128xf32, #tpu.memory_space<vmem>>, vector<1x128x128xf32>
    %137 = vector.shape_cast %136 : vector<1x128x128xf32> to vector<128x128xf32>
    %138 = arith.addf %134, %137 : vector<128x128xf32>
    %cst_78 = arith.constant 1.000000e+00 : f32
    %139 = vector.broadcast %cst_78 : f32 to vector<128x128xf32>
    %140 = arith.cmpf oge, %138, %139 : vector<128x128xf32>
    %cst_79 = arith.constant 1.000000e+00 : f32
    %cst_80 = arith.constant 0.000000e+00 : f32
    %141 = vector.broadcast %cst_79 : f32 to vector<128x128xf32>
    %142 = vector.broadcast %cst_80 : f32 to vector<128x128xf32>
    %143 = arith.select %140, %141, %142 : vector<128x128xi1>, vector<128x128xf32>
    %cst_81 = arith.constant 0.000000e+00 : f32
    %144 = vector.broadcast %cst_81 : f32 to vector<128x128xf32>
    %145 = arith.select %140, %144, %138 : vector<128x128xi1>, vector<128x128xf32>
    %c0_82 = arith.constant 0 : index
    %c0_83 = arith.constant 0 : index
    %146 = vector.load %arg8[%c0_82, %c0_83] : memref<128x128xf32, #tpu.memory_space<vmem>>, vector<128x128xf32>
    tpu.vector_store %arg8[%c0_82, %c0_83], %145 {strides = array<i32>} : memref<128x128xf32, #tpu.memory_space<vmem>>, vector<128x128xf32>,
    %c1_i32_84 = arith.constant 1 : i32
    %147 = tpu.dynamic_rotate %143 by %c1_i32_84 dim 0 : vector<128x128xf32>, i32 -> vector<128x128xf32>
    %cst_85 = arith.constant 0.000000e+00 : f32
    %148 = vector.shape_cast %80 : vector<128x1xi1> to vector<128x1xi1>
    %149 = vector.broadcast %148 : vector<128x1xi1> to vector<128x128xi1>
    %150 = vector.broadcast %cst_85 : f32 to vector<128x128xf32>
    %151 = arith.select %149, %150, %147 : vector<128x128xi1>, vector<128x128xf32>
    %c127_i32_86 = arith.constant 127 : i32
    %152 = tpu.dynamic_rotate %143 by %c127_i32_86 dim 0 : vector<128x128xf32>, i32 -> vector<128x128xf32>
    %cst_87 = arith.constant 0.000000e+00 : f32
    %153 = vector.shape_cast %82 : vector<128x1xi1> to vector<128x1xi1>
    %154 = vector.broadcast %153 : vector<128x1xi1> to vector<128x128xi1>
    %155 = vector.broadcast %cst_87 : f32 to vector<128x128xf32>
    %156 = arith.select %154, %155, %152 : vector<128x128xi1>, vector<128x128xf32>
    %c0_88 = arith.constant 0 : index
    %c0_89 = arith.constant 0 : index
    %157 = vector.load %arg9[%c0_88, %c0_89] : memref<128x128xf32, #tpu.memory_space<vmem>>, vector<128x128xf32>
    %158 = arith.truncf %151 : vector<128x128xf32> to vector<128x128xbf16>
    %cst_90 = arith.constant dense<0.000000e+00> : vector<128x128xf32>
    %159 = tpu.matmul %158, %10, %cst_90 {dimension_numbers = #tpu.dot_dimension_numbers<[1], [0], [0], [1], [0, 0, 1, 1], [], []>} : vector<128x128xbf16>, vector<128x128xbf16>, vector<128x128xf32> -> vector<128x128xf32>
    %160 = arith.truncf %143 : vector<128x128xf32> to vector<128x128xbf16>
    %cst_91 = arith.constant dense<0.000000e+00> : vector<128x128xf32>
    %161 = tpu.matmul %160, %12, %cst_91 {dimension_numbers = #tpu.dot_dimension_numbers<[1], [0], [0], [1], [0, 0, 1, 1], [], []>} : vector<128x128xbf16>, vector<128x128xbf16>, vector<128x128xf32> -> vector<128x128xf32>
    %162 = arith.addf %159, %161 : vector<128x128xf32>
    %163 = arith.truncf %156 : vector<128x128xf32> to vector<128x128xbf16>
    %cst_92 = arith.constant dense<0.000000e+00> : vector<128x128xf32>
    %164 = tpu.matmul %163, %14, %cst_92 {dimension_numbers = #tpu.dot_dimension_numbers<[1], [0], [0], [1], [0, 0, 1, 1], [], []>} : vector<128x128xbf16>, vector<128x128xbf16>, vector<128x128xf32> -> vector<128x128xf32>
    %165 = arith.addf %162, %164 : vector<128x128xf32>
    %166 = vector.broadcast %16 : vector<1x128xf32> to vector<128x128xf32>
    %167 = arith.addf %165, %166 : vector<128x128xf32>
    %168 = arith.addf %157, %167 : vector<128x128xf32>
    %cst_93 = arith.constant 1.000000e+00 : f32
    %169 = vector.broadcast %cst_93 : f32 to vector<128x128xf32>
    %170 = arith.cmpf oge, %168, %169 : vector<128x128xf32>
    %cst_94 = arith.constant 1.000000e+00 : f32
    %cst_95 = arith.constant 0.000000e+00 : f32
    %171 = vector.broadcast %cst_94 : f32 to vector<128x128xf32>
    %172 = vector.broadcast %cst_95 : f32 to vector<128x128xf32>
    %173 = arith.select %170, %171, %172 : vector<128x128xi1>, vector<128x128xf32>
    %cst_96 = arith.constant 0.000000e+00 : f32
    %174 = vector.broadcast %cst_96 : f32 to vector<128x128xf32>
    %175 = arith.select %170, %174, %168 : vector<128x128xi1>, vector<128x128xf32>
    %c0_97 = arith.constant 0 : index
    %c0_98 = arith.constant 0 : index
    %176 = vector.load %arg9[%c0_97, %c0_98] : memref<128x128xf32, #tpu.memory_space<vmem>>, vector<128x128xf32>
    tpu.vector_store %arg9[%c0_97, %c0_98], %175 {strides = array<i32>} : memref<128x128xf32, #tpu.memory_space<vmem>>, vector<128x128xf32>,
    %177 = arith.index_cast %c1_i32_73 : i32 to index
    %c0_99 = arith.constant 0 : index
    %c0_100 = arith.constant 0 : index
    %178 = vector.load %arg2[%177, %c0_99, %c0_100] : memref<4x128x128xf32, #tpu.memory_space<vmem>>, vector<1x128x128xf32>
    %179 = vector.shape_cast %178 : vector<1x128x128xf32> to vector<128x128xf32>
    %180 = arith.addf %173, %179 : vector<128x128xf32>
    %181 = arith.index_cast %c1_i32_73 : i32 to index
    %c0_101 = arith.constant 0 : index
    %c0_102 = arith.constant 0 : index
    %182 = vector.load %arg7[%181, %c0_101, %c0_102] : memref<4x128x128xf32, #tpu.memory_space<vmem>>, vector<1x128x128xf32>
    %183 = vector.shape_cast %182 : vector<1x128x128xf32> to vector<128x128xf32>
    %184 = vector.shape_cast %180 : vector<128x128xf32> to vector<1x128x128xf32>
    tpu.vector_store %arg7[%181, %c0_101, %c0_102], %184 {strides = array<i32>} : memref<4x128x128xf32, #tpu.memory_space<vmem>>, vector<1x128x128xf32>,
    %c2_i32 = arith.constant 2 : i32
    %c0_103 = arith.constant 0 : index
    %c0_104 = arith.constant 0 : index
    %185 = vector.load %arg8[%c0_103, %c0_104] : memref<128x128xf32, #tpu.memory_space<vmem>>, vector<128x128xf32>
    %186 = arith.index_cast %c2_i32 : i32 to index
    %c0_105 = arith.constant 0 : index
    %c0_106 = arith.constant 0 : index
    %187 = vector.load %arg10[%186, %c0_105, %c0_106] : memref<4x128x128xf32, #tpu.memory_space<vmem>>, vector<1x128x128xf32>
    %188 = vector.shape_cast %187 : vector<1x128x128xf32> to vector<128x128xf32>
    %189 = arith.addf %185, %188 : vector<128x128xf32>
    %cst_107 = arith.constant 1.000000e+00 : f32
    %190 = vector.broadcast %cst_107 : f32 to vector<128x128xf32>
    %191 = arith.cmpf oge, %189, %190 : vector<128x128xf32>
    %cst_108 = arith.constant 1.000000e+00 : f32
    %cst_109 = arith.constant 0.000000e+00 : f32
    %192 = vector.broadcast %cst_108 : f32 to vector<128x128xf32>
    %193 = vector.broadcast %cst_109 : f32 to vector<128x128xf32>
    %194 = arith.select %191, %192, %193 : vector<128x128xi1>, vector<128x128xf32>
    %cst_110 = arith.constant 0.000000e+00 : f32
    %195 = vector.broadcast %cst_110 : f32 to vector<128x128xf32>
    %196 = arith.select %191, %195, %189 : vector<128x128xi1>, vector<128x128xf32>
    %c0_111 = arith.constant 0 : index
    %c0_112 = arith.constant 0 : index
    %197 = vector.load %arg8[%c0_111, %c0_112] : memref<128x128xf32, #tpu.memory_space<vmem>>, vector<128x128xf32>
    tpu.vector_store %arg8[%c0_111, %c0_112], %196 {strides = array<i32>} : memref<128x128xf32, #tpu.memory_space<vmem>>, vector<128x128xf32>,
    %c1_i32_113 = arith.constant 1 : i32
    %198 = tpu.dynamic_rotate %194 by %c1_i32_113 dim 0 : vector<128x128xf32>, i32 -> vector<128x128xf32>
    %cst_114 = arith.constant 0.000000e+00 : f32
    %199 = vector.shape_cast %80 : vector<128x1xi1> to vector<128x1xi1>
    %200 = vector.broadcast %199 : vector<128x1xi1> to vector<128x128xi1>
    %201 = vector.broadcast %cst_114 : f32 to vector<128x128xf32>
    %202 = arith.select %200, %201, %198 : vector<128x128xi1>, vector<128x128xf32>
    %c127_i32_115 = arith.constant 127 : i32
    %203 = tpu.dynamic_rotate %194 by %c127_i32_115 dim 0 : vector<128x128xf32>, i32 -> vector<128x128xf32>
    %cst_116 = arith.constant 0.000000e+00 : f32
    %204 = vector.shape_cast %82 : vector<128x1xi1> to vector<128x1xi1>
    %205 = vector.broadcast %204 : vector<128x1xi1> to vector<128x128xi1>
    %206 = vector.broadcast %cst_116 : f32 to vector<128x128xf32>
    %207 = arith.select %205, %206, %203 : vector<128x128xi1>, vector<128x128xf32>
    %c0_117 = arith.constant 0 : index
    %c0_118 = arith.constant 0 : index
    %208 = vector.load %arg9[%c0_117, %c0_118] : memref<128x128xf32, #tpu.memory_space<vmem>>, vector<128x128xf32>
    %209 = arith.truncf %202 : vector<128x128xf32> to vector<128x128xbf16>
    %cst_119 = arith.constant dense<0.000000e+00> : vector<128x128xf32>
    %210 = tpu.matmul %209, %10, %cst_119 {dimension_numbers = #tpu.dot_dimension_numbers<[1], [0], [0], [1], [0, 0, 1, 1], [], []>} : vector<128x128xbf16>, vector<128x128xbf16>, vector<128x128xf32> -> vector<128x128xf32>
    %211 = arith.truncf %194 : vector<128x128xf32> to vector<128x128xbf16>
    %cst_120 = arith.constant dense<0.000000e+00> : vector<128x128xf32>
    %212 = tpu.matmul %211, %12, %cst_120 {dimension_numbers = #tpu.dot_dimension_numbers<[1], [0], [0], [1], [0, 0, 1, 1], [], []>} : vector<128x128xbf16>, vector<128x128xbf16>, vector<128x128xf32> -> vector<128x128xf32>
    %213 = arith.addf %210, %212 : vector<128x128xf32>
    %214 = arith.truncf %207 : vector<128x128xf32> to vector<128x128xbf16>
    %cst_121 = arith.constant dense<0.000000e+00> : vector<128x128xf32>
    %215 = tpu.matmul %214, %14, %cst_121 {dimension_numbers = #tpu.dot_dimension_numbers<[1], [0], [0], [1], [0, 0, 1, 1], [], []>} : vector<128x128xbf16>, vector<128x128xbf16>, vector<128x128xf32> -> vector<128x128xf32>
    %216 = arith.addf %213, %215 : vector<128x128xf32>
    %217 = vector.broadcast %16 : vector<1x128xf32> to vector<128x128xf32>
    %218 = arith.addf %216, %217 : vector<128x128xf32>
    %219 = arith.addf %208, %218 : vector<128x128xf32>
    %cst_122 = arith.constant 1.000000e+00 : f32
    %220 = vector.broadcast %cst_122 : f32 to vector<128x128xf32>
    %221 = arith.cmpf oge, %219, %220 : vector<128x128xf32>
    %cst_123 = arith.constant 1.000000e+00 : f32
    %cst_124 = arith.constant 0.000000e+00 : f32
    %222 = vector.broadcast %cst_123 : f32 to vector<128x128xf32>
    %223 = vector.broadcast %cst_124 : f32 to vector<128x128xf32>
    %224 = arith.select %221, %222, %223 : vector<128x128xi1>, vector<128x128xf32>
    %cst_125 = arith.constant 0.000000e+00 : f32
    %225 = vector.broadcast %cst_125 : f32 to vector<128x128xf32>
    %226 = arith.select %221, %225, %219 : vector<128x128xi1>, vector<128x128xf32>
    %c0_126 = arith.constant 0 : index
    %c0_127 = arith.constant 0 : index
    %227 = vector.load %arg9[%c0_126, %c0_127] : memref<128x128xf32, #tpu.memory_space<vmem>>, vector<128x128xf32>
    tpu.vector_store %arg9[%c0_126, %c0_127], %226 {strides = array<i32>} : memref<128x128xf32, #tpu.memory_space<vmem>>, vector<128x128xf32>,
    %228 = arith.index_cast %c2_i32 : i32 to index
    %c0_128 = arith.constant 0 : index
    %c0_129 = arith.constant 0 : index
    %229 = vector.load %arg2[%228, %c0_128, %c0_129] : memref<4x128x128xf32, #tpu.memory_space<vmem>>, vector<1x128x128xf32>
    %230 = vector.shape_cast %229 : vector<1x128x128xf32> to vector<128x128xf32>
    %231 = arith.addf %224, %230 : vector<128x128xf32>
    %232 = arith.index_cast %c2_i32 : i32 to index
    %c0_130 = arith.constant 0 : index
    %c0_131 = arith.constant 0 : index
    %233 = vector.load %arg7[%232, %c0_130, %c0_131] : memref<4x128x128xf32, #tpu.memory_space<vmem>>, vector<1x128x128xf32>
    %234 = vector.shape_cast %233 : vector<1x128x128xf32> to vector<128x128xf32>
    %235 = vector.shape_cast %231 : vector<128x128xf32> to vector<1x128x128xf32>
    tpu.vector_store %arg7[%232, %c0_130, %c0_131], %235 {strides = array<i32>} : memref<4x128x128xf32, #tpu.memory_space<vmem>>, vector<1x128x128xf32>,
    %c3_i32 = arith.constant 3 : i32
    %c0_132 = arith.constant 0 : index
    %c0_133 = arith.constant 0 : index
    %236 = vector.load %arg8[%c0_132, %c0_133] : memref<128x128xf32, #tpu.memory_space<vmem>>, vector<128x128xf32>
    %237 = arith.index_cast %c3_i32 : i32 to index
    %c0_134 = arith.constant 0 : index
    %c0_135 = arith.constant 0 : index
    %238 = vector.load %arg10[%237, %c0_134, %c0_135] : memref<4x128x128xf32, #tpu.memory_space<vmem>>, vector<1x128x128xf32>
    %239 = vector.shape_cast %238 : vector<1x128x128xf32> to vector<128x128xf32>
    %240 = arith.addf %236, %239 : vector<128x128xf32>
    %cst_136 = arith.constant 1.000000e+00 : f32
    %241 = vector.broadcast %cst_136 : f32 to vector<128x128xf32>
    %242 = arith.cmpf oge, %240, %241 : vector<128x128xf32>
    %cst_137 = arith.constant 1.000000e+00 : f32
    %cst_138 = arith.constant 0.000000e+00 : f32
    %243 = vector.broadcast %cst_137 : f32 to vector<128x128xf32>
    %244 = vector.broadcast %cst_138 : f32 to vector<128x128xf32>
    %245 = arith.select %242, %243, %244 : vector<128x128xi1>, vector<128x128xf32>
    %cst_139 = arith.constant 0.000000e+00 : f32
    %246 = vector.broadcast %cst_139 : f32 to vector<128x128xf32>
    %247 = arith.select %242, %246, %240 : vector<128x128xi1>, vector<128x128xf32>
    %c0_140 = arith.constant 0 : index
    %c0_141 = arith.constant 0 : index
    %248 = vector.load %arg8[%c0_140, %c0_141] : memref<128x128xf32, #tpu.memory_space<vmem>>, vector<128x128xf32>
    tpu.vector_store %arg8[%c0_140, %c0_141], %247 {strides = array<i32>} : memref<128x128xf32, #tpu.memory_space<vmem>>, vector<128x128xf32>,
    %c1_i32_142 = arith.constant 1 : i32
    %249 = tpu.dynamic_rotate %245 by %c1_i32_142 dim 0 : vector<128x128xf32>, i32 -> vector<128x128xf32>
    %cst_143 = arith.constant 0.000000e+00 : f32
    %250 = vector.shape_cast %80 : vector<128x1xi1> to vector<128x1xi1>
    %251 = vector.broadcast %250 : vector<128x1xi1> to vector<128x128xi1>
    %252 = vector.broadcast %cst_143 : f32 to vector<128x128xf32>
    %253 = arith.select %251, %252, %249 : vector<128x128xi1>, vector<128x128xf32>
    %c127_i32_144 = arith.constant 127 : i32
    %254 = tpu.dynamic_rotate %245 by %c127_i32_144 dim 0 : vector<128x128xf32>, i32 -> vector<128x128xf32>
    %cst_145 = arith.constant 0.000000e+00 : f32
    %255 = vector.shape_cast %82 : vector<128x1xi1> to vector<128x1xi1>
    %256 = vector.broadcast %255 : vector<128x1xi1> to vector<128x128xi1>
    %257 = vector.broadcast %cst_145 : f32 to vector<128x128xf32>
    %258 = arith.select %256, %257, %254 : vector<128x128xi1>, vector<128x128xf32>
    %c0_146 = arith.constant 0 : index
    %c0_147 = arith.constant 0 : index
    %259 = vector.load %arg9[%c0_146, %c0_147] : memref<128x128xf32, #tpu.memory_space<vmem>>, vector<128x128xf32>
    %260 = arith.truncf %253 : vector<128x128xf32> to vector<128x128xbf16>
    %cst_148 = arith.constant dense<0.000000e+00> : vector<128x128xf32>
    %261 = tpu.matmul %260, %10, %cst_148 {dimension_numbers = #tpu.dot_dimension_numbers<[1], [0], [0], [1], [0, 0, 1, 1], [], []>} : vector<128x128xbf16>, vector<128x128xbf16>, vector<128x128xf32> -> vector<128x128xf32>
    %262 = arith.truncf %245 : vector<128x128xf32> to vector<128x128xbf16>
    %cst_149 = arith.constant dense<0.000000e+00> : vector<128x128xf32>
    %263 = tpu.matmul %262, %12, %cst_149 {dimension_numbers = #tpu.dot_dimension_numbers<[1], [0], [0], [1], [0, 0, 1, 1], [], []>} : vector<128x128xbf16>, vector<128x128xbf16>, vector<128x128xf32> -> vector<128x128xf32>
    %264 = arith.addf %261, %263 : vector<128x128xf32>
    %265 = arith.truncf %258 : vector<128x128xf32> to vector<128x128xbf16>
    %cst_150 = arith.constant dense<0.000000e+00> : vector<128x128xf32>
    %266 = tpu.matmul %265, %14, %cst_150 {dimension_numbers = #tpu.dot_dimension_numbers<[1], [0], [0], [1], [0, 0, 1, 1], [], []>} : vector<128x128xbf16>, vector<128x128xbf16>, vector<128x128xf32> -> vector<128x128xf32>
    %267 = arith.addf %264, %266 : vector<128x128xf32>
    %268 = vector.broadcast %16 : vector<1x128xf32> to vector<128x128xf32>
    %269 = arith.addf %267, %268 : vector<128x128xf32>
    %270 = arith.addf %259, %269 : vector<128x128xf32>
    %cst_151 = arith.constant 1.000000e+00 : f32
    %271 = vector.broadcast %cst_151 : f32 to vector<128x128xf32>
    %272 = arith.cmpf oge, %270, %271 : vector<128x128xf32>
    %cst_152 = arith.constant 1.000000e+00 : f32
    %cst_153 = arith.constant 0.000000e+00 : f32
    %273 = vector.broadcast %cst_152 : f32 to vector<128x128xf32>
    %274 = vector.broadcast %cst_153 : f32 to vector<128x128xf32>
    %275 = arith.select %272, %273, %274 : vector<128x128xi1>, vector<128x128xf32>
    %cst_154 = arith.constant 0.000000e+00 : f32
    %276 = vector.broadcast %cst_154 : f32 to vector<128x128xf32>
    %277 = arith.select %272, %276, %270 : vector<128x128xi1>, vector<128x128xf32>
    %c0_155 = arith.constant 0 : index
    %c0_156 = arith.constant 0 : index
    %278 = vector.load %arg9[%c0_155, %c0_156] : memref<128x128xf32, #tpu.memory_space<vmem>>, vector<128x128xf32>
    tpu.vector_store %arg9[%c0_155, %c0_156], %277 {strides = array<i32>} : memref<128x128xf32, #tpu.memory_space<vmem>>, vector<128x128xf32>,
    %279 = arith.index_cast %c3_i32 : i32 to index
    %c0_157 = arith.constant 0 : index
    %c0_158 = arith.constant 0 : index
    %280 = vector.load %arg2[%279, %c0_157, %c0_158] : memref<4x128x128xf32, #tpu.memory_space<vmem>>, vector<1x128x128xf32>
    %281 = vector.shape_cast %280 : vector<1x128x128xf32> to vector<128x128xf32>
    %282 = arith.addf %275, %281 : vector<128x128xf32>
    %283 = arith.index_cast %c3_i32 : i32 to index
    %c0_159 = arith.constant 0 : index
    %c0_160 = arith.constant 0 : index
    %284 = vector.load %arg7[%283, %c0_159, %c0_160] : memref<4x128x128xf32, #tpu.memory_space<vmem>>, vector<1x128x128xf32>
    %285 = vector.shape_cast %284 : vector<1x128x128xf32> to vector<128x128xf32>
    %286 = vector.shape_cast %282 : vector<128x128xf32> to vector<1x128x128xf32>
    tpu.vector_store %arg7[%283, %c0_159, %c0_160], %286 {strides = array<i32>} : memref<4x128x128xf32, #tpu.memory_space<vmem>>, vector<1x128x128xf32>,
    %c4_i32 = arith.constant 4 : i32
    return
  }
  func.func @transform_0(%arg0: i32, %arg1: i32) -> (i32, i32, i32) {
    %c0_i32 = arith.constant 0 : i32
    %c0_i32_0 = arith.constant 0 : i32
    return %arg1, %arg0, %c0_i32 : i32, i32, i32
  }
  func.func @transform_1(%arg0: i32, %arg1: i32) -> (i32, i32, i32) {
    %c0_i32 = arith.constant 0 : i32
    %c0_i32_0 = arith.constant 0 : i32
    %c0_i32_1 = arith.constant 0 : i32
    %c0_i32_2 = arith.constant 0 : i32
    return %c0_i32, %c0_i32_0, %c0_i32_1 : i32, i32, i32
  }
  func.func @transform_2(%arg0: i32, %arg1: i32) -> (i32, i32) {
    %c0_i32 = arith.constant 0 : i32
    %c0_i32_0 = arith.constant 0 : i32
    %c0_i32_1 = arith.constant 0 : i32
    return %c0_i32, %c0_i32_0 : i32, i32
  }
  func.func @transform_3(%arg0: i32, %arg1: i32) -> (i32, i32, i32) {
    %c0_i32 = arith.constant 0 : i32
    %c0_i32_0 = arith.constant 0 : i32
    %c0_i32_1 = arith.constant 0 : i32
    %c0_i32_2 = arith.constant 0 : i32
    return %c0_i32, %c0_i32_0, %c0_i32_1 : i32, i32, i32
  }
  func.func @transform_4(%arg0: i32, %arg1: i32) -> (i32, i32) {
    %c0_i32 = arith.constant 0 : i32
    %c0_i32_0 = arith.constant 0 : i32
    %c0_i32_1 = arith.constant 0 : i32
    return %c0_i32, %c0_i32_0 : i32, i32
  }
  func.func @transform_5(%arg0: i32, %arg1: i32) -> (i32, i32, i32) {
    %c0_i32 = arith.constant 0 : i32
    %c0_i32_0 = arith.constant 0 : i32
    return %arg1, %arg0, %c0_i32 : i32, i32, i32
  }
}

</mosaic_0001>

<llo_original>
// kernel: tpu_custom_call.1
$region0: #{tpu_custom_call.1}
  #allocation0 [shape = 'u32[]', space=smem, size = 0x4, offset = 0x4, fixed_abs, tag = 'smem constant byte address 0x4 - core index']
  #allocation1 [shape = 'u32[72,128]{1,0:T(1,128)}', space=vmem, size = 0x9000, scoped, tag = 'internal scratch']
  #allocation2 [shape = 'f32[128,128]{1,0:T(8,128)}', space=vmem, size = 0x10000, scoped, tag = 'scratch operand']
  #allocation3 [shape = 'f32[128,128]{1,0:T(8,128)}', space=vmem, size = 0x10000, scoped, tag = 'scratch operand']
  #allocation4 [shape = 'f32[4,128,128]{2,1,0:T(8,128)}', space=vmem, size = 0x40000, scoped, tag = 'scratch operand']
  #allocation12 [shape = 's32[]', space=sflag, size = 0x4, offset = 0, fixed_abs, tag = 'sflag constant byte address 0x0 - dummy sync flag']
  #allocation14 [shape = 's32[]', space=sflag, size = 0x4, offset = 0, fixed_abs, tag = 'sflag constant byte address 0x0 - dummy sync flag']
  %s0 = inlined_call_operand.hbm [shape: f32[8,256,128], index: 0, kind: input, shape index: {}]
  %s1 = inlined_call_operand.hbm [shape: bf16[3,128,128], index: 1, kind: input, shape index: {}]
  %s2 = inlined_call_operand.vmem [shape: f32[1,128], index: 2, kind: input, shape index: {}]
  %s3 = inlined_call_operand.hbm [shape: bf16[3,128,128], index: 3, kind: input, shape index: {}]
  %s4 = inlined_call_operand.vmem [shape: f32[1,128], index: 4, kind: input, shape index: {}]
  %s5 = inlined_call_operand.hbm [shape: f32[8,256,128], index: 5, kind: output, shape index: {}]
  %s6 = sld [smem:[#allocation0]]
  $region69: #{tpu_custom_call.1} parent=0
    _
  %s8 = ssub.s32 1, %s6
  %s9 = scalar_select 0, %s8, %s6
  $region1: #{tpu_custom_call.1} parent=0
    #allocation5 [shape = 'u8[524288]{0}', space=vmem, size = 0x80000, scoped, tag = 'input window, operand 0']
    #allocation6 [shape = 's32[2]{0}', space=sflag, size = 0x8, scoped, tag = 'scoped memory for tpu_custom_call.1']
    #allocation7 [shape = 's32[2]{0}', space=sflag, size = 0x8, scoped, tag = 'scoped memory for tpu_custom_call.1']
    #allocation8 [shape = 'u8[98304]{0}', space=vmem, size = 0x18000, scoped, tag = 'input window, operand 1, single buffered']
    #allocation9 [shape = 's32[1]{0}', space=sflag, size = 0x4, scoped, tag = 'scoped memory for tpu_custom_call.1']
    #allocation10 [shape = 'u8[98304]{0}', space=vmem, size = 0x18000, scoped, tag = 'input window, operand 3, single buffered']
    #allocation11 [shape = 'u8[524288]{0}', space=vmem, size = 0x80000, scoped, tag = 'output window, operand 0']
    %10 = vsyncpa [#allocation6], 0
    %s11 = scalar_lea.sflag [#allocation6], 1
    %12 = vsyncpa %s11, 0
    %13 = vsyncpa [#allocation9], 0
    %14 = vsyncpa [#allocation7], 0
    %s15 = scalar_lea.sflag [#allocation7], 1
    %16 = vsyncpa %s15, 0
    loop: start=0, step=1, limit=6
    $region2: #{tpu_custom_call.1} parent=1 // loop_pre_header
      _
    $region3: #{tpu_custom_call.1} parent=1 // loop_header
      %s18 = sphi 0, %s22
      %p19 = scmp.ge.s32.totalorder %s18, 6
      %s25 = sphi 0, %s37
      %s26 = sphi 0, %s33
      %s27 = sphi 0, %s25
      %s28 = sphi 0, %s26
      %s29 = sphi 0, %s27
      %s30 = sphi 0, %s28
      %s42 = sphi 0, %s44
      %s45 = sphi 0, %s42
      %s46 = sphi 0, %s45
      %s62 = sphi 0, %s46
      %s66 = sphi 0, %s66
      %s68 = sphi 0, %s66
      %s69 = sphi 0, %s68
      %s83 = sphi 0, %s69
      %s87 = sphi 0, %s87
      %s89 = sphi 0, %s87
      %s90 = sphi 0, %s89
      %s104 = sphi 0, %s90
      %s108 = sphi 0, %s108
      %s110 = sphi 0, %s108
      %s111 = sphi 0, %s110
      %s125 = sphi 0, %s111
      %s129 = sphi 0, %s129
      %s131 = sphi 0, %s129
      %s132 = sphi 0, %s131
      %s146 = sphi 0, %s132
      %s154 = sphi 0, %s156
      %s157 = sphi 0, %s154
      %s158 = sphi 0, %s157
      %s174 = sphi 0, %s158
    $region4: #{tpu_custom_call.1} parent=1 // loop_header_branch
      %21 = sbr.rel (%p19) target = $region8
    $region5: #{tpu_custom_call.1} parent=1 // loop_body
      %s23 = ssub.s32 %s18, 1
      %s24 = ssub.s32 %s18, 2
      %s31 = sadd.s32 1, %s26
      %p32 = scmp.ge.s32.totalorder %s31, 2
      %s33 = scalar_select %p32, 0, %s31
      %s34 = sadd.s32 1, %s25
      %s35 = scalar_select %p32, %s34, %s25
      %p36 = scmp.ge.s32.totalorder %s35, 2
      %s37 = scalar_select %p36, 0, %s35
      %s38 = ssub.s32 %s26, %s33
      %s39 = ssub.s32 %s25, %s37
      %s40 = sor.u32 %s38, %s39
      %p41 = scmp.eq.s32.totalorder %s40, 0
      %s43 = sadd.s32 %s42, 1
      %s44 = scalar_select %p41, %s42, %s43
      %p47 = pneg %p41
      %p48 = scmp.eq.s32.totalorder %s18, 3
      %p49 = por %p47, %p48
      %p50 = scmp.ne.s32.totalorder %s42, %s45
      %p51 = scmp.eq.s32.totalorder %s18, 0
      %p52 = por %p50, %p51
      %p53 = scmp.ne.s32.totalorder %s42, %s45
      %p54 = scmp.eq.s32.totalorder %s23, 3
      %p55 = por %p53, %p54
      %p56 = scmp.ne.s32.totalorder %s45, %s46
      %p57 = scmp.eq.s32.totalorder %s23, 0
      %p58 = por %p56, %p57
      %p59 = scmp.ne.s32.totalorder %s45, %s46
      %p60 = scmp.eq.s32.totalorder %s24, 3
      %p61 = por %p59, %p60
      %p63 = scmp.ne.s32.totalorder %s46, %s62
      %p64 = scmp.eq.s32.totalorder %s24, 0
      %p65 = por %p63, %p64
      %s67 = sadd.s32 %s66, 1
      %p70 = scmp.eq.s32.totalorder %s18, 3
      %p71 = scmp.ne.s32.totalorder %s66, %s68
      %p72 = scmp.eq.s32.totalorder %s18, 0
      %p73 = por %p71, %p72
      %p74 = scmp.ne.s32.totalorder %s66, %s68
      %p75 = scmp.eq.s32.totalorder %s23, 3
      %p76 = por %p74, %p75
      %p77 = scmp.ne.s32.totalorder %s68, %s69
      %p78 = scmp.eq.s32.totalorder %s23, 0
      %p79 = por %p77, %p78
      %p80 = scmp.ne.s32.totalorder %s68, %s69
      %p81 = scmp.eq.s32.totalorder %s24, 3
      %p82 = por %p80, %p81
      %p84 = scmp.ne.s32.totalorder %s69, %s83
      %p85 = scmp.eq.s32.totalorder %s24, 0
      %p86 = por %p84, %p85
      %s88 = sadd.s32 %s87, 1
      %p91 = scmp.eq.s32.totalorder %s18, 3
      %p92 = scmp.ne.s32.totalorder %s87, %s89
      %p93 = scmp.eq.s32.totalorder %s18, 0
      %p94 = por %p92, %p93
      %p95 = scmp.ne.s32.totalorder %s87, %s89
      %p96 = scmp.eq.s32.totalorder %s23, 3
      %p97 = por %p95, %p96
      %p98 = scmp.ne.s32.totalorder %s89, %s90
      %p99 = scmp.eq.s32.totalorder %s23, 0
      %p100 = por %p98, %p99
      %p101 = scmp.ne.s32.totalorder %s89, %s90
      %p102 = scmp.eq.s32.totalorder %s24, 3
      %p103 = por %p101, %p102
      %p105 = scmp.ne.s32.totalorder %s90, %s104
      %p106 = scmp.eq.s32.totalorder %s24, 0
      %p107 = por %p105, %p106
      %s109 = sadd.s32 %s108, 1
      %p112 = scmp.eq.s32.totalorder %s18, 3
      %p113 = scmp.ne.s32.totalorder %s108, %s110
      %p114 = scmp.eq.s32.totalorder %s18, 0
      %p115 = por %p113, %p114
      %p116 = scmp.ne.s32.totalorder %s108, %s110
      %p117 = scmp.eq.s32.totalorder %s23, 3
      %p118 = por %p116, %p117
      %p119 = scmp.ne.s32.totalorder %s110, %s111
      %p120 = scmp.eq.s32.totalorder %s23, 0
      %p121 = por %p119, %p120
      %p122 = scmp.ne.s32.totalorder %s110, %s111
      %p123 = scmp.eq.s32.totalorder %s24, 3
      %p124 = por %p122, %p123
      %p126 = scmp.ne.s32.totalorder %s111, %s125
      %p127 = scmp.eq.s32.totalorder %s24, 0
      %p128 = por %p126, %p127
      %s130 = sadd.s32 %s129, 1
      %p133 = scmp.eq.s32.totalorder %s18, 3
      %p134 = scmp.ne.s32.totalorder %s129, %s131
      %p135 = scmp.eq.s32.totalorder %s18, 0
      %p136 = por %p134, %p135
      %p137 = scmp.ne.s32.totalorder %s129, %s131
      %p138 = scmp.eq.s32.totalorder %s23, 3
      %p139 = por %p137, %p138
      %p140 = scmp.ne.s32.totalorder %s131, %s132
      %p141 = scmp.eq.s32.totalorder %s23, 0
      %p142 = por %p140, %p141
      %p143 = scmp.ne.s32.totalorder %s131, %s132
      %p144 = scmp.eq.s32.totalorder %s24, 3
      %p145 = por %p143, %p144
      %p147 = scmp.ne.s32.totalorder %s132, %s146
      %p148 = scmp.eq.s32.totalorder %s24, 0
      %p149 = por %p147, %p148
      %s150 = ssub.s32 %s26, %s33
      %s151 = ssub.s32 %s25, %s37
      %s152 = sor.u32 %s150, %s151
      %p153 = scmp.eq.s32.totalorder %s152, 0
      %s155 = sadd.s32 %s154, 1
      %s156 = scalar_select %p153, %s154, %s155
      %p159 = pneg %p153
      %p160 = scmp.eq.s32.totalorder %s18, 3
      %p161 = por %p159, %p160
      %p162 = scmp.ne.s32.totalorder %s154, %s157
      %p163 = scmp.eq.s32.totalorder %s18, 0
      %p164 = por %p162, %p163
      %p165 = scmp.ne.s32.totalorder %s154, %s157
      %p166 = scmp.eq.s32.totalorder %s23, 3
      %p167 = por %p165, %p166
      %p168 = scmp.ne.s32.totalorder %s157, %s158
      %p169 = scmp.eq.s32.totalorder %s23, 0
      %p170 = por %p168, %p169
      %p171 = scmp.ne.s32.totalorder %s157, %s158
      %p172 = scmp.eq.s32.totalorder %s24, 3
      %p173 = por %p171, %p172
      %p175 = scmp.ne.s32.totalorder %s158, %s174
      %p176 = scmp.eq.s32.totalorder %s24, 0
      %p177 = por %p175, %p176
      %p178 = scmp.le.s32.totalorder 1, %s18
      %p179 = scmp.lt.s32.totalorder %s18, 5
      %p180 = pnand %p178, %p179
      %p181 = pneg %p180
      // Predicated region
      $region9: #{tpu_custom_call.1} parent=5 // pred_check
        _
      $region10: #{tpu_custom_call.1} parent=5 // pred_check_branch
        %183 = sbr.rel (%p180) target = $region12
      $region11: #{tpu_custom_call.1} parent=5 // pred_region
        %s184 = ssub.s32 %s18, 1
        // Predicated region
        $region13: #{tpu_custom_call.1} parent=11 // pred_check
          %p185 = pneg %p79
        $region14: #{tpu_custom_call.1} parent=11 // pred_check_branch
          %187 = sbr.rel (%p185) target = $region16
        $region15: #{tpu_custom_call.1} parent=11 // pred_region
          %189 = vsyncadd [#allocation9], 0
          %s190 = sshll.u32 %s1, 4
          %s191 = int_to_ptr.hbm [resolvable:$true] %s190
          %s192 = sshll.u32 [#allocation8], 4
          %s193 = int_to_ptr.vmem [resolvable:$true] %s192
          %198 = dma.hbm_to_vmem [thread:$0]  %s191, 3072, %s193, [#allocation9], 64, 64, 4
        $region16: #{tpu_custom_call.1} parent=11 // pred_fallthru
          _
        // Predicated region
        $region17: #{tpu_custom_call.1} parent=11 // pred_check
          %p199 = pneg %p100
        $region18: #{tpu_custom_call.1} parent=11 // pred_check_branch
          %201 = sbr.rel (%p199) target = $region20
        $region19: #{tpu_custom_call.1} parent=11 // pred_region
          _
        $region20: #{tpu_custom_call.1} parent=11 // pred_fallthru
          _
        // Predicated region
        $region21: #{tpu_custom_call.1} parent=11 // pred_check
          %p202 = pneg %p121
        $region22: #{tpu_custom_call.1} parent=11 // pred_check_branch
          %204 = sbr.rel (%p202) target = $region24
        $region23: #{tpu_custom_call.1} parent=11 // pred_region
          %206 = vsyncadd [#allocation9], 0
          %s207 = sshll.u32 %s3, 4
          %s208 = int_to_ptr.hbm [resolvable:$true] %s207
          %s209 = sshll.u32 [#allocation10], 4
          %s210 = int_to_ptr.vmem [resolvable:$true] %s209
          %215 = dma.hbm_to_vmem [thread:$0]  %s208, 3072, %s210, [#allocation9], 64, 64, 4
        $region24: #{tpu_custom_call.1} parent=11 // pred_fallthru
          _
        // Predicated region
        $region25: #{tpu_custom_call.1} parent=11 // pred_check
          %p216 = pneg %p142
        $region26: #{tpu_custom_call.1} parent=11 // pred_check_branch
          %218 = sbr.rel (%p216) target = $region28
        $region27: #{tpu_custom_call.1} parent=11 // pred_region
          _
        $region28: #{tpu_custom_call.1} parent=11 // pred_fallthru
          _
      $region12: #{tpu_custom_call.1} parent=5 // pred_fallthru
        _
      %p219 = scmp.lt.s32.totalorder %s18, 4
      // Predicated region
      $region29: #{tpu_custom_call.1} parent=5 // pred_check
        %p220 = pneg %p219
      $region30: #{tpu_custom_call.1} parent=5 // pred_check_branch
        %222 = sbr.rel (%p220) target = $region32
      $region31: #{tpu_custom_call.1} parent=5 // pred_region
        // Predicated region
        $region33: #{tpu_custom_call.1} parent=31 // pred_check
          %p223 = pneg %p52
        $region34: #{tpu_custom_call.1} parent=31 // pred_check_branch
          %225 = sbr.rel (%p223) target = $region36
        $region35: #{tpu_custom_call.1} parent=31 // pred_region
          #allocation13 [shape = 'u32[6]{0}', space=smem, size = 0x18, scoped, tag = 'DMA stride descriptor']
          %s226 = sand.u32 %s42, 1
          %s227 = scalar_lea.sflag [#allocation6], %s226
          %s228 = sand.u32 %s42, 1
          %s229 = smul.addr %s228, 512
          %s230 = scalar_lea.vmem [#allocation5], %s229
          %s231 = smul.u32 4, %s26
          %s232 = smul.u32 16, %s25
          %234 = vsyncadd %s227, 0
          %s235 = smul.addr %s231, 32
          %s236 = sadd.s32 %s232, %s235
          %s237 = smul.addr %s236, 8
          %s238 = scalar_lea.hbm %s0, %s237
          %s240 = sshll.u32 1, 14
          %s241 = sxor.u32 4294967295, %s240
          %s243 = sld [smem:[#allocation0]]
          %s244 = sadd.s32 2, %s243
          %s246 = sshll.u32 7, 26
          %s247 = sxor.u32 4294967295, %s246
          %s248 = sand.u32 0, %s247
          %s249 = sshll.u32 %s244, 26
          %s250 = sor.u32 %s248, %s249
          %s251 = sshll.u32 %s238, 4
          %s252 = int_to_ptr.hbm [resolvable:$true] %s251
          %s253 = sshll.u32 %s230, 4
          %s254 = int_to_ptr.vmem [resolvable:$true] %s253
          %260 = sst [smem:[#allocation13]] 4096
          %s261 = scalar_lea.smem [#allocation13], 1
          %262 = sst [smem:[%s261]] 2048
          %s263 = scalar_lea.smem [#allocation13], 2
          %264 = sst [smem:[%s263]] 16
          %s265 = scalar_lea.smem [#allocation13], 3
          %266 = sst [smem:[%s265]] 128
          %s267 = scalar_lea.smem [#allocation13], 4
          %268 = sst [smem:[%s267]] 128
          %s269 = scalar_lea.smem [#allocation13], 5
          %270 = sst [smem:[%s269]] 8
          %272 = dma.general %s252, 8192, %s254, %s227, [#allocation12], [#allocation13], %s250, 0
        $region36: #{tpu_custom_call.1} parent=31 // pred_fallthru
          _
      $region32: #{tpu_custom_call.1} parent=5 // pred_fallthru
        _
      %p273 = scmp.le.s32.totalorder 1, %s18
      %p274 = scmp.lt.s32.totalorder %s18, 5
      %p275 = pnand %p273, %p274
      %p276 = pneg %p275
      // Predicated region
      $region37: #{tpu_custom_call.1} parent=5 // pred_check
        _
      $region38: #{tpu_custom_call.1} parent=5 // pred_check_branch
        %278 = sbr.rel (%p275) target = $region40
      $region39: #{tpu_custom_call.1} parent=5 // pred_region
        %s279 = ssub.s32 %s18, 1
        %s280 = sand.u32 %s45, 1
        %s281 = scalar_lea.sflag [#allocation6], %s280
        %s282 = sand.u32 %s45, 1
        %s283 = smul.addr %s282, 512
        %s284 = scalar_lea.vmem [#allocation5], %s283
        // Predicated region
        $region41: #{tpu_custom_call.1} parent=39 // pred_check
          %p285 = pneg %p58
        $region42: #{tpu_custom_call.1} parent=39 // pred_check_branch
          %287 = sbr.rel (%p285) target = $region44
        $region43: #{tpu_custom_call.1} parent=39 // pred_region
          %289 = dma.done %s281, 8192
        $region44: #{tpu_custom_call.1} parent=39 // pred_fallthru
          _
        // Predicated region
        $region45: #{tpu_custom_call.1} parent=39 // pred_check
          %p290 = pneg %p79
        $region46: #{tpu_custom_call.1} parent=39 // pred_check_branch
          %292 = sbr.rel (%p290) target = $region48
        $region47: #{tpu_custom_call.1} parent=39 // pred_region
          %294 = dma.done [#allocation9], 3072
        $region48: #{tpu_custom_call.1} parent=39 // pred_fallthru
          _
        // Predicated region
        $region49: #{tpu_custom_call.1} parent=39 // pred_check
          %p295 = pneg %p121
        $region50: #{tpu_custom_call.1} parent=39 // pred_check_branch
          %297 = sbr.rel (%p295) target = $region52
        $region51: #{tpu_custom_call.1} parent=39 // pred_region
          %299 = dma.done [#allocation9], 3072
        $region52: #{tpu_custom_call.1} parent=39 // pred_fallthru
          _
        %s300 = sand.u32 %s45, 1
        %s301 = scalar_lea.sflag [#allocation6], %s300
        %s302 = sand.u32 %s45, 1
        %s303 = smul.addr %s302, 512
        %s304 = scalar_lea.vmem [#allocation5], %s303
        %p305 = pneg %p58
        %p306 = pneg %p55
        %p307 = pneg %p79
        %p308 = pneg %p76
        %p309 = pneg %p100
        %p310 = pneg %p97
        %p311 = pneg %p121
        %p312 = pneg %p118
        %p313 = pneg %p142
        %p314 = pneg %p139
        %p315 = pneg %p170
        %p316 = pneg %p167
        %s317 = sand.u32 %s157, 1
        %s318 = scalar_lea.sflag [#allocation7], %s317
        %s319 = sand.u32 %s157, 1
        %s320 = smul.addr %s319, 512
        %s321 = scalar_lea.vmem [#allocation11], %s320
        %s322 = smul.u32 4, %s28
        %s323 = smul.u32 16, %s27
        %s324 = smul.u32 4, %s28
        %s325 = smul.u32 16, %s27
        %p326 = scmp.eq.s32.totalorder %s28, 0
        // Predicated region
        $region53: #{tpu_custom_call.1} parent=39 // pred_check
          %p327 = pneg %p326
        $region54: #{tpu_custom_call.1} parent=39 // pred_check_branch
          %329 = sbr.rel (%p327) target = $region56
        $region55: #{tpu_custom_call.1} parent=39 // pred_region
          %330 = vst [vmem:[#allocation2] sm:$0xff] 0.0
          %331 = vst [vmem:[#allocation2 + $0x8] sm:$0xff] 0.0
          %332 = vst [vmem:[#allocation2 + $0x10] sm:$0xff] 0.0
          %333 = vst [vmem:[#allocation2 + $0x18] sm:$0xff] 0.0
          %334 = vst [vmem:[#allocation2 + $0x20] sm:$0xff] 0.0
          %335 = vst [vmem:[#allocation2 + $0x28] sm:$0xff] 0.0
          %336 = vst [vmem:[#allocation2 + $0x30] sm:$0xff] 0.0
          %337 = vst [vmem:[#allocation2 + $0x38] sm:$0xff] 0.0
          %338 = vst [vmem:[#allocation2 + $0x40] sm:$0xff] 0.0
          %339 = vst [vmem:[#allocation2 + $0x48] sm:$0xff] 0.0
          %340 = vst [vmem:[#allocation2 + $0x50] sm:$0xff] 0.0
          %341 = vst [vmem:[#allocation2 + $0x58] sm:$0xff] 0.0
          %342 = vst [vmem:[#allocation2 + $0x60] sm:$0xff] 0.0
          %343 = vst [vmem:[#allocation2 + $0x68] sm:$0xff] 0.0
          %344 = vst [vmem:[#allocation2 + $0x70] sm:$0xff] 0.0
          %345 = vst [vmem:[#allocation2 + $0x78] sm:$0xff] 0.0
          %346 = vst [vmem:[#allocation3] sm:$0xff] 0.0
          %347 = vst [vmem:[#allocation3 + $0x8] sm:$0xff] 0.0
          %348 = vst [vmem:[#allocation3 + $0x10] sm:$0xff] 0.0
          %349 = vst [vmem:[#allocation3 + $0x18] sm:$0xff] 0.0
          %350 = vst [vmem:[#allocation3 + $0x20] sm:$0xff] 0.0
          %351 = vst [vmem:[#allocation3 + $0x28] sm:$0xff] 0.0
          %352 = vst [vmem:[#allocation3 + $0x30] sm:$0xff] 0.0
          %353 = vst [vmem:[#allocation3 + $0x38] sm:$0xff] 0.0
          %354 = vst [vmem:[#allocation3 + $0x40] sm:$0xff] 0.0
          %355 = vst [vmem:[#allocation3 + $0x48] sm:$0xff] 0.0
          %356 = vst [vmem:[#allocation3 + $0x50] sm:$0xff] 0.0
          %357 = vst [vmem:[#allocation3 + $0x58] sm:$0xff] 0.0
          %358 = vst [vmem:[#allocation3 + $0x60] sm:$0xff] 0.0
          %359 = vst [vmem:[#allocation3 + $0x68] sm:$0xff] 0.0
          %360 = vst [vmem:[#allocation3 + $0x70] sm:$0xff] 0.0
          %361 = vst [vmem:[#allocation3 + $0x78] sm:$0xff] 0.0
        $region56: #{tpu_custom_call.1} parent=39 // pred_fallthru
          _
        %v362 = vld [vmem:[#allocation8] sm:$0xf]
        %v363 = vld [vmem:[#allocation8 + $0x4] sm:$0xf]
        %v364 = vld [vmem:[#allocation8 + $0x8] sm:$0xf]
        %v365 = vld [vmem:[#allocation8 + $0xc] sm:$0xf]
        %v366 = vld [vmem:[#allocation8 + $0x10] sm:$0xf]
        %v367 = vld [vmem:[#allocation8 + $0x14] sm:$0xf]
        %v368 = vld [vmem:[#allocation8 + $0x18] sm:$0xf]
        %v369 = vld [vmem:[#allocation8 + $0x1c] sm:$0xf]
        %v370 = vld [vmem:[#allocation8 + $0x20] sm:$0xf]
        %v371 = vld [vmem:[#allocation8 + $0x24] sm:$0xf]
        %v372 = vld [vmem:[#allocation8 + $0x28] sm:$0xf]
        %v373 = vld [vmem:[#allocation8 + $0x2c] sm:$0xf]
        %v374 = vld [vmem:[#allocation8 + $0x30] sm:$0xf]
        %v375 = vld [vmem:[#allocation8 + $0x34] sm:$0xf]
        %v376 = vld [vmem:[#allocation8 + $0x38] sm:$0xf]
        %v377 = vld [vmem:[#allocation8 + $0x3c] sm:$0xf]
        %s378 = scalar_lea.vmem [#allocation8], 64
        %v379 = vld [vmem:[%s378] sm:$0xf]
        %v380 = vld [vmem:[%s378 + $0x4] sm:$0xf]
        %v381 = vld [vmem:[%s378 + $0x8] sm:$0xf]
        %v382 = vld [vmem:[%s378 + $0xc] sm:$0xf]
        %v383 = vld [vmem:[%s378 + $0x10] sm:$0xf]
        %v384 = vld [vmem:[%s378 + $0x14] sm:$0xf]
        %v385 = vld [vmem:[%s378 + $0x18] sm:$0xf]
        %v386 = vld [vmem:[%s378 + $0x1c] sm:$0xf]
        %v387 = vld [vmem:[%s378 + $0x20] sm:$0xf]
        %v388 = vld [vmem:[%s378 + $0x24] sm:$0xf]
        %v389 = vld [vmem:[%s378 + $0x28] sm:$0xf]
        %v390 = vld [vmem:[%s378 + $0x2c] sm:$0xf]
        %v391 = vld [vmem:[%s378 + $0x30] sm:$0xf]
        %v392 = vld [vmem:[%s378 + $0x34] sm:$0xf]
        %v393 = vld [vmem:[%s378 + $0x38] sm:$0xf]
        %v394 = vld [vmem:[%s378 + $0x3c] sm:$0xf]
        %s395 = scalar_lea.vmem [#allocation8], 128
        %v396 = vld [vmem:[%s395] sm:$0xf]
        %v397 = vld [vmem:[%s395 + $0x4] sm:$0xf]
        %v398 = vld [vmem:[%s395 + $0x8] sm:$0xf]
        %v399 = vld [vmem:[%s395 + $0xc] sm:$0xf]
        %v400 = vld [vmem:[%s395 + $0x10] sm:$0xf]
        %v401 = vld [vmem:[%s395 + $0x14] sm:$0xf]
        %v402 = vld [vmem:[%s395 + $0x18] sm:$0xf]
        %v403 = vld [vmem:[%s395 + $0x1c] sm:$0xf]
        %v404 = vld [vmem:[%s395 + $0x20] sm:$0xf]
        %v405 = vld [vmem:[%s395 + $0x24] sm:$0xf]
        %v406 = vld [vmem:[%s395 + $0x28] sm:$0xf]
        %v407 = vld [vmem:[%s395 + $0x2c] sm:$0xf]
        %v408 = vld [vmem:[%s395 + $0x30] sm:$0xf]
        %v409 = vld [vmem:[%s395 + $0x34] sm:$0xf]
        %v410 = vld [vmem:[%s395 + $0x38] sm:$0xf]
        %v411 = vld [vmem:[%s395 + $0x3c] sm:$0xf]
        %v412 = vld [vmem:[#allocation10] sm:$0xf]
        %v413 = vld [vmem:[#allocation10 + $0x4] sm:$0xf]
        %v414 = vld [vmem:[#allocation10 + $0x8] sm:$0xf]
        %v415 = vld [vmem:[#allocation10 + $0xc] sm:$0xf]
        %v416 = vld [vmem:[#allocation10 + $0x10] sm:$0xf]
        %v417 = vld [vmem:[#allocation10 + $0x14] sm:$0xf]
        %v418 = vld [vmem:[#allocation10 + $0x18] sm:$0xf]
        %v419 = vld [vmem:[#allocation10 + $0x1c] sm:$0xf]
        %v420 = vld [vmem:[#allocation10 + $0x20] sm:$0xf]
        %v421 = vld [vmem:[#allocation10 + $0x24] sm:$0xf]
        %v422 = vld [vmem:[#allocation10 + $0x28] sm:$0xf]
        %v423 = vld [vmem:[#allocation10 + $0x2c] sm:$0xf]
        %v424 = vld [vmem:[#allocation10 + $0x30] sm:$0xf]
        %v425 = vld [vmem:[#allocation10 + $0x34] sm:$0xf]
        %v426 = vld [vmem:[#allocation10 + $0x38] sm:$0xf]
        %v427 = vld [vmem:[#allocation10 + $0x3c] sm:$0xf]
        %s428 = scalar_lea.vmem [#allocation10], 64
        %v429 = vld [vmem:[%s428] sm:$0xf]
        %v430 = vld [vmem:[%s428 + $0x4] sm:$0xf]
        %v431 = vld [vmem:[%s428 + $0x8] sm:$0xf]
        %v432 = vld [vmem:[%s428 + $0xc] sm:$0xf]
        %v433 = vld [vmem:[%s428 + $0x10] sm:$0xf]
        %v434 = vld [vmem:[%s428 + $0x14] sm:$0xf]
        %v435 = vld [vmem:[%s428 + $0x18] sm:$0xf]
        %v436 = vld [vmem:[%s428 + $0x1c] sm:$0xf]
        %v437 = vld [vmem:[%s428 + $0x20] sm:$0xf]
        %v438 = vld [vmem:[%s428 + $0x24] sm:$0xf]
        %v439 = vld [vmem:[%s428 + $0x28] sm:$0xf]
        %v440 = vld [vmem:[%s428 + $0x2c] sm:$0xf]
        %v441 = vld [vmem:[%s428 + $0x30] sm:$0xf]
        %v442 = vld [vmem:[%s428 + $0x34] sm:$0xf]
        %v443 = vld [vmem:[%s428 + $0x38] sm:$0xf]
        %v444 = vld [vmem:[%s428 + $0x3c] sm:$0xf]
        %s445 = scalar_lea.vmem [#allocation10], 128
        %v446 = vld [vmem:[%s445] sm:$0xf]
        %v447 = vld [vmem:[%s445 + $0x4] sm:$0xf]
        %v448 = vld [vmem:[%s445 + $0x8] sm:$0xf]
        %v449 = vld [vmem:[%s445 + $0xc] sm:$0xf]
        %v450 = vld [vmem:[%s445 + $0x10] sm:$0xf]
        %v451 = vld [vmem:[%s445 + $0x14] sm:$0xf]
        %v452 = vld [vmem:[%s445 + $0x18] sm:$0xf]
        %v453 = vld [vmem:[%s445 + $0x1c] sm:$0xf]
        %v454 = vld [vmem:[%s445 + $0x20] sm:$0xf]
        %v455 = vld [vmem:[%s445 + $0x24] sm:$0xf]
        %v456 = vld [vmem:[%s445 + $0x28] sm:$0xf]
        %v457 = vld [vmem:[%s445 + $0x2c] sm:$0xf]
        %v458 = vld [vmem:[%s445 + $0x30] sm:$0xf]
        %v459 = vld [vmem:[%s445 + $0x34] sm:$0xf]
        %v460 = vld [vmem:[%s445 + $0x38] sm:$0xf]
        %v461 = vld [vmem:[%s445 + $0x3c] sm:$0xf]
        %v462 = vld [vmem:[%s2] sm:$0x1]
        %v463 = vld [vmem:[%s4] sm:$0x1]
        %v464 = vlaneseq
        %v465 = vshrl.u32 %v464, 7
        %v466 = vadd.s32 %v465, 8
        %v467 = vadd.s32 %v465, 16
        %v468 = vadd.s32 %v465, 24
        %v469 = vadd.s32 %v465, 32
        %v470 = vadd.s32 %v465, 40
        %v471 = vadd.s32 %v465, 48
        %v472 = vadd.s32 %v465, 56
        %v473 = vadd.s32 %v465, 64
        %v474 = vadd.s32 %v465, 72
        %v475 = vadd.s32 %v465, 80
        %v476 = vadd.s32 %v465, 88
        %v477 = vadd.s32 %v465, 96
        %v478 = vadd.s32 %v465, 104
        %v479 = vadd.s32 %v465, 112
        %v480 = vadd.s32 %v465, 120
        %v481 = vadd.s32 %v465, 128
        %v482 = vadd.s32 %v465, 136
        %v483 = vadd.s32 %v465, 144
        %v484 = vadd.s32 %v465, 152
        %v485 = vadd.s32 %v465, 160
        %v486 = vadd.s32 %v465, 168
        %v487 = vadd.s32 %v465, 176
        %v488 = vadd.s32 %v465, 184
        %v489 = vadd.s32 %v465, 192
        %v490 = vadd.s32 %v465, 200
        %v491 = vadd.s32 %v465, 208
        %v492 = vadd.s32 %v465, 216
        %v493 = vadd.s32 %v465, 224
        %v494 = vadd.s32 %v465, 232
        %v495 = vadd.s32 %v465, 240
        %v496 = vadd.s32 %v465, 248
        %v497 = vadd.s32 %v465, 256
        %v498 = vadd.s32 %v465, 264
        %v499 = vadd.s32 %v465, 272
        %v500 = vadd.s32 %v465, 280
        %v501 = vadd.s32 %v465, 288
        %v502 = vadd.s32 %v465, 296
        %v503 = vadd.s32 %v465, 304
        %v504 = vadd.s32 %v465, 312
        %v505 = vadd.s32 %v465, 320
        %v506 = vadd.s32 %v465, 328
        %v507 = vadd.s32 %v465, 336
        %v508 = vadd.s32 %v465, 344
        %v509 = vadd.s32 %v465, 352
        %v510 = vadd.s32 %v465, 360
        %v511 = vadd.s32 %v465, 368
        %v512 = vadd.s32 %v465, 376
        %v513 = vadd.s32 %v465, 384
        %v514 = vadd.s32 %v465, 392
        %v515 = vadd.s32 %v465, 400
        %v516 = vadd.s32 %v465, 408
        %v517 = vadd.s32 %v465, 416
        %v518 = vadd.s32 %v465, 424
        %v519 = vadd.s32 %v465, 432
        %v520 = vadd.s32 %v465, 440
        %v521 = vadd.s32 %v465, 448
        %v522 = vadd.s32 %v465, 456
        %v523 = vadd.s32 %v465, 464
        %v524 = vadd.s32 %v465, 472
        %v525 = vadd.s32 %v465, 480
        %v526 = vadd.s32 %v465, 488
        %v527 = vadd.s32 %v465, 496
        %v528 = vadd.s32 %v465, 504
        %vm529 = vcmp.lt.s32.totalorder %v465, 0
        %v530 = vsub.s32 0, %v465
        %v531 = vsel %vm529, %v530, %v465
        %v532 = vshrl.u32 %v531, 6
        %v533 = vand.u32 %v531, 63
        %v534 = vsub.s32 0, %v533
        %v535 = vsel %vm529, %v534, %v533
        %vm536 = vcmp.lt.s32.totalorder %v466, 0
        %v537 = vsub.s32 0, %v466
        %v538 = vsel %vm536, %v537, %v466
        %v539 = vshrl.u32 %v538, 6
        %v540 = vand.u32 %v538, 63
        %v541 = vsub.s32 0, %v540
        %v542 = vsel %vm536, %v541, %v540
        %vm543 = vcmp.lt.s32.totalorder %v467, 0
        %v544 = vsub.s32 0, %v467
        %v545 = vsel %vm543, %v544, %v467
        %v546 = vshrl.u32 %v545, 6
        %v547 = vand.u32 %v545, 63
        %v548 = vsub.s32 0, %v547
        %v549 = vsel %vm543, %v548, %v547
        %vm550 = vcmp.lt.s32.totalorder %v468, 0
        %v551 = vsub.s32 0, %v468
        %v552 = vsel %vm550, %v551, %v468
        %v553 = vshrl.u32 %v552, 6
        %v554 = vand.u32 %v552, 63
        %v555 = vsub.s32 0, %v554
        %v556 = vsel %vm550, %v555, %v554
        %vm557 = vcmp.lt.s32.totalorder %v469, 0
        %v558 = vsub.s32 0, %v469
        %v559 = vsel %vm557, %v558, %v469
        %v560 = vshrl.u32 %v559, 6
        %v561 = vand.u32 %v559, 63
        %v562 = vsub.s32 0, %v561
        %v563 = vsel %vm557, %v562, %v561
        %vm564 = vcmp.lt.s32.totalorder %v470, 0
        %v565 = vsub.s32 0, %v470
        %v566 = vsel %vm564, %v565, %v470
        %v567 = vshrl.u32 %v566, 6
        %v568 = vand.u32 %v566, 63
        %v569 = vsub.s32 0, %v568
        %v570 = vsel %vm564, %v569, %v568
        %vm571 = vcmp.lt.s32.totalorder %v471, 0
        %v572 = vsub.s32 0, %v471
        %v573 = vsel %vm571, %v572, %v471
        %v574 = vshrl.u32 %v573, 6
        %v575 = vand.u32 %v573, 63
        %v576 = vsub.s32 0, %v575
        %v577 = vsel %vm571, %v576, %v575
        %vm578 = vcmp.lt.s32.totalorder %v472, 0
        %v579 = vsub.s32 0, %v472
        %v580 = vsel %vm578, %v579, %v472
        %v581 = vshrl.u32 %v580, 6
        %v582 = vand.u32 %v580, 63
        %v583 = vsub.s32 0, %v582
        %v584 = vsel %vm578, %v583, %v582
        %vm585 = vcmp.lt.s32.totalorder %v473, 0
        %v586 = vsub.s32 0, %v473
        %v587 = vsel %vm585, %v586, %v473
        %v588 = vshrl.u32 %v587, 6
        %v589 = vand.u32 %v587, 63
        %v590 = vsub.s32 0, %v589
        %v591 = vsel %vm585, %v590, %v589
        %vm592 = vcmp.lt.s32.totalorder %v474, 0
        %v593 = vsub.s32 0, %v474
        %v594 = vsel %vm592, %v593, %v474
        %v595 = vshrl.u32 %v594, 6
        %v596 = vand.u32 %v594, 63
        %v597 = vsub.s32 0, %v596
        %v598 = vsel %vm592, %v597, %v596
        %vm599 = vcmp.lt.s32.totalorder %v475, 0
        %v600 = vsub.s32 0, %v475
        %v601 = vsel %vm599, %v600, %v475
        %v602 = vshrl.u32 %v601, 6
        %v603 = vand.u32 %v601, 63
        %v604 = vsub.s32 0, %v603
        %v605 = vsel %vm599, %v604, %v603
        %vm606 = vcmp.lt.s32.totalorder %v476, 0
        %v607 = vsub.s32 0, %v476
        %v608 = vsel %vm606, %v607, %v476
        %v609 = vshrl.u32 %v608, 6
        %v610 = vand.u32 %v608, 63
        %v611 = vsub.s32 0, %v610
        %v612 = vsel %vm606, %v611, %v610
        %vm613 = vcmp.lt.s32.totalorder %v477, 0
        %v614 = vsub.s32 0, %v477
        %v615 = vsel %vm613, %v614, %v477
        %v616 = vshrl.u32 %v615, 6
        %v617 = vand.u32 %v615, 63
        %v618 = vsub.s32 0, %v617
        %v619 = vsel %vm613, %v618, %v617
        %vm620 = vcmp.lt.s32.totalorder %v478, 0
        %v621 = vsub.s32 0, %v478
        %v622 = vsel %vm620, %v621, %v478
        %v623 = vshrl.u32 %v622, 6
        %v624 = vand.u32 %v622, 63
        %v625 = vsub.s32 0, %v624
        %v626 = vsel %vm620, %v625, %v624
        %vm627 = vcmp.lt.s32.totalorder %v479, 0
        %v628 = vsub.s32 0, %v479
        %v629 = vsel %vm627, %v628, %v479
        %v630 = vshrl.u32 %v629, 6
        %v631 = vand.u32 %v629, 63
        %v632 = vsub.s32 0, %v631
        %v633 = vsel %vm627, %v632, %v631
        %vm634 = vcmp.lt.s32.totalorder %v480, 0
        %v635 = vsub.s32 0, %v480
        %v636 = vsel %vm634, %v635, %v480
        %v637 = vshrl.u32 %v636, 6
        %v638 = vand.u32 %v636, 63
        %v639 = vsub.s32 0, %v638
        %v640 = vsel %vm634, %v639, %v638
        %vm641 = vcmp.lt.s32.totalorder %v481, 0
        %v642 = vsub.s32 0, %v481
        %v643 = vsel %vm641, %v642, %v481
        %v644 = vshrl.u32 %v643, 6
        %v645 = vand.u32 %v643, 63
        %v646 = vsub.s32 0, %v645
        %v647 = vsel %vm641, %v646, %v645
        %vm648 = vcmp.lt.s32.totalorder %v482, 0
        %v649 = vsub.s32 0, %v482
        %v650 = vsel %vm648, %v649, %v482
        %v651 = vshrl.u32 %v650, 6
        %v652 = vand.u32 %v650, 63
        %v653 = vsub.s32 0, %v652
        %v654 = vsel %vm648, %v653, %v652
        %vm655 = vcmp.lt.s32.totalorder %v483, 0
        %v656 = vsub.s32 0, %v483
        %v657 = vsel %vm655, %v656, %v483
        %v658 = vshrl.u32 %v657, 6
        %v659 = vand.u32 %v657, 63
        %v660 = vsub.s32 0, %v659
        %v661 = vsel %vm655, %v660, %v659
        %vm662 = vcmp.lt.s32.totalorder %v484, 0
        %v663 = vsub.s32 0, %v484
        %v664 = vsel %vm662, %v663, %v484
        %v665 = vshrl.u32 %v664, 6
        %v666 = vand.u32 %v664, 63
        %v667 = vsub.s32 0, %v666
        %v668 = vsel %vm662, %v667, %v666
        %vm669 = vcmp.lt.s32.totalorder %v485, 0
        %v670 = vsub.s32 0, %v485
        %v671 = vsel %vm669, %v670, %v485
        %v672 = vshrl.u32 %v671, 6
        %v673 = vand.u32 %v671, 63
        %v674 = vsub.s32 0, %v673
        %v675 = vsel %vm669, %v674, %v673
        %vm676 = vcmp.lt.s32.totalorder %v486, 0
        %v677 = vsub.s32 0, %v486
        %v678 = vsel %vm676, %v677, %v486
        %v679 = vshrl.u32 %v678, 6
        %v680 = vand.u32 %v678, 63
        %v681 = vsub.s32 0, %v680
        %v682 = vsel %vm676, %v681, %v680
        %vm683 = vcmp.lt.s32.totalorder %v487, 0
        %v684 = vsub.s32 0, %v487
        %v685 = vsel %vm683, %v684, %v487
        %v686 = vshrl.u32 %v685, 6
        %v687 = vand.u32 %v685, 63
        %v688 = vsub.s32 0, %v687
        %v689 = vsel %vm683, %v688, %v687
        %vm690 = vcmp.lt.s32.totalorder %v488, 0
        %v691 = vsub.s32 0, %v488
        %v692 = vsel %vm690, %v691, %v488
        %v693 = vshrl.u32 %v692, 6
        %v694 = vand.u32 %v692, 63
        %v695 = vsub.s32 0, %v694
        %v696 = vsel %vm690, %v695, %v694
        %vm697 = vcmp.lt.s32.totalorder %v489, 0
        %v698 = vsub.s32 0, %v489
        %v699 = vsel %vm697, %v698, %v489
        %v700 = vshrl.u32 %v699, 6
        %v701 = vand.u32 %v699, 63
        %v702 = vsub.s32 0, %v701
        %v703 = vsel %vm697, %v702, %v701
        %vm704 = vcmp.lt.s32.totalorder %v490, 0
        %v705 = vsub.s32 0, %v490
        %v706 = vsel %vm704, %v705, %v490
        %v707 = vshrl.u32 %v706, 6
        %v708 = vand.u32 %v706, 63
        %v709 = vsub.s32 0, %v708
        %v710 = vsel %vm704, %v709, %v708
        %vm711 = vcmp.lt.s32.totalorder %v491, 0
        %v712 = vsub.s32 0, %v491
        %v713 = vsel %vm711, %v712, %v491
        %v714 = vshrl.u32 %v713, 6
        %v715 = vand.u32 %v713, 63
        %v716 = vsub.s32 0, %v715
        %v717 = vsel %vm711, %v716, %v715
        %vm718 = vcmp.lt.s32.totalorder %v492, 0
        %v719 = vsub.s32 0, %v492
        %v720 = vsel %vm718, %v719, %v492
        %v721 = vshrl.u32 %v720, 6
        %v722 = vand.u32 %v720, 63
        %v723 = vsub.s32 0, %v722
        %v724 = vsel %vm718, %v723, %v722
        %vm725 = vcmp.lt.s32.totalorder %v493, 0
        %v726 = vsub.s32 0, %v493
        %v727 = vsel %vm725, %v726, %v493
        %v728 = vshrl.u32 %v727, 6
        %v729 = vand.u32 %v727, 63
        %v730 = vsub.s32 0, %v729
        %v731 = vsel %vm725, %v730, %v729
        %vm732 = vcmp.lt.s32.totalorder %v494, 0
        %v733 = vsub.s32 0, %v494
        %v734 = vsel %vm732, %v733, %v494
        %v735 = vshrl.u32 %v734, 6
        %v736 = vand.u32 %v734, 63
        %v737 = vsub.s32 0, %v736
        %v738 = vsel %vm732, %v737, %v736
        %vm739 = vcmp.lt.s32.totalorder %v495, 0
        %v740 = vsub.s32 0, %v495
        %v741 = vsel %vm739, %v740, %v495
        %v742 = vshrl.u32 %v741, 6
        %v743 = vand.u32 %v741, 63
        %v744 = vsub.s32 0, %v743
        %v745 = vsel %vm739, %v744, %v743
        %vm746 = vcmp.lt.s32.totalorder %v496, 0
        %v747 = vsub.s32 0, %v496
        %v748 = vsel %vm746, %v747, %v496
        %v749 = vshrl.u32 %v748, 6
        %v750 = vand.u32 %v748, 63
        %v751 = vsub.s32 0, %v750
        %v752 = vsel %vm746, %v751, %v750
        %vm753 = vcmp.lt.s32.totalorder %v497, 0
        %v754 = vsub.s32 0, %v497
        %v755 = vsel %vm753, %v754, %v497
        %v756 = vshrl.u32 %v755, 6
        %v757 = vand.u32 %v755, 63
        %v758 = vsub.s32 0, %v757
        %v759 = vsel %vm753, %v758, %v757
        %vm760 = vcmp.lt.s32.totalorder %v498, 0
        %v761 = vsub.s32 0, %v498
        %v762 = vsel %vm760, %v761, %v498
        %v763 = vshrl.u32 %v762, 6
        %v764 = vand.u32 %v762, 63
        %v765 = vsub.s32 0, %v764
        %v766 = vsel %vm760, %v765, %v764
        %vm767 = vcmp.lt.s32.totalorder %v499, 0
        %v768 = vsub.s32 0, %v499
        %v769 = vsel %vm767, %v768, %v499
        %v770 = vshrl.u32 %v769, 6
        %v771 = vand.u32 %v769, 63
        %v772 = vsub.s32 0, %v771
        %v773 = vsel %vm767, %v772, %v771
        %vm774 = vcmp.lt.s32.totalorder %v500, 0
        %v775 = vsub.s32 0, %v500
        %v776 = vsel %vm774, %v775, %v500
        %v777 = vshrl.u32 %v776, 6
        %v778 = vand.u32 %v776, 63
        %v779 = vsub.s32 0, %v778
        %v780 = vsel %vm774, %v779, %v778
        %vm781 = vcmp.lt.s32.totalorder %v501, 0
        %v782 = vsub.s32 0, %v501
        %v783 = vsel %vm781, %v782, %v501
        %v784 = vshrl.u32 %v783, 6
        %v785 = vand.u32 %v783, 63
        %v786 = vsub.s32 0, %v785
        %v787 = vsel %vm781, %v786, %v785
        %vm788 = vcmp.lt.s32.totalorder %v502, 0
        %v789 = vsub.s32 0, %v502
        %v790 = vsel %vm788, %v789, %v502
        %v791 = vshrl.u32 %v790, 6
        %v792 = vand.u32 %v790, 63
        %v793 = vsub.s32 0, %v792
        %v794 = vsel %vm788, %v793, %v792
        %vm795 = vcmp.lt.s32.totalorder %v503, 0
        %v796 = vsub.s32 0, %v503
        %v797 = vsel %vm795, %v796, %v503
        %v798 = vshrl.u32 %v797, 6
        %v799 = vand.u32 %v797, 63
        %v800 = vsub.s32 0, %v799
        %v801 = vsel %vm795, %v800, %v799
        %vm802 = vcmp.lt.s32.totalorder %v504, 0
        %v803 = vsub.s32 0, %v504
        %v804 = vsel %vm802, %v803, %v504
        %v805 = vshrl.u32 %v804, 6
        %v806 = vand.u32 %v804, 63
        %v807 = vsub.s32 0, %v806
        %v808 = vsel %vm802, %v807, %v806
        %vm809 = vcmp.lt.s32.totalorder %v505, 0
        %v810 = vsub.s32 0, %v505
        %v811 = vsel %vm809, %v810, %v505
        %v812 = vshrl.u32 %v811, 6
        %v813 = vand.u32 %v811, 63
        %v814 = vsub.s32 0, %v813
        %v815 = vsel %vm809, %v814, %v813
        %vm816 = vcmp.lt.s32.totalorder %v506, 0
        %v817 = vsub.s32 0, %v506
        %v818 = vsel %vm816, %v817, %v506
        %v819 = vshrl.u32 %v818, 6
        %v820 = vand.u32 %v818, 63
        %v821 = vsub.s32 0, %v820
        %v822 = vsel %vm816, %v821, %v820
        %vm823 = vcmp.lt.s32.totalorder %v507, 0
        %v824 = vsub.s32 0, %v507
        %v825 = vsel %vm823, %v824, %v507
        %v826 = vshrl.u32 %v825, 6
        %v827 = vand.u32 %v825, 63
        %v828 = vsub.s32 0, %v827
        %v829 = vsel %vm823, %v828, %v827
        %vm830 = vcmp.lt.s32.totalorder %v508, 0
        %v831 = vsub.s32 0, %v508
        %v832 = vsel %vm830, %v831, %v508
        %v833 = vshrl.u32 %v832, 6
        %v834 = vand.u32 %v832, 63
        %v835 = vsub.s32 0, %v834
        %v836 = vsel %vm830, %v835, %v834
        %vm837 = vcmp.lt.s32.totalorder %v509, 0
        %v838 = vsub.s32 0, %v509
        %v839 = vsel %vm837, %v838, %v509
        %v840 = vshrl.u32 %v839, 6
        %v841 = vand.u32 %v839, 63
        %v842 = vsub.s32 0, %v841
        %v843 = vsel %vm837, %v842, %v841
        %vm844 = vcmp.lt.s32.totalorder %v510, 0
        %v845 = vsub.s32 0, %v510
        %v846 = vsel %vm844, %v845, %v510
        %v847 = vshrl.u32 %v846, 6
        %v848 = vand.u32 %v846, 63
        %v849 = vsub.s32 0, %v848
        %v850 = vsel %vm844, %v849, %v848
        %vm851 = vcmp.lt.s32.totalorder %v511, 0
        %v852 = vsub.s32 0, %v511
        %v853 = vsel %vm851, %v852, %v511
        %v854 = vshrl.u32 %v853, 6
        %v855 = vand.u32 %v853, 63
        %v856 = vsub.s32 0, %v855
        %v857 = vsel %vm851, %v856, %v855
        %vm858 = vcmp.lt.s32.totalorder %v512, 0
        %v859 = vsub.s32 0, %v512
        %v860 = vsel %vm858, %v859, %v512
        %v861 = vshrl.u32 %v860, 6
        %v862 = vand.u32 %v860, 63
        %v863 = vsub.s32 0, %v862
        %v864 = vsel %vm858, %v863, %v862
        %vm865 = vcmp.lt.s32.totalorder %v513, 0
        %v866 = vsub.s32 0, %v513
        %v867 = vsel %vm865, %v866, %v513
        %v868 = vshrl.u32 %v867, 6
        %v869 = vand.u32 %v867, 63
        %v870 = vsub.s32 0, %v869
        %v871 = vsel %vm865, %v870, %v869
        %vm872 = vcmp.lt.s32.totalorder %v514, 0
        %v873 = vsub.s32 0, %v514
        %v874 = vsel %vm872, %v873, %v514
        %v875 = vshrl.u32 %v874, 6
        %v876 = vand.u32 %v874, 63
        %v877 = vsub.s32 0, %v876
        %v878 = vsel %vm872, %v877, %v876
        %vm879 = vcmp.lt.s32.totalorder %v515, 0
        %v880 = vsub.s32 0, %v515
        %v881 = vsel %vm879, %v880, %v515
        %v882 = vshrl.u32 %v881, 6
        %v883 = vand.u32 %v881, 63
        %v884 = vsub.s32 0, %v883
        %v885 = vsel %vm879, %v884, %v883
        %vm886 = vcmp.lt.s32.totalorder %v516, 0
        %v887 = vsub.s32 0, %v516
        %v888 = vsel %vm886, %v887, %v516
        %v889 = vshrl.u32 %v888, 6
        %v890 = vand.u32 %v888, 63
        %v891 = vsub.s32 0, %v890
        %v892 = vsel %vm886, %v891, %v890
        %vm893 = vcmp.lt.s32.totalorder %v517, 0
        %v894 = vsub.s32 0, %v517
        %v895 = vsel %vm893, %v894, %v517
        %v896 = vshrl.u32 %v895, 6
        %v897 = vand.u32 %v895, 63
        %v898 = vsub.s32 0, %v897
        %v899 = vsel %vm893, %v898, %v897
        %vm900 = vcmp.lt.s32.totalorder %v518, 0
        %v901 = vsub.s32 0, %v518
        %v902 = vsel %vm900, %v901, %v518
        %v903 = vshrl.u32 %v902, 6
        %v904 = vand.u32 %v902, 63
        %v905 = vsub.s32 0, %v904
        %v906 = vsel %vm900, %v905, %v904
        %vm907 = vcmp.lt.s32.totalorder %v519, 0
        %v908 = vsub.s32 0, %v519
        %v909 = vsel %vm907, %v908, %v519
        %v910 = vshrl.u32 %v909, 6
        %v911 = vand.u32 %v909, 63
        %v912 = vsub.s32 0, %v911
        %v913 = vsel %vm907, %v912, %v911
        %vm914 = vcmp.lt.s32.totalorder %v520, 0
        %v915 = vsub.s32 0, %v520
        %v916 = vsel %vm914, %v915, %v520
        %v917 = vshrl.u32 %v916, 6
        %v918 = vand.u32 %v916, 63
        %v919 = vsub.s32 0, %v918
        %v920 = vsel %vm914, %v919, %v918
        %vm921 = vcmp.lt.s32.totalorder %v521, 0
        %v922 = vsub.s32 0, %v521
        %v923 = vsel %vm921, %v922, %v521
        %v924 = vshrl.u32 %v923, 6
        %v925 = vand.u32 %v923, 63
        %v926 = vsub.s32 0, %v925
        %v927 = vsel %vm921, %v926, %v925
        %vm928 = vcmp.lt.s32.totalorder %v522, 0
        %v929 = vsub.s32 0, %v522
        %v930 = vsel %vm928, %v929, %v522
        %v931 = vshrl.u32 %v930, 6
        %v932 = vand.u32 %v930, 63
        %v933 = vsub.s32 0, %v932
        %v934 = vsel %vm928, %v933, %v932
        %vm935 = vcmp.lt.s32.totalorder %v523, 0
        %v936 = vsub.s32 0, %v523
        %v937 = vsel %vm935, %v936, %v523
        %v938 = vshrl.u32 %v937, 6
        %v939 = vand.u32 %v937, 63
        %v940 = vsub.s32 0, %v939
        %v941 = vsel %vm935, %v940, %v939
        %vm942 = vcmp.lt.s32.totalorder %v524, 0
        %v943 = vsub.s32 0, %v524
        %v944 = vsel %vm942, %v943, %v524
        %v945 = vshrl.u32 %v944, 6
        %v946 = vand.u32 %v944, 63
        %v947 = vsub.s32 0, %v946
        %v948 = vsel %vm942, %v947, %v946
        %vm949 = vcmp.lt.s32.totalorder %v525, 0
        %v950 = vsub.s32 0, %v525
        %v951 = vsel %vm949, %v950, %v525
        %v952 = vshrl.u32 %v951, 6
        %v953 = vand.u32 %v951, 63
        %v954 = vsub.s32 0, %v953
        %v955 = vsel %vm949, %v954, %v953
        %vm956 = vcmp.lt.s32.totalorder %v526, 0
        %v957 = vsub.s32 0, %v526
        %v958 = vsel %vm956, %v957, %v526
        %v959 = vshrl.u32 %v958, 6
        %v960 = vand.u32 %v958, 63
        %v961 = vsub.s32 0, %v960
        %v962 = vsel %vm956, %v961, %v960
        %vm963 = vcmp.lt.s32.totalorder %v527, 0
        %v964 = vsub.s32 0, %v527
        %v965 = vsel %vm963, %v964, %v527
        %v966 = vshrl.u32 %v965, 6
        %v967 = vand.u32 %v965, 63
        %v968 = vsub.s32 0, %v967
        %v969 = vsel %vm963, %v968, %v967
        %vm970 = vcmp.lt.s32.totalorder %v528, 0
        %v971 = vsub.s32 0, %v528
        %v972 = vsel %vm970, %v971, %v528
        %v973 = vshrl.u32 %v972, 6
        %v974 = vand.u32 %v972, 63
        %v975 = vsub.s32 0, %v974
        %v976 = vsel %vm970, %v975, %v974
        %vm977 = vcmp.ne.s32.totalorder %v535, 0
        %vm978 = vcmp.ne.s32.totalorder %v542, 0
        %vm979 = vcmp.ne.s32.totalorder %v549, 0
        %vm980 = vcmp.ne.s32.totalorder %v556, 0
        %vm981 = vcmp.ne.s32.totalorder %v563, 0
        %vm982 = vcmp.ne.s32.totalorder %v570, 0
        %vm983 = vcmp.ne.s32.totalorder %v577, 0
        %vm984 = vcmp.ne.s32.totalorder %v584, 0
        %vm985 = vcmp.ne.s32.totalorder %v591, 0
        %vm986 = vcmp.ne.s32.totalorder %v598, 0
        %vm987 = vcmp.ne.s32.totalorder %v605, 0
        %vm988 = vcmp.ne.s32.totalorder %v612, 0
        %vm989 = vcmp.ne.s32.totalorder %v619, 0
        %vm990 = vcmp.ne.s32.totalorder %v626, 0
        %vm991 = vcmp.ne.s32.totalorder %v633, 0
        %vm992 = vcmp.ne.s32.totalorder %v640, 0
        %vm993 = vcmp.ne.s32.totalorder %v647, 0
        %vm994 = vcmp.ne.s32.totalorder %v654, 0
        %vm995 = vcmp.ne.s32.totalorder %v661, 0
        %vm996 = vcmp.ne.s32.totalorder %v668, 0
        %vm997 = vcmp.ne.s32.totalorder %v675, 0
        %vm998 = vcmp.ne.s32.totalorder %v682, 0
        %vm999 = vcmp.ne.s32.totalorder %v689, 0
        %vm1000 = vcmp.ne.s32.totalorder %v696, 0
        %vm1001 = vcmp.ne.s32.totalorder %v703, 0
        %vm1002 = vcmp.ne.s32.totalorder %v710, 0
        %vm1003 = vcmp.ne.s32.totalorder %v717, 0
        %vm1004 = vcmp.ne.s32.totalorder %v724, 0
        %vm1005 = vcmp.ne.s32.totalorder %v731, 0
        %vm1006 = vcmp.ne.s32.totalorder %v738, 0
        %vm1007 = vcmp.ne.s32.totalorder %v745, 0
        %vm1008 = vcmp.ne.s32.totalorder %v752, 0
        %vm1009 = vcmp.ne.s32.totalorder %v759, 0
        %vm1010 = vcmp.ne.s32.totalorder %v766, 0
        %vm1011 = vcmp.ne.s32.totalorder %v773, 0
        %vm1012 = vcmp.ne.s32.totalorder %v780, 0
        %vm1013 = vcmp.ne.s32.totalorder %v787, 0
        %vm1014 = vcmp.ne.s32.totalorder %v794, 0
        %vm1015 = vcmp.ne.s32.totalorder %v801, 0
        %vm1016 = vcmp.ne.s32.totalorder %v808, 0
        %vm1017 = vcmp.ne.s32.totalorder %v815, 0
        %vm1018 = vcmp.ne.s32.totalorder %v822, 0
        %vm1019 = vcmp.ne.s32.totalorder %v829, 0
        %vm1020 = vcmp.ne.s32.totalorder %v836, 0
        %vm1021 = vcmp.ne.s32.totalorder %v843, 0
        %vm1022 = vcmp.ne.s32.totalorder %v850, 0
        %vm1023 = vcmp.ne.s32.totalorder %v857, 0
        %vm1024 = vcmp.ne.s32.totalorder %v864, 0
        %vm1025 = vcmp.ne.s32.totalorder %v871, 0
        %vm1026 = vcmp.ne.s32.totalorder %v878, 0
        %vm1027 = vcmp.ne.s32.totalorder %v885, 0
        %vm1028 = vcmp.ne.s32.totalorder %v892, 0
        %vm1029 = vcmp.ne.s32.totalorder %v899, 0
        %vm1030 = vcmp.ne.s32.totalorder %v906, 0
        %vm1031 = vcmp.ne.s32.totalorder %v913, 0
        %vm1032 = vcmp.ne.s32.totalorder %v920, 0
        %vm1033 = vcmp.ne.s32.totalorder %v927, 0
        %vm1034 = vcmp.ne.s32.totalorder %v934, 0
        %vm1035 = vcmp.ne.s32.totalorder %v941, 0
        %vm1036 = vcmp.ne.s32.totalorder %v948, 0
        %vm1037 = vcmp.ne.s32.totalorder %v955, 0
        %vm1038 = vcmp.ne.s32.totalorder %v962, 0
        %vm1039 = vcmp.ne.s32.totalorder %v969, 0
        %vm1040 = vcmp.ne.s32.totalorder %v976, 0
        %vm1041 = vcmp.lt.s32.totalorder %v535, 0
        %vm1042 = vcmp.lt.s32.totalorder %v542, 0
        %vm1043 = vcmp.lt.s32.totalorder %v549, 0
        %vm1044 = vcmp.lt.s32.totalorder %v556, 0
        %vm1045 = vcmp.lt.s32.totalorder %v563, 0
        %vm1046 = vcmp.lt.s32.totalorder %v570, 0
        %vm1047 = vcmp.lt.s32.totalorder %v577, 0
        %vm1048 = vcmp.lt.s32.totalorder %v584, 0
        %vm1049 = vcmp.lt.s32.totalorder %v591, 0
        %vm1050 = vcmp.lt.s32.totalorder %v598, 0
        %vm1051 = vcmp.lt.s32.totalorder %v605, 0
        %vm1052 = vcmp.lt.s32.totalorder %v612, 0
        %vm1053 = vcmp.lt.s32.totalorder %v619, 0
        %vm1054 = vcmp.lt.s32.totalorder %v626, 0
        %vm1055 = vcmp.lt.s32.totalorder %v633, 0
        %vm1056 = vcmp.lt.s32.totalorder %v640, 0
        %vm1057 = vcmp.lt.s32.totalorder %v647, 0
        %vm1058 = vcmp.lt.s32.totalorder %v654, 0
        %vm1059 = vcmp.lt.s32.totalorder %v661, 0
        %vm1060 = vcmp.lt.s32.totalorder %v668, 0
        %vm1061 = vcmp.lt.s32.totalorder %v675, 0
        %vm1062 = vcmp.lt.s32.totalorder %v682, 0
        %vm1063 = vcmp.lt.s32.totalorder %v689, 0
        %vm1064 = vcmp.lt.s32.totalorder %v696, 0
        %vm1065 = vcmp.lt.s32.totalorder %v703, 0
        %vm1066 = vcmp.lt.s32.totalorder %v710, 0
        %vm1067 = vcmp.lt.s32.totalorder %v717, 0
        %vm1068 = vcmp.lt.s32.totalorder %v724, 0
        %vm1069 = vcmp.lt.s32.totalorder %v731, 0
        %vm1070 = vcmp.lt.s32.totalorder %v738, 0
        %vm1071 = vcmp.lt.s32.totalorder %v745, 0
        %vm1072 = vcmp.lt.s32.totalorder %v752, 0
        %vm1073 = vcmp.lt.s32.totalorder %v759, 0
        %vm1074 = vcmp.lt.s32.totalorder %v766, 0
        %vm1075 = vcmp.lt.s32.totalorder %v773, 0
        %vm1076 = vcmp.lt.s32.totalorder %v780, 0
        %vm1077 = vcmp.lt.s32.totalorder %v787, 0
        %vm1078 = vcmp.lt.s32.totalorder %v794, 0
        %vm1079 = vcmp.lt.s32.totalorder %v801, 0
        %vm1080 = vcmp.lt.s32.totalorder %v808, 0
        %vm1081 = vcmp.lt.s32.totalorder %v815, 0
        %vm1082 = vcmp.lt.s32.totalorder %v822, 0
        %vm1083 = vcmp.lt.s32.totalorder %v829, 0
        %vm1084 = vcmp.lt.s32.totalorder %v836, 0
        %vm1085 = vcmp.lt.s32.totalorder %v843, 0
        %vm1086 = vcmp.lt.s32.totalorder %v850, 0
        %vm1087 = vcmp.lt.s32.totalorder %v857, 0
        %vm1088 = vcmp.lt.s32.totalorder %v864, 0
        %vm1089 = vcmp.lt.s32.totalorder %v871, 0
        %vm1090 = vcmp.lt.s32.totalorder %v878, 0
        %vm1091 = vcmp.lt.s32.totalorder %v885, 0
        %vm1092 = vcmp.lt.s32.totalorder %v892, 0
        %vm1093 = vcmp.lt.s32.totalorder %v899, 0
        %vm1094 = vcmp.lt.s32.totalorder %v906, 0
        %vm1095 = vcmp.lt.s32.totalorder %v913, 0
        %vm1096 = vcmp.lt.s32.totalorder %v920, 0
        %vm1097 = vcmp.lt.s32.totalorder %v927, 0
        %vm1098 = vcmp.lt.s32.totalorder %v934, 0
        %vm1099 = vcmp.lt.s32.totalorder %v941, 0
        %vm1100 = vcmp.lt.s32.totalorder %v948, 0
        %vm1101 = vcmp.lt.s32.totalorder %v955, 0
        %vm1102 = vcmp.lt.s32.totalorder %v962, 0
        %vm1103 = vcmp.lt.s32.totalorder %v969, 0
        %vm1104 = vcmp.lt.s32.totalorder %v976, 0
        %vm1105 = vmand %vm1041, %vm977
        %vm1106 = vmand %vm1042, %vm978
        %vm1107 = vmand %vm1043, %vm979
        %vm1108 = vmand %vm1044, %vm980
        %vm1109 = vmand %vm1045, %vm981
        %vm1110 = vmand %vm1046, %vm982
        %vm1111 = vmand %vm1047, %vm983
        %vm1112 = vmand %vm1048, %vm984
        %vm1113 = vmand %vm1049, %vm985
        %vm1114 = vmand %vm1050, %vm986
        %vm1115 = vmand %vm1051, %vm987
        %vm1116 = vmand %vm1052, %vm988
        %vm1117 = vmand %vm1053, %vm989
        %vm1118 = vmand %vm1054, %vm990
        %vm1119 = vmand %vm1055, %vm991
        %vm1120 = vmand %vm1056, %vm992
        %vm1121 = vmand %vm1057, %vm993
        %vm1122 = vmand %vm1058, %vm994
        %vm1123 = vmand %vm1059, %vm995
        %vm1124 = vmand %vm1060, %vm996
        %vm1125 = vmand %vm1061, %vm997
        %vm1126 = vmand %vm1062, %vm998
        %vm1127 = vmand %vm1063, %vm999
        %vm1128 = vmand %vm1064, %vm1000
        %vm1129 = vmand %vm1065, %vm1001
        %vm1130 = vmand %vm1066, %vm1002
        %vm1131 = vmand %vm1067, %vm1003
        %vm1132 = vmand %vm1068, %vm1004
        %vm1133 = vmand %vm1069, %vm1005
        %vm1134 = vmand %vm1070, %vm1006
        %vm1135 = vmand %vm1071, %vm1007
        %vm1136 = vmand %vm1072, %vm1008
        %vm1137 = vmand %vm1073, %vm1009
        %vm1138 = vmand %vm1074, %vm1010
        %vm1139 = vmand %vm1075, %vm1011
        %vm1140 = vmand %vm1076, %vm1012
        %vm1141 = vmand %vm1077, %vm1013
        %vm1142 = vmand %vm1078, %vm1014
        %vm1143 = vmand %vm1079, %vm1015
        %vm1144 = vmand %vm1080, %vm1016
        %vm1145 = vmand %vm1081, %vm1017
        %vm1146 = vmand %vm1082, %vm1018
        %vm1147 = vmand %vm1083, %vm1019
        %vm1148 = vmand %vm1084, %vm1020
        %vm1149 = vmand %vm1085, %vm1021
        %vm1150 = vmand %vm1086, %vm1022
        %vm1151 = vmand %vm1087, %vm1023
        %vm1152 = vmand %vm1088, %vm1024
        %vm1153 = vmand %vm1089, %vm1025
        %vm1154 = vmand %vm1090, %vm1026
        %vm1155 = vmand %vm1091, %vm1027
        %vm1156 = vmand %vm1092, %vm1028
        %vm1157 = vmand %vm1093, %vm1029
        %vm1158 = vmand %vm1094, %vm1030
        %vm1159 = vmand %vm1095, %vm1031
        %vm1160 = vmand %vm1096, %vm1032
        %vm1161 = vmand %vm1097, %vm1033
        %vm1162 = vmand %vm1098, %vm1034
        %vm1163 = vmand %vm1099, %vm1035
        %vm1164 = vmand %vm1100, %vm1036
        %vm1165 = vmand %vm1101, %vm1037
        %vm1166 = vmand %vm1102, %vm1038
        %vm1167 = vmand %vm1103, %vm1039
        %vm1168 = vmand %vm1104, %vm1040
        %v1169 = vadd.s32 %v535, 64
        %v1170 = vadd.s32 %v542, 64
        %v1171 = vadd.s32 %v549, 64
        %v1172 = vadd.s32 %v556, 64
        %v1173 = vadd.s32 %v563, 64
        %v1174 = vadd.s32 %v570, 64
        %v1175 = vadd.s32 %v577, 64
        %v1176 = vadd.s32 %v584, 64
        %v1177 = vadd.s32 %v591, 64
        %v1178 = vadd.s32 %v598, 64
        %v1179 = vadd.s32 %v605, 64
        %v1180 = vadd.s32 %v612, 64
        %v1181 = vadd.s32 %v619, 64
        %v1182 = vadd.s32 %v626, 64
        %v1183 = vadd.s32 %v633, 64
        %v1184 = vadd.s32 %v640, 64
        %v1185 = vadd.s32 %v647, 64
        %v1186 = vadd.s32 %v654, 64
        %v1187 = vadd.s32 %v661, 64
        %v1188 = vadd.s32 %v668, 64
        %v1189 = vadd.s32 %v675, 64
        %v1190 = vadd.s32 %v682, 64
        %v1191 = vadd.s32 %v689, 64
        %v1192 = vadd.s32 %v696, 64
        %v1193 = vadd.s32 %v703, 64
        %v1194 = vadd.s32 %v710, 64
        %v1195 = vadd.s32 %v717, 64
        %v1196 = vadd.s32 %v724, 64
        %v1197 = vadd.s32 %v731, 64
        %v1198 = vadd.s32 %v738, 64
        %v1199 = vadd.s32 %v745, 64
        %v1200 = vadd.s32 %v752, 64
        %v1201 = vadd.s32 %v759, 64
        %v1202 = vadd.s32 %v766, 64
        %v1203 = vadd.s32 %v773, 64
        %v1204 = vadd.s32 %v780, 64
        %v1205 = vadd.s32 %v787, 64
        %v1206 = vadd.s32 %v794, 64
        %v1207 = vadd.s32 %v801, 64
        %v1208 = vadd.s32 %v808, 64
        %v1209 = vadd.s32 %v815, 64
        %v1210 = vadd.s32 %v822, 64
        %v1211 = vadd.s32 %v829, 64
        %v1212 = vadd.s32 %v836, 64
        %v1213 = vadd.s32 %v843, 64
        %v1214 = vadd.s32 %v850, 64
        %v1215 = vadd.s32 %v857, 64
        %v1216 = vadd.s32 %v864, 64
        %v1217 = vadd.s32 %v871, 64
        %v1218 = vadd.s32 %v878, 64
        %v1219 = vadd.s32 %v885, 64
        %v1220 = vadd.s32 %v892, 64
        %v1221 = vadd.s32 %v899, 64
        %v1222 = vadd.s32 %v906, 64
        %v1223 = vadd.s32 %v913, 64
        %v1224 = vadd.s32 %v920, 64
        %v1225 = vadd.s32 %v927, 64
        %v1226 = vadd.s32 %v934, 64
        %v1227 = vadd.s32 %v941, 64
        %v1228 = vadd.s32 %v948, 64
        %v1229 = vadd.s32 %v955, 64
        %v1230 = vadd.s32 %v962, 64
        %v1231 = vadd.s32 %v969, 64
        %v1232 = vadd.s32 %v976, 64
        %v1233 = vsel %vm1105, %v1169, %v535
        %v1234 = vsel %vm1106, %v1170, %v542
        %v1235 = vsel %vm1107, %v1171, %v549
        %v1236 = vsel %vm1108, %v1172, %v556
        %v1237 = vsel %vm1109, %v1173, %v563
        %v1238 = vsel %vm1110, %v1174, %v570
        %v1239 = vsel %vm1111, %v1175, %v577
        %v1240 = vsel %vm1112, %v1176, %v584
        %v1241 = vsel %vm1113, %v1177, %v591
        %v1242 = vsel %vm1114, %v1178, %v598
        %v1243 = vsel %vm1115, %v1179, %v605
        %v1244 = vsel %vm1116, %v1180, %v612
        %v1245 = vsel %vm1117, %v1181, %v619
        %v1246 = vsel %vm1118, %v1182, %v626
        %v1247 = vsel %vm1119, %v1183, %v633
        %v1248 = vsel %vm1120, %v1184, %v640
        %v1249 = vsel %vm1121, %v1185, %v647
        %v1250 = vsel %vm1122, %v1186, %v654
        %v1251 = vsel %vm1123, %v1187, %v661
        %v1252 = vsel %vm1124, %v1188, %v668
        %v1253 = vsel %vm1125, %v1189, %v675
        %v1254 = vsel %vm1126, %v1190, %v682
        %v1255 = vsel %vm1127, %v1191, %v689
        %v1256 = vsel %vm1128, %v1192, %v696
        %v1257 = vsel %vm1129, %v1193, %v703
        %v1258 = vsel %vm1130, %v1194, %v710
        %v1259 = vsel %vm1131, %v1195, %v717
        %v1260 = vsel %vm1132, %v1196, %v724
        %v1261 = vsel %vm1133, %v1197, %v731
        %v1262 = vsel %vm1134, %v1198, %v738
        %v1263 = vsel %vm1135, %v1199, %v745
        %v1264 = vsel %vm1136, %v1200, %v752
        %v1265 = vsel %vm1137, %v1201, %v759
        %v1266 = vsel %vm1138, %v1202, %v766
        %v1267 = vsel %vm1139, %v1203, %v773
        %v1268 = vsel %vm1140, %v1204, %v780
        %v1269 = vsel %vm1141, %v1205, %v787
        %v1270 = vsel %vm1142, %v1206, %v794
        %v1271 = vsel %vm1143, %v1207, %v801
        %v1272 = vsel %vm1144, %v1208, %v808
        %v1273 = vsel %vm1145, %v1209, %v815
        %v1274 = vsel %vm1146, %v1210, %v822
        %v1275 = vsel %vm1147, %v1211, %v829
        %v1276 = vsel %vm1148, %v1212, %v836
        %v1277 = vsel %vm1149, %v1213, %v843
        %v1278 = vsel %vm1150, %v1214, %v850
        %v1279 = vsel %vm1151, %v1215, %v857
        %v1280 = vsel %vm1152, %v1216, %v864
        %v1281 = vsel %vm1153, %v1217, %v871
        %v1282 = vsel %vm1154, %v1218, %v878
        %v1283 = vsel %vm1155, %v1219, %v885
        %v1284 = vsel %vm1156, %v1220, %v892
        %v1285 = vsel %vm1157, %v1221, %v899
        %v1286 = vsel %vm1158, %v1222, %v906
        %v1287 = vsel %vm1159, %v1223, %v913
        %v1288 = vsel %vm1160, %v1224, %v920
        %v1289 = vsel %vm1161, %v1225, %v927
        %v1290 = vsel %vm1162, %v1226, %v934
        %v1291 = vsel %vm1163, %v1227, %v941
        %v1292 = vsel %vm1164, %v1228, %v948
        %v1293 = vsel %vm1165, %v1229, %v955
        %v1294 = vsel %vm1166, %v1230, %v962
        %v1295 = vsel %vm1167, %v1231, %v969
        %v1296 = vsel %vm1168, %v1232, %v976
        %v1297 = vld [vmem:[%s284] sm:$0xff]
        %v1298 = vld [vmem:[%s284 + $0x8] sm:$0xff]
        %v1299 = vld [vmem:[%s284 + $0x10] sm:$0xff]
        %v1300 = vld [vmem:[%s284 + $0x18] sm:$0xff]
        %v1301 = vld [vmem:[%s284 + $0x20] sm:$0xff]
        %v1302 = vld [vmem:[%s284 + $0x28] sm:$0xff]
        %v1303 = vld [vmem:[%s284 + $0x30] sm:$0xff]
        %v1304 = vld [vmem:[%s284 + $0x38] sm:$0xff]
        %v1305 = vld [vmem:[%s284 + $0x40] sm:$0xff]
        %v1306 = vld [vmem:[%s284 + $0x48] sm:$0xff]
        %v1307 = vld [vmem:[%s284 + $0x50] sm:$0xff]
        %v1308 = vld [vmem:[%s284 + $0x58] sm:$0xff]
        %v1309 = vld [vmem:[%s284 + $0x60] sm:$0xff]
        %v1310 = vld [vmem:[%s284 + $0x68] sm:$0xff]
        %v1311 = vld [vmem:[%s284 + $0x70] sm:$0xff]
        %v1312 = vld [vmem:[%s284 + $0x78] sm:$0xff]
        %v1313 = vld [vmem:[%s284 + $0x80] sm:$0xff]
        %v1314 = vld [vmem:[%s284 + $0x88] sm:$0xff]
        %v1315 = vld [vmem:[%s284 + $0x90] sm:$0xff]
        %v1316 = vld [vmem:[%s284 + $0x98] sm:$0xff]
        %v1317 = vld [vmem:[%s284 + $0xa0] sm:$0xff]
        %v1318 = vld [vmem:[%s284 + $0xa8] sm:$0xff]
        %v1319 = vld [vmem:[%s284 + $0xb0] sm:$0xff]
        %v1320 = vld [vmem:[%s284 + $0xb8] sm:$0xff]
        %v1321 = vld [vmem:[%s284 + $0xc0] sm:$0xff]
        %v1322 = vld [vmem:[%s284 + $0xc8] sm:$0xff]
        %v1323 = vld [vmem:[%s284 + $0xd0] sm:$0xff]
        %v1324 = vld [vmem:[%s284 + $0xd8] sm:$0xff]
        %v1325 = vld [vmem:[%s284 + $0xe0] sm:$0xff]
        %v1326 = vld [vmem:[%s284 + $0xe8] sm:$0xff]
        %v1327 = vld [vmem:[%s284 + $0xf0] sm:$0xff]
        %v1328 = vld [vmem:[%s284 + $0xf8] sm:$0xff]
        %v1329 = vld [vmem:[%s284 + $0x100] sm:$0xff]
        %v1330 = vld [vmem:[%s284 + $0x108] sm:$0xff]
        %v1331 = vld [vmem:[%s284 + $0x110] sm:$0xff]
        %v1332 = vld [vmem:[%s284 + $0x118] sm:$0xff]
        %v1333 = vld [vmem:[%s284 + $0x120] sm:$0xff]
        %v1334 = vld [vmem:[%s284 + $0x128] sm:$0xff]
        %v1335 = vld [vmem:[%s284 + $0x130] sm:$0xff]
        %v1336 = vld [vmem:[%s284 + $0x138] sm:$0xff]
        %v1337 = vld [vmem:[%s284 + $0x140] sm:$0xff]
        %v1338 = vld [vmem:[%s284 + $0x148] sm:$0xff]
        %v1339 = vld [vmem:[%s284 + $0x150] sm:$0xff]
        %v1340 = vld [vmem:[%s284 + $0x158] sm:$0xff]
        %v1341 = vld [vmem:[%s284 + $0x160] sm:$0xff]
        %v1342 = vld [vmem:[%s284 + $0x168] sm:$0xff]
        %v1343 = vld [vmem:[%s284 + $0x170] sm:$0xff]
        %v1344 = vld [vmem:[%s284 + $0x178] sm:$0xff]
        %v1345 = vld [vmem:[%s284 + $0x180] sm:$0xff]
        %v1346 = vld [vmem:[%s284 + $0x188] sm:$0xff]
        %v1347 = vld [vmem:[%s284 + $0x190] sm:$0xff]
        %v1348 = vld [vmem:[%s284 + $0x198] sm:$0xff]
        %v1349 = vld [vmem:[%s284 + $0x1a0] sm:$0xff]
        %v1350 = vld [vmem:[%s284 + $0x1a8] sm:$0xff]
        %v1351 = vld [vmem:[%s284 + $0x1b0] sm:$0xff]
        %v1352 = vld [vmem:[%s284 + $0x1b8] sm:$0xff]
        %v1353 = vld [vmem:[%s284 + $0x1c0] sm:$0xff]
        %v1354 = vld [vmem:[%s284 + $0x1c8] sm:$0xff]
        %v1355 = vld [vmem:[%s284 + $0x1d0] sm:$0xff]
        %v1356 = vld [vmem:[%s284 + $0x1d8] sm:$0xff]
        %v1357 = vld [vmem:[%s284 + $0x1e0] sm:$0xff]
        %v1358 = vld [vmem:[%s284 + $0x1e8] sm:$0xff]
        %v1359 = vld [vmem:[%s284 + $0x1f0] sm:$0xff]
        %v1360 = vld [vmem:[%s284 + $0x1f8] sm:$0xff]
        %vm1361 = vcmp.eq.s32.totalorder %v1233, 0
        %vm1362 = vcmp.eq.s32.totalorder %v1234, 0
        %vm1363 = vcmp.eq.s32.totalorder %v1235, 0
        %vm1364 = vcmp.eq.s32.totalorder %v1236, 0
        %vm1365 = vcmp.eq.s32.totalorder %v1237, 0
        %vm1366 = vcmp.eq.s32.totalorder %v1238, 0
        %vm1367 = vcmp.eq.s32.totalorder %v1239, 0
        %vm1368 = vcmp.eq.s32.totalorder %v1240, 0
        %vm1369 = vcmp.eq.s32.totalorder %v1241, 0
        %vm1370 = vcmp.eq.s32.totalorder %v1242, 0
        %vm1371 = vcmp.eq.s32.totalorder %v1243, 0
        %vm1372 = vcmp.eq.s32.totalorder %v1244, 0
        %vm1373 = vcmp.eq.s32.totalorder %v1245, 0
        %vm1374 = vcmp.eq.s32.totalorder %v1246, 0
        %vm1375 = vcmp.eq.s32.totalorder %v1247, 0
        %vm1376 = vcmp.eq.s32.totalorder %v1248, 0
        %vm1377 = vcmp.eq.s32.totalorder %v1249, 0
        %vm1378 = vcmp.eq.s32.totalorder %v1250, 0
        %vm1379 = vcmp.eq.s32.totalorder %v1251, 0
        %vm1380 = vcmp.eq.s32.totalorder %v1252, 0
        %vm1381 = vcmp.eq.s32.totalorder %v1253, 0
        %vm1382 = vcmp.eq.s32.totalorder %v1254, 0
        %vm1383 = vcmp.eq.s32.totalorder %v1255, 0
        %vm1384 = vcmp.eq.s32.totalorder %v1256, 0
        %vm1385 = vcmp.eq.s32.totalorder %v1257, 0
        %vm1386 = vcmp.eq.s32.totalorder %v1258, 0
        %vm1387 = vcmp.eq.s32.totalorder %v1259, 0
        %vm1388 = vcmp.eq.s32.totalorder %v1260, 0
        %vm1389 = vcmp.eq.s32.totalorder %v1261, 0
        %vm1390 = vcmp.eq.s32.totalorder %v1262, 0
        %vm1391 = vcmp.eq.s32.totalorder %v1263, 0
        %vm1392 = vcmp.eq.s32.totalorder %v1264, 0
        %vm1393 = vcmp.eq.s32.totalorder %v1265, 0
        %vm1394 = vcmp.eq.s32.totalorder %v1266, 0
        %vm1395 = vcmp.eq.s32.totalorder %v1267, 0
        %vm1396 = vcmp.eq.s32.totalorder %v1268, 0
        %vm1397 = vcmp.eq.s32.totalorder %v1269, 0
        %vm1398 = vcmp.eq.s32.totalorder %v1270, 0
        %vm1399 = vcmp.eq.s32.totalorder %v1271, 0
        %vm1400 = vcmp.eq.s32.totalorder %v1272, 0
        %vm1401 = vcmp.eq.s32.totalorder %v1273, 0
        %vm1402 = vcmp.eq.s32.totalorder %v1274, 0
        %vm1403 = vcmp.eq.s32.totalorder %v1275, 0
        %vm1404 = vcmp.eq.s32.totalorder %v1276, 0
        %vm1405 = vcmp.eq.s32.totalorder %v1277, 0
        %vm1406 = vcmp.eq.s32.totalorder %v1278, 0
        %vm1407 = vcmp.eq.s32.totalorder %v1279, 0
        %vm1408 = vcmp.eq.s32.totalorder %v1280, 0
        %vm1409 = vcmp.eq.s32.totalorder %v1281, 0
        %vm1410 = vcmp.eq.s32.totalorder %v1282, 0
        %vm1411 = vcmp.eq.s32.totalorder %v1283, 0
        %vm1412 = vcmp.eq.s32.totalorder %v1284, 0
        %vm1413 = vcmp.eq.s32.totalorder %v1285, 0
        %vm1414 = vcmp.eq.s32.totalorder %v1286, 0
        %vm1415 = vcmp.eq.s32.totalorder %v1287, 0
        %vm1416 = vcmp.eq.s32.totalorder %v1288, 0
        %vm1417 = vcmp.eq.s32.totalorder %v1289, 0
        %vm1418 = vcmp.eq.s32.totalorder %v1290, 0
        %vm1419 = vcmp.eq.s32.totalorder %v1291, 0
        %vm1420 = vcmp.eq.s32.totalorder %v1292, 0
        %vm1421 = vcmp.eq.s32.totalorder %v1293, 0
        %vm1422 = vcmp.eq.s32.totalorder %v1294, 0
        %vm1423 = vcmp.eq.s32.totalorder %v1295, 0
        %vm1424 = vcmp.eq.s32.totalorder %v1296, 0
        %vm1425 = vcmp.eq.s32.totalorder %v1233, 63
        %vm1426 = vcmp.eq.s32.totalorder %v1234, 63
        %vm1427 = vcmp.eq.s32.totalorder %v1235, 63
        %vm1428 = vcmp.eq.s32.totalorder %v1236, 63
        %vm1429 = vcmp.eq.s32.totalorder %v1237, 63
        %vm1430 = vcmp.eq.s32.totalorder %v1238, 63
        %vm1431 = vcmp.eq.s32.totalorder %v1239, 63
        %vm1432 = vcmp.eq.s32.totalorder %v1240, 63
        %vm1433 = vcmp.eq.s32.totalorder %v1241, 63
        %vm1434 = vcmp.eq.s32.totalorder %v1242, 63
        %vm1435 = vcmp.eq.s32.totalorder %v1243, 63
        %vm1436 = vcmp.eq.s32.totalorder %v1244, 63
        %vm1437 = vcmp.eq.s32.totalorder %v1245, 63
        %vm1438 = vcmp.eq.s32.totalorder %v1246, 63
        %vm1439 = vcmp.eq.s32.totalorder %v1247, 63
        %vm1440 = vcmp.eq.s32.totalorder %v1248, 63
        %vm1441 = vcmp.eq.s32.totalorder %v1249, 63
        %vm1442 = vcmp.eq.s32.totalorder %v1250, 63
        %vm1443 = vcmp.eq.s32.totalorder %v1251, 63
        %vm1444 = vcmp.eq.s32.totalorder %v1252, 63
        %vm1445 = vcmp.eq.s32.totalorder %v1253, 63
        %vm1446 = vcmp.eq.s32.totalorder %v1254, 63
        %vm1447 = vcmp.eq.s32.totalorder %v1255, 63
        %vm1448 = vcmp.eq.s32.totalorder %v1256, 63
        %vm1449 = vcmp.eq.s32.totalorder %v1257, 63
        %vm1450 = vcmp.eq.s32.totalorder %v1258, 63
        %vm1451 = vcmp.eq.s32.totalorder %v1259, 63
        %vm1452 = vcmp.eq.s32.totalorder %v1260, 63
        %vm1453 = vcmp.eq.s32.totalorder %v1261, 63
        %vm1454 = vcmp.eq.s32.totalorder %v1262, 63
        %vm1455 = vcmp.eq.s32.totalorder %v1263, 63
        %vm1456 = vcmp.eq.s32.totalorder %v1264, 63
        %vm1457 = vcmp.eq.s32.totalorder %v1265, 63
        %vm1458 = vcmp.eq.s32.totalorder %v1266, 63
        %vm1459 = vcmp.eq.s32.totalorder %v1267, 63
        %vm1460 = vcmp.eq.s32.totalorder %v1268, 63
        %vm1461 = vcmp.eq.s32.totalorder %v1269, 63
        %vm1462 = vcmp.eq.s32.totalorder %v1270, 63
        %vm1463 = vcmp.eq.s32.totalorder %v1271, 63
        %vm1464 = vcmp.eq.s32.totalorder %v1272, 63
        %vm1465 = vcmp.eq.s32.totalorder %v1273, 63
        %vm1466 = vcmp.eq.s32.totalorder %v1274, 63
        %vm1467 = vcmp.eq.s32.totalorder %v1275, 63
        %vm1468 = vcmp.eq.s32.totalorder %v1276, 63
        %vm1469 = vcmp.eq.s32.totalorder %v1277, 63
        %vm1470 = vcmp.eq.s32.totalorder %v1278, 63
        %vm1471 = vcmp.eq.s32.totalorder %v1279, 63
        %vm1472 = vcmp.eq.s32.totalorder %v1280, 63
        %vm1473 = vcmp.eq.s32.totalorder %v1281, 63
        %vm1474 = vcmp.eq.s32.totalorder %v1282, 63
        %vm1475 = vcmp.eq.s32.totalorder %v1283, 63
        %vm1476 = vcmp.eq.s32.totalorder %v1284, 63
        %vm1477 = vcmp.eq.s32.totalorder %v1285, 63
        %vm1478 = vcmp.eq.s32.totalorder %v1286, 63
        %vm1479 = vcmp.eq.s32.totalorder %v1287, 63
        %vm1480 = vcmp.eq.s32.totalorder %v1288, 63
        %vm1481 = vcmp.eq.s32.totalorder %v1289, 63
        %vm1482 = vcmp.eq.s32.totalorder %v1290, 63
        %vm1483 = vcmp.eq.s32.totalorder %v1291, 63
        %vm1484 = vcmp.eq.s32.totalorder %v1292, 63
        %vm1485 = vcmp.eq.s32.totalorder %v1293, 63
        %vm1486 = vcmp.eq.s32.totalorder %v1294, 63
        %vm1487 = vcmp.eq.s32.totalorder %v1295, 63
        %vm1488 = vcmp.eq.s32.totalorder %v1296, 63
        %v1489 = vrot.slane %v1297, 7
        %v1490 = vrot.slane %v1298, 7
        %v1491 = vrot.slane %v1299, 7
        %v1492 = vrot.slane %v1300, 7
        %v1493 = vrot.slane %v1301, 7
        %v1494 = vrot.slane %v1302, 7
        %v1495 = vrot.slane %v1303, 7
        %v1496 = vrot.slane %v1304, 7
        %v1497 = vrot.slane %v1305, 7
        %v1498 = vrot.slane %v1306, 7
        %v1499 = vrot.slane %v1307, 7
        %v1500 = vrot.slane %v1308, 7
        %v1501 = vrot.slane %v1309, 7
        %v1502 = vrot.slane %v1310, 7
        %v1503 = vrot.slane %v1311, 7
        %v1504 = vrot.slane %v1312, 7
        %v1505 = vrot.slane %v1313, 7
        %v1506 = vrot.slane %v1314, 7
        %v1507 = vrot.slane %v1315, 7
        %v1508 = vrot.slane %v1316, 7
        %v1509 = vrot.slane %v1317, 7
        %v1510 = vrot.slane %v1318, 7
        %v1511 = vrot.slane %v1319, 7
        %v1512 = vrot.slane %v1320, 7
        %v1513 = vrot.slane %v1321, 7
        %v1514 = vrot.slane %v1322, 7
        %v1515 = vrot.slane %v1323, 7
        %v1516 = vrot.slane %v1324, 7
        %v1517 = vrot.slane %v1325, 7
        %v1518 = vrot.slane %v1326, 7
        %v1519 = vrot.slane %v1327, 7
        %v1520 = vrot.slane %v1328, 7
        %v1521 = vrot.slane %v1329, 7
        %v1522 = vrot.slane %v1330, 7
        %v1523 = vrot.slane %v1331, 7
        %v1524 = vrot.slane %v1332, 7
        %v1525 = vrot.slane %v1333, 7
        %v1526 = vrot.slane %v1334, 7
        %v1527 = vrot.slane %v1335, 7
        %v1528 = vrot.slane %v1336, 7
        %v1529 = vrot.slane %v1337, 7
        %v1530 = vrot.slane %v1338, 7
        %v1531 = vrot.slane %v1339, 7
        %v1532 = vrot.slane %v1340, 7
        %v1533 = vrot.slane %v1341, 7
        %v1534 = vrot.slane %v1342, 7
        %v1535 = vrot.slane %v1343, 7
        %v1536 = vrot.slane %v1344, 7
        %v1537 = vrot.slane %v1345, 7
        %v1538 = vrot.slane %v1346, 7
        %v1539 = vrot.slane %v1347, 7
        %v1540 = vrot.slane %v1348, 7
        %v1541 = vrot.slane %v1349, 7
        %v1542 = vrot.slane %v1350, 7
        %v1543 = vrot.slane %v1351, 7
        %v1544 = vrot.slane %v1352, 7
        %v1545 = vrot.slane %v1353, 7
        %v1546 = vrot.slane %v1354, 7
        %v1547 = vrot.slane %v1355, 7
        %v1548 = vrot.slane %v1356, 7
        %v1549 = vrot.slane %v1357, 7
        %v1550 = vrot.slane %v1358, 7
        %v1551 = vrot.slane %v1359, 7
        %v1552 = vrot.slane %v1360, 7
        %vm1553 = vcmp.lt.s32.totalorder %v465, 1
        %v1554 = vsel %vm1553, %v1551, %v1552
        %v1555 = vsel %vm1553, %v1550, %v1551
        %v1556 = vsel %vm1553, %v1549, %v1550
        %v1557 = vsel %vm1553, %v1548, %v1549
        %v1558 = vsel %vm1553, %v1547, %v1548
        %v1559 = vsel %vm1553, %v1546, %v1547
        %v1560 = vsel %vm1553, %v1545, %v1546
        %v1561 = vsel %vm1553, %v1544, %v1545
        %v1562 = vsel %vm1553, %v1543, %v1544
        %v1563 = vsel %vm1553, %v1542, %v1543
        %v1564 = vsel %vm1553, %v1541, %v1542
        %v1565 = vsel %vm1553, %v1540, %v1541
        %v1566 = vsel %vm1553, %v1539, %v1540
        %v1567 = vsel %vm1553, %v1538, %v1539
        %v1568 = vsel %vm1553, %v1537, %v1538
        %v1569 = vsel %vm1553, %v1536, %v1537
        %v1570 = vsel %vm1553, %v1535, %v1536
        %v1571 = vsel %vm1553, %v1534, %v1535
        %v1572 = vsel %vm1553, %v1533, %v1534
        %v1573 = vsel %vm1553, %v1532, %v1533
        %v1574 = vsel %vm1553, %v1531, %v1532
        %v1575 = vsel %vm1553, %v1530, %v1531
        %v1576 = vsel %vm1553, %v1529, %v1530
        %v1577 = vsel %vm1553, %v1528, %v1529
        %v1578 = vsel %vm1553, %v1527, %v1528
        %v1579 = vsel %vm1553, %v1526, %v1527
        %v1580 = vsel %vm1553, %v1525, %v1526
        %v1581 = vsel %vm1553, %v1524, %v1525
        %v1582 = vsel %vm1553, %v1523, %v1524
        %v1583 = vsel %vm1553, %v1522, %v1523
        %v1584 = vsel %vm1553, %v1521, %v1522
        %v1585 = vsel %vm1553, %v1520, %v1521
        %v1586 = vsel %vm1553, %v1519, %v1520
        %v1587 = vsel %vm1553, %v1518, %v1519
        %v1588 = vsel %vm1553, %v1517, %v1518
        %v1589 = vsel %vm1553, %v1516, %v1517
        %v1590 = vsel %vm1553, %v1515, %v1516
        %v1591 = vsel %vm1553, %v1514, %v1515
        %v1592 = vsel %vm1553, %v1513, %v1514
        %v1593 = vsel %vm1553, %v1512, %v1513
        %v1594 = vsel %vm1553, %v1511, %v1512
        %v1595 = vsel %vm1553, %v1510, %v1511
        %v1596 = vsel %vm1553, %v1509, %v1510
        %v1597 = vsel %vm1553, %v1508, %v1509
        %v1598 = vsel %vm1553, %v1507, %v1508
        %v1599 = vsel %vm1553, %v1506, %v1507
        %v1600 = vsel %vm1553, %v1505, %v1506
        %v1601 = vsel %vm1553, %v1504, %v1505
        %v1602 = vsel %vm1553, %v1503, %v1504
        %v1603 = vsel %vm1553, %v1502, %v1503
        %v1604 = vsel %vm1553, %v1501, %v1502
        %v1605 = vsel %vm1553, %v1500, %v1501
        %v1606 = vsel %vm1553, %v1499, %v1500
        %v1607 = vsel %vm1553, %v1498, %v1499
        %v1608 = vsel %vm1553, %v1497, %v1498
        %v1609 = vsel %vm1553, %v1496, %v1497
        %v1610 = vsel %vm1553, %v1495, %v1496
        %v1611 = vsel %vm1553, %v1494, %v1495
        %v1612 = vsel %vm1553, %v1493, %v1494
        %v1613 = vsel %vm1553, %v1492, %v1493
        %v1614 = vsel %vm1553, %v1491, %v1492
        %v1615 = vsel %vm1553, %v1490, %v1491
        %v1616 = vsel %vm1553, %v1489, %v1490
        %v1617 = vsel %vm1553, %v1552, %v1489
        %v1618 = vsel %vm1361, 1, 0
        %v1619 = vsel %vm1362, 1, 0
        %v1620 = vsel %vm1363, 1, 0
        %v1621 = vsel %vm1364, 1, 0
        %v1622 = vsel %vm1365, 1, 0
        %v1623 = vsel %vm1366, 1, 0
        %v1624 = vsel %vm1367, 1, 0
        %v1625 = vsel %vm1368, 1, 0
        %v1626 = vsel %vm1369, 1, 0
        %v1627 = vsel %vm1370, 1, 0
        %v1628 = vsel %vm1371, 1, 0
        %v1629 = vsel %vm1372, 1, 0
        %v1630 = vsel %vm1373, 1, 0
        %v1631 = vsel %vm1374, 1, 0
        %v1632 = vsel %vm1375, 1, 0
        %v1633 = vsel %vm1376, 1, 0
        %v1634 = vsel %vm1377, 1, 0
        %v1635 = vsel %vm1378, 1, 0
        %v1636 = vsel %vm1379, 1, 0
        %v1637 = vsel %vm1380, 1, 0
        %v1638 = vsel %vm1381, 1, 0
        %v1639 = vsel %vm1382, 1, 0
        %v1640 = vsel %vm1383, 1, 0
        %v1641 = vsel %vm1384, 1, 0
        %v1642 = vsel %vm1385, 1, 0
        %v1643 = vsel %vm1386, 1, 0
        %v1644 = vsel %vm1387, 1, 0
        %v1645 = vsel %vm1388, 1, 0
        %v1646 = vsel %vm1389, 1, 0
        %v1647 = vsel %vm1390, 1, 0
        %v1648 = vsel %vm1391, 1, 0
        %v1649 = vsel %vm1392, 1, 0
        %v1650 = vsel %vm1393, 1, 0
        %v1651 = vsel %vm1394, 1, 0
        %v1652 = vsel %vm1395, 1, 0
        %v1653 = vsel %vm1396, 1, 0
        %v1654 = vsel %vm1397, 1, 0
        %v1655 = vsel %vm1398, 1, 0
        %v1656 = vsel %vm1399, 1, 0
        %v1657 = vsel %vm1400, 1, 0
        %v1658 = vsel %vm1401, 1, 0
        %v1659 = vsel %vm1402, 1, 0
        %v1660 = vsel %vm1403, 1, 0
        %v1661 = vsel %vm1404, 1, 0
        %v1662 = vsel %vm1405, 1, 0
        %v1663 = vsel %vm1406, 1, 0
        %v1664 = vsel %vm1407, 1, 0
        %v1665 = vsel %vm1408, 1, 0
        %v1666 = vsel %vm1409, 1, 0
        %v1667 = vsel %vm1410, 1, 0
        %v1668 = vsel %vm1411, 1, 0
        %v1669 = vsel %vm1412, 1, 0
        %v1670 = vsel %vm1413, 1, 0
        %v1671 = vsel %vm1414, 1, 0
        %v1672 = vsel %vm1415, 1, 0
        %v1673 = vsel %vm1416, 1, 0
        %v1674 = vsel %vm1417, 1, 0
        %v1675 = vsel %vm1418, 1, 0
        %v1676 = vsel %vm1419, 1, 0
        %v1677 = vsel %vm1420, 1, 0
        %v1678 = vsel %vm1421, 1, 0
        %v1679 = vsel %vm1422, 1, 0
        %v1680 = vsel %vm1423, 1, 0
        %v1681 = vsel %vm1424, 1, 0
        %vm1682 = vcmp.eq.s32.totalorder %v1618, 1
        %vm1683 = vcmp.eq.s32.totalorder %v1619, 1
        %vm1684 = vcmp.eq.s32.totalorder %v1620, 1
        %vm1685 = vcmp.eq.s32.totalorder %v1621, 1
        %vm1686 = vcmp.eq.s32.totalorder %v1622, 1
        %vm1687 = vcmp.eq.s32.totalorder %v1623, 1
        %vm1688 = vcmp.eq.s32.totalorder %v1624, 1
        %vm1689 = vcmp.eq.s32.totalorder %v1625, 1
        %vm1690 = vcmp.eq.s32.totalorder %v1626, 1
        %vm1691 = vcmp.eq.s32.totalorder %v1627, 1
        %vm1692 = vcmp.eq.s32.totalorder %v1628, 1
        %vm1693 = vcmp.eq.s32.totalorder %v1629, 1
        %vm1694 = vcmp.eq.s32.totalorder %v1630, 1
        %vm1695 = vcmp.eq.s32.totalorder %v1631, 1
        %vm1696 = vcmp.eq.s32.totalorder %v1632, 1
        %vm1697 = vcmp.eq.s32.totalorder %v1633, 1
        %vm1698 = vcmp.eq.s32.totalorder %v1634, 1
        %vm1699 = vcmp.eq.s32.totalorder %v1635, 1
        %vm1700 = vcmp.eq.s32.totalorder %v1636, 1
        %vm1701 = vcmp.eq.s32.totalorder %v1637, 1
        %vm1702 = vcmp.eq.s32.totalorder %v1638, 1
        %vm1703 = vcmp.eq.s32.totalorder %v1639, 1
        %vm1704 = vcmp.eq.s32.totalorder %v1640, 1
        %vm1705 = vcmp.eq.s32.totalorder %v1641, 1
        %vm1706 = vcmp.eq.s32.totalorder %v1642, 1
        %vm1707 = vcmp.eq.s32.totalorder %v1643, 1
        %vm1708 = vcmp.eq.s32.totalorder %v1644, 1
        %vm1709 = vcmp.eq.s32.totalorder %v1645, 1
        %vm1710 = vcmp.eq.s32.totalorder %v1646, 1
        %vm1711 = vcmp.eq.s32.totalorder %v1647, 1
        %vm1712 = vcmp.eq.s32.totalorder %v1648, 1
        %vm1713 = vcmp.eq.s32.totalorder %v1649, 1
        %vm1714 = vcmp.eq.s32.totalorder %v1650, 1
        %vm1715 = vcmp.eq.s32.totalorder %v1651, 1
        %vm1716 = vcmp.eq.s32.totalorder %v1652, 1
        %vm1717 = vcmp.eq.s32.totalorder %v1653, 1
        %vm1718 = vcmp.eq.s32.totalorder %v1654, 1
        %vm1719 = vcmp.eq.s32.totalorder %v1655, 1
        %vm1720 = vcmp.eq.s32.totalorder %v1656, 1
        %vm1721 = vcmp.eq.s32.totalorder %v1657, 1
        %vm1722 = vcmp.eq.s32.totalorder %v1658, 1
        %vm1723 = vcmp.eq.s32.totalorder %v1659, 1
        %vm1724 = vcmp.eq.s32.totalorder %v1660, 1
        %vm1725 = vcmp.eq.s32.totalorder %v1661, 1
        %vm1726 = vcmp.eq.s32.totalorder %v1662, 1
        %vm1727 = vcmp.eq.s32.totalorder %v1663, 1
        %vm1728 = vcmp.eq.s32.totalorder %v1664, 1
        %vm1729 = vcmp.eq.s32.totalorder %v1665, 1
        %vm1730 = vcmp.eq.s32.totalorder %v1666, 1
        %vm1731 = vcmp.eq.s32.totalorder %v1667, 1
        %vm1732 = vcmp.eq.s32.totalorder %v1668, 1
        %vm1733 = vcmp.eq.s32.totalorder %v1669, 1
        %vm1734 = vcmp.eq.s32.totalorder %v1670, 1
        %vm1735 = vcmp.eq.s32.totalorder %v1671, 1
        %vm1736 = vcmp.eq.s32.totalorder %v1672, 1
        %vm1737 = vcmp.eq.s32.totalorder %v1673, 1
        %vm1738 = vcmp.eq.s32.totalorder %v1674, 1
        %vm1739 = vcmp.eq.s32.totalorder %v1675, 1
        %vm1740 = vcmp.eq.s32.totalorder %v1676, 1
        %vm1741 = vcmp.eq.s32.totalorder %v1677, 1
        %vm1742 = vcmp.eq.s32.totalorder %v1678, 1
        %vm1743 = vcmp.eq.s32.totalorder %v1679, 1
        %vm1744 = vcmp.eq.s32.totalorder %v1680, 1
        %vm1745 = vcmp.eq.s32.totalorder %v1681, 1
        %v1746 = vsel %vm1682, 0.0, %v1617
        %v1747 = vsel %vm1683, 0.0, %v1616
        %v1748 = vsel %vm1684, 0.0, %v1615
        %v1749 = vsel %vm1685, 0.0, %v1614
        %v1750 = vsel %vm1686, 0.0, %v1613
        %v1751 = vsel %vm1687, 0.0, %v1612
        %v1752 = vsel %vm1688, 0.0, %v1611
        %v1753 = vsel %vm1689, 0.0, %v1610
        %v1754 = vsel %vm1690, 0.0, %v1609
        %v1755 = vsel %vm1691, 0.0, %v1608
        %v1756 = vsel %vm1692, 0.0, %v1607
        %v1757 = vsel %vm1693, 0.0, %v1606
        %v1758 = vsel %vm1694, 0.0, %v1605
        %v1759 = vsel %vm1695, 0.0, %v1604
        %v1760 = vsel %vm1696, 0.0, %v1603
        %v1761 = vsel %vm1697, 0.0, %v1602
        %v1762 = vsel %vm1698, 0.0, %v1601
        %v1763 = vsel %vm1699, 0.0, %v1600
        %v1764 = vsel %vm1700, 0.0, %v1599
        %v1765 = vsel %vm1701, 0.0, %v1598
        %v1766 = vsel %vm1702, 0.0, %v1597
        %v1767 = vsel %vm1703, 0.0, %v1596
        %v1768 = vsel %vm1704, 0.0, %v1595
        %v1769 = vsel %vm1705, 0.0, %v1594
        %v1770 = vsel %vm1706, 0.0, %v1593
        %v1771 = vsel %vm1707, 0.0, %v1592
        %v1772 = vsel %vm1708, 0.0, %v1591
        %v1773 = vsel %vm1709, 0.0, %v1590
        %v1774 = vsel %vm1710, 0.0, %v1589
        %v1775 = vsel %vm1711, 0.0, %v1588
        %v1776 = vsel %vm1712, 0.0, %v1587
        %v1777 = vsel %vm1713, 0.0, %v1586
        %v1778 = vsel %vm1714, 0.0, %v1585
        %v1779 = vsel %vm1715, 0.0, %v1584
        %v1780 = vsel %vm1716, 0.0, %v1583
        %v1781 = vsel %vm1717, 0.0, %v1582
        %v1782 = vsel %vm1718, 0.0, %v1581
        %v1783 = vsel %vm1719, 0.0, %v1580
        %v1784 = vsel %vm1720, 0.0, %v1579
        %v1785 = vsel %vm1721, 0.0, %v1578
        %v1786 = vsel %vm1722, 0.0, %v1577
        %v1787 = vsel %vm1723, 0.0, %v1576
        %v1788 = vsel %vm1724, 0.0, %v1575
        %v1789 = vsel %vm1725, 0.0, %v1574
        %v1790 = vsel %vm1726, 0.0, %v1573
        %v1791 = vsel %vm1727, 0.0, %v1572
        %v1792 = vsel %vm1728, 0.0, %v1571
        %v1793 = vsel %vm1729, 0.0, %v1570
        %v1794 = vsel %vm1730, 0.0, %v1569
        %v1795 = vsel %vm1731, 0.0, %v1568
        %v1796 = vsel %vm1732, 0.0, %v1567
        %v1797 = vsel %vm1733, 0.0, %v1566
        %v1798 = vsel %vm1734, 0.0, %v1565
        %v1799 = vsel %vm1735, 0.0, %v1564
        %v1800 = vsel %vm1736, 0.0, %v1563
        %v1801 = vsel %vm1737, 0.0, %v1562
        %v1802 = vsel %vm1738, 0.0, %v1561
        %v1803 = vsel %vm1739, 0.0, %v1560
        %v1804 = vsel %vm1740, 0.0, %v1559
        %v1805 = vsel %vm1741, 0.0, %v1558
        %v1806 = vsel %vm1742, 0.0, %v1557
        %v1807 = vsel %vm1743, 0.0, %v1556
        %v1808 = vsel %vm1744, 0.0, %v1555
        %v1809 = vsel %vm1745, 0.0, %v1554
        %v1810 = vrot.slane %v1297, 1
        %v1811 = vrot.slane %v1298, 1
        %v1812 = vrot.slane %v1299, 1
        %v1813 = vrot.slane %v1300, 1
        %v1814 = vrot.slane %v1301, 1
        %v1815 = vrot.slane %v1302, 1
        %v1816 = vrot.slane %v1303, 1
        %v1817 = vrot.slane %v1304, 1
        %v1818 = vrot.slane %v1305, 1
        %v1819 = vrot.slane %v1306, 1
        %v1820 = vrot.slane %v1307, 1
        %v1821 = vrot.slane %v1308, 1
        %v1822 = vrot.slane %v1309, 1
        %v1823 = vrot.slane %v1310, 1
        %v1824 = vrot.slane %v1311, 1
        %v1825 = vrot.slane %v1312, 1
        %v1826 = vrot.slane %v1313, 1
        %v1827 = vrot.slane %v1314, 1
        %v1828 = vrot.slane %v1315, 1
        %v1829 = vrot.slane %v1316, 1
        %v1830 = vrot.slane %v1317, 1
        %v1831 = vrot.slane %v1318, 1
        %v1832 = vrot.slane %v1319, 1
        %v1833 = vrot.slane %v1320, 1
        %v1834 = vrot.slane %v1321, 1
        %v1835 = vrot.slane %v1322, 1
        %v1836 = vrot.slane %v1323, 1
        %v1837 = vrot.slane %v1324, 1
        %v1838 = vrot.slane %v1325, 1
        %v1839 = vrot.slane %v1326, 1
        %v1840 = vrot.slane %v1327, 1
        %v1841 = vrot.slane %v1328, 1
        %v1842 = vrot.slane %v1329, 1
        %v1843 = vrot.slane %v1330, 1
        %v1844 = vrot.slane %v1331, 1
        %v1845 = vrot.slane %v1332, 1
        %v1846 = vrot.slane %v1333, 1
        %v1847 = vrot.slane %v1334, 1
        %v1848 = vrot.slane %v1335, 1
        %v1849 = vrot.slane %v1336, 1
        %v1850 = vrot.slane %v1337, 1
        %v1851 = vrot.slane %v1338, 1
        %v1852 = vrot.slane %v1339, 1
        %v1853 = vrot.slane %v1340, 1
        %v1854 = vrot.slane %v1341, 1
        %v1855 = vrot.slane %v1342, 1
        %v1856 = vrot.slane %v1343, 1
        %v1857 = vrot.slane %v1344, 1
        %v1858 = vrot.slane %v1345, 1
        %v1859 = vrot.slane %v1346, 1
        %v1860 = vrot.slane %v1347, 1
        %v1861 = vrot.slane %v1348, 1
        %v1862 = vrot.slane %v1349, 1
        %v1863 = vrot.slane %v1350, 1
        %v1864 = vrot.slane %v1351, 1
        %v1865 = vrot.slane %v1352, 1
        %v1866 = vrot.slane %v1353, 1
        %v1867 = vrot.slane %v1354, 1
        %v1868 = vrot.slane %v1355, 1
        %v1869 = vrot.slane %v1356, 1
        %v1870 = vrot.slane %v1357, 1
        %v1871 = vrot.slane %v1358, 1
        %v1872 = vrot.slane %v1359, 1
        %v1873 = vrot.slane %v1360, 1
        %vm1874 = vcmp.lt.s32.totalorder %v465, 7
        %v1875 = vsel %vm1874, %v1872, %v1873
        %v1876 = vsel %vm1874, %v1871, %v1872
        %v1877 = vsel %vm1874, %v1870, %v1871
        %v1878 = vsel %vm1874, %v1869, %v1870
        %v1879 = vsel %vm1874, %v1868, %v1869
        %v1880 = vsel %vm1874, %v1867, %v1868
        %v1881 = vsel %vm1874, %v1866, %v1867
        %v1882 = vsel %vm1874, %v1865, %v1866
        %v1883 = vsel %vm1874, %v1864, %v1865
        %v1884 = vsel %vm1874, %v1863, %v1864
        %v1885 = vsel %vm1874, %v1862, %v1863
        %v1886 = vsel %vm1874, %v1861, %v1862
        %v1887 = vsel %vm1874, %v1860, %v1861
        %v1888 = vsel %vm1874, %v1859, %v1860
        %v1889 = vsel %vm1874, %v1858, %v1859
        %v1890 = vsel %vm1874, %v1857, %v1858
        %v1891 = vsel %vm1874, %v1856, %v1857
        %v1892 = vsel %vm1874, %v1855, %v1856
        %v1893 = vsel %vm1874, %v1854, %v1855
        %v1894 = vsel %vm1874, %v1853, %v1854
        %v1895 = vsel %vm1874, %v1852, %v1853
        %v1896 = vsel %vm1874, %v1851, %v1852
        %v1897 = vsel %vm1874, %v1850, %v1851
        %v1898 = vsel %vm1874, %v1849, %v1850
        %v1899 = vsel %vm1874, %v1848, %v1849
        %v1900 = vsel %vm1874, %v1847, %v1848
        %v1901 = vsel %vm1874, %v1846, %v1847
        %v1902 = vsel %vm1874, %v1845, %v1846
        %v1903 = vsel %vm1874, %v1844, %v1845
        %v1904 = vsel %vm1874, %v1843, %v1844
        %v1905 = vsel %vm1874, %v1842, %v1843
        %v1906 = vsel %vm1874, %v1841, %v1842
        %v1907 = vsel %vm1874, %v1840, %v1841
        %v1908 = vsel %vm1874, %v1839, %v1840
        %v1909 = vsel %vm1874, %v1838, %v1839
        %v1910 = vsel %vm1874, %v1837, %v1838
        %v1911 = vsel %vm1874, %v1836, %v1837
        %v1912 = vsel %vm1874, %v1835, %v1836
        %v1913 = vsel %vm1874, %v1834, %v1835
        %v1914 = vsel %vm1874, %v1833, %v1834
        %v1915 = vsel %vm1874, %v1832, %v1833
        %v1916 = vsel %vm1874, %v1831, %v1832
        %v1917 = vsel %vm1874, %v1830, %v1831
        %v1918 = vsel %vm1874, %v1829, %v1830
        %v1919 = vsel %vm1874, %v1828, %v1829
        %v1920 = vsel %vm1874, %v1827, %v1828
        %v1921 = vsel %vm1874, %v1826, %v1827
        %v1922 = vsel %vm1874, %v1825, %v1826
        %v1923 = vsel %vm1874, %v1824, %v1825
        %v1924 = vsel %vm1874, %v1823, %v1824
        %v1925 = vsel %vm1874, %v1822, %v1823
        %v1926 = vsel %vm1874, %v1821, %v1822
        %v1927 = vsel %vm1874, %v1820, %v1821
        %v1928 = vsel %vm1874, %v1819, %v1820
        %v1929 = vsel %vm1874, %v1818, %v1819
        %v1930 = vsel %vm1874, %v1817, %v1818
        %v1931 = vsel %vm1874, %v1816, %v1817
        %v1932 = vsel %vm1874, %v1815, %v1816
        %v1933 = vsel %vm1874, %v1814, %v1815
        %v1934 = vsel %vm1874, %v1813, %v1814
        %v1935 = vsel %vm1874, %v1812, %v1813
        %v1936 = vsel %vm1874, %v1811, %v1812
        %v1937 = vsel %vm1874, %v1810, %v1811
        %v1938 = vsel %vm1874, %v1873, %v1810
        %v1939 = vsel %vm1425, 1, 0
        %v1940 = vsel %vm1426, 1, 0
        %v1941 = vsel %vm1427, 1, 0
        %v1942 = vsel %vm1428, 1, 0
        %v1943 = vsel %vm1429, 1, 0
        %v1944 = vsel %vm1430, 1, 0
        %v1945 = vsel %vm1431, 1, 0
        %v1946 = vsel %vm1432, 1, 0
        %v1947 = vsel %vm1433, 1, 0
        %v1948 = vsel %vm1434, 1, 0
        %v1949 = vsel %vm1435, 1, 0
        %v1950 = vsel %vm1436, 1, 0
        %v1951 = vsel %vm1437, 1, 0
        %v1952 = vsel %vm1438, 1, 0
        %v1953 = vsel %vm1439, 1, 0
        %v1954 = vsel %vm1440, 1, 0
        %v1955 = vsel %vm1441, 1, 0
        %v1956 = vsel %vm1442, 1, 0
        %v1957 = vsel %vm1443, 1, 0
        %v1958 = vsel %vm1444, 1, 0
        %v1959 = vsel %vm1445, 1, 0
        %v1960 = vsel %vm1446, 1, 0
        %v1961 = vsel %vm1447, 1, 0
        %v1962 = vsel %vm1448, 1, 0
        %v1963 = vsel %vm1449, 1, 0
        %v1964 = vsel %vm1450, 1, 0
        %v1965 = vsel %vm1451, 1, 0
        %v1966 = vsel %vm1452, 1, 0
        %v1967 = vsel %vm1453, 1, 0
        %v1968 = vsel %vm1454, 1, 0
        %v1969 = vsel %vm1455, 1, 0
        %v1970 = vsel %vm1456, 1, 0
        %v1971 = vsel %vm1457, 1, 0
        %v1972 = vsel %vm1458, 1, 0
        %v1973 = vsel %vm1459, 1, 0
        %v1974 = vsel %vm1460, 1, 0
        %v1975 = vsel %vm1461, 1, 0
        %v1976 = vsel %vm1462, 1, 0
        %v1977 = vsel %vm1463, 1, 0
        %v1978 = vsel %vm1464, 1, 0
        %v1979 = vsel %vm1465, 1, 0
        %v1980 = vsel %vm1466, 1, 0
        %v1981 = vsel %vm1467, 1, 0
        %v1982 = vsel %vm1468, 1, 0
        %v1983 = vsel %vm1469, 1, 0
        %v1984 = vsel %vm1470, 1, 0
        %v1985 = vsel %vm1471, 1, 0
        %v1986 = vsel %vm1472, 1, 0
        %v1987 = vsel %vm1473, 1, 0
        %v1988 = vsel %vm1474, 1, 0
        %v1989 = vsel %vm1475, 1, 0
        %v1990 = vsel %vm1476, 1, 0
        %v1991 = vsel %vm1477, 1, 0
        %v1992 = vsel %vm1478, 1, 0
        %v1993 = vsel %vm1479, 1, 0
        %v1994 = vsel %vm1480, 1, 0
        %v1995 = vsel %vm1481, 1, 0
        %v1996 = vsel %vm1482, 1, 0
        %v1997 = vsel %vm1483, 1, 0
        %v1998 = vsel %vm1484, 1, 0
        %v1999 = vsel %vm1485, 1, 0
        %v2000 = vsel %vm1486, 1, 0
        %v2001 = vsel %vm1487, 1, 0
        %v2002 = vsel %vm1488, 1, 0
        %vm2003 = vcmp.eq.s32.totalorder %v1939, 1
        %vm2004 = vcmp.eq.s32.totalorder %v1940, 1
        %vm2005 = vcmp.eq.s32.totalorder %v1941, 1
        %vm2006 = vcmp.eq.s32.totalorder %v1942, 1
        %vm2007 = vcmp.eq.s32.totalorder %v1943, 1
        %vm2008 = vcmp.eq.s32.totalorder %v1944, 1
        %vm2009 = vcmp.eq.s32.totalorder %v1945, 1
        %vm2010 = vcmp.eq.s32.totalorder %v1946, 1
        %vm2011 = vcmp.eq.s32.totalorder %v1947, 1
        %vm2012 = vcmp.eq.s32.totalorder %v1948, 1
        %vm2013 = vcmp.eq.s32.totalorder %v1949, 1
        %vm2014 = vcmp.eq.s32.totalorder %v1950, 1
        %vm2015 = vcmp.eq.s32.totalorder %v1951, 1
        %vm2016 = vcmp.eq.s32.totalorder %v1952, 1
        %vm2017 = vcmp.eq.s32.totalorder %v1953, 1
        %vm2018 = vcmp.eq.s32.totalorder %v1954, 1
        %vm2019 = vcmp.eq.s32.totalorder %v1955, 1
        %vm2020 = vcmp.eq.s32.totalorder %v1956, 1
        %vm2021 = vcmp.eq.s32.totalorder %v1957, 1
        %vm2022 = vcmp.eq.s32.totalorder %v1958, 1
        %vm2023 = vcmp.eq.s32.totalorder %v1959, 1
        %vm2024 = vcmp.eq.s32.totalorder %v1960, 1
        %vm2025 = vcmp.eq.s32.totalorder %v1961, 1
        %vm2026 = vcmp.eq.s32.totalorder %v1962, 1
        %vm2027 = vcmp.eq.s32.totalorder %v1963, 1
        %vm2028 = vcmp.eq.s32.totalorder %v1964, 1
        %vm2029 = vcmp.eq.s32.totalorder %v1965, 1
        %vm2030 = vcmp.eq.s32.totalorder %v1966, 1
        %vm2031 = vcmp.eq.s32.totalorder %v1967, 1
        %vm2032 = vcmp.eq.s32.totalorder %v1968, 1
        %vm2033 = vcmp.eq.s32.totalorder %v1969, 1
        %vm2034 = vcmp.eq.s32.totalorder %v1970, 1
        %vm2035 = vcmp.eq.s32.totalorder %v1971, 1
        %vm2036 = vcmp.eq.s32.totalorder %v1972, 1
        %vm2037 = vcmp.eq.s32.totalorder %v1973, 1
        %vm2038 = vcmp.eq.s32.totalorder %v1974, 1
        %vm2039 = vcmp.eq.s32.totalorder %v1975, 1
        %vm2040 = vcmp.eq.s32.totalorder %v1976, 1
        %vm2041 = vcmp.eq.s32.totalorder %v1977, 1
        %vm2042 = vcmp.eq.s32.totalorder %v1978, 1
        %vm2043 = vcmp.eq.s32.totalorder %v1979, 1
        %vm2044 = vcmp.eq.s32.totalorder %v1980, 1
        %vm2045 = vcmp.eq.s32.totalorder %v1981, 1
        %vm2046 = vcmp.eq.s32.totalorder %v1982, 1
        %vm2047 = vcmp.eq.s32.totalorder %v1983, 1
        %vm2048 = vcmp.eq.s32.totalorder %v1984, 1
        %vm2049 = vcmp.eq.s32.totalorder %v1985, 1
        %vm2050 = vcmp.eq.s32.totalorder %v1986, 1
        %vm2051 = vcmp.eq.s32.totalorder %v1987, 1
        %vm2052 = vcmp.eq.s32.totalorder %v1988, 1
        %vm2053 = vcmp.eq.s32.totalorder %v1989, 1
        %vm2054 = vcmp.eq.s32.totalorder %v1990, 1
        %vm2055 = vcmp.eq.s32.totalorder %v1991, 1
        %vm2056 = vcmp.eq.s32.totalorder %v1992, 1
        %vm2057 = vcmp.eq.s32.totalorder %v1993, 1
        %vm2058 = vcmp.eq.s32.totalorder %v1994, 1
        %vm2059 = vcmp.eq.s32.totalorder %v1995, 1
        %vm2060 = vcmp.eq.s32.totalorder %v1996, 1
        %vm2061 = vcmp.eq.s32.totalorder %v1997, 1
        %vm2062 = vcmp.eq.s32.totalorder %v1998, 1
        %vm2063 = vcmp.eq.s32.totalorder %v1999, 1
        %vm2064 = vcmp.eq.s32.totalorder %v2000, 1
        %vm2065 = vcmp.eq.s32.totalorder %v2001, 1
        %vm2066 = vcmp.eq.s32.totalorder %v2002, 1
        %v2067 = vsel %vm2003, 0.0, %v1937
        %v2068 = vsel %vm2004, 0.0, %v1936
        %v2069 = vsel %vm2005, 0.0, %v1935
        %v2070 = vsel %vm2006, 0.0, %v1934
        %v2071 = vsel %vm2007, 0.0, %v1933
        %v2072 = vsel %vm2008, 0.0, %v1932
        %v2073 = vsel %vm2009, 0.0, %v1931
        %v2074 = vsel %vm2010, 0.0, %v1930
        %v2075 = vsel %vm2011, 0.0, %v1929
        %v2076 = vsel %vm2012, 0.0, %v1928
        %v2077 = vsel %vm2013, 0.0, %v1927
        %v2078 = vsel %vm2014, 0.0, %v1926
        %v2079 = vsel %vm2015, 0.0, %v1925
        %v2080 = vsel %vm2016, 0.0, %v1924
        %v2081 = vsel %vm2017, 0.0, %v1923
        %v2082 = vsel %vm2018, 0.0, %v1922
        %v2083 = vsel %vm2019, 0.0, %v1921
        %v2084 = vsel %vm2020, 0.0, %v1920
        %v2085 = vsel %vm2021, 0.0, %v1919
        %v2086 = vsel %vm2022, 0.0, %v1918
        %v2087 = vsel %vm2023, 0.0, %v1917
        %v2088 = vsel %vm2024, 0.0, %v1916
        %v2089 = vsel %vm2025, 0.0, %v1915
        %v2090 = vsel %vm2026, 0.0, %v1914
        %v2091 = vsel %vm2027, 0.0, %v1913
        %v2092 = vsel %vm2028, 0.0, %v1912
        %v2093 = vsel %vm2029, 0.0, %v1911
        %v2094 = vsel %vm2030, 0.0, %v1910
        %v2095 = vsel %vm2031, 0.0, %v1909
        %v2096 = vsel %vm2032, 0.0, %v1908
        %v2097 = vsel %vm2033, 0.0, %v1907
        %v2098 = vsel %vm2034, 0.0, %v1906
        %v2099 = vsel %vm2035, 0.0, %v1905
        %v2100 = vsel %vm2036, 0.0, %v1904
        %v2101 = vsel %vm2037, 0.0, %v1903
        %v2102 = vsel %vm2038, 0.0, %v1902
        %v2103 = vsel %vm2039, 0.0, %v1901
        %v2104 = vsel %vm2040, 0.0, %v1900
        %v2105 = vsel %vm2041, 0.0, %v1899
        %v2106 = vsel %vm2042, 0.0, %v1898
        %v2107 = vsel %vm2043, 0.0, %v1897
        %v2108 = vsel %vm2044, 0.0, %v1896
        %v2109 = vsel %vm2045, 0.0, %v1895
        %v2110 = vsel %vm2046, 0.0, %v1894
        %v2111 = vsel %vm2047, 0.0, %v1893
        %v2112 = vsel %vm2048, 0.0, %v1892
        %v2113 = vsel %vm2049, 0.0, %v1891
        %v2114 = vsel %vm2050, 0.0, %v1890
        %v2115 = vsel %vm2051, 0.0, %v1889
        %v2116 = vsel %vm2052, 0.0, %v1888
        %v2117 = vsel %vm2053, 0.0, %v1887
        %v2118 = vsel %vm2054, 0.0, %v1886
        %v2119 = vsel %vm2055, 0.0, %v1885
        %v2120 = vsel %vm2056, 0.0, %v1884
        %v2121 = vsel %vm2057, 0.0, %v1883
        %v2122 = vsel %vm2058, 0.0, %v1882
        %v2123 = vsel %vm2059, 0.0, %v1881
        %v2124 = vsel %vm2060, 0.0, %v1880
        %v2125 = vsel %vm2061, 0.0, %v1879
        %v2126 = vsel %vm2062, 0.0, %v1878
        %v2127 = vsel %vm2063, 0.0, %v1877
        %v2128 = vsel %vm2064, 0.0, %v1876
        %v2129 = vsel %vm2065, 0.0, %v1875
        %v2130 = vsel %vm2066, 0.0, %v1938
        %v2131 = vpack.c.bf16 %v1747, %v1746
        %v2132 = vpack.c.bf16 %v1749, %v1748
        %v2133 = vpack.c.bf16 %v1751, %v1750
        %v2134 = vpack.c.bf16 %v1753, %v1752
        %v2135 = vpack.c.bf16 %v1755, %v1754
        %v2136 = vpack.c.bf16 %v1757, %v1756
        %v2137 = vpack.c.bf16 %v1759, %v1758
        %v2138 = vpack.c.bf16 %v1761, %v1760
        %v2139 = vpack.c.bf16 %v1763, %v1762
        %v2140 = vpack.c.bf16 %v1765, %v1764
        %v2141 = vpack.c.bf16 %v1767, %v1766
        %v2142 = vpack.c.bf16 %v1769, %v1768
        %v2143 = vpack.c.bf16 %v1771, %v1770
        %v2144 = vpack.c.bf16 %v1773, %v1772
        %v2145 = vpack.c.bf16 %v1775, %v1774
        %v2146 = vpack.c.bf16 %v1777, %v1776
        %v2147 = vpack.c.bf16 %v1779, %v1778
        %v2148 = vpack.c.bf16 %v1781, %v1780
        %v2149 = vpack.c.bf16 %v1783, %v1782
        %v2150 = vpack.c.bf16 %v1785, %v1784
        %v2151 = vpack.c.bf16 %v1787, %v1786
        %v2152 = vpack.c.bf16 %v1789, %v1788
        %v2153 = vpack.c.bf16 %v1791, %v1790
        %v2154 = vpack.c.bf16 %v1793, %v1792
        %v2155 = vpack.c.bf16 %v1795, %v1794
        %v2156 = vpack.c.bf16 %v1797, %v1796
        %v2157 = vpack.c.bf16 %v1799, %v1798
        %v2158 = vpack.c.bf16 %v1801, %v1800
        %v2159 = vpack.c.bf16 %v1803, %v1802
        %v2160 = vpack.c.bf16 %v1805, %v1804
        %v2161 = vpack.c.bf16 %v1807, %v1806
        %v2162 = vpack.c.bf16 %v1809, %v1808
        %v2163 = vpack.c.bf16 %v1298, %v1297
        %v2164 = vpack.c.bf16 %v1300, %v1299
        %v2165 = vpack.c.bf16 %v1302, %v1301
        %v2166 = vpack.c.bf16 %v1304, %v1303
        %v2167 = vpack.c.bf16 %v1306, %v1305
        %v2168 = vpack.c.bf16 %v1308, %v1307
        %v2169 = vpack.c.bf16 %v1310, %v1309
        %v2170 = vpack.c.bf16 %v1312, %v1311
        %v2171 = vpack.c.bf16 %v1314, %v1313
        %v2172 = vpack.c.bf16 %v1316, %v1315
        %v2173 = vpack.c.bf16 %v1318, %v1317
        %v2174 = vpack.c.bf16 %v1320, %v1319
        %v2175 = vpack.c.bf16 %v1322, %v1321
        %v2176 = vpack.c.bf16 %v1324, %v1323
        %v2177 = vpack.c.bf16 %v1326, %v1325
        %v2178 = vpack.c.bf16 %v1328, %v1327
        %v2179 = vpack.c.bf16 %v1330, %v1329
        %v2180 = vpack.c.bf16 %v1332, %v1331
        %v2181 = vpack.c.bf16 %v1334, %v1333
        %v2182 = vpack.c.bf16 %v1336, %v1335
        %v2183 = vpack.c.bf16 %v1338, %v1337
        %v2184 = vpack.c.bf16 %v1340, %v1339
        %v2185 = vpack.c.bf16 %v1342, %v1341
        %v2186 = vpack.c.bf16 %v1344, %v1343
        %v2187 = vpack.c.bf16 %v1346, %v1345
        %v2188 = vpack.c.bf16 %v1348, %v1347
        %v2189 = vpack.c.bf16 %v1350, %v1349
        %v2190 = vpack.c.bf16 %v1352, %v1351
        %v2191 = vpack.c.bf16 %v1354, %v1353
        %v2192 = vpack.c.bf16 %v1356, %v1355
        %v2193 = vpack.c.bf16 %v1358, %v1357
        %v2194 = vpack.c.bf16 %v1360, %v1359
        %v2211 = vunpack.c.l.b16 %v379
        %v2212 = vunpack.c.l.b16 %v380
        %v2213 = vunpack.c.l.b16 %v381
        %v2214 = vunpack.c.l.b16 %v382
        %v2215 = vunpack.c.l.b16 %v383
        %v2216 = vunpack.c.l.b16 %v384
        %v2217 = vunpack.c.l.b16 %v385
        %v2218 = vunpack.c.l.b16 %v386
        %v2219 = vunpack.c.l.b16 %v387
        %v2220 = vunpack.c.l.b16 %v388
        %v2221 = vunpack.c.l.b16 %v389
        %v2222 = vunpack.c.l.b16 %v390
        %v2223 = vunpack.c.l.b16 %v391
        %v2224 = vunpack.c.l.b16 %v392
        %v2225 = vunpack.c.l.b16 %v393
        %v2226 = vunpack.c.l.b16 %v394
        %v2227 = vpack.c.b16 %v2212, %v2211
        %v2228 = vpack.c.b16 %v2214, %v2213
        %v2229 = vpack.c.b16 %v2216, %v2215
        %v2230 = vpack.c.b16 %v2218, %v2217
        %v2231 = vpack.c.b16 %v2220, %v2219
        %v2232 = vpack.c.b16 %v2222, %v2221
        %v2233 = vpack.c.b16 %v2224, %v2223
        %v2234 = vpack.c.b16 %v2226, %v2225
        %2243 = vmatpush.bf16.msra.mxu0 %v2234
        %2244 = vmatpush.bf16.msra.mxu0 %v2233
        %2245 = vmatpush.bf16.msra.mxu0 %v2232
        %2246 = vmatpush.bf16.msra.mxu0 %v2231
        %2247 = vmatpush.bf16.msra.mxu0 %v2230
        %2248 = vmatpush.bf16.msra.mxu0 %v2229
        %2249 = vmatpush.bf16.msra.mxu0 %v2228
        %2250 = vmatpush.bf16.msra.mxu0 %v2227
        %2251 = vmatmul.bf16.gmra.mxu0 %v2163
        %v2252 = vpop.f32.mrf.mxu0
        %v2253 = vadd.f32 0.0, %v2252
        %v2254 = vpop.f32.mrf.mxu0
        %v2255 = vadd.f32 0.0, %v2254
        %2256 = vmatmul.bf16.gmra.mxu0 %v2164
        %v2257 = vpop.f32.mrf.mxu0
        %v2258 = vadd.f32 0.0, %v2257
        %v2259 = vpop.f32.mrf.mxu0
        %v2260 = vadd.f32 0.0, %v2259
        %2261 = vmatmul.bf16.gmra.mxu0 %v2165
        %v2262 = vpop.f32.mrf.mxu0
        %v2263 = vadd.f32 0.0, %v2262
        %v2264 = vpop.f32.mrf.mxu0
        %v2265 = vadd.f32 0.0, %v2264
        %2266 = vmatmul.bf16.gmra.mxu0 %v2166
        %v2267 = vpop.f32.mrf.mxu0
        %v2268 = vadd.f32 0.0, %v2267
        %v2269 = vpop.f32.mrf.mxu0
        %v2270 = vadd.f32 0.0, %v2269
        %2271 = vmatmul.bf16.gmra.mxu0 %v2167
        %v2272 = vpop.f32.mrf.mxu0
        %v2273 = vadd.f32 0.0, %v2272
        %v2274 = vpop.f32.mrf.mxu0
        %v2275 = vadd.f32 0.0, %v2274
        %2276 = vmatmul.bf16.gmra.mxu0 %v2168
        %v2277 = vpop.f32.mrf.mxu0
        %v2278 = vadd.f32 0.0, %v2277
        %v2279 = vpop.f32.mrf.mxu0
        %v2280 = vadd.f32 0.0, %v2279
        %2281 = vmatmul.bf16.gmra.mxu0 %v2169
        %v2282 = vpop.f32.mrf.mxu0
        %v2283 = vadd.f32 0.0, %v2282
        %v2284 = vpop.f32.mrf.mxu0
        %v2285 = vadd.f32 0.0, %v2284
        %2286 = vmatmul.bf16.gmra.mxu0 %v2170
        %v2287 = vpop.f32.mrf.mxu0
        %v2288 = vadd.f32 0.0, %v2287
        %v2289 = vpop.f32.mrf.mxu0
        %v2290 = vadd.f32 0.0, %v2289
        %2291 = vmatmul.bf16.gmra.mxu0 %v2171
        %v2292 = vpop.f32.mrf.mxu0
        %v2293 = vadd.f32 0.0, %v2292
        %v2294 = vpop.f32.mrf.mxu0
        %v2295 = vadd.f32 0.0, %v2294
        %2296 = vmatmul.bf16.gmra.mxu0 %v2172
        %v2297 = vpop.f32.mrf.mxu0
        %v2298 = vadd.f32 0.0, %v2297
        %v2299 = vpop.f32.mrf.mxu0
        %v2300 = vadd.f32 0.0, %v2299
        %2301 = vmatmul.bf16.gmra.mxu0 %v2173
        %v2302 = vpop.f32.mrf.mxu0
        %v2303 = vadd.f32 0.0, %v2302
        %v2304 = vpop.f32.mrf.mxu0
        %v2305 = vadd.f32 0.0, %v2304
        %2306 = vmatmul.bf16.gmra.mxu0 %v2174
        %v2307 = vpop.f32.mrf.mxu0
        %v2308 = vadd.f32 0.0, %v2307
        %v2309 = vpop.f32.mrf.mxu0
        %v2310 = vadd.f32 0.0, %v2309
        %2311 = vmatmul.bf16.gmra.mxu0 %v2175
        %v2312 = vpop.f32.mrf.mxu0
        %v2313 = vadd.f32 0.0, %v2312
        %v2314 = vpop.f32.mrf.mxu0
        %v2315 = vadd.f32 0.0, %v2314
        %2316 = vmatmul.bf16.gmra.mxu0 %v2176
        %v2317 = vpop.f32.mrf.mxu0
        %v2318 = vadd.f32 0.0, %v2317
        %v2319 = vpop.f32.mrf.mxu0
        %v2320 = vadd.f32 0.0, %v2319
        %2321 = vmatmul.bf16.gmra.mxu0 %v2177
        %v2322 = vpop.f32.mrf.mxu0
        %v2323 = vadd.f32 0.0, %v2322
        %v2324 = vpop.f32.mrf.mxu0
        %v2325 = vadd.f32 0.0, %v2324
        %2326 = vmatmul.bf16.gmra.mxu0 %v2178
        %v2327 = vpop.f32.mrf.mxu0
        %v2328 = vadd.f32 0.0, %v2327
        %v2329 = vpop.f32.mrf.mxu0
        %v2330 = vadd.f32 0.0, %v2329
        %2331 = vmatmul.bf16.gmra.mxu0 %v2179
        %v2332 = vpop.f32.mrf.mxu0
        %v2333 = vadd.f32 0.0, %v2332
        %v2334 = vpop.f32.mrf.mxu0
        %v2335 = vadd.f32 0.0, %v2334
        %2336 = vmatmul.bf16.gmra.mxu0 %v2180
        %v2337 = vpop.f32.mrf.mxu0
        %v2338 = vadd.f32 0.0, %v2337
        %v2339 = vpop.f32.mrf.mxu0
        %v2340 = vadd.f32 0.0, %v2339
        %2341 = vmatmul.bf16.gmra.mxu0 %v2181
        %v2342 = vpop.f32.mrf.mxu0
        %v2343 = vadd.f32 0.0, %v2342
        %v2344 = vpop.f32.mrf.mxu0
        %v2345 = vadd.f32 0.0, %v2344
        %2346 = vmatmul.bf16.gmra.mxu0 %v2182
        %v2347 = vpop.f32.mrf.mxu0
        %v2348 = vadd.f32 0.0, %v2347
        %v2349 = vpop.f32.mrf.mxu0
        %v2350 = vadd.f32 0.0, %v2349
        %2351 = vmatmul.bf16.gmra.mxu0 %v2183
        %v2352 = vpop.f32.mrf.mxu0
        %v2353 = vadd.f32 0.0, %v2352
        %v2354 = vpop.f32.mrf.mxu0
        %v2355 = vadd.f32 0.0, %v2354
        %2356 = vmatmul.bf16.gmra.mxu0 %v2184
        %v2357 = vpop.f32.mrf.mxu0
        %v2358 = vadd.f32 0.0, %v2357
        %v2359 = vpop.f32.mrf.mxu0
        %v2360 = vadd.f32 0.0, %v2359
        %2361 = vmatmul.bf16.gmra.mxu0 %v2185
        %v2362 = vpop.f32.mrf.mxu0
        %v2363 = vadd.f32 0.0, %v2362
        %v2364 = vpop.f32.mrf.mxu0
        %v2365 = vadd.f32 0.0, %v2364
        %2366 = vmatmul.bf16.gmra.mxu0 %v2186
        %v2367 = vpop.f32.mrf.mxu0
        %v2368 = vadd.f32 0.0, %v2367
        %v2369 = vpop.f32.mrf.mxu0
        %v2370 = vadd.f32 0.0, %v2369
        %2371 = vmatmul.bf16.gmra.mxu0 %v2187
        %v2372 = vpop.f32.mrf.mxu0
        %v2373 = vadd.f32 0.0, %v2372
        %v2374 = vpop.f32.mrf.mxu0
        %v2375 = vadd.f32 0.0, %v2374
        %2376 = vmatmul.bf16.gmra.mxu0 %v2188
        %v2377 = vpop.f32.mrf.mxu0
        %v2378 = vadd.f32 0.0, %v2377
        %v2379 = vpop.f32.mrf.mxu0
        %v2380 = vadd.f32 0.0, %v2379
        %2381 = vmatmul.bf16.gmra.mxu0 %v2189
        %v2382 = vpop.f32.mrf.mxu0
        %v2383 = vadd.f32 0.0, %v2382
        %v2384 = vpop.f32.mrf.mxu0
        %v2385 = vadd.f32 0.0, %v2384
        %2386 = vmatmul.bf16.gmra.mxu0 %v2190
        %v2387 = vpop.f32.mrf.mxu0
        %v2388 = vadd.f32 0.0, %v2387
        %v2389 = vpop.f32.mrf.mxu0
        %v2390 = vadd.f32 0.0, %v2389
        %2391 = vmatmul.bf16.gmra.mxu0 %v2191
        %v2392 = vpop.f32.mrf.mxu0
        %v2393 = vadd.f32 0.0, %v2392
        %v2394 = vpop.f32.mrf.mxu0
        %v2395 = vadd.f32 0.0, %v2394
        %2396 = vmatmul.bf16.gmra.mxu0 %v2192
        %v2397 = vpop.f32.mrf.mxu0
        %v2398 = vadd.f32 0.0, %v2397
        %v2399 = vpop.f32.mrf.mxu0
        %v2400 = vadd.f32 0.0, %v2399
        %2401 = vmatmul.bf16.gmra.mxu0 %v2193
        %v2402 = vpop.f32.mrf.mxu0
        %v2403 = vadd.f32 0.0, %v2402
        %v2404 = vpop.f32.mrf.mxu0
        %v2405 = vadd.f32 0.0, %v2404
        %2406 = vmatmul.bf16.gmra.mxu0 %v2194
        %v2407 = vpop.f32.mrf.mxu0
        %v2408 = vadd.f32 0.0, %v2407
        %v2409 = vpop.f32.mrf.mxu0
        %v2410 = vadd.f32 0.0, %v2409
        %2411 = vdwg.mxu0
        %v2428 = vunpack.c.l.b16 %v362
        %v2429 = vunpack.c.l.b16 %v363
        %v2430 = vunpack.c.l.b16 %v364
        %v2431 = vunpack.c.l.b16 %v365
        %v2432 = vunpack.c.l.b16 %v366
        %v2433 = vunpack.c.l.b16 %v367
        %v2434 = vunpack.c.l.b16 %v368
        %v2435 = vunpack.c.l.b16 %v369
        %v2436 = vunpack.c.l.b16 %v370
        %v2437 = vunpack.c.l.b16 %v371
        %v2438 = vunpack.c.l.b16 %v372
        %v2439 = vunpack.c.l.b16 %v373
        %v2440 = vunpack.c.l.b16 %v374
        %v2441 = vunpack.c.l.b16 %v375
        %v2442 = vunpack.c.l.b16 %v376
        %v2443 = vunpack.c.l.b16 %v377
        %v2444 = vpack.c.b16 %v2429, %v2428
        %v2445 = vpack.c.b16 %v2431, %v2430
        %v2446 = vpack.c.b16 %v2433, %v2432
        %v2447 = vpack.c.b16 %v2435, %v2434
        %v2448 = vpack.c.b16 %v2437, %v2436
        %v2449 = vpack.c.b16 %v2439, %v2438
        %v2450 = vpack.c.b16 %v2441, %v2440
        %v2451 = vpack.c.b16 %v2443, %v2442
        %2460 = vmatpush.bf16.msra.mxu0 %v2451
        %2461 = vmatpush.bf16.msra.mxu0 %v2450
        %2462 = vmatpush.bf16.msra.mxu0 %v2449
        %2463 = vmatpush.bf16.msra.mxu0 %v2448
        %2464 = vmatpush.bf16.msra.mxu0 %v2447
        %2465 = vmatpush.bf16.msra.mxu0 %v2446
        %2466 = vmatpush.bf16.msra.mxu0 %v2445
        %2467 = vmatpush.bf16.msra.mxu0 %v2444
        %2468 = vmatmul.bf16.gmra.mxu0 %v2131
        %v2469 = vpop.f32.mrf.mxu0
        %v2470 = vadd.f32 %v2253, %v2469
        %v2471 = vpop.f32.mrf.mxu0
        %v2472 = vadd.f32 %v2255, %v2471
        %2473 = vmatmul.bf16.gmra.mxu0 %v2132
        %v2474 = vpop.f32.mrf.mxu0
        %v2475 = vadd.f32 %v2258, %v2474
        %v2476 = vpop.f32.mrf.mxu0
        %v2477 = vadd.f32 %v2260, %v2476
        %2478 = vmatmul.bf16.gmra.mxu0 %v2133
        %v2479 = vpop.f32.mrf.mxu0
        %v2480 = vadd.f32 %v2263, %v2479
        %v2481 = vpop.f32.mrf.mxu0
        %v2482 = vadd.f32 %v2265, %v2481
        %2483 = vmatmul.bf16.gmra.mxu0 %v2134
        %v2484 = vpop.f32.mrf.mxu0
        %v2485 = vadd.f32 %v2268, %v2484
        %v2486 = vpop.f32.mrf.mxu0
        %v2487 = vadd.f32 %v2270, %v2486
        %2488 = vmatmul.bf16.gmra.mxu0 %v2135
        %v2489 = vpop.f32.mrf.mxu0
        %v2490 = vadd.f32 %v2273, %v2489
        %v2491 = vpop.f32.mrf.mxu0
        %v2492 = vadd.f32 %v2275, %v2491
        %2493 = vmatmul.bf16.gmra.mxu0 %v2136
        %v2494 = vpop.f32.mrf.mxu0
        %v2495 = vadd.f32 %v2278, %v2494
        %v2496 = vpop.f32.mrf.mxu0
        %v2497 = vadd.f32 %v2280, %v2496
        %2498 = vmatmul.bf16.gmra.mxu0 %v2137
        %v2499 = vpop.f32.mrf.mxu0
        %v2500 = vadd.f32 %v2283, %v2499
        %v2501 = vpop.f32.mrf.mxu0
        %v2502 = vadd.f32 %v2285, %v2501
        %2503 = vmatmul.bf16.gmra.mxu0 %v2138
        %v2504 = vpop.f32.mrf.mxu0
        %v2505 = vadd.f32 %v2288, %v2504
        %v2506 = vpop.f32.mrf.mxu0
        %v2507 = vadd.f32 %v2290, %v2506
        %2508 = vmatmul.bf16.gmra.mxu0 %v2139
        %v2509 = vpop.f32.mrf.mxu0
        %v2510 = vadd.f32 %v2293, %v2509
        %v2511 = vpop.f32.mrf.mxu0
        %v2512 = vadd.f32 %v2295, %v2511
        %2513 = vmatmul.bf16.gmra.mxu0 %v2140
        %v2514 = vpop.f32.mrf.mxu0
        %v2515 = vadd.f32 %v2298, %v2514
        %v2516 = vpop.f32.mrf.mxu0
        %v2517 = vadd.f32 %v2300, %v2516
        %2518 = vmatmul.bf16.gmra.mxu0 %v2141
        %v2519 = vpop.f32.mrf.mxu0
        %v2520 = vadd.f32 %v2303, %v2519
        %v2521 = vpop.f32.mrf.mxu0
        %v2522 = vadd.f32 %v2305, %v2521
        %2523 = vmatmul.bf16.gmra.mxu0 %v2142
        %v2524 = vpop.f32.mrf.mxu0
        %v2525 = vadd.f32 %v2308, %v2524
        %v2526 = vpop.f32.mrf.mxu0
        %v2527 = vadd.f32 %v2310, %v2526
        %2528 = vmatmul.bf16.gmra.mxu0 %v2143
        %v2529 = vpop.f32.mrf.mxu0
        %v2530 = vadd.f32 %v2313, %v2529
        %v2531 = vpop.f32.mrf.mxu0
        %v2532 = vadd.f32 %v2315, %v2531
        %2533 = vmatmul.bf16.gmra.mxu0 %v2144
        %v2534 = vpop.f32.mrf.mxu0
        %v2535 = vadd.f32 %v2318, %v2534
        %v2536 = vpop.f32.mrf.mxu0
        %v2537 = vadd.f32 %v2320, %v2536
        %2538 = vmatmul.bf16.gmra.mxu0 %v2145
        %v2539 = vpop.f32.mrf.mxu0
        %v2540 = vadd.f32 %v2323, %v2539
        %v2541 = vpop.f32.mrf.mxu0
        %v2542 = vadd.f32 %v2325, %v2541
        %2543 = vmatmul.bf16.gmra.mxu0 %v2146
        %v2544 = vpop.f32.mrf.mxu0
        %v2545 = vadd.f32 %v2328, %v2544
        %v2546 = vpop.f32.mrf.mxu0
        %v2547 = vadd.f32 %v2330, %v2546
        %2548 = vmatmul.bf16.gmra.mxu0 %v2147
        %v2549 = vpop.f32.mrf.mxu0
        %v2550 = vadd.f32 %v2333, %v2549
        %v2551 = vpop.f32.mrf.mxu0
        %v2552 = vadd.f32 %v2335, %v2551
        %2553 = vmatmul.bf16.gmra.mxu0 %v2148
        %v2554 = vpop.f32.mrf.mxu0
        %v2555 = vadd.f32 %v2338, %v2554
        %v2556 = vpop.f32.mrf.mxu0
        %v2557 = vadd.f32 %v2340, %v2556
        %2558 = vmatmul.bf16.gmra.mxu0 %v2149
        %v2559 = vpop.f32.mrf.mxu0
        %v2560 = vadd.f32 %v2343, %v2559
        %v2561 = vpop.f32.mrf.mxu0
        %v2562 = vadd.f32 %v2345, %v2561
        %2563 = vmatmul.bf16.gmra.mxu0 %v2150
        %v2564 = vpop.f32.mrf.mxu0
        %v2565 = vadd.f32 %v2348, %v2564
        %v2566 = vpop.f32.mrf.mxu0
        %v2567 = vadd.f32 %v2350, %v2566
        %2568 = vmatmul.bf16.gmra.mxu0 %v2151
        %v2569 = vpop.f32.mrf.mxu0
        %v2570 = vadd.f32 %v2353, %v2569
        %v2571 = vpop.f32.mrf.mxu0
        %v2572 = vadd.f32 %v2355, %v2571
        %2573 = vmatmul.bf16.gmra.mxu0 %v2152
        %v2574 = vpop.f32.mrf.mxu0
        %v2575 = vadd.f32 %v2358, %v2574
        %v2576 = vpop.f32.mrf.mxu0
        %v2577 = vadd.f32 %v2360, %v2576
        %2578 = vmatmul.bf16.gmra.mxu0 %v2153
        %v2579 = vpop.f32.mrf.mxu0
        %v2580 = vadd.f32 %v2363, %v2579
        %v2581 = vpop.f32.mrf.mxu0
        %v2582 = vadd.f32 %v2365, %v2581
        %2583 = vmatmul.bf16.gmra.mxu0 %v2154
        %v2584 = vpop.f32.mrf.mxu0
        %v2585 = vadd.f32 %v2368, %v2584
        %v2586 = vpop.f32.mrf.mxu0
        %v2587 = vadd.f32 %v2370, %v2586
        %2588 = vmatmul.bf16.gmra.mxu0 %v2155
        %v2589 = vpop.f32.mrf.mxu0
        %v2590 = vadd.f32 %v2373, %v2589
        %v2591 = vpop.f32.mrf.mxu0
        %v2592 = vadd.f32 %v2375, %v2591
        %2593 = vmatmul.bf16.gmra.mxu0 %v2156
        %v2594 = vpop.f32.mrf.mxu0
        %v2595 = vadd.f32 %v2378, %v2594
        %v2596 = vpop.f32.mrf.mxu0
        %v2597 = vadd.f32 %v2380, %v2596
        %2598 = vmatmul.bf16.gmra.mxu0 %v2157
        %v2599 = vpop.f32.mrf.mxu0
        %v2600 = vadd.f32 %v2383, %v2599
        %v2601 = vpop.f32.mrf.mxu0
        %v2602 = vadd.f32 %v2385, %v2601
        %2603 = vmatmul.bf16.gmra.mxu0 %v2158
        %v2604 = vpop.f32.mrf.mxu0
        %v2605 = vadd.f32 %v2388, %v2604
        %v2606 = vpop.f32.mrf.mxu0
        %v2607 = vadd.f32 %v2390, %v2606
        %2608 = vmatmul.bf16.gmra.mxu0 %v2159
        %v2609 = vpop.f32.mrf.mxu0
        %v2610 = vadd.f32 %v2393, %v2609
        %v2611 = vpop.f32.mrf.mxu0
        %v2612 = vadd.f32 %v2395, %v2611
        %2613 = vmatmul.bf16.gmra.mxu0 %v2160
        %v2614 = vpop.f32.mrf.mxu0
        %v2615 = vadd.f32 %v2398, %v2614
        %v2616 = vpop.f32.mrf.mxu0
        %v2617 = vadd.f32 %v2400, %v2616
        %2618 = vmatmul.bf16.gmra.mxu0 %v2161
        %v2619 = vpop.f32.mrf.mxu0
        %v2620 = vadd.f32 %v2403, %v2619
        %v2621 = vpop.f32.mrf.mxu0
        %v2622 = vadd.f32 %v2405, %v2621
        %2623 = vmatmul.bf16.gmra.mxu0 %v2162
        %v2624 = vpop.f32.mrf.mxu0
        %v2625 = vadd.f32 %v2408, %v2624
        %v2626 = vpop.f32.mrf.mxu0
        %v2627 = vadd.f32 %v2410, %v2626
        %2628 = vdwg.mxu0
        %v2629 = vpack.c.bf16 %v2068, %v2067
        %v2630 = vpack.c.bf16 %v2070, %v2069
        %v2631 = vpack.c.bf16 %v2072, %v2071
        %v2632 = vpack.c.bf16 %v2074, %v2073
        %v2633 = vpack.c.bf16 %v2076, %v2075
        %v2634 = vpack.c.bf16 %v2078, %v2077
        %v2635 = vpack.c.bf16 %v2080, %v2079
        %v2636 = vpack.c.bf16 %v2082, %v2081
        %v2637 = vpack.c.bf16 %v2084, %v2083
        %v2638 = vpack.c.bf16 %v2086, %v2085
        %v2639 = vpack.c.bf16 %v2088, %v2087
        %v2640 = vpack.c.bf16 %v2090, %v2089
        %v2641 = vpack.c.bf16 %v2092, %v2091
        %v2642 = vpack.c.bf16 %v2094, %v2093
        %v2643 = vpack.c.bf16 %v2096, %v2095
        %v2644 = vpack.c.bf16 %v2098, %v2097
        %v2645 = vpack.c.bf16 %v2100, %v2099
        %v2646 = vpack.c.bf16 %v2102, %v2101
        %v2647 = vpack.c.bf16 %v2104, %v2103
        %v2648 = vpack.c.bf16 %v2106, %v2105
        %v2649 = vpack.c.bf16 %v2108, %v2107
        %v2650 = vpack.c.bf16 %v2110, %v2109
        %v2651 = vpack.c.bf16 %v2112, %v2111
        %v2652 = vpack.c.bf16 %v2114, %v2113
        %v2653 = vpack.c.bf16 %v2116, %v2115
        %v2654 = vpack.c.bf16 %v2118, %v2117
        %v2655 = vpack.c.bf16 %v2120, %v2119
        %v2656 = vpack.c.bf16 %v2122, %v2121
        %v2657 = vpack.c.bf16 %v2124, %v2123
        %v2658 = vpack.c.bf16 %v2126, %v2125
        %v2659 = vpack.c.bf16 %v2128, %v2127
        %v2660 = vpack.c.bf16 %v2130, %v2129
        %v2677 = vunpack.c.l.b16 %v396
        %v2678 = vunpack.c.l.b16 %v397
        %v2679 = vunpack.c.l.b16 %v398
        %v2680 = vunpack.c.l.b16 %v399
        %v2681 = vunpack.c.l.b16 %v400
        %v2682 = vunpack.c.l.b16 %v401
        %v2683 = vunpack.c.l.b16 %v402
        %v2684 = vunpack.c.l.b16 %v403
        %v2685 = vunpack.c.l.b16 %v404
        %v2686 = vunpack.c.l.b16 %v405
        %v2687 = vunpack.c.l.b16 %v406
        %v2688 = vunpack.c.l.b16 %v407
        %v2689 = vunpack.c.l.b16 %v408
        %v2690 = vunpack.c.l.b16 %v409
        %v2691 = vunpack.c.l.b16 %v410
        %v2692 = vunpack.c.l.b16 %v411
        %v2693 = vpack.c.b16 %v2678, %v2677
        %v2694 = vpack.c.b16 %v2680, %v2679
        %v2695 = vpack.c.b16 %v2682, %v2681
        %v2696 = vpack.c.b16 %v2684, %v2683
        %v2697 = vpack.c.b16 %v2686, %v2685
        %v2698 = vpack.c.b16 %v2688, %v2687
        %v2699 = vpack.c.b16 %v2690, %v2689
        %v2700 = vpack.c.b16 %v2692, %v2691
        %2709 = vmatpush.bf16.msra.mxu0 %v2700
        %2710 = vmatpush.bf16.msra.mxu0 %v2699
        %2711 = vmatpush.bf16.msra.mxu0 %v2698
        %2712 = vmatpush.bf16.msra.mxu0 %v2697
        %2713 = vmatpush.bf16.msra.mxu0 %v2696
        %2714 = vmatpush.bf16.msra.mxu0 %v2695
        %2715 = vmatpush.bf16.msra.mxu0 %v2694
        %2716 = vmatpush.bf16.msra.mxu0 %v2693
        %2717 = vmatmul.bf16.gmra.mxu0 %v2629
        %v2718 = vpop.f32.mrf.mxu0
        %v2719 = vadd.f32 0.0, %v2718
        %v2720 = vpop.f32.mrf.mxu0
        %v2721 = vadd.f32 0.0, %v2720
        %2722 = vmatmul.bf16.gmra.mxu0 %v2630
        %v2723 = vpop.f32.mrf.mxu0
        %v2724 = vadd.f32 0.0, %v2723
        %v2725 = vpop.f32.mrf.mxu0
        %v2726 = vadd.f32 0.0, %v2725
        %2727 = vmatmul.bf16.gmra.mxu0 %v2631
        %v2728 = vpop.f32.mrf.mxu0
        %v2729 = vadd.f32 0.0, %v2728
        %v2730 = vpop.f32.mrf.mxu0
        %v2731 = vadd.f32 0.0, %v2730
        %2732 = vmatmul.bf16.gmra.mxu0 %v2632
        %v2733 = vpop.f32.mrf.mxu0
        %v2734 = vadd.f32 0.0, %v2733
        %v2735 = vpop.f32.mrf.mxu0
        %v2736 = vadd.f32 0.0, %v2735
        %2737 = vmatmul.bf16.gmra.mxu0 %v2633
        %v2738 = vpop.f32.mrf.mxu0
        %v2739 = vadd.f32 0.0, %v2738
        %v2740 = vpop.f32.mrf.mxu0
        %v2741 = vadd.f32 0.0, %v2740
        %2742 = vmatmul.bf16.gmra.mxu0 %v2634
        %v2743 = vpop.f32.mrf.mxu0
        %v2744 = vadd.f32 0.0, %v2743
        %v2745 = vpop.f32.mrf.mxu0
        %v2746 = vadd.f32 0.0, %v2745
        %2747 = vmatmul.bf16.gmra.mxu0 %v2635
        %v2748 = vpop.f32.mrf.mxu0
        %v2749 = vadd.f32 0.0, %v2748
        %v2750 = vpop.f32.mrf.mxu0
        %v2751 = vadd.f32 0.0, %v2750
        %2752 = vmatmul.bf16.gmra.mxu0 %v2636
        %v2753 = vpop.f32.mrf.mxu0
        %v2754 = vadd.f32 0.0, %v2753
        %v2755 = vpop.f32.mrf.mxu0
        %v2756 = vadd.f32 0.0, %v2755
        %2757 = vmatmul.bf16.gmra.mxu0 %v2637
        %v2758 = vpop.f32.mrf.mxu0
        %v2759 = vadd.f32 0.0, %v2758
        %v2760 = vpop.f32.mrf.mxu0
        %v2761 = vadd.f32 0.0, %v2760
        %2762 = vmatmul.bf16.gmra.mxu0 %v2638
        %v2763 = vpop.f32.mrf.mxu0
        %v2764 = vadd.f32 0.0, %v2763
        %v2765 = vpop.f32.mrf.mxu0
        %v2766 = vadd.f32 0.0, %v2765
        %2767 = vmatmul.bf16.gmra.mxu0 %v2639
        %v2768 = vpop.f32.mrf.mxu0
        %v2769 = vadd.f32 0.0, %v2768
        %v2770 = vpop.f32.mrf.mxu0
        %v2771 = vadd.f32 0.0, %v2770
        %2772 = vmatmul.bf16.gmra.mxu0 %v2640
        %v2773 = vpop.f32.mrf.mxu0
        %v2774 = vadd.f32 0.0, %v2773
        %v2775 = vpop.f32.mrf.mxu0
        %v2776 = vadd.f32 0.0, %v2775
        %2777 = vmatmul.bf16.gmra.mxu0 %v2641
        %v2778 = vpop.f32.mrf.mxu0
        %v2779 = vadd.f32 0.0, %v2778
        %v2780 = vpop.f32.mrf.mxu0
        %v2781 = vadd.f32 0.0, %v2780
        %2782 = vmatmul.bf16.gmra.mxu0 %v2642
        %v2783 = vpop.f32.mrf.mxu0
        %v2784 = vadd.f32 0.0, %v2783
        %v2785 = vpop.f32.mrf.mxu0
        %v2786 = vadd.f32 0.0, %v2785
        %2787 = vmatmul.bf16.gmra.mxu0 %v2643
        %v2788 = vpop.f32.mrf.mxu0
        %v2789 = vadd.f32 0.0, %v2788
        %v2790 = vpop.f32.mrf.mxu0
        %v2791 = vadd.f32 0.0, %v2790
        %2792 = vmatmul.bf16.gmra.mxu0 %v2644
        %v2793 = vpop.f32.mrf.mxu0
        %v2794 = vadd.f32 0.0, %v2793
        %v2795 = vpop.f32.mrf.mxu0
        %v2796 = vadd.f32 0.0, %v2795
        %2797 = vmatmul.bf16.gmra.mxu0 %v2645
        %v2798 = vpop.f32.mrf.mxu0
        %v2799 = vadd.f32 0.0, %v2798
        %v2800 = vpop.f32.mrf.mxu0
        %v2801 = vadd.f32 0.0, %v2800
        %2802 = vmatmul.bf16.gmra.mxu0 %v2646
        %v2803 = vpop.f32.mrf.mxu0
        %v2804 = vadd.f32 0.0, %v2803
        %v2805 = vpop.f32.mrf.mxu0
        %v2806 = vadd.f32 0.0, %v2805
        %2807 = vmatmul.bf16.gmra.mxu0 %v2647
        %v2808 = vpop.f32.mrf.mxu0
        %v2809 = vadd.f32 0.0, %v2808
        %v2810 = vpop.f32.mrf.mxu0
        %v2811 = vadd.f32 0.0, %v2810
        %2812 = vmatmul.bf16.gmra.mxu0 %v2648
        %v2813 = vpop.f32.mrf.mxu0
        %v2814 = vadd.f32 0.0, %v2813
        %v2815 = vpop.f32.mrf.mxu0
        %v2816 = vadd.f32 0.0, %v2815
        %2817 = vmatmul.bf16.gmra.mxu0 %v2649
        %v2818 = vpop.f32.mrf.mxu0
        %v2819 = vadd.f32 0.0, %v2818
        %v2820 = vpop.f32.mrf.mxu0
        %v2821 = vadd.f32 0.0, %v2820
        %2822 = vmatmul.bf16.gmra.mxu0 %v2650
        %v2823 = vpop.f32.mrf.mxu0
        %v2824 = vadd.f32 0.0, %v2823
        %v2825 = vpop.f32.mrf.mxu0
        %v2826 = vadd.f32 0.0, %v2825
        %2827 = vmatmul.bf16.gmra.mxu0 %v2651
        %v2828 = vpop.f32.mrf.mxu0
        %v2829 = vadd.f32 0.0, %v2828
        %v2830 = vpop.f32.mrf.mxu0
        %v2831 = vadd.f32 0.0, %v2830
        %2832 = vmatmul.bf16.gmra.mxu0 %v2652
        %v2833 = vpop.f32.mrf.mxu0
        %v2834 = vadd.f32 0.0, %v2833
        %v2835 = vpop.f32.mrf.mxu0
        %v2836 = vadd.f32 0.0, %v2835
        %2837 = vmatmul.bf16.gmra.mxu0 %v2653
        %v2838 = vpop.f32.mrf.mxu0
        %v2839 = vadd.f32 0.0, %v2838
        %v2840 = vpop.f32.mrf.mxu0
        %v2841 = vadd.f32 0.0, %v2840
        %2842 = vmatmul.bf16.gmra.mxu0 %v2654
        %v2843 = vpop.f32.mrf.mxu0
        %v2844 = vadd.f32 0.0, %v2843
        %v2845 = vpop.f32.mrf.mxu0
        %v2846 = vadd.f32 0.0, %v2845
        %2847 = vmatmul.bf16.gmra.mxu0 %v2655
        %v2848 = vpop.f32.mrf.mxu0
        %v2849 = vadd.f32 0.0, %v2848
        %v2850 = vpop.f32.mrf.mxu0
        %v2851 = vadd.f32 0.0, %v2850
        %2852 = vmatmul.bf16.gmra.mxu0 %v2656
        %v2853 = vpop.f32.mrf.mxu0
        %v2854 = vadd.f32 0.0, %v2853
        %v2855 = vpop.f32.mrf.mxu0
        %v2856 = vadd.f32 0.0, %v2855
        %2857 = vmatmul.bf16.gmra.mxu0 %v2657
        %v2858 = vpop.f32.mrf.mxu0
        %v2859 = vadd.f32 0.0, %v2858
        %v2860 = vpop.f32.mrf.mxu0
        %v2861 = vadd.f32 0.0, %v2860
        %2862 = vmatmul.bf16.gmra.mxu0 %v2658
        %v2863 = vpop.f32.mrf.mxu0
        %v2864 = vadd.f32 0.0, %v2863
        %v2865 = vpop.f32.mrf.mxu0
        %v2866 = vadd.f32 0.0, %v2865
        %2867 = vmatmul.bf16.gmra.mxu0 %v2659
        %v2868 = vpop.f32.mrf.mxu0
        %v2869 = vadd.f32 0.0, %v2868
        %v2870 = vpop.f32.mrf.mxu0
        %v2871 = vadd.f32 0.0, %v2870
        %2872 = vmatmul.bf16.gmra.mxu0 %v2660
        %v2873 = vpop.f32.mrf.mxu0
        %v2874 = vadd.f32 0.0, %v2873
        %v2875 = vpop.f32.mrf.mxu0
        %v2876 = vadd.f32 0.0, %v2875
        %2877 = vdwg.mxu0
        %v2878 = vadd.f32 %v2470, %v2719
        %v2879 = vadd.f32 %v2472, %v2721
        %v2880 = vadd.f32 %v2475, %v2724
        %v2881 = vadd.f32 %v2477, %v2726
        %v2882 = vadd.f32 %v2480, %v2729
        %v2883 = vadd.f32 %v2482, %v2731
        %v2884 = vadd.f32 %v2485, %v2734
        %v2885 = vadd.f32 %v2487, %v2736
        %v2886 = vadd.f32 %v2490, %v2739
        %v2887 = vadd.f32 %v2492, %v2741
        %v2888 = vadd.f32 %v2495, %v2744
        %v2889 = vadd.f32 %v2497, %v2746
        %v2890 = vadd.f32 %v2500, %v2749
        %v2891 = vadd.f32 %v2502, %v2751
        %v2892 = vadd.f32 %v2505, %v2754
        %v2893 = vadd.f32 %v2507, %v2756
        %v2894 = vadd.f32 %v2510, %v2759
        %v2895 = vadd.f32 %v2512, %v2761
        %v2896 = vadd.f32 %v2515, %v2764
        %v2897 = vadd.f32 %v2517, %v2766
        %v2898 = vadd.f32 %v2520, %v2769
        %v2899 = vadd.f32 %v2522, %v2771
        %v2900 = vadd.f32 %v2525, %v2774
        %v2901 = vadd.f32 %v2527, %v2776
        %v2902 = vadd.f32 %v2530, %v2779
        %v2903 = vadd.f32 %v2532, %v2781
        %v2904 = vadd.f32 %v2535, %v2784
        %v2905 = vadd.f32 %v2537, %v2786
        %v2906 = vadd.f32 %v2540, %v2789
        %v2907 = vadd.f32 %v2542, %v2791
        %v2908 = vadd.f32 %v2545, %v2794
        %v2909 = vadd.f32 %v2547, %v2796
        %v2910 = vadd.f32 %v2550, %v2799
        %v2911 = vadd.f32 %v2552, %v2801
        %v2912 = vadd.f32 %v2555, %v2804
        %v2913 = vadd.f32 %v2557, %v2806
        %v2914 = vadd.f32 %v2560, %v2809
        %v2915 = vadd.f32 %v2562, %v2811
        %v2916 = vadd.f32 %v2565, %v2814
        %v2917 = vadd.f32 %v2567, %v2816
        %v2918 = vadd.f32 %v2570, %v2819
        %v2919 = vadd.f32 %v2572, %v2821
        %v2920 = vadd.f32 %v2575, %v2824
        %v2921 = vadd.f32 %v2577, %v2826
        %v2922 = vadd.f32 %v2580, %v2829
        %v2923 = vadd.f32 %v2582, %v2831
        %v2924 = vadd.f32 %v2585, %v2834
        %v2925 = vadd.f32 %v2587, %v2836
        %v2926 = vadd.f32 %v2590, %v2839
        %v2927 = vadd.f32 %v2592, %v2841
        %v2928 = vadd.f32 %v2595, %v2844
        %v2929 = vadd.f32 %v2597, %v2846
        %v2930 = vadd.f32 %v2600, %v2849
        %v2931 = vadd.f32 %v2602, %v2851
        %v2932 = vadd.f32 %v2605, %v2854
        %v2933 = vadd.f32 %v2607, %v2856
        %v2934 = vadd.f32 %v2610, %v2859
        %v2935 = vadd.f32 %v2612, %v2861
        %v2936 = vadd.f32 %v2615, %v2864
        %v2937 = vadd.f32 %v2617, %v2866
        %v2938 = vadd.f32 %v2620, %v2869
        %v2939 = vadd.f32 %v2622, %v2871
        %v2940 = vadd.f32 %v2625, %v2874
        %v2941 = vadd.f32 %v2627, %v2876
        %v2943 = vperm.slane %v462, 0
        %v2945 = vadd.f32 %v2878, %v2943
        %v2946 = vadd.f32 %v2879, %v2943
        %v2947 = vadd.f32 %v2880, %v2943
        %v2948 = vadd.f32 %v2881, %v2943
        %v2949 = vadd.f32 %v2882, %v2943
        %v2950 = vadd.f32 %v2883, %v2943
        %v2951 = vadd.f32 %v2884, %v2943
        %v2952 = vadd.f32 %v2885, %v2943
        %v2953 = vadd.f32 %v2886, %v2943
        %v2954 = vadd.f32 %v2887, %v2943
        %v2955 = vadd.f32 %v2888, %v2943
        %v2956 = vadd.f32 %v2889, %v2943
        %v2957 = vadd.f32 %v2890, %v2943
        %v2958 = vadd.f32 %v2891, %v2943
        %v2959 = vadd.f32 %v2892, %v2943
        %v2960 = vadd.f32 %v2893, %v2943
        %v2961 = vadd.f32 %v2894, %v2943
        %v2962 = vadd.f32 %v2895, %v2943
        %v2963 = vadd.f32 %v2896, %v2943
        %v2964 = vadd.f32 %v2897, %v2943
        %v2965 = vadd.f32 %v2898, %v2943
        %v2966 = vadd.f32 %v2899, %v2943
        %v2967 = vadd.f32 %v2900, %v2943
        %v2968 = vadd.f32 %v2901, %v2943
        %v2969 = vadd.f32 %v2902, %v2943
        %v2970 = vadd.f32 %v2903, %v2943
        %v2971 = vadd.f32 %v2904, %v2943
        %v2972 = vadd.f32 %v2905, %v2943
        %v2973 = vadd.f32 %v2906, %v2943
        %v2974 = vadd.f32 %v2907, %v2943
        %v2975 = vadd.f32 %v2908, %v2943
        %v2976 = vadd.f32 %v2909, %v2943
        %v2977 = vadd.f32 %v2910, %v2943
        %v2978 = vadd.f32 %v2911, %v2943
        %v2979 = vadd.f32 %v2912, %v2943
        %v2980 = vadd.f32 %v2913, %v2943
        %v2981 = vadd.f32 %v2914, %v2943
        %v2982 = vadd.f32 %v2915, %v2943
        %v2983 = vadd.f32 %v2916, %v2943
        %v2984 = vadd.f32 %v2917, %v2943
        %v2985 = vadd.f32 %v2918, %v2943
        %v2986 = vadd.f32 %v2919, %v2943
        %v2987 = vadd.f32 %v2920, %v2943
        %v2988 = vadd.f32 %v2921, %v2943
        %v2989 = vadd.f32 %v2922, %v2943
        %v2990 = vadd.f32 %v2923, %v2943
        %v2991 = vadd.f32 %v2924, %v2943
        %v2992 = vadd.f32 %v2925, %v2943
        %v2993 = vadd.f32 %v2926, %v2943
        %v2994 = vadd.f32 %v2927, %v2943
        %v2995 = vadd.f32 %v2928, %v2943
        %v2996 = vadd.f32 %v2929, %v2943
        %v2997 = vadd.f32 %v2930, %v2943
        %v2998 = vadd.f32 %v2931, %v2943
        %v2999 = vadd.f32 %v2932, %v2943
        %v3000 = vadd.f32 %v2933, %v2943
        %v3001 = vadd.f32 %v2934, %v2943
        %v3002 = vadd.f32 %v2935, %v2943
        %v3003 = vadd.f32 %v2936, %v2943
        %v3004 = vadd.f32 %v2937, %v2943
        %v3005 = vadd.f32 %v2938, %v2943
        %v3006 = vadd.f32 %v2939, %v2943
        %v3007 = vadd.f32 %v2940, %v2943
        %v3008 = vadd.f32 %v2941, %v2943
        %3009 = vst [vmem:[#allocation4] sm:$0xff] %v2945
        %3010 = vst [vmem:[#allocation4 + $0x8] sm:$0xff] %v2946
        %3011 = vst [vmem:[#allocation4 + $0x10] sm:$0xff] %v2947
        %3012 = vst [vmem:[#allocation4 + $0x18] sm:$0xff] %v2948
        %3013 = vst [vmem:[#allocation4 + $0x20] sm:$0xff] %v2949
        %3014 = vst [vmem:[#allocation4 + $0x28] sm:$0xff] %v2950
        %3015 = vst [vmem:[#allocation4 + $0x30] sm:$0xff] %v2951
        %3016 = vst [vmem:[#allocation4 + $0x38] sm:$0xff] %v2952
        %3017 = vst [vmem:[#allocation4 + $0x40] sm:$0xff] %v2953
        %3018 = vst [vmem:[#allocation4 + $0x48] sm:$0xff] %v2954
        %3019 = vst [vmem:[#allocation4 + $0x50] sm:$0xff] %v2955
        %3020 = vst [vmem:[#allocation4 + $0x58] sm:$0xff] %v2956
        %3021 = vst [vmem:[#allocation4 + $0x60] sm:$0xff] %v2957
        %3022 = vst [vmem:[#allocation4 + $0x68] sm:$0xff] %v2958
        %3023 = vst [vmem:[#allocation4 + $0x70] sm:$0xff] %v2959
        %3024 = vst [vmem:[#allocation4 + $0x78] sm:$0xff] %v2960
        %3025 = vst [vmem:[#allocation4 + $0x80] sm:$0xff] %v2961
        %3026 = vst [vmem:[#allocation4 + $0x88] sm:$0xff] %v2962
        %3027 = vst [vmem:[#allocation4 + $0x90] sm:$0xff] %v2963
        %3028 = vst [vmem:[#allocation4 + $0x98] sm:$0xff] %v2964
        %3029 = vst [vmem:[#allocation4 + $0xa0] sm:$0xff] %v2965
        %3030 = vst [vmem:[#allocation4 + $0xa8] sm:$0xff] %v2966
        %3031 = vst [vmem:[#allocation4 + $0xb0] sm:$0xff] %v2967
        %3032 = vst [vmem:[#allocation4 + $0xb8] sm:$0xff] %v2968
        %3033 = vst [vmem:[#allocation4 + $0xc0] sm:$0xff] %v2969
        %3034 = vst [vmem:[#allocation4 + $0xc8] sm:$0xff] %v2970
        %3035 = vst [vmem:[#allocation4 + $0xd0] sm:$0xff] %v2971
        %3036 = vst [vmem:[#allocation4 + $0xd8] sm:$0xff] %v2972
        %3037 = vst [vmem:[#allocation4 + $0xe0] sm:$0xff] %v2973
        %3038 = vst [vmem:[#allocation4 + $0xe8] sm:$0xff] %v2974
        %3039 = vst [vmem:[#allocation4 + $0xf0] sm:$0xff] %v2975
        %3040 = vst [vmem:[#allocation4 + $0xf8] sm:$0xff] %v2976
        %3041 = vst [vmem:[#allocation4 + $0x100] sm:$0xff] %v2977
        %3042 = vst [vmem:[#allocation4 + $0x108] sm:$0xff] %v2978
        %3043 = vst [vmem:[#allocation4 + $0x110] sm:$0xff] %v2979
        %3044 = vst [vmem:[#allocation4 + $0x118] sm:$0xff] %v2980
        %3045 = vst [vmem:[#allocation4 + $0x120] sm:$0xff] %v2981
        %3046 = vst [vmem:[#allocation4 + $0x128] sm:$0xff] %v2982
        %3047 = vst [vmem:[#allocation4 + $0x130] sm:$0xff] %v2983
        %3048 = vst [vmem:[#allocation4 + $0x138] sm:$0xff] %v2984
        %3049 = vst [vmem:[#allocation4 + $0x140] sm:$0xff] %v2985
        %3050 = vst [vmem:[#allocation4 + $0x148] sm:$0xff] %v2986
        %3051 = vst [vmem:[#allocation4 + $0x150] sm:$0xff] %v2987
        %3052 = vst [vmem:[#allocation4 + $0x158] sm:$0xff] %v2988
        %3053 = vst [vmem:[#allocation4 + $0x160] sm:$0xff] %v2989
        %3054 = vst [vmem:[#allocation4 + $0x168] sm:$0xff] %v2990
        %3055 = vst [vmem:[#allocation4 + $0x170] sm:$0xff] %v2991
        %3056 = vst [vmem:[#allocation4 + $0x178] sm:$0xff] %v2992
        %3057 = vst [vmem:[#allocation4 + $0x180] sm:$0xff] %v2993
        %3058 = vst [vmem:[#allocation4 + $0x188] sm:$0xff] %v2994
        %3059 = vst [vmem:[#allocation4 + $0x190] sm:$0xff] %v2995
        %3060 = vst [vmem:[#allocation4 + $0x198] sm:$0xff] %v2996
        %3061 = vst [vmem:[#allocation4 + $0x1a0] sm:$0xff] %v2997
        %3062 = vst [vmem:[#allocation4 + $0x1a8] sm:$0xff] %v2998
        %3063 = vst [vmem:[#allocation4 + $0x1b0] sm:$0xff] %v2999
        %3064 = vst [vmem:[#allocation4 + $0x1b8] sm:$0xff] %v3000
        %3065 = vst [vmem:[#allocation4 + $0x1c0] sm:$0xff] %v3001
        %3066 = vst [vmem:[#allocation4 + $0x1c8] sm:$0xff] %v3002
        %3067 = vst [vmem:[#allocation4 + $0x1d0] sm:$0xff] %v3003
        %3068 = vst [vmem:[#allocation4 + $0x1d8] sm:$0xff] %v3004
        %3069 = vst [vmem:[#allocation4 + $0x1e0] sm:$0xff] %v3005
        %3070 = vst [vmem:[#allocation4 + $0x1e8] sm:$0xff] %v3006
        %3071 = vst [vmem:[#allocation4 + $0x1f0] sm:$0xff] %v3007
        %3072 = vst [vmem:[#allocation4 + $0x1f8] sm:$0xff] %v3008
        %v3073 = vld [vmem:[#allocation2] sm:$0xff]
        %v3074 = vld [vmem:[#allocation2 + $0x8] sm:$0xff]
        %v3075 = vld [vmem:[#allocation2 + $0x10] sm:$0xff]
        %v3076 = vld [vmem:[#allocation2 + $0x18] sm:$0xff]
        %v3077 = vld [vmem:[#allocation2 + $0x20] sm:$0xff]
        %v3078 = vld [vmem:[#allocation2 + $0x28] sm:$0xff]
        %v3079 = vld [vmem:[#allocation2 + $0x30] sm:$0xff]
        %v3080 = vld [vmem:[#allocation2 + $0x38] sm:$0xff]
        %v3081 = vld [vmem:[#allocation2 + $0x40] sm:$0xff]
        %v3082 = vld [vmem:[#allocation2 + $0x48] sm:$0xff]
        %v3083 = vld [vmem:[#allocation2 + $0x50] sm:$0xff]
        %v3084 = vld [vmem:[#allocation2 + $0x58] sm:$0xff]
        %v3085 = vld [vmem:[#allocation2 + $0x60] sm:$0xff]
        %v3086 = vld [vmem:[#allocation2 + $0x68] sm:$0xff]
        %v3087 = vld [vmem:[#allocation2 + $0x70] sm:$0xff]
        %v3088 = vld [vmem:[#allocation2 + $0x78] sm:$0xff]
        %v3089 = vld [vmem:[#allocation4] sm:$0xff]
        %v3090 = vld [vmem:[#allocation4 + $0x8] sm:$0xff]
        %v3091 = vld [vmem:[#allocation4 + $0x10] sm:$0xff]
        %v3092 = vld [vmem:[#allocation4 + $0x18] sm:$0xff]
        %v3093 = vld [vmem:[#allocation4 + $0x20] sm:$0xff]
        %v3094 = vld [vmem:[#allocation4 + $0x28] sm:$0xff]
        %v3095 = vld [vmem:[#allocation4 + $0x30] sm:$0xff]
        %v3096 = vld [vmem:[#allocation4 + $0x38] sm:$0xff]
        %v3097 = vld [vmem:[#allocation4 + $0x40] sm:$0xff]
        %v3098 = vld [vmem:[#allocation4 + $0x48] sm:$0xff]
        %v3099 = vld [vmem:[#allocation4 + $0x50] sm:$0xff]
        %v3100 = vld [vmem:[#allocation4 + $0x58] sm:$0xff]
        %v3101 = vld [vmem:[#allocation4 + $0x60] sm:$0xff]
        %v3102 = vld [vmem:[#allocation4 + $0x68] sm:$0xff]
        %v3103 = vld [vmem:[#allocation4 + $0x70] sm:$0xff]
        %v3104 = vld [vmem:[#allocation4 + $0x78] sm:$0xff]
        %v3105 = vadd.f32 %v3073, %v3089
        %v3106 = vadd.f32 %v3074, %v3090
        %v3107 = vadd.f32 %v3075, %v3091
        %v3108 = vadd.f32 %v3076, %v3092
        %v3109 = vadd.f32 %v3077, %v3093
        %v3110 = vadd.f32 %v3078, %v3094
        %v3111 = vadd.f32 %v3079, %v3095
        %v3112 = vadd.f32 %v3080, %v3096
        %v3113 = vadd.f32 %v3081, %v3097
        %v3114 = vadd.f32 %v3082, %v3098
        %v3115 = vadd.f32 %v3083, %v3099
        %v3116 = vadd.f32 %v3084, %v3100
        %v3117 = vadd.f32 %v3085, %v3101
        %v3118 = vadd.f32 %v3086, %v3102
        %v3119 = vadd.f32 %v3087, %v3103
        %v3120 = vadd.f32 %v3088, %v3104
        %vm3121 = vcmp.ge.f32.partialorder %v3105, 1.0
        %vm3122 = vcmp.ge.f32.partialorder %v3106, 1.0
        %vm3123 = vcmp.ge.f32.partialorder %v3107, 1.0
        %vm3124 = vcmp.ge.f32.partialorder %v3108, 1.0
        %vm3125 = vcmp.ge.f32.partialorder %v3109, 1.0
        %vm3126 = vcmp.ge.f32.partialorder %v3110, 1.0
        %vm3127 = vcmp.ge.f32.partialorder %v3111, 1.0
        %vm3128 = vcmp.ge.f32.partialorder %v3112, 1.0
        %vm3129 = vcmp.ge.f32.partialorder %v3113, 1.0
        %vm3130 = vcmp.ge.f32.partialorder %v3114, 1.0
        %vm3131 = vcmp.ge.f32.partialorder %v3115, 1.0
        %vm3132 = vcmp.ge.f32.partialorder %v3116, 1.0
        %vm3133 = vcmp.ge.f32.partialorder %v3117, 1.0
        %vm3134 = vcmp.ge.f32.partialorder %v3118, 1.0
        %vm3135 = vcmp.ge.f32.partialorder %v3119, 1.0
        %vm3136 = vcmp.ge.f32.partialorder %v3120, 1.0
        %v3137 = vsel %vm3121, 1.0, 0.0
        %v3138 = vsel %vm3122, 1.0, 0.0
        %v3139 = vsel %vm3123, 1.0, 0.0
        %v3140 = vsel %vm3124, 1.0, 0.0
        %v3141 = vsel %vm3125, 1.0, 0.0
        %v3142 = vsel %vm3126, 1.0, 0.0
        %v3143 = vsel %vm3127, 1.0, 0.0
        %v3144 = vsel %vm3128, 1.0, 0.0
        %v3145 = vsel %vm3129, 1.0, 0.0
        %v3146 = vsel %vm3130, 1.0, 0.0
        %v3147 = vsel %vm3131, 1.0, 0.0
        %v3148 = vsel %vm3132, 1.0, 0.0
        %v3149 = vsel %vm3133, 1.0, 0.0
        %v3150 = vsel %vm3134, 1.0, 0.0
        %v3151 = vsel %vm3135, 1.0, 0.0
        %v3152 = vsel %vm3136, 1.0, 0.0
        %v3153 = vsel %vm3121, 0.0, %v3105
        %v3154 = vsel %vm3122, 0.0, %v3106
        %v3155 = vsel %vm3123, 0.0, %v3107
        %v3156 = vsel %vm3124, 0.0, %v3108
        %v3157 = vsel %vm3125, 0.0, %v3109
        %v3158 = vsel %vm3126, 0.0, %v3110
        %v3159 = vsel %vm3127, 0.0, %v3111
        %v3160 = vsel %vm3128, 0.0, %v3112
        %v3161 = vsel %vm3129, 0.0, %v3113
        %v3162 = vsel %vm3130, 0.0, %v3114
        %v3163 = vsel %vm3131, 0.0, %v3115
        %v3164 = vsel %vm3132, 0.0, %v3116
        %v3165 = vsel %vm3133, 0.0, %v3117
        %v3166 = vsel %vm3134, 0.0, %v3118
        %v3167 = vsel %vm3135, 0.0, %v3119
        %v3168 = vsel %vm3136, 0.0, %v3120
        %3169 = vst [vmem:[#allocation2] sm:$0xff] %v3153
        %3170 = vst [vmem:[#allocation2 + $0x8] sm:$0xff] %v3154
        %3171 = vst [vmem:[#allocation2 + $0x10] sm:$0xff] %v3155
        %3172 = vst [vmem:[#allocation2 + $0x18] sm:$0xff] %v3156
        %3173 = vst [vmem:[#allocation2 + $0x20] sm:$0xff] %v3157
        %3174 = vst [vmem:[#allocation2 + $0x28] sm:$0xff] %v3158
        %3175 = vst [vmem:[#allocation2 + $0x30] sm:$0xff] %v3159
        %3176 = vst [vmem:[#allocation2 + $0x38] sm:$0xff] %v3160
        %3177 = vst [vmem:[#allocation2 + $0x40] sm:$0xff] %v3161
        %3178 = vst [vmem:[#allocation2 + $0x48] sm:$0xff] %v3162
        %3179 = vst [vmem:[#allocation2 + $0x50] sm:$0xff] %v3163
        %3180 = vst [vmem:[#allocation2 + $0x58] sm:$0xff] %v3164
        %3181 = vst [vmem:[#allocation2 + $0x60] sm:$0xff] %v3165
        %3182 = vst [vmem:[#allocation2 + $0x68] sm:$0xff] %v3166
        %3183 = vst [vmem:[#allocation2 + $0x70] sm:$0xff] %v3167
        %3184 = vst [vmem:[#allocation2 + $0x78] sm:$0xff] %v3168
        %v3185 = vrot.slane %v3137, 7
        %v3186 = vrot.slane %v3138, 7
        %v3187 = vrot.slane %v3139, 7
        %v3188 = vrot.slane %v3140, 7
        %v3189 = vrot.slane %v3141, 7
        %v3190 = vrot.slane %v3142, 7
        %v3191 = vrot.slane %v3143, 7
        %v3192 = vrot.slane %v3144, 7
        %v3193 = vrot.slane %v3145, 7
        %v3194 = vrot.slane %v3146, 7
        %v3195 = vrot.slane %v3147, 7
        %v3196 = vrot.slane %v3148, 7
        %v3197 = vrot.slane %v3149, 7
        %v3198 = vrot.slane %v3150, 7
        %v3199 = vrot.slane %v3151, 7
        %v3200 = vrot.slane %v3152, 7
        %v3201 = vsel %vm1553, %v3199, %v3200
        %v3202 = vsel %vm1553, %v3198, %v3199
        %v3203 = vsel %vm1553, %v3197, %v3198
        %v3204 = vsel %vm1553, %v3196, %v3197
        %v3205 = vsel %vm1553, %v3195, %v3196
        %v3206 = vsel %vm1553, %v3194, %v3195
        %v3207 = vsel %vm1553, %v3193, %v3194
        %v3208 = vsel %vm1553, %v3192, %v3193
        %v3209 = vsel %vm1553, %v3191, %v3192
        %v3210 = vsel %vm1553, %v3190, %v3191
        %v3211 = vsel %vm1553, %v3189, %v3190
        %v3212 = vsel %vm1553, %v3188, %v3189
        %v3213 = vsel %vm1553, %v3187, %v3188
        %v3214 = vsel %vm1553, %v3186, %v3187
        %v3215 = vsel %vm1553, %v3185, %v3186
        %v3216 = vsel %vm1553, %v3200, %v3185
        %v3217 = vsel %vm1682, 0.0, %v3216
        %v3218 = vsel %vm1683, 0.0, %v3215
        %v3219 = vsel %vm1684, 0.0, %v3214
        %v3220 = vsel %vm1685, 0.0, %v3213
        %v3221 = vsel %vm1686, 0.0, %v3212
        %v3222 = vsel %vm1687, 0.0, %v3211
        %v3223 = vsel %vm1688, 0.0, %v3210
        %v3224 = vsel %vm1689, 0.0, %v3209
        %v3225 = vsel %vm1690, 0.0, %v3208
        %v3226 = vsel %vm1691, 0.0, %v3207
        %v3227 = vsel %vm1692, 0.0, %v3206
        %v3228 = vsel %vm1693, 0.0, %v3205
        %v3229 = vsel %vm1694, 0.0, %v3204
        %v3230 = vsel %vm1695, 0.0, %v3203
        %v3231 = vsel %vm1696, 0.0, %v3202
        %v3232 = vsel %vm1697, 0.0, %v3201
        %v3233 = vrot.slane %v3137, 1
        %v3234 = vrot.slane %v3138, 1
        %v3235 = vrot.slane %v3139, 1
        %v3236 = vrot.slane %v3140, 1
        %v3237 = vrot.slane %v3141, 1
        %v3238 = vrot.slane %v3142, 1
        %v3239 = vrot.slane %v3143, 1
        %v3240 = vrot.slane %v3144, 1
        %v3241 = vrot.slane %v3145, 1
        %v3242 = vrot.slane %v3146, 1
        %v3243 = vrot.slane %v3147, 1
        %v3244 = vrot.slane %v3148, 1
        %v3245 = vrot.slane %v3149, 1
        %v3246 = vrot.slane %v3150, 1
        %v3247 = vrot.slane %v3151, 1
        %v3248 = vrot.slane %v3152, 1
        %v3249 = vsel %vm1874, %v3247, %v3248
        %v3250 = vsel %vm1874, %v3246, %v3247
        %v3251 = vsel %vm1874, %v3245, %v3246
        %v3252 = vsel %vm1874, %v3244, %v3245
        %v3253 = vsel %vm1874, %v3243, %v3244
        %v3254 = vsel %vm1874, %v3242, %v3243
        %v3255 = vsel %vm1874, %v3241, %v3242
        %v3256 = vsel %vm1874, %v3240, %v3241
        %v3257 = vsel %vm1874, %v3239, %v3240
        %v3258 = vsel %vm1874, %v3238, %v3239
        %v3259 = vsel %vm1874, %v3237, %v3238
        %v3260 = vsel %vm1874, %v3236, %v3237
        %v3261 = vsel %vm1874, %v3235, %v3236
        %v3262 = vsel %vm1874, %v3234, %v3235
        %v3263 = vsel %vm1874, %v3233, %v3234
        %v3264 = vsel %vm1874, %v3248, %v3233
        %v3265 = vsel %vm2003, 0.0, %v3263
        %v3266 = vsel %vm2004, 0.0, %v3262
        %v3267 = vsel %vm2005, 0.0, %v3261
        %v3268 = vsel %vm2006, 0.0, %v3260
        %v3269 = vsel %vm2007, 0.0, %v3259
        %v3270 = vsel %vm2008, 0.0, %v3258
        %v3271 = vsel %vm2009, 0.0, %v3257
        %v3272 = vsel %vm2010, 0.0, %v3256
        %v3273 = vsel %vm2011, 0.0, %v3255
        %v3274 = vsel %vm2012, 0.0, %v3254
        %v3275 = vsel %vm2013, 0.0, %v3253
        %v3276 = vsel %vm2014, 0.0, %v3252
        %v3277 = vsel %vm2015, 0.0, %v3251
        %v3278 = vsel %vm2016, 0.0, %v3250
        %v3279 = vsel %vm2017, 0.0, %v3249
        %v3280 = vsel %vm2018, 0.0, %v3264
        %v3281 = vld [vmem:[#allocation3] sm:$0xff]
        %v3282 = vld [vmem:[#allocation3 + $0x8] sm:$0xff]
        %v3283 = vld [vmem:[#allocation3 + $0x10] sm:$0xff]
        %v3284 = vld [vmem:[#allocation3 + $0x18] sm:$0xff]
        %v3285 = vld [vmem:[#allocation3 + $0x20] sm:$0xff]
        %v3286 = vld [vmem:[#allocation3 + $0x28] sm:$0xff]
        %v3287 = vld [vmem:[#allocation3 + $0x30] sm:$0xff]
        %v3288 = vld [vmem:[#allocation3 + $0x38] sm:$0xff]
        %v3289 = vld [vmem:[#allocation3 + $0x40] sm:$0xff]
        %v3290 = vld [vmem:[#allocation3 + $0x48] sm:$0xff]
        %v3291 = vld [vmem:[#allocation3 + $0x50] sm:$0xff]
        %v3292 = vld [vmem:[#allocation3 + $0x58] sm:$0xff]
        %v3293 = vld [vmem:[#allocation3 + $0x60] sm:$0xff]
        %v3294 = vld [vmem:[#allocation3 + $0x68] sm:$0xff]
        %v3295 = vld [vmem:[#allocation3 + $0x70] sm:$0xff]
        %v3296 = vld [vmem:[#allocation3 + $0x78] sm:$0xff]
        %v3297 = vpack.c.bf16 %v3218, %v3217
        %v3298 = vpack.c.bf16 %v3220, %v3219
        %v3299 = vpack.c.bf16 %v3222, %v3221
        %v3300 = vpack.c.bf16 %v3224, %v3223
        %v3301 = vpack.c.bf16 %v3226, %v3225
        %v3302 = vpack.c.bf16 %v3228, %v3227
        %v3303 = vpack.c.bf16 %v3230, %v3229
        %v3304 = vpack.c.bf16 %v3232, %v3231
        %v3305 = vpack.c.bf16 %v3138, %v3137
        %v3306 = vpack.c.bf16 %v3140, %v3139
        %v3307 = vpack.c.bf16 %v3142, %v3141
        %v3308 = vpack.c.bf16 %v3144, %v3143
        %v3309 = vpack.c.bf16 %v3146, %v3145
        %v3310 = vpack.c.bf16 %v3148, %v3147
        %v3311 = vpack.c.bf16 %v3150, %v3149
        %v3312 = vpack.c.bf16 %v3152, %v3151
        %v3329 = vunpack.c.l.b16 %v429
        %v3330 = vunpack.c.l.b16 %v430
        %v3331 = vunpack.c.l.b16 %v431
        %v3332 = vunpack.c.l.b16 %v432
        %v3333 = vunpack.c.l.b16 %v433
        %v3334 = vunpack.c.l.b16 %v434
        %v3335 = vunpack.c.l.b16 %v435
        %v3336 = vunpack.c.l.b16 %v436
        %v3337 = vunpack.c.l.b16 %v437
        %v3338 = vunpack.c.l.b16 %v438
        %v3339 = vunpack.c.l.b16 %v439
        %v3340 = vunpack.c.l.b16 %v440
        %v3341 = vunpack.c.l.b16 %v441
        %v3342 = vunpack.c.l.b16 %v442
        %v3343 = vunpack.c.l.b16 %v443
        %v3344 = vunpack.c.l.b16 %v444
        %v3345 = vpack.c.b16 %v3330, %v3329
        %v3346 = vpack.c.b16 %v3332, %v3331
        %v3347 = vpack.c.b16 %v3334, %v3333
        %v3348 = vpack.c.b16 %v3336, %v3335
        %v3349 = vpack.c.b16 %v3338, %v3337
        %v3350 = vpack.c.b16 %v3340, %v3339
        %v3351 = vpack.c.b16 %v3342, %v3341
        %v3352 = vpack.c.b16 %v3344, %v3343
        %3361 = vmatpush.bf16.msra.mxu0 %v3352
        %3362 = vmatpush.bf16.msra.mxu0 %v3351
        %3363 = vmatpush.bf16.msra.mxu0 %v3350
        %3364 = vmatpush.bf16.msra.mxu0 %v3349
        %3365 = vmatpush.bf16.msra.mxu0 %v3348
        %3366 = vmatpush.bf16.msra.mxu0 %v3347
        %3367 = vmatpush.bf16.msra.mxu0 %v3346
        %3368 = vmatpush.bf16.msra.mxu0 %v3345
        %3369 = vmatmul.bf16.gmra.mxu0 %v3305
        %v3370 = vpop.f32.mrf.mxu0
        %v3371 = vadd.f32 0.0, %v3370
        %v3372 = vpop.f32.mrf.mxu0
        %v3373 = vadd.f32 0.0, %v3372
        %3374 = vmatmul.bf16.gmra.mxu0 %v3306
        %v3375 = vpop.f32.mrf.mxu0
        %v3376 = vadd.f32 0.0, %v3375
        %v3377 = vpop.f32.mrf.mxu0
        %v3378 = vadd.f32 0.0, %v3377
        %3379 = vmatmul.bf16.gmra.mxu0 %v3307
        %v3380 = vpop.f32.mrf.mxu0
        %v3381 = vadd.f32 0.0, %v3380
        %v3382 = vpop.f32.mrf.mxu0
        %v3383 = vadd.f32 0.0, %v3382
        %3384 = vmatmul.bf16.gmra.mxu0 %v3308
        %v3385 = vpop.f32.mrf.mxu0
        %v3386 = vadd.f32 0.0, %v3385
        %v3387 = vpop.f32.mrf.mxu0
        %v3388 = vadd.f32 0.0, %v3387
        %3389 = vmatmul.bf16.gmra.mxu0 %v3309
        %v3390 = vpop.f32.mrf.mxu0
        %v3391 = vadd.f32 0.0, %v3390
        %v3392 = vpop.f32.mrf.mxu0
        %v3393 = vadd.f32 0.0, %v3392
        %3394 = vmatmul.bf16.gmra.mxu0 %v3310
        %v3395 = vpop.f32.mrf.mxu0
        %v3396 = vadd.f32 0.0, %v3395
        %v3397 = vpop.f32.mrf.mxu0
        %v3398 = vadd.f32 0.0, %v3397
        %3399 = vmatmul.bf16.gmra.mxu0 %v3311
        %v3400 = vpop.f32.mrf.mxu0
        %v3401 = vadd.f32 0.0, %v3400
        %v3402 = vpop.f32.mrf.mxu0
        %v3403 = vadd.f32 0.0, %v3402
        %3404 = vmatmul.bf16.gmra.mxu0 %v3312
        %v3405 = vpop.f32.mrf.mxu0
        %v3406 = vadd.f32 0.0, %v3405
        %v3407 = vpop.f32.mrf.mxu0
        %v3408 = vadd.f32 0.0, %v3407
        %3409 = vdwg.mxu0
        %v3426 = vunpack.c.l.b16 %v412
        %v3427 = vunpack.c.l.b16 %v413
        %v3428 = vunpack.c.l.b16 %v414
        %v3429 = vunpack.c.l.b16 %v415
        %v3430 = vunpack.c.l.b16 %v416
        %v3431 = vunpack.c.l.b16 %v417
        %v3432 = vunpack.c.l.b16 %v418
        %v3433 = vunpack.c.l.b16 %v419
        %v3434 = vunpack.c.l.b16 %v420
        %v3435 = vunpack.c.l.b16 %v421
        %v3436 = vunpack.c.l.b16 %v422
        %v3437 = vunpack.c.l.b16 %v423
        %v3438 = vunpack.c.l.b16 %v424
        %v3439 = vunpack.c.l.b16 %v425
        %v3440 = vunpack.c.l.b16 %v426
        %v3441 = vunpack.c.l.b16 %v427
        %v3442 = vpack.c.b16 %v3427, %v3426
        %v3443 = vpack.c.b16 %v3429, %v3428
        %v3444 = vpack.c.b16 %v3431, %v3430
        %v3445 = vpack.c.b16 %v3433, %v3432
        %v3446 = vpack.c.b16 %v3435, %v3434
        %v3447 = vpack.c.b16 %v3437, %v3436
        %v3448 = vpack.c.b16 %v3439, %v3438
        %v3449 = vpack.c.b16 %v3441, %v3440
        %3458 = vmatpush.bf16.msra.mxu0 %v3449
        %3459 = vmatpush.bf16.msra.mxu0 %v3448
        %3460 = vmatpush.bf16.msra.mxu0 %v3447
        %3461 = vmatpush.bf16.msra.mxu0 %v3446
        %3462 = vmatpush.bf16.msra.mxu0 %v3445
        %3463 = vmatpush.bf16.msra.mxu0 %v3444
        %3464 = vmatpush.bf16.msra.mxu0 %v3443
        %3465 = vmatpush.bf16.msra.mxu0 %v3442
        %3466 = vmatmul.bf16.gmra.mxu0 %v3297
        %v3467 = vpop.f32.mrf.mxu0
        %v3468 = vadd.f32 %v3371, %v3467
        %v3469 = vpop.f32.mrf.mxu0
        %v3470 = vadd.f32 %v3373, %v3469
        %3471 = vmatmul.bf16.gmra.mxu0 %v3298
        %v3472 = vpop.f32.mrf.mxu0
        %v3473 = vadd.f32 %v3376, %v3472
        %v3474 = vpop.f32.mrf.mxu0
        %v3475 = vadd.f32 %v3378, %v3474
        %3476 = vmatmul.bf16.gmra.mxu0 %v3299
        %v3477 = vpop.f32.mrf.mxu0
        %v3478 = vadd.f32 %v3381, %v3477
        %v3479 = vpop.f32.mrf.mxu0
        %v3480 = vadd.f32 %v3383, %v3479
        %3481 = vmatmul.bf16.gmra.mxu0 %v3300
        %v3482 = vpop.f32.mrf.mxu0
        %v3483 = vadd.f32 %v3386, %v3482
        %v3484 = vpop.f32.mrf.mxu0
        %v3485 = vadd.f32 %v3388, %v3484
        %3486 = vmatmul.bf16.gmra.mxu0 %v3301
        %v3487 = vpop.f32.mrf.mxu0
        %v3488 = vadd.f32 %v3391, %v3487
        %v3489 = vpop.f32.mrf.mxu0
        %v3490 = vadd.f32 %v3393, %v3489
        %3491 = vmatmul.bf16.gmra.mxu0 %v3302
        %v3492 = vpop.f32.mrf.mxu0
        %v3493 = vadd.f32 %v3396, %v3492
        %v3494 = vpop.f32.mrf.mxu0
        %v3495 = vadd.f32 %v3398, %v3494
        %3496 = vmatmul.bf16.gmra.mxu0 %v3303
        %v3497 = vpop.f32.mrf.mxu0
        %v3498 = vadd.f32 %v3401, %v3497
        %v3499 = vpop.f32.mrf.mxu0
        %v3500 = vadd.f32 %v3403, %v3499
        %3501 = vmatmul.bf16.gmra.mxu0 %v3304
        %v3502 = vpop.f32.mrf.mxu0
        %v3503 = vadd.f32 %v3406, %v3502
        %v3504 = vpop.f32.mrf.mxu0
        %v3505 = vadd.f32 %v3408, %v3504
        %3506 = vdwg.mxu0
        %v3507 = vpack.c.bf16 %v3266, %v3265
        %v3508 = vpack.c.bf16 %v3268, %v3267
        %v3509 = vpack.c.bf16 %v3270, %v3269
        %v3510 = vpack.c.bf16 %v3272, %v3271
        %v3511 = vpack.c.bf16 %v3274, %v3273
        %v3512 = vpack.c.bf16 %v3276, %v3275
        %v3513 = vpack.c.bf16 %v3278, %v3277
        %v3514 = vpack.c.bf16 %v3280, %v3279
        %v3531 = vunpack.c.l.b16 %v446
        %v3532 = vunpack.c.l.b16 %v447
        %v3533 = vunpack.c.l.b16 %v448
        %v3534 = vunpack.c.l.b16 %v449
        %v3535 = vunpack.c.l.b16 %v450
        %v3536 = vunpack.c.l.b16 %v451
        %v3537 = vunpack.c.l.b16 %v452
        %v3538 = vunpack.c.l.b16 %v453
        %v3539 = vunpack.c.l.b16 %v454
        %v3540 = vunpack.c.l.b16 %v455
        %v3541 = vunpack.c.l.b16 %v456
        %v3542 = vunpack.c.l.b16 %v457
        %v3543 = vunpack.c.l.b16 %v458
        %v3544 = vunpack.c.l.b16 %v459
        %v3545 = vunpack.c.l.b16 %v460
        %v3546 = vunpack.c.l.b16 %v461
        %v3547 = vpack.c.b16 %v3532, %v3531
        %v3548 = vpack.c.b16 %v3534, %v3533
        %v3549 = vpack.c.b16 %v3536, %v3535
        %v3550 = vpack.c.b16 %v3538, %v3537
        %v3551 = vpack.c.b16 %v3540, %v3539
        %v3552 = vpack.c.b16 %v3542, %v3541
        %v3553 = vpack.c.b16 %v3544, %v3543
        %v3554 = vpack.c.b16 %v3546, %v3545
        %3563 = vmatpush.bf16.msra.mxu0 %v3554
        %3564 = vmatpush.bf16.msra.mxu0 %v3553
        %3565 = vmatpush.bf16.msra.mxu0 %v3552
        %3566 = vmatpush.bf16.msra.mxu0 %v3551
        %3567 = vmatpush.bf16.msra.mxu0 %v3550
        %3568 = vmatpush.bf16.msra.mxu0 %v3549
        %3569 = vmatpush.bf16.msra.mxu0 %v3548
        %3570 = vmatpush.bf16.msra.mxu0 %v3547
        %3571 = vmatmul.bf16.gmra.mxu0 %v3507
        %v3572 = vpop.f32.mrf.mxu0
        %v3573 = vadd.f32 0.0, %v3572
        %v3574 = vpop.f32.mrf.mxu0
        %v3575 = vadd.f32 0.0, %v3574
        %3576 = vmatmul.bf16.gmra.mxu0 %v3508
        %v3577 = vpop.f32.mrf.mxu0
        %v3578 = vadd.f32 0.0, %v3577
        %v3579 = vpop.f32.mrf.mxu0
        %v3580 = vadd.f32 0.0, %v3579
        %3581 = vmatmul.bf16.gmra.mxu0 %v3509
        %v3582 = vpop.f32.mrf.mxu0
        %v3583 = vadd.f32 0.0, %v3582
        %v3584 = vpop.f32.mrf.mxu0
        %v3585 = vadd.f32 0.0, %v3584
        %3586 = vmatmul.bf16.gmra.mxu0 %v3510
        %v3587 = vpop.f32.mrf.mxu0
        %v3588 = vadd.f32 0.0, %v3587
        %v3589 = vpop.f32.mrf.mxu0
        %v3590 = vadd.f32 0.0, %v3589
        %3591 = vmatmul.bf16.gmra.mxu0 %v3511
        %v3592 = vpop.f32.mrf.mxu0
        %v3593 = vadd.f32 0.0, %v3592
        %v3594 = vpop.f32.mrf.mxu0
        %v3595 = vadd.f32 0.0, %v3594
        %3596 = vmatmul.bf16.gmra.mxu0 %v3512
        %v3597 = vpop.f32.mrf.mxu0
        %v3598 = vadd.f32 0.0, %v3597
        %v3599 = vpop.f32.mrf.mxu0
        %v3600 = vadd.f32 0.0, %v3599
        %3601 = vmatmul.bf16.gmra.mxu0 %v3513
        %v3602 = vpop.f32.mrf.mxu0
        %v3603 = vadd.f32 0.0, %v3602
        %v3604 = vpop.f32.mrf.mxu0
        %v3605 = vadd.f32 0.0, %v3604
        %3606 = vmatmul.bf16.gmra.mxu0 %v3514
        %v3607 = vpop.f32.mrf.mxu0
        %v3608 = vadd.f32 0.0, %v3607
        %v3609 = vpop.f32.mrf.mxu0
        %v3610 = vadd.f32 0.0, %v3609
        %3611 = vdwg.mxu0
        %v3612 = vadd.f32 %v3468, %v3573
        %v3613 = vadd.f32 %v3470, %v3575
        %v3614 = vadd.f32 %v3473, %v3578
        %v3615 = vadd.f32 %v3475, %v3580
        %v3616 = vadd.f32 %v3478, %v3583
        %v3617 = vadd.f32 %v3480, %v3585
        %v3618 = vadd.f32 %v3483, %v3588
        %v3619 = vadd.f32 %v3485, %v3590
        %v3620 = vadd.f32 %v3488, %v3593
        %v3621 = vadd.f32 %v3490, %v3595
        %v3622 = vadd.f32 %v3493, %v3598
        %v3623 = vadd.f32 %v3495, %v3600
        %v3624 = vadd.f32 %v3498, %v3603
        %v3625 = vadd.f32 %v3500, %v3605
        %v3626 = vadd.f32 %v3503, %v3608
        %v3627 = vadd.f32 %v3505, %v3610
        %v3629 = vperm.slane %v463, 0
        %v3631 = vadd.f32 %v3612, %v3629
        %v3632 = vadd.f32 %v3613, %v3629
        %v3633 = vadd.f32 %v3614, %v3629
        %v3634 = vadd.f32 %v3615, %v3629
        %v3635 = vadd.f32 %v3616, %v3629
        %v3636 = vadd.f32 %v3617, %v3629
        %v3637 = vadd.f32 %v3618, %v3629
        %v3638 = vadd.f32 %v3619, %v3629
        %v3639 = vadd.f32 %v3620, %v3629
        %v3640 = vadd.f32 %v3621, %v3629
        %v3641 = vadd.f32 %v3622, %v3629
        %v3642 = vadd.f32 %v3623, %v3629
        %v3643 = vadd.f32 %v3624, %v3629
        %v3644 = vadd.f32 %v3625, %v3629
        %v3645 = vadd.f32 %v3626, %v3629
        %v3646 = vadd.f32 %v3627, %v3629
        %v3647 = vadd.f32 %v3281, %v3631
        %v3648 = vadd.f32 %v3282, %v3632
        %v3649 = vadd.f32 %v3283, %v3633
        %v3650 = vadd.f32 %v3284, %v3634
        %v3651 = vadd.f32 %v3285, %v3635
        %v3652 = vadd.f32 %v3286, %v3636
        %v3653 = vadd.f32 %v3287, %v3637
        %v3654 = vadd.f32 %v3288, %v3638
        %v3655 = vadd.f32 %v3289, %v3639
        %v3656 = vadd.f32 %v3290, %v3640
        %v3657 = vadd.f32 %v3291, %v3641
        %v3658 = vadd.f32 %v3292, %v3642
        %v3659 = vadd.f32 %v3293, %v3643
        %v3660 = vadd.f32 %v3294, %v3644
        %v3661 = vadd.f32 %v3295, %v3645
        %v3662 = vadd.f32 %v3296, %v3646
        %vm3663 = vcmp.ge.f32.partialorder %v3647, 1.0
        %vm3664 = vcmp.ge.f32.partialorder %v3648, 1.0
        %vm3665 = vcmp.ge.f32.partialorder %v3649, 1.0
        %vm3666 = vcmp.ge.f32.partialorder %v3650, 1.0
        %vm3667 = vcmp.ge.f32.partialorder %v3651, 1.0
        %vm3668 = vcmp.ge.f32.partialorder %v3652, 1.0
        %vm3669 = vcmp.ge.f32.partialorder %v3653, 1.0
        %vm3670 = vcmp.ge.f32.partialorder %v3654, 1.0
        %vm3671 = vcmp.ge.f32.partialorder %v3655, 1.0
        %vm3672 = vcmp.ge.f32.partialorder %v3656, 1.0
        %vm3673 = vcmp.ge.f32.partialorder %v3657, 1.0
        %vm3674 = vcmp.ge.f32.partialorder %v3658, 1.0
        %vm3675 = vcmp.ge.f32.partialorder %v3659, 1.0
        %vm3676 = vcmp.ge.f32.partialorder %v3660, 1.0
        %vm3677 = vcmp.ge.f32.partialorder %v3661, 1.0
        %vm3678 = vcmp.ge.f32.partialorder %v3662, 1.0
        %v3679 = vsel %vm3663, 1.0, 0.0
        %v3680 = vsel %vm3664, 1.0, 0.0
        %v3681 = vsel %vm3665, 1.0, 0.0
        %v3682 = vsel %vm3666, 1.0, 0.0
        %v3683 = vsel %vm3667, 1.0, 0.0
        %v3684 = vsel %vm3668, 1.0, 0.0
        %v3685 = vsel %vm3669, 1.0, 0.0
        %v3686 = vsel %vm3670, 1.0, 0.0
        %v3687 = vsel %vm3671, 1.0, 0.0
        %v3688 = vsel %vm3672, 1.0, 0.0
        %v3689 = vsel %vm3673, 1.0, 0.0
        %v3690 = vsel %vm3674, 1.0, 0.0
        %v3691 = vsel %vm3675, 1.0, 0.0
        %v3692 = vsel %vm3676, 1.0, 0.0
        %v3693 = vsel %vm3677, 1.0, 0.0
        %v3694 = vsel %vm3678, 1.0, 0.0
        %v3695 = vsel %vm3663, 0.0, %v3647
        %v3696 = vsel %vm3664, 0.0, %v3648
        %v3697 = vsel %vm3665, 0.0, %v3649
        %v3698 = vsel %vm3666, 0.0, %v3650
        %v3699 = vsel %vm3667, 0.0, %v3651
        %v3700 = vsel %vm3668, 0.0, %v3652
        %v3701 = vsel %vm3669, 0.0, %v3653
        %v3702 = vsel %vm3670, 0.0, %v3654
        %v3703 = vsel %vm3671, 0.0, %v3655
        %v3704 = vsel %vm3672, 0.0, %v3656
        %v3705 = vsel %vm3673, 0.0, %v3657
        %v3706 = vsel %vm3674, 0.0, %v3658
        %v3707 = vsel %vm3675, 0.0, %v3659
        %v3708 = vsel %vm3676, 0.0, %v3660
        %v3709 = vsel %vm3677, 0.0, %v3661
        %v3710 = vsel %vm3678, 0.0, %v3662
        %3711 = vst [vmem:[#allocation3] sm:$0xff] %v3695
        %3712 = vst [vmem:[#allocation3 + $0x8] sm:$0xff] %v3696
        %3713 = vst [vmem:[#allocation3 + $0x10] sm:$0xff] %v3697
        %3714 = vst [vmem:[#allocation3 + $0x18] sm:$0xff] %v3698
        %3715 = vst [vmem:[#allocation3 + $0x20] sm:$0xff] %v3699
        %3716 = vst [vmem:[#allocation3 + $0x28] sm:$0xff] %v3700
        %3717 = vst [vmem:[#allocation3 + $0x30] sm:$0xff] %v3701
        %3718 = vst [vmem:[#allocation3 + $0x38] sm:$0xff] %v3702
        %3719 = vst [vmem:[#allocation3 + $0x40] sm:$0xff] %v3703
        %3720 = vst [vmem:[#allocation3 + $0x48] sm:$0xff] %v3704
        %3721 = vst [vmem:[#allocation3 + $0x50] sm:$0xff] %v3705
        %3722 = vst [vmem:[#allocation3 + $0x58] sm:$0xff] %v3706
        %3723 = vst [vmem:[#allocation3 + $0x60] sm:$0xff] %v3707
        %3724 = vst [vmem:[#allocation3 + $0x68] sm:$0xff] %v3708
        %3725 = vst [vmem:[#allocation3 + $0x70] sm:$0xff] %v3709
        %3726 = vst [vmem:[#allocation3 + $0x78] sm:$0xff] %v3710
        %v3727 = vld [vmem:[%s284] sm:$0xff]
        %v3728 = vld [vmem:[%s284 + $0x8] sm:$0xff]
        %v3729 = vld [vmem:[%s284 + $0x10] sm:$0xff]
        %v3730 = vld [vmem:[%s284 + $0x18] sm:$0xff]
        %v3731 = vld [vmem:[%s284 + $0x20] sm:$0xff]
        %v3732 = vld [vmem:[%s284 + $0x28] sm:$0xff]
        %v3733 = vld [vmem:[%s284 + $0x30] sm:$0xff]
        %v3734 = vld [vmem:[%s284 + $0x38] sm:$0xff]
        %v3735 = vld [vmem:[%s284 + $0x40] sm:$0xff]
        %v3736 = vld [vmem:[%s284 + $0x48] sm:$0xff]
        %v3737 = vld [vmem:[%s284 + $0x50] sm:$0xff]
        %v3738 = vld [vmem:[%s284 + $0x58] sm:$0xff]
        %v3739 = vld [vmem:[%s284 + $0x60] sm:$0xff]
        %v3740 = vld [vmem:[%s284 + $0x68] sm:$0xff]
        %v3741 = vld [vmem:[%s284 + $0x70] sm:$0xff]
        %v3742 = vld [vmem:[%s284 + $0x78] sm:$0xff]
        %v3743 = vadd.f32 %v3679, %v3727
        %v3744 = vadd.f32 %v3680, %v3728
        %v3745 = vadd.f32 %v3681, %v3729
        %v3746 = vadd.f32 %v3682, %v3730
        %v3747 = vadd.f32 %v3683, %v3731
        %v3748 = vadd.f32 %v3684, %v3732
        %v3749 = vadd.f32 %v3685, %v3733
        %v3750 = vadd.f32 %v3686, %v3734
        %v3751 = vadd.f32 %v3687, %v3735
        %v3752 = vadd.f32 %v3688, %v3736
        %v3753 = vadd.f32 %v3689, %v3737
        %v3754 = vadd.f32 %v3690, %v3738
        %v3755 = vadd.f32 %v3691, %v3739
        %v3756 = vadd.f32 %v3692, %v3740
        %v3757 = vadd.f32 %v3693, %v3741
        %v3758 = vadd.f32 %v3694, %v3742
        %3759 = vst [vmem:[%s321] sm:$0xff] %v3743
        %3760 = vst [vmem:[%s321 + $0x8] sm:$0xff] %v3744
        %3761 = vst [vmem:[%s321 + $0x10] sm:$0xff] %v3745
        %3762 = vst [vmem:[%s321 + $0x18] sm:$0xff] %v3746
        %3763 = vst [vmem:[%s321 + $0x20] sm:$0xff] %v3747
        %3764 = vst [vmem:[%s321 + $0x28] sm:$0xff] %v3748
        %3765 = vst [vmem:[%s321 + $0x30] sm:$0xff] %v3749
        %3766 = vst [vmem:[%s321 + $0x38] sm:$0xff] %v3750
        %3767 = vst [vmem:[%s321 + $0x40] sm:$0xff] %v3751
        %3768 = vst [vmem:[%s321 + $0x48] sm:$0xff] %v3752
        %3769 = vst [vmem:[%s321 + $0x50] sm:$0xff] %v3753
        %3770 = vst [vmem:[%s321 + $0x58] sm:$0xff] %v3754
        %3771 = vst [vmem:[%s321 + $0x60] sm:$0xff] %v3755
        %3772 = vst [vmem:[%s321 + $0x68] sm:$0xff] %v3756
        %3773 = vst [vmem:[%s321 + $0x70] sm:$0xff] %v3757
        %3774 = vst [vmem:[%s321 + $0x78] sm:$0xff] %v3758
        %v3775 = vld [vmem:[#allocation2] sm:$0xff]
        %v3776 = vld [vmem:[#allocation2 + $0x8] sm:$0xff]
        %v3777 = vld [vmem:[#allocation2 + $0x10] sm:$0xff]
        %v3778 = vld [vmem:[#allocation2 + $0x18] sm:$0xff]
        %v3779 = vld [vmem:[#allocation2 + $0x20] sm:$0xff]
        %v3780 = vld [vmem:[#allocation2 + $0x28] sm:$0xff]
        %v3781 = vld [vmem:[#allocation2 + $0x30] sm:$0xff]
        %v3782 = vld [vmem:[#allocation2 + $0x38] sm:$0xff]
        %v3783 = vld [vmem:[#allocation2 + $0x40] sm:$0xff]
        %v3784 = vld [vmem:[#allocation2 + $0x48] sm:$0xff]
        %v3785 = vld [vmem:[#allocation2 + $0x50] sm:$0xff]
        %v3786 = vld [vmem:[#allocation2 + $0x58] sm:$0xff]
        %v3787 = vld [vmem:[#allocation2 + $0x60] sm:$0xff]
        %v3788 = vld [vmem:[#allocation2 + $0x68] sm:$0xff]
        %v3789 = vld [vmem:[#allocation2 + $0x70] sm:$0xff]
        %v3790 = vld [vmem:[#allocation2 + $0x78] sm:$0xff]
        %s3791 = scalar_lea.vmem [#allocation4], 128
        %v3792 = vld [vmem:[%s3791] sm:$0xff]
        %v3793 = vld [vmem:[%s3791 + $0x8] sm:$0xff]
        %v3794 = vld [vmem:[%s3791 + $0x10] sm:$0xff]
        %v3795 = vld [vmem:[%s3791 + $0x18] sm:$0xff]
        %v3796 = vld [vmem:[%s3791 + $0x20] sm:$0xff]
        %v3797 = vld [vmem:[%s3791 + $0x28] sm:$0xff]
        %v3798 = vld [vmem:[%s3791 + $0x30] sm:$0xff]
        %v3799 = vld [vmem:[%s3791 + $0x38] sm:$0xff]
        %v3800 = vld [vmem:[%s3791 + $0x40] sm:$0xff]
        %v3801 = vld [vmem:[%s3791 + $0x48] sm:$0xff]
        %v3802 = vld [vmem:[%s3791 + $0x50] sm:$0xff]
        %v3803 = vld [vmem:[%s3791 + $0x58] sm:$0xff]
        %v3804 = vld [vmem:[%s3791 + $0x60] sm:$0xff]
        %v3805 = vld [vmem:[%s3791 + $0x68] sm:$0xff]
        %v3806 = vld [vmem:[%s3791 + $0x70] sm:$0xff]
        %v3807 = vld [vmem:[%s3791 + $0x78] sm:$0xff]
        %v3808 = vadd.f32 %v3775, %v3792
        %v3809 = vadd.f32 %v3776, %v3793
        %v3810 = vadd.f32 %v3777, %v3794
        %v3811 = vadd.f32 %v3778, %v3795
        %v3812 = vadd.f32 %v3779, %v3796
        %v3813 = vadd.f32 %v3780, %v3797
        %v3814 = vadd.f32 %v3781, %v3798
        %v3815 = vadd.f32 %v3782, %v3799
        %v3816 = vadd.f32 %v3783, %v3800
        %v3817 = vadd.f32 %v3784, %v3801
        %v3818 = vadd.f32 %v3785, %v3802
        %v3819 = vadd.f32 %v3786, %v3803
        %v3820 = vadd.f32 %v3787, %v3804
        %v3821 = vadd.f32 %v3788, %v3805
        %v3822 = vadd.f32 %v3789, %v3806
        %v3823 = vadd.f32 %v3790, %v3807
        %vm3824 = vcmp.ge.f32.partialorder %v3808, 1.0
        %vm3825 = vcmp.ge.f32.partialorder %v3809, 1.0
        %vm3826 = vcmp.ge.f32.partialorder %v3810, 1.0
        %vm3827 = vcmp.ge.f32.partialorder %v3811, 1.0
        %vm3828 = vcmp.ge.f32.partialorder %v3812, 1.0
        %vm3829 = vcmp.ge.f32.partialorder %v3813, 1.0
        %vm3830 = vcmp.ge.f32.partialorder %v3814, 1.0
        %vm3831 = vcmp.ge.f32.partialorder %v3815, 1.0
        %vm3832 = vcmp.ge.f32.partialorder %v3816, 1.0
        %vm3833 = vcmp.ge.f32.partialorder %v3817, 1.0
        %vm3834 = vcmp.ge.f32.partialorder %v3818, 1.0
        %vm3835 = vcmp.ge.f32.partialorder %v3819, 1.0
        %vm3836 = vcmp.ge.f32.partialorder %v3820, 1.0
        %vm3837 = vcmp.ge.f32.partialorder %v3821, 1.0
        %vm3838 = vcmp.ge.f32.partialorder %v3822, 1.0
        %vm3839 = vcmp.ge.f32.partialorder %v3823, 1.0
        %v3840 = vsel %vm3824, 1.0, 0.0
        %v3841 = vsel %vm3825, 1.0, 0.0
        %v3842 = vsel %vm3826, 1.0, 0.0
        %v3843 = vsel %vm3827, 1.0, 0.0
        %v3844 = vsel %vm3828, 1.0, 0.0
        %v3845 = vsel %vm3829, 1.0, 0.0
        %v3846 = vsel %vm3830, 1.0, 0.0
        %v3847 = vsel %vm3831, 1.0, 0.0
        %v3848 = vsel %vm3832, 1.0, 0.0
        %v3849 = vsel %vm3833, 1.0, 0.0
        %v3850 = vsel %vm3834, 1.0, 0.0
        %v3851 = vsel %vm3835, 1.0, 0.0
        %v3852 = vsel %vm3836, 1.0, 0.0
        %v3853 = vsel %vm3837, 1.0, 0.0
        %v3854 = vsel %vm3838, 1.0, 0.0
        %v3855 = vsel %vm3839, 1.0, 0.0
        %v3856 = vsel %vm3824, 0.0, %v3808
        %v3857 = vsel %vm3825, 0.0, %v3809
        %v3858 = vsel %vm3826, 0.0, %v3810
        %v3859 = vsel %vm3827, 0.0, %v3811
        %v3860 = vsel %vm3828, 0.0, %v3812
        %v3861 = vsel %vm3829, 0.0, %v3813
        %v3862 = vsel %vm3830, 0.0, %v3814
        %v3863 = vsel %vm3831, 0.0, %v3815
        %v3864 = vsel %vm3832, 0.0, %v3816
        %v3865 = vsel %vm3833, 0.0, %v3817
        %v3866 = vsel %vm3834, 0.0, %v3818
        %v3867 = vsel %vm3835, 0.0, %v3819
        %v3868 = vsel %vm3836, 0.0, %v3820
        %v3869 = vsel %vm3837, 0.0, %v3821
        %v3870 = vsel %vm3838, 0.0, %v3822
        %v3871 = vsel %vm3839, 0.0, %v3823
        %3872 = vst [vmem:[#allocation2] sm:$0xff] %v3856
        %3873 = vst [vmem:[#allocation2 + $0x8] sm:$0xff] %v3857
        %3874 = vst [vmem:[#allocation2 + $0x10] sm:$0xff] %v3858
        %3875 = vst [vmem:[#allocation2 + $0x18] sm:$0xff] %v3859
        %3876 = vst [vmem:[#allocation2 + $0x20] sm:$0xff] %v3860
        %3877 = vst [vmem:[#allocation2 + $0x28] sm:$0xff] %v3861
        %3878 = vst [vmem:[#allocation2 + $0x30] sm:$0xff] %v3862
        %3879 = vst [vmem:[#allocation2 + $0x38] sm:$0xff] %v3863
        %3880 = vst [vmem:[#allocation2 + $0x40] sm:$0xff] %v3864
        %3881 = vst [vmem:[#allocation2 + $0x48] sm:$0xff] %v3865
        %3882 = vst [vmem:[#allocation2 + $0x50] sm:$0xff] %v3866
        %3883 = vst [vmem:[#allocation2 + $0x58] sm:$0xff] %v3867
        %3884 = vst [vmem:[#allocation2 + $0x60] sm:$0xff] %v3868
        %3885 = vst [vmem:[#allocation2 + $0x68] sm:$0xff] %v3869
        %3886 = vst [vmem:[#allocation2 + $0x70] sm:$0xff] %v3870
        %3887 = vst [vmem:[#allocation2 + $0x78] sm:$0xff] %v3871
        %v3888 = vrot.slane %v3840, 7
        %v3889 = vrot.slane %v3841, 7
        %v3890 = vrot.slane %v3842, 7
        %v3891 = vrot.slane %v3843, 7
        %v3892 = vrot.slane %v3844, 7
        %v3893 = vrot.slane %v3845, 7
        %v3894 = vrot.slane %v3846, 7
        %v3895 = vrot.slane %v3847, 7
        %v3896 = vrot.slane %v3848, 7
        %v3897 = vrot.slane %v3849, 7
        %v3898 = vrot.slane %v3850, 7
        %v3899 = vrot.slane %v3851, 7
        %v3900 = vrot.slane %v3852, 7
        %v3901 = vrot.slane %v3853, 7
        %v3902 = vrot.slane %v3854, 7
        %v3903 = vrot.slane %v3855, 7
        %v3904 = vsel %vm1553, %v3902, %v3903
        %v3905 = vsel %vm1553, %v3901, %v3902
        %v3906 = vsel %vm1553, %v3900, %v3901
        %v3907 = vsel %vm1553, %v3899, %v3900
        %v3908 = vsel %vm1553, %v3898, %v3899
        %v3909 = vsel %vm1553, %v3897, %v3898
        %v3910 = vsel %vm1553, %v3896, %v3897
        %v3911 = vsel %vm1553, %v3895, %v3896
        %v3912 = vsel %vm1553, %v3894, %v3895
        %v3913 = vsel %vm1553, %v3893, %v3894
        %v3914 = vsel %vm1553, %v3892, %v3893
        %v3915 = vsel %vm1553, %v3891, %v3892
        %v3916 = vsel %vm1553, %v3890, %v3891
        %v3917 = vsel %vm1553, %v3889, %v3890
        %v3918 = vsel %vm1553, %v3888, %v3889
        %v3919 = vsel %vm1553, %v3903, %v3888
        %v3920 = vsel %vm1682, 0.0, %v3919
        %v3921 = vsel %vm1683, 0.0, %v3918
        %v3922 = vsel %vm1684, 0.0, %v3917
        %v3923 = vsel %vm1685, 0.0, %v3916
        %v3924 = vsel %vm1686, 0.0, %v3915
        %v3925 = vsel %vm1687, 0.0, %v3914
        %v3926 = vsel %vm1688, 0.0, %v3913
        %v3927 = vsel %vm1689, 0.0, %v3912
        %v3928 = vsel %vm1690, 0.0, %v3911
        %v3929 = vsel %vm1691, 0.0, %v3910
        %v3930 = vsel %vm1692, 0.0, %v3909
        %v3931 = vsel %vm1693, 0.0, %v3908
        %v3932 = vsel %vm1694, 0.0, %v3907
        %v3933 = vsel %vm1695, 0.0, %v3906
        %v3934 = vsel %vm1696, 0.0, %v3905
        %v3935 = vsel %vm1697, 0.0, %v3904
        %v3936 = vrot.slane %v3840, 1
        %v3937 = vrot.slane %v3841, 1
        %v3938 = vrot.slane %v3842, 1
        %v3939 = vrot.slane %v3843, 1
        %v3940 = vrot.slane %v3844, 1
        %v3941 = vrot.slane %v3845, 1
        %v3942 = vrot.slane %v3846, 1
        %v3943 = vrot.slane %v3847, 1
        %v3944 = vrot.slane %v3848, 1
        %v3945 = vrot.slane %v3849, 1
        %v3946 = vrot.slane %v3850, 1
        %v3947 = vrot.slane %v3851, 1
        %v3948 = vrot.slane %v3852, 1
        %v3949 = vrot.slane %v3853, 1
        %v3950 = vrot.slane %v3854, 1
        %v3951 = vrot.slane %v3855, 1
        %v3952 = vsel %vm1874, %v3950, %v3951
        %v3953 = vsel %vm1874, %v3949, %v3950
        %v3954 = vsel %vm1874, %v3948, %v3949
        %v3955 = vsel %vm1874, %v3947, %v3948
        %v3956 = vsel %vm1874, %v3946, %v3947
        %v3957 = vsel %vm1874, %v3945, %v3946
        %v3958 = vsel %vm1874, %v3944, %v3945
        %v3959 = vsel %vm1874, %v3943, %v3944
        %v3960 = vsel %vm1874, %v3942, %v3943
        %v3961 = vsel %vm1874, %v3941, %v3942
        %v3962 = vsel %vm1874, %v3940, %v3941
        %v3963 = vsel %vm1874, %v3939, %v3940
        %v3964 = vsel %vm1874, %v3938, %v3939
        %v3965 = vsel %vm1874, %v3937, %v3938
        %v3966 = vsel %vm1874, %v3936, %v3937
        %v3967 = vsel %vm1874, %v3951, %v3936
        %v3968 = vsel %vm2003, 0.0, %v3966
        %v3969 = vsel %vm2004, 0.0, %v3965
        %v3970 = vsel %vm2005, 0.0, %v3964
        %v3971 = vsel %vm2006, 0.0, %v3963
        %v3972 = vsel %vm2007, 0.0, %v3962
        %v3973 = vsel %vm2008, 0.0, %v3961
        %v3974 = vsel %vm2009, 0.0, %v3960
        %v3975 = vsel %vm2010, 0.0, %v3959
        %v3976 = vsel %vm2011, 0.0, %v3958
        %v3977 = vsel %vm2012, 0.0, %v3957
        %v3978 = vsel %vm2013, 0.0, %v3956
        %v3979 = vsel %vm2014, 0.0, %v3955
        %v3980 = vsel %vm2015, 0.0, %v3954
        %v3981 = vsel %vm2016, 0.0, %v3953
        %v3982 = vsel %vm2017, 0.0, %v3952
        %v3983 = vsel %vm2018, 0.0, %v3967
        %v3984 = vld [vmem:[#allocation3] sm:$0xff]
        %v3985 = vld [vmem:[#allocation3 + $0x8] sm:$0xff]
        %v3986 = vld [vmem:[#allocation3 + $0x10] sm:$0xff]
        %v3987 = vld [vmem:[#allocation3 + $0x18] sm:$0xff]
        %v3988 = vld [vmem:[#allocation3 + $0x20] sm:$0xff]
        %v3989 = vld [vmem:[#allocation3 + $0x28] sm:$0xff]
        %v3990 = vld [vmem:[#allocation3 + $0x30] sm:$0xff]
        %v3991 = vld [vmem:[#allocation3 + $0x38] sm:$0xff]
        %v3992 = vld [vmem:[#allocation3 + $0x40] sm:$0xff]
        %v3993 = vld [vmem:[#allocation3 + $0x48] sm:$0xff]
        %v3994 = vld [vmem:[#allocation3 + $0x50] sm:$0xff]
        %v3995 = vld [vmem:[#allocation3 + $0x58] sm:$0xff]
        %v3996 = vld [vmem:[#allocation3 + $0x60] sm:$0xff]
        %v3997 = vld [vmem:[#allocation3 + $0x68] sm:$0xff]
        %v3998 = vld [vmem:[#allocation3 + $0x70] sm:$0xff]
        %v3999 = vld [vmem:[#allocation3 + $0x78] sm:$0xff]
        %v4000 = vpack.c.bf16 %v3921, %v3920
        %v4001 = vpack.c.bf16 %v3923, %v3922
        %v4002 = vpack.c.bf16 %v3925, %v3924
        %v4003 = vpack.c.bf16 %v3927, %v3926
        %v4004 = vpack.c.bf16 %v3929, %v3928
        %v4005 = vpack.c.bf16 %v3931, %v3930
        %v4006 = vpack.c.bf16 %v3933, %v3932
        %v4007 = vpack.c.bf16 %v3935, %v3934
        %v4008 = vpack.c.bf16 %v3841, %v3840
        %v4009 = vpack.c.bf16 %v3843, %v3842
        %v4010 = vpack.c.bf16 %v3845, %v3844
        %v4011 = vpack.c.bf16 %v3847, %v3846
        %v4012 = vpack.c.bf16 %v3849, %v3848
        %v4013 = vpack.c.bf16 %v3851, %v3850
        %v4014 = vpack.c.bf16 %v3853, %v3852
        %v4015 = vpack.c.bf16 %v3855, %v3854
        %4016 = vmatpush.bf16.msra.mxu0 %v3352
        %4017 = vmatpush.bf16.msra.mxu0 %v3351
        %4018 = vmatpush.bf16.msra.mxu0 %v3350
        %4019 = vmatpush.bf16.msra.mxu0 %v3349
        %4020 = vmatpush.bf16.msra.mxu0 %v3348
        %4021 = vmatpush.bf16.msra.mxu0 %v3347
        %4022 = vmatpush.bf16.msra.mxu0 %v3346
        %4023 = vmatpush.bf16.msra.mxu0 %v3345
        %4024 = vmatmul.bf16.gmra.mxu0 %v4008
        %v4025 = vpop.f32.mrf.mxu0
        %v4026 = vadd.f32 0.0, %v4025
        %v4027 = vpop.f32.mrf.mxu0
        %v4028 = vadd.f32 0.0, %v4027
        %4029 = vmatmul.bf16.gmra.mxu0 %v4009
        %v4030 = vpop.f32.mrf.mxu0
        %v4031 = vadd.f32 0.0, %v4030
        %v4032 = vpop.f32.mrf.mxu0
        %v4033 = vadd.f32 0.0, %v4032
        %4034 = vmatmul.bf16.gmra.mxu0 %v4010
        %v4035 = vpop.f32.mrf.mxu0
        %v4036 = vadd.f32 0.0, %v4035
        %v4037 = vpop.f32.mrf.mxu0
        %v4038 = vadd.f32 0.0, %v4037
        %4039 = vmatmul.bf16.gmra.mxu0 %v4011
        %v4040 = vpop.f32.mrf.mxu0
        %v4041 = vadd.f32 0.0, %v4040
        %v4042 = vpop.f32.mrf.mxu0
        %v4043 = vadd.f32 0.0, %v4042
        %4044 = vmatmul.bf16.gmra.mxu0 %v4012
        %v4045 = vpop.f32.mrf.mxu0
        %v4046 = vadd.f32 0.0, %v4045
        %v4047 = vpop.f32.mrf.mxu0
        %v4048 = vadd.f32 0.0, %v4047
        %4049 = vmatmul.bf16.gmra.mxu0 %v4013
        %v4050 = vpop.f32.mrf.mxu0
        %v4051 = vadd.f32 0.0, %v4050
        %v4052 = vpop.f32.mrf.mxu0
        %v4053 = vadd.f32 0.0, %v4052
        %4054 = vmatmul.bf16.gmra.mxu0 %v4014
        %v4055 = vpop.f32.mrf.mxu0
        %v4056 = vadd.f32 0.0, %v4055
        %v4057 = vpop.f32.mrf.mxu0
        %v4058 = vadd.f32 0.0, %v4057
        %4059 = vmatmul.bf16.gmra.mxu0 %v4015
        %v4060 = vpop.f32.mrf.mxu0
        %v4061 = vadd.f32 0.0, %v4060
        %v4062 = vpop.f32.mrf.mxu0
        %v4063 = vadd.f32 0.0, %v4062
        %4064 = vdwg.mxu0
        %4065 = vmatpush.bf16.msra.mxu0 %v3449
        %4066 = vmatpush.bf16.msra.mxu0 %v3448
        %4067 = vmatpush.bf16.msra.mxu0 %v3447
        %4068 = vmatpush.bf16.msra.mxu0 %v3446
        %4069 = vmatpush.bf16.msra.mxu0 %v3445
        %4070 = vmatpush.bf16.msra.mxu0 %v3444
        %4071 = vmatpush.bf16.msra.mxu0 %v3443
        %4072 = vmatpush.bf16.msra.mxu0 %v3442
        %4073 = vmatmul.bf16.gmra.mxu0 %v4000
        %v4074 = vpop.f32.mrf.mxu0
        %v4075 = vadd.f32 %v4026, %v4074
        %v4076 = vpop.f32.mrf.mxu0
        %v4077 = vadd.f32 %v4028, %v4076
        %4078 = vmatmul.bf16.gmra.mxu0 %v4001
        %v4079 = vpop.f32.mrf.mxu0
        %v4080 = vadd.f32 %v4031, %v4079
        %v4081 = vpop.f32.mrf.mxu0
        %v4082 = vadd.f32 %v4033, %v4081
        %4083 = vmatmul.bf16.gmra.mxu0 %v4002
        %v4084 = vpop.f32.mrf.mxu0
        %v4085 = vadd.f32 %v4036, %v4084
        %v4086 = vpop.f32.mrf.mxu0
        %v4087 = vadd.f32 %v4038, %v4086
        %4088 = vmatmul.bf16.gmra.mxu0 %v4003
        %v4089 = vpop.f32.mrf.mxu0
        %v4090 = vadd.f32 %v4041, %v4089
        %v4091 = vpop.f32.mrf.mxu0
        %v4092 = vadd.f32 %v4043, %v4091
        %4093 = vmatmul.bf16.gmra.mxu0 %v4004
        %v4094 = vpop.f32.mrf.mxu0
        %v4095 = vadd.f32 %v4046, %v4094
        %v4096 = vpop.f32.mrf.mxu0
        %v4097 = vadd.f32 %v4048, %v4096
        %4098 = vmatmul.bf16.gmra.mxu0 %v4005
        %v4099 = vpop.f32.mrf.mxu0
        %v4100 = vadd.f32 %v4051, %v4099
        %v4101 = vpop.f32.mrf.mxu0
        %v4102 = vadd.f32 %v4053, %v4101
        %4103 = vmatmul.bf16.gmra.mxu0 %v4006
        %v4104 = vpop.f32.mrf.mxu0
        %v4105 = vadd.f32 %v4056, %v4104
        %v4106 = vpop.f32.mrf.mxu0
        %v4107 = vadd.f32 %v4058, %v4106
        %4108 = vmatmul.bf16.gmra.mxu0 %v4007
        %v4109 = vpop.f32.mrf.mxu0
        %v4110 = vadd.f32 %v4061, %v4109
        %v4111 = vpop.f32.mrf.mxu0
        %v4112 = vadd.f32 %v4063, %v4111
        %4113 = vdwg.mxu0
        %v4114 = vpack.c.bf16 %v3969, %v3968
        %v4115 = vpack.c.bf16 %v3971, %v3970
        %v4116 = vpack.c.bf16 %v3973, %v3972
        %v4117 = vpack.c.bf16 %v3975, %v3974
        %v4118 = vpack.c.bf16 %v3977, %v3976
        %v4119 = vpack.c.bf16 %v3979, %v3978
        %v4120 = vpack.c.bf16 %v3981, %v3980
        %v4121 = vpack.c.bf16 %v3983, %v3982
        %4122 = vmatpush.bf16.msra.mxu0 %v3554
        %4123 = vmatpush.bf16.msra.mxu0 %v3553
        %4124 = vmatpush.bf16.msra.mxu0 %v3552
        %4125 = vmatpush.bf16.msra.mxu0 %v3551
        %4126 = vmatpush.bf16.msra.mxu0 %v3550
        %4127 = vmatpush.bf16.msra.mxu0 %v3549
        %4128 = vmatpush.bf16.msra.mxu0 %v3548
        %4129 = vmatpush.bf16.msra.mxu0 %v3547
        %4130 = vmatmul.bf16.gmra.mxu0 %v4114
        %v4131 = vpop.f32.mrf.mxu0
        %v4132 = vadd.f32 0.0, %v4131
        %v4133 = vpop.f32.mrf.mxu0
        %v4134 = vadd.f32 0.0, %v4133
        %4135 = vmatmul.bf16.gmra.mxu0 %v4115
        %v4136 = vpop.f32.mrf.mxu0
        %v4137 = vadd.f32 0.0, %v4136
        %v4138 = vpop.f32.mrf.mxu0
        %v4139 = vadd.f32 0.0, %v4138
        %4140 = vmatmul.bf16.gmra.mxu0 %v4116
        %v4141 = vpop.f32.mrf.mxu0
        %v4142 = vadd.f32 0.0, %v4141
        %v4143 = vpop.f32.mrf.mxu0
        %v4144 = vadd.f32 0.0, %v4143
        %4145 = vmatmul.bf16.gmra.mxu0 %v4117
        %v4146 = vpop.f32.mrf.mxu0
        %v4147 = vadd.f32 0.0, %v4146
        %v4148 = vpop.f32.mrf.mxu0
        %v4149 = vadd.f32 0.0, %v4148
        %4150 = vmatmul.bf16.gmra.mxu0 %v4118
        %v4151 = vpop.f32.mrf.mxu0
        %v4152 = vadd.f32 0.0, %v4151
        %v4153 = vpop.f32.mrf.mxu0
        %v4154 = vadd.f32 0.0, %v4153
        %4155 = vmatmul.bf16.gmra.mxu0 %v4119
        %v4156 = vpop.f32.mrf.mxu0
        %v4157 = vadd.f32 0.0, %v4156
        %v4158 = vpop.f32.mrf.mxu0
        %v4159 = vadd.f32 0.0, %v4158
        %4160 = vmatmul.bf16.gmra.mxu0 %v4120
        %v4161 = vpop.f32.mrf.mxu0
        %v4162 = vadd.f32 0.0, %v4161
        %v4163 = vpop.f32.mrf.mxu0
        %v4164 = vadd.f32 0.0, %v4163
        %4165 = vmatmul.bf16.gmra.mxu0 %v4121
        %v4166 = vpop.f32.mrf.mxu0
        %v4167 = vadd.f32 0.0, %v4166
        %v4168 = vpop.f32.mrf.mxu0
        %v4169 = vadd.f32 0.0, %v4168
        %4170 = vdwg.mxu0
        %v4171 = vadd.f32 %v4075, %v4132
        %v4172 = vadd.f32 %v4077, %v4134
        %v4173 = vadd.f32 %v4080, %v4137
        %v4174 = vadd.f32 %v4082, %v4139
        %v4175 = vadd.f32 %v4085, %v4142
        %v4176 = vadd.f32 %v4087, %v4144
        %v4177 = vadd.f32 %v4090, %v4147
        %v4178 = vadd.f32 %v4092, %v4149
        %v4179 = vadd.f32 %v4095, %v4152
        %v4180 = vadd.f32 %v4097, %v4154
        %v4181 = vadd.f32 %v4100, %v4157
        %v4182 = vadd.f32 %v4102, %v4159
        %v4183 = vadd.f32 %v4105, %v4162
        %v4184 = vadd.f32 %v4107, %v4164
        %v4185 = vadd.f32 %v4110, %v4167
        %v4186 = vadd.f32 %v4112, %v4169
        %v4187 = vadd.f32 %v4171, %v3629
        %v4188 = vadd.f32 %v4172, %v3629
        %v4189 = vadd.f32 %v4173, %v3629
        %v4190 = vadd.f32 %v4174, %v3629
        %v4191 = vadd.f32 %v4175, %v3629
        %v4192 = vadd.f32 %v4176, %v3629
        %v4193 = vadd.f32 %v4177, %v3629
        %v4194 = vadd.f32 %v4178, %v3629
        %v4195 = vadd.f32 %v4179, %v3629
        %v4196 = vadd.f32 %v4180, %v3629
        %v4197 = vadd.f32 %v4181, %v3629
        %v4198 = vadd.f32 %v4182, %v3629
        %v4199 = vadd.f32 %v4183, %v3629
        %v4200 = vadd.f32 %v4184, %v3629
        %v4201 = vadd.f32 %v4185, %v3629
        %v4202 = vadd.f32 %v4186, %v3629
        %v4203 = vadd.f32 %v3984, %v4187
        %v4204 = vadd.f32 %v3985, %v4188
        %v4205 = vadd.f32 %v3986, %v4189
        %v4206 = vadd.f32 %v3987, %v4190
        %v4207 = vadd.f32 %v3988, %v4191
        %v4208 = vadd.f32 %v3989, %v4192
        %v4209 = vadd.f32 %v3990, %v4193
        %v4210 = vadd.f32 %v3991, %v4194
        %v4211 = vadd.f32 %v3992, %v4195
        %v4212 = vadd.f32 %v3993, %v4196
        %v4213 = vadd.f32 %v3994, %v4197
        %v4214 = vadd.f32 %v3995, %v4198
        %v4215 = vadd.f32 %v3996, %v4199
        %v4216 = vadd.f32 %v3997, %v4200
        %v4217 = vadd.f32 %v3998, %v4201
        %v4218 = vadd.f32 %v3999, %v4202
        %vm4219 = vcmp.ge.f32.partialorder %v4203, 1.0
        %vm4220 = vcmp.ge.f32.partialorder %v4204, 1.0
        %vm4221 = vcmp.ge.f32.partialorder %v4205, 1.0
        %vm4222 = vcmp.ge.f32.partialorder %v4206, 1.0
        %vm4223 = vcmp.ge.f32.partialorder %v4207, 1.0
        %vm4224 = vcmp.ge.f32.partialorder %v4208, 1.0
        %vm4225 = vcmp.ge.f32.partialorder %v4209, 1.0
        %vm4226 = vcmp.ge.f32.partialorder %v4210, 1.0
        %vm4227 = vcmp.ge.f32.partialorder %v4211, 1.0
        %vm4228 = vcmp.ge.f32.partialorder %v4212, 1.0
        %vm4229 = vcmp.ge.f32.partialorder %v4213, 1.0
        %vm4230 = vcmp.ge.f32.partialorder %v4214, 1.0
        %vm4231 = vcmp.ge.f32.partialorder %v4215, 1.0
        %vm4232 = vcmp.ge.f32.partialorder %v4216, 1.0
        %vm4233 = vcmp.ge.f32.partialorder %v4217, 1.0
        %vm4234 = vcmp.ge.f32.partialorder %v4218, 1.0
        %v4235 = vsel %vm4219, 1.0, 0.0
        %v4236 = vsel %vm4220, 1.0, 0.0
        %v4237 = vsel %vm4221, 1.0, 0.0
        %v4238 = vsel %vm4222, 1.0, 0.0
        %v4239 = vsel %vm4223, 1.0, 0.0
        %v4240 = vsel %vm4224, 1.0, 0.0
        %v4241 = vsel %vm4225, 1.0, 0.0
        %v4242 = vsel %vm4226, 1.0, 0.0
        %v4243 = vsel %vm4227, 1.0, 0.0
        %v4244 = vsel %vm4228, 1.0, 0.0
        %v4245 = vsel %vm4229, 1.0, 0.0
        %v4246 = vsel %vm4230, 1.0, 0.0
        %v4247 = vsel %vm4231, 1.0, 0.0
        %v4248 = vsel %vm4232, 1.0, 0.0
        %v4249 = vsel %vm4233, 1.0, 0.0
        %v4250 = vsel %vm4234, 1.0, 0.0
        %v4251 = vsel %vm4219, 0.0, %v4203
        %v4252 = vsel %vm4220, 0.0, %v4204
        %v4253 = vsel %vm4221, 0.0, %v4205
        %v4254 = vsel %vm4222, 0.0, %v4206
        %v4255 = vsel %vm4223, 0.0, %v4207
        %v4256 = vsel %vm4224, 0.0, %v4208
        %v4257 = vsel %vm4225, 0.0, %v4209
        %v4258 = vsel %vm4226, 0.0, %v4210
        %v4259 = vsel %vm4227, 0.0, %v4211
        %v4260 = vsel %vm4228, 0.0, %v4212
        %v4261 = vsel %vm4229, 0.0, %v4213
        %v4262 = vsel %vm4230, 0.0, %v4214
        %v4263 = vsel %vm4231, 0.0, %v4215
        %v4264 = vsel %vm4232, 0.0, %v4216
        %v4265 = vsel %vm4233, 0.0, %v4217
        %v4266 = vsel %vm4234, 0.0, %v4218
        %4267 = vst [vmem:[#allocation3] sm:$0xff] %v4251
        %4268 = vst [vmem:[#allocation3 + $0x8] sm:$0xff] %v4252
        %4269 = vst [vmem:[#allocation3 + $0x10] sm:$0xff] %v4253
        %4270 = vst [vmem:[#allocation3 + $0x18] sm:$0xff] %v4254
        %4271 = vst [vmem:[#allocation3 + $0x20] sm:$0xff] %v4255
        %4272 = vst [vmem:[#allocation3 + $0x28] sm:$0xff] %v4256
        %4273 = vst [vmem:[#allocation3 + $0x30] sm:$0xff] %v4257
        %4274 = vst [vmem:[#allocation3 + $0x38] sm:$0xff] %v4258
        %4275 = vst [vmem:[#allocation3 + $0x40] sm:$0xff] %v4259
        %4276 = vst [vmem:[#allocation3 + $0x48] sm:$0xff] %v4260
        %4277 = vst [vmem:[#allocation3 + $0x50] sm:$0xff] %v4261
        %4278 = vst [vmem:[#allocation3 + $0x58] sm:$0xff] %v4262
        %4279 = vst [vmem:[#allocation3 + $0x60] sm:$0xff] %v4263
        %4280 = vst [vmem:[#allocation3 + $0x68] sm:$0xff] %v4264
        %4281 = vst [vmem:[#allocation3 + $0x70] sm:$0xff] %v4265
        %4282 = vst [vmem:[#allocation3 + $0x78] sm:$0xff] %v4266
        %s4283 = scalar_lea.vmem %s284, 128 [#allocation5]
        %v4284 = vld [vmem:[%s4283] sm:$0xff]
        %v4285 = vld [vmem:[%s4283 + $0x8] sm:$0xff]
        %v4286 = vld [vmem:[%s4283 + $0x10] sm:$0xff]
        %v4287 = vld [vmem:[%s4283 + $0x18] sm:$0xff]
        %v4288 = vld [vmem:[%s4283 + $0x20] sm:$0xff]
        %v4289 = vld [vmem:[%s4283 + $0x28] sm:$0xff]
        %v4290 = vld [vmem:[%s4283 + $0x30] sm:$0xff]
        %v4291 = vld [vmem:[%s4283 + $0x38] sm:$0xff]
        %v4292 = vld [vmem:[%s4283 + $0x40] sm:$0xff]
        %v4293 = vld [vmem:[%s4283 + $0x48] sm:$0xff]
        %v4294 = vld [vmem:[%s4283 + $0x50] sm:$0xff]
        %v4295 = vld [vmem:[%s4283 + $0x58] sm:$0xff]
        %v4296 = vld [vmem:[%s4283 + $0x60] sm:$0xff]
        %v4297 = vld [vmem:[%s4283 + $0x68] sm:$0xff]
        %v4298 = vld [vmem:[%s4283 + $0x70] sm:$0xff]
        %v4299 = vld [vmem:[%s4283 + $0x78] sm:$0xff]
        %v4300 = vadd.f32 %v4235, %v4284
        %v4301 = vadd.f32 %v4236, %v4285
        %v4302 = vadd.f32 %v4237, %v4286
        %v4303 = vadd.f32 %v4238, %v4287
        %v4304 = vadd.f32 %v4239, %v4288
        %v4305 = vadd.f32 %v4240, %v4289
        %v4306 = vadd.f32 %v4241, %v4290
        %v4307 = vadd.f32 %v4242, %v4291
        %v4308 = vadd.f32 %v4243, %v4292
        %v4309 = vadd.f32 %v4244, %v4293
        %v4310 = vadd.f32 %v4245, %v4294
        %v4311 = vadd.f32 %v4246, %v4295
        %v4312 = vadd.f32 %v4247, %v4296
        %v4313 = vadd.f32 %v4248, %v4297
        %v4314 = vadd.f32 %v4249, %v4298
        %v4315 = vadd.f32 %v4250, %v4299
        %s4316 = scalar_lea.vmem %s321, 128 [#allocation11]
        %4317 = vst [vmem:[%s4316] sm:$0xff] %v4300
        %4318 = vst [vmem:[%s4316 + $0x8] sm:$0xff] %v4301
        %4319 = vst [vmem:[%s4316 + $0x10] sm:$0xff] %v4302
        %4320 = vst [vmem:[%s4316 + $0x18] sm:$0xff] %v4303
        %4321 = vst [vmem:[%s4316 + $0x20] sm:$0xff] %v4304
        %4322 = vst [vmem:[%s4316 + $0x28] sm:$0xff] %v4305
        %4323 = vst [vmem:[%s4316 + $0x30] sm:$0xff] %v4306
        %4324 = vst [vmem:[%s4316 + $0x38] sm:$0xff] %v4307
        %4325 = vst [vmem:[%s4316 + $0x40] sm:$0xff] %v4308
        %4326 = vst [vmem:[%s4316 + $0x48] sm:$0xff] %v4309
        %4327 = vst [vmem:[%s4316 + $0x50] sm:$0xff] %v4310
        %4328 = vst [vmem:[%s4316 + $0x58] sm:$0xff] %v4311
        %4329 = vst [vmem:[%s4316 + $0x60] sm:$0xff] %v4312
        %4330 = vst [vmem:[%s4316 + $0x68] sm:$0xff] %v4313
        %4331 = vst [vmem:[%s4316 + $0x70] sm:$0xff] %v4314
        %4332 = vst [vmem:[%s4316 + $0x78] sm:$0xff] %v4315
        %v4333 = vld [vmem:[#allocation2] sm:$0xff]
        %v4334 = vld [vmem:[#allocation2 + $0x8] sm:$0xff]
        %v4335 = vld [vmem:[#allocation2 + $0x10] sm:$0xff]
        %v4336 = vld [vmem:[#allocation2 + $0x18] sm:$0xff]
        %v4337 = vld [vmem:[#allocation2 + $0x20] sm:$0xff]
        %v4338 = vld [vmem:[#allocation2 + $0x28] sm:$0xff]
        %v4339 = vld [vmem:[#allocation2 + $0x30] sm:$0xff]
        %v4340 = vld [vmem:[#allocation2 + $0x38] sm:$0xff]
        %v4341 = vld [vmem:[#allocation2 + $0x40] sm:$0xff]
        %v4342 = vld [vmem:[#allocation2 + $0x48] sm:$0xff]
        %v4343 = vld [vmem:[#allocation2 + $0x50] sm:$0xff]
        %v4344 = vld [vmem:[#allocation2 + $0x58] sm:$0xff]
        %v4345 = vld [vmem:[#allocation2 + $0x60] sm:$0xff]
        %v4346 = vld [vmem:[#allocation2 + $0x68] sm:$0xff]
        %v4347 = vld [vmem:[#allocation2 + $0x70] sm:$0xff]
        %v4348 = vld [vmem:[#allocation2 + $0x78] sm:$0xff]
        %s4349 = scalar_lea.vmem [#allocation4], 256
        %v4350 = vld [vmem:[%s4349] sm:$0xff]
        %v4351 = vld [vmem:[%s4349 + $0x8] sm:$0xff]
        %v4352 = vld [vmem:[%s4349 + $0x10] sm:$0xff]
        %v4353 = vld [vmem:[%s4349 + $0x18] sm:$0xff]
        %v4354 = vld [vmem:[%s4349 + $0x20] sm:$0xff]
        %v4355 = vld [vmem:[%s4349 + $0x28] sm:$0xff]
        %v4356 = vld [vmem:[%s4349 + $0x30] sm:$0xff]
        %v4357 = vld [vmem:[%s4349 + $0x38] sm:$0xff]
        %v4358 = vld [vmem:[%s4349 + $0x40] sm:$0xff]
        %v4359 = vld [vmem:[%s4349 + $0x48] sm:$0xff]
        %v4360 = vld [vmem:[%s4349 + $0x50] sm:$0xff]
        %v4361 = vld [vmem:[%s4349 + $0x58] sm:$0xff]
        %v4362 = vld [vmem:[%s4349 + $0x60] sm:$0xff]
        %v4363 = vld [vmem:[%s4349 + $0x68] sm:$0xff]
        %v4364 = vld [vmem:[%s4349 + $0x70] sm:$0xff]
        %v4365 = vld [vmem:[%s4349 + $0x78] sm:$0xff]
        %v4366 = vadd.f32 %v4333, %v4350
        %v4367 = vadd.f32 %v4334, %v4351
        %v4368 = vadd.f32 %v4335, %v4352
        %v4369 = vadd.f32 %v4336, %v4353
        %v4370 = vadd.f32 %v4337, %v4354
        %v4371 = vadd.f32 %v4338, %v4355
        %v4372 = vadd.f32 %v4339, %v4356
        %v4373 = vadd.f32 %v4340, %v4357
        %v4374 = vadd.f32 %v4341, %v4358
        %v4375 = vadd.f32 %v4342, %v4359
        %v4376 = vadd.f32 %v4343, %v4360
        %v4377 = vadd.f32 %v4344, %v4361
        %v4378 = vadd.f32 %v4345, %v4362
        %v4379 = vadd.f32 %v4346, %v4363
        %v4380 = vadd.f32 %v4347, %v4364
        %v4381 = vadd.f32 %v4348, %v4365
        %vm4382 = vcmp.ge.f32.partialorder %v4366, 1.0
        %vm4383 = vcmp.ge.f32.partialorder %v4367, 1.0
        %vm4384 = vcmp.ge.f32.partialorder %v4368, 1.0
        %vm4385 = vcmp.ge.f32.partialorder %v4369, 1.0
        %vm4386 = vcmp.ge.f32.partialorder %v4370, 1.0
        %vm4387 = vcmp.ge.f32.partialorder %v4371, 1.0
        %vm4388 = vcmp.ge.f32.partialorder %v4372, 1.0
        %vm4389 = vcmp.ge.f32.partialorder %v4373, 1.0
        %vm4390 = vcmp.ge.f32.partialorder %v4374, 1.0
        %vm4391 = vcmp.ge.f32.partialorder %v4375, 1.0
        %vm4392 = vcmp.ge.f32.partialorder %v4376, 1.0
        %vm4393 = vcmp.ge.f32.partialorder %v4377, 1.0
        %vm4394 = vcmp.ge.f32.partialorder %v4378, 1.0
        %vm4395 = vcmp.ge.f32.partialorder %v4379, 1.0
        %vm4396 = vcmp.ge.f32.partialorder %v4380, 1.0
        %vm4397 = vcmp.ge.f32.partialorder %v4381, 1.0
        %v4398 = vsel %vm4382, 1.0, 0.0
        %v4399 = vsel %vm4383, 1.0, 0.0
        %v4400 = vsel %vm4384, 1.0, 0.0
        %v4401 = vsel %vm4385, 1.0, 0.0
        %v4402 = vsel %vm4386, 1.0, 0.0
        %v4403 = vsel %vm4387, 1.0, 0.0
        %v4404 = vsel %vm4388, 1.0, 0.0
        %v4405 = vsel %vm4389, 1.0, 0.0
        %v4406 = vsel %vm4390, 1.0, 0.0
        %v4407 = vsel %vm4391, 1.0, 0.0
        %v4408 = vsel %vm4392, 1.0, 0.0
        %v4409 = vsel %vm4393, 1.0, 0.0
        %v4410 = vsel %vm4394, 1.0, 0.0
        %v4411 = vsel %vm4395, 1.0, 0.0
        %v4412 = vsel %vm4396, 1.0, 0.0
        %v4413 = vsel %vm4397, 1.0, 0.0
        %v4414 = vsel %vm4382, 0.0, %v4366
        %v4415 = vsel %vm4383, 0.0, %v4367
        %v4416 = vsel %vm4384, 0.0, %v4368
        %v4417 = vsel %vm4385, 0.0, %v4369
        %v4418 = vsel %vm4386, 0.0, %v4370
        %v4419 = vsel %vm4387, 0.0, %v4371
        %v4420 = vsel %vm4388, 0.0, %v4372
        %v4421 = vsel %vm4389, 0.0, %v4373
        %v4422 = vsel %vm4390, 0.0, %v4374
        %v4423 = vsel %vm4391, 0.0, %v4375
        %v4424 = vsel %vm4392, 0.0, %v4376
        %v4425 = vsel %vm4393, 0.0, %v4377
        %v4426 = vsel %vm4394, 0.0, %v4378
        %v4427 = vsel %vm4395, 0.0, %v4379
        %v4428 = vsel %vm4396, 0.0, %v4380
        %v4429 = vsel %vm4397, 0.0, %v4381
        %4430 = vst [vmem:[#allocation2] sm:$0xff] %v4414
        %4431 = vst [vmem:[#allocation2 + $0x8] sm:$0xff] %v4415
        %4432 = vst [vmem:[#allocation2 + $0x10] sm:$0xff] %v4416
        %4433 = vst [vmem:[#allocation2 + $0x18] sm:$0xff] %v4417
        %4434 = vst [vmem:[#allocation2 + $0x20] sm:$0xff] %v4418
        %4435 = vst [vmem:[#allocation2 + $0x28] sm:$0xff] %v4419
        %4436 = vst [vmem:[#allocation2 + $0x30] sm:$0xff] %v4420
        %4437 = vst [vmem:[#allocation2 + $0x38] sm:$0xff] %v4421
        %4438 = vst [vmem:[#allocation2 + $0x40] sm:$0xff] %v4422
        %4439 = vst [vmem:[#allocation2 + $0x48] sm:$0xff] %v4423
        %4440 = vst [vmem:[#allocation2 + $0x50] sm:$0xff] %v4424
        %4441 = vst [vmem:[#allocation2 + $0x58] sm:$0xff] %v4425
        %4442 = vst [vmem:[#allocation2 + $0x60] sm:$0xff] %v4426
        %4443 = vst [vmem:[#allocation2 + $0x68] sm:$0xff] %v4427
        %4444 = vst [vmem:[#allocation2 + $0x70] sm:$0xff] %v4428
        %4445 = vst [vmem:[#allocation2 + $0x78] sm:$0xff] %v4429
        %v4446 = vrot.slane %v4398, 7
        %v4447 = vrot.slane %v4399, 7
        %v4448 = vrot.slane %v4400, 7
        %v4449 = vrot.slane %v4401, 7
        %v4450 = vrot.slane %v4402, 7
        %v4451 = vrot.slane %v4403, 7
        %v4452 = vrot.slane %v4404, 7
        %v4453 = vrot.slane %v4405, 7
        %v4454 = vrot.slane %v4406, 7
        %v4455 = vrot.slane %v4407, 7
        %v4456 = vrot.slane %v4408, 7
        %v4457 = vrot.slane %v4409, 7
        %v4458 = vrot.slane %v4410, 7
        %v4459 = vrot.slane %v4411, 7
        %v4460 = vrot.slane %v4412, 7
        %v4461 = vrot.slane %v4413, 7
        %v4462 = vsel %vm1553, %v4460, %v4461
        %v4463 = vsel %vm1553, %v4459, %v4460
        %v4464 = vsel %vm1553, %v4458, %v4459
        %v4465 = vsel %vm1553, %v4457, %v4458
        %v4466 = vsel %vm1553, %v4456, %v4457
        %v4467 = vsel %vm1553, %v4455, %v4456
        %v4468 = vsel %vm1553, %v4454, %v4455
        %v4469 = vsel %vm1553, %v4453, %v4454
        %v4470 = vsel %vm1553, %v4452, %v4453
        %v4471 = vsel %vm1553, %v4451, %v4452
        %v4472 = vsel %vm1553, %v4450, %v4451
        %v4473 = vsel %vm1553, %v4449, %v4450
        %v4474 = vsel %vm1553, %v4448, %v4449
        %v4475 = vsel %vm1553, %v4447, %v4448
        %v4476 = vsel %vm1553, %v4446, %v4447
        %v4477 = vsel %vm1553, %v4461, %v4446
        %v4478 = vsel %vm1682, 0.0, %v4477
        %v4479 = vsel %vm1683, 0.0, %v4476
        %v4480 = vsel %vm1684, 0.0, %v4475
        %v4481 = vsel %vm1685, 0.0, %v4474
        %v4482 = vsel %vm1686, 0.0, %v4473
        %v4483 = vsel %vm1687, 0.0, %v4472
        %v4484 = vsel %vm1688, 0.0, %v4471
        %v4485 = vsel %vm1689, 0.0, %v4470
        %v4486 = vsel %vm1690, 0.0, %v4469
        %v4487 = vsel %vm1691, 0.0, %v4468
        %v4488 = vsel %vm1692, 0.0, %v4467
        %v4489 = vsel %vm1693, 0.0, %v4466
        %v4490 = vsel %vm1694, 0.0, %v4465
        %v4491 = vsel %vm1695, 0.0, %v4464
        %v4492 = vsel %vm1696, 0.0, %v4463
        %v4493 = vsel %vm1697, 0.0, %v4462
        %v4494 = vrot.slane %v4398, 1
        %v4495 = vrot.slane %v4399, 1
        %v4496 = vrot.slane %v4400, 1
        %v4497 = vrot.slane %v4401, 1
        %v4498 = vrot.slane %v4402, 1
        %v4499 = vrot.slane %v4403, 1
        %v4500 = vrot.slane %v4404, 1
        %v4501 = vrot.slane %v4405, 1
        %v4502 = vrot.slane %v4406, 1
        %v4503 = vrot.slane %v4407, 1
        %v4504 = vrot.slane %v4408, 1
        %v4505 = vrot.slane %v4409, 1
        %v4506 = vrot.slane %v4410, 1
        %v4507 = vrot.slane %v4411, 1
        %v4508 = vrot.slane %v4412, 1
        %v4509 = vrot.slane %v4413, 1
        %v4510 = vsel %vm1874, %v4508, %v4509
        %v4511 = vsel %vm1874, %v4507, %v4508
        %v4512 = vsel %vm1874, %v4506, %v4507
        %v4513 = vsel %vm1874, %v4505, %v4506
        %v4514 = vsel %vm1874, %v4504, %v4505
        %v4515 = vsel %vm1874, %v4503, %v4504
        %v4516 = vsel %vm1874, %v4502, %v4503
        %v4517 = vsel %vm1874, %v4501, %v4502
        %v4518 = vsel %vm1874, %v4500, %v4501
        %v4519 = vsel %vm1874, %v4499, %v4500
        %v4520 = vsel %vm1874, %v4498, %v4499
        %v4521 = vsel %vm1874, %v4497, %v4498
        %v4522 = vsel %vm1874, %v4496, %v4497
        %v4523 = vsel %vm1874, %v4495, %v4496
        %v4524 = vsel %vm1874, %v4494, %v4495
        %v4525 = vsel %vm1874, %v4509, %v4494
        %v4526 = vsel %vm2003, 0.0, %v4524
        %v4527 = vsel %vm2004, 0.0, %v4523
        %v4528 = vsel %vm2005, 0.0, %v4522
        %v4529 = vsel %vm2006, 0.0, %v4521
        %v4530 = vsel %vm2007, 0.0, %v4520
        %v4531 = vsel %vm2008, 0.0, %v4519
        %v4532 = vsel %vm2009, 0.0, %v4518
        %v4533 = vsel %vm2010, 0.0, %v4517
        %v4534 = vsel %vm2011, 0.0, %v4516
        %v4535 = vsel %vm2012, 0.0, %v4515
        %v4536 = vsel %vm2013, 0.0, %v4514
        %v4537 = vsel %vm2014, 0.0, %v4513
        %v4538 = vsel %vm2015, 0.0, %v4512
        %v4539 = vsel %vm2016, 0.0, %v4511
        %v4540 = vsel %vm2017, 0.0, %v4510
        %v4541 = vsel %vm2018, 0.0, %v4525
        %v4542 = vld [vmem:[#allocation3] sm:$0xff]
        %v4543 = vld [vmem:[#allocation3 + $0x8] sm:$0xff]
        %v4544 = vld [vmem:[#allocation3 + $0x10] sm:$0xff]
        %v4545 = vld [vmem:[#allocation3 + $0x18] sm:$0xff]
        %v4546 = vld [vmem:[#allocation3 + $0x20] sm:$0xff]
        %v4547 = vld [vmem:[#allocation3 + $0x28] sm:$0xff]
        %v4548 = vld [vmem:[#allocation3 + $0x30] sm:$0xff]
        %v4549 = vld [vmem:[#allocation3 + $0x38] sm:$0xff]
        %v4550 = vld [vmem:[#allocation3 + $0x40] sm:$0xff]
        %v4551 = vld [vmem:[#allocation3 + $0x48] sm:$0xff]
        %v4552 = vld [vmem:[#allocation3 + $0x50] sm:$0xff]
        %v4553 = vld [vmem:[#allocation3 + $0x58] sm:$0xff]
        %v4554 = vld [vmem:[#allocation3 + $0x60] sm:$0xff]
        %v4555 = vld [vmem:[#allocation3 + $0x68] sm:$0xff]
        %v4556 = vld [vmem:[#allocation3 + $0x70] sm:$0xff]
        %v4557 = vld [vmem:[#allocation3 + $0x78] sm:$0xff]
        %v4558 = vpack.c.bf16 %v4479, %v4478
        %v4559 = vpack.c.bf16 %v4481, %v4480
        %v4560 = vpack.c.bf16 %v4483, %v4482
        %v4561 = vpack.c.bf16 %v4485, %v4484
        %v4562 = vpack.c.bf16 %v4487, %v4486
        %v4563 = vpack.c.bf16 %v4489, %v4488
        %v4564 = vpack.c.bf16 %v4491, %v4490
        %v4565 = vpack.c.bf16 %v4493, %v4492
        %v4566 = vpack.c.bf16 %v4399, %v4398
        %v4567 = vpack.c.bf16 %v4401, %v4400
        %v4568 = vpack.c.bf16 %v4403, %v4402
        %v4569 = vpack.c.bf16 %v4405, %v4404
        %v4570 = vpack.c.bf16 %v4407, %v4406
        %v4571 = vpack.c.bf16 %v4409, %v4408
        %v4572 = vpack.c.bf16 %v4411, %v4410
        %v4573 = vpack.c.bf16 %v4413, %v4412
        %4574 = vmatpush.bf16.msra.mxu0 %v3352
        %4575 = vmatpush.bf16.msra.mxu0 %v3351
        %4576 = vmatpush.bf16.msra.mxu0 %v3350
        %4577 = vmatpush.bf16.msra.mxu0 %v3349
        %4578 = vmatpush.bf16.msra.mxu0 %v3348
        %4579 = vmatpush.bf16.msra.mxu0 %v3347
        %4580 = vmatpush.bf16.msra.mxu0 %v3346
        %4581 = vmatpush.bf16.msra.mxu0 %v3345
        %4582 = vmatmul.bf16.gmra.mxu0 %v4566
        %v4583 = vpop.f32.mrf.mxu0
        %v4584 = vadd.f32 0.0, %v4583
        %v4585 = vpop.f32.mrf.mxu0
        %v4586 = vadd.f32 0.0, %v4585
        %4587 = vmatmul.bf16.gmra.mxu0 %v4567
        %v4588 = vpop.f32.mrf.mxu0
        %v4589 = vadd.f32 0.0, %v4588
        %v4590 = vpop.f32.mrf.mxu0
        %v4591 = vadd.f32 0.0, %v4590
        %4592 = vmatmul.bf16.gmra.mxu0 %v4568
        %v4593 = vpop.f32.mrf.mxu0
        %v4594 = vadd.f32 0.0, %v4593
        %v4595 = vpop.f32.mrf.mxu0
        %v4596 = vadd.f32 0.0, %v4595
        %4597 = vmatmul.bf16.gmra.mxu0 %v4569
        %v4598 = vpop.f32.mrf.mxu0
        %v4599 = vadd.f32 0.0, %v4598
        %v4600 = vpop.f32.mrf.mxu0
        %v4601 = vadd.f32 0.0, %v4600
        %4602 = vmatmul.bf16.gmra.mxu0 %v4570
        %v4603 = vpop.f32.mrf.mxu0
        %v4604 = vadd.f32 0.0, %v4603
        %v4605 = vpop.f32.mrf.mxu0
        %v4606 = vadd.f32 0.0, %v4605
        %4607 = vmatmul.bf16.gmra.mxu0 %v4571
        %v4608 = vpop.f32.mrf.mxu0
        %v4609 = vadd.f32 0.0, %v4608
        %v4610 = vpop.f32.mrf.mxu0
        %v4611 = vadd.f32 0.0, %v4610
        %4612 = vmatmul.bf16.gmra.mxu0 %v4572
        %v4613 = vpop.f32.mrf.mxu0
        %v4614 = vadd.f32 0.0, %v4613
        %v4615 = vpop.f32.mrf.mxu0
        %v4616 = vadd.f32 0.0, %v4615
        %4617 = vmatmul.bf16.gmra.mxu0 %v4573
        %v4618 = vpop.f32.mrf.mxu0
        %v4619 = vadd.f32 0.0, %v4618
        %v4620 = vpop.f32.mrf.mxu0
        %v4621 = vadd.f32 0.0, %v4620
        %4622 = vdwg.mxu0
        %4623 = vmatpush.bf16.msra.mxu0 %v3449
        %4624 = vmatpush.bf16.msra.mxu0 %v3448
        %4625 = vmatpush.bf16.msra.mxu0 %v3447
        %4626 = vmatpush.bf16.msra.mxu0 %v3446
        %4627 = vmatpush.bf16.msra.mxu0 %v3445
        %4628 = vmatpush.bf16.msra.mxu0 %v3444
        %4629 = vmatpush.bf16.msra.mxu0 %v3443
        %4630 = vmatpush.bf16.msra.mxu0 %v3442
        %4631 = vmatmul.bf16.gmra.mxu0 %v4558
        %v4632 = vpop.f32.mrf.mxu0
        %v4633 = vadd.f32 %v4584, %v4632
        %v4634 = vpop.f32.mrf.mxu0
        %v4635 = vadd.f32 %v4586, %v4634
        %4636 = vmatmul.bf16.gmra.mxu0 %v4559
        %v4637 = vpop.f32.mrf.mxu0
        %v4638 = vadd.f32 %v4589, %v4637
        %v4639 = vpop.f32.mrf.mxu0
        %v4640 = vadd.f32 %v4591, %v4639
        %4641 = vmatmul.bf16.gmra.mxu0 %v4560
        %v4642 = vpop.f32.mrf.mxu0
        %v4643 = vadd.f32 %v4594, %v4642
        %v4644 = vpop.f32.mrf.mxu0
        %v4645 = vadd.f32 %v4596, %v4644
        %4646 = vmatmul.bf16.gmra.mxu0 %v4561
        %v4647 = vpop.f32.mrf.mxu0
        %v4648 = vadd.f32 %v4599, %v4647
        %v4649 = vpop.f32.mrf.mxu0
        %v4650 = vadd.f32 %v4601, %v4649
        %4651 = vmatmul.bf16.gmra.mxu0 %v4562
        %v4652 = vpop.f32.mrf.mxu0
        %v4653 = vadd.f32 %v4604, %v4652
        %v4654 = vpop.f32.mrf.mxu0
        %v4655 = vadd.f32 %v4606, %v4654
        %4656 = vmatmul.bf16.gmra.mxu0 %v4563
        %v4657 = vpop.f32.mrf.mxu0
        %v4658 = vadd.f32 %v4609, %v4657
        %v4659 = vpop.f32.mrf.mxu0
        %v4660 = vadd.f32 %v4611, %v4659
        %4661 = vmatmul.bf16.gmra.mxu0 %v4564
        %v4662 = vpop.f32.mrf.mxu0
        %v4663 = vadd.f32 %v4614, %v4662
        %v4664 = vpop.f32.mrf.mxu0
        %v4665 = vadd.f32 %v4616, %v4664
        %4666 = vmatmul.bf16.gmra.mxu0 %v4565
        %v4667 = vpop.f32.mrf.mxu0
        %v4668 = vadd.f32 %v4619, %v4667
        %v4669 = vpop.f32.mrf.mxu0
        %v4670 = vadd.f32 %v4621, %v4669
        %4671 = vdwg.mxu0
        %v4672 = vpack.c.bf16 %v4527, %v4526
        %v4673 = vpack.c.bf16 %v4529, %v4528
        %v4674 = vpack.c.bf16 %v4531, %v4530
        %v4675 = vpack.c.bf16 %v4533, %v4532
        %v4676 = vpack.c.bf16 %v4535, %v4534
        %v4677 = vpack.c.bf16 %v4537, %v4536
        %v4678 = vpack.c.bf16 %v4539, %v4538
        %v4679 = vpack.c.bf16 %v4541, %v4540
        %4680 = vmatpush.bf16.msra.mxu0 %v3554
        %4681 = vmatpush.bf16.msra.mxu0 %v3553
        %4682 = vmatpush.bf16.msra.mxu0 %v3552
        %4683 = vmatpush.bf16.msra.mxu0 %v3551
        %4684 = vmatpush.bf16.msra.mxu0 %v3550
        %4685 = vmatpush.bf16.msra.mxu0 %v3549
        %4686 = vmatpush.bf16.msra.mxu0 %v3548
        %4687 = vmatpush.bf16.msra.mxu0 %v3547
        %4688 = vmatmul.bf16.gmra.mxu0 %v4672
        %v4689 = vpop.f32.mrf.mxu0
        %v4690 = vadd.f32 0.0, %v4689
        %v4691 = vpop.f32.mrf.mxu0
        %v4692 = vadd.f32 0.0, %v4691
        %4693 = vmatmul.bf16.gmra.mxu0 %v4673
        %v4694 = vpop.f32.mrf.mxu0
        %v4695 = vadd.f32 0.0, %v4694
        %v4696 = vpop.f32.mrf.mxu0
        %v4697 = vadd.f32 0.0, %v4696
        %4698 = vmatmul.bf16.gmra.mxu0 %v4674
        %v4699 = vpop.f32.mrf.mxu0
        %v4700 = vadd.f32 0.0, %v4699
        %v4701 = vpop.f32.mrf.mxu0
        %v4702 = vadd.f32 0.0, %v4701
        %4703 = vmatmul.bf16.gmra.mxu0 %v4675
        %v4704 = vpop.f32.mrf.mxu0
        %v4705 = vadd.f32 0.0, %v4704
        %v4706 = vpop.f32.mrf.mxu0
        %v4707 = vadd.f32 0.0, %v4706
        %4708 = vmatmul.bf16.gmra.mxu0 %v4676
        %v4709 = vpop.f32.mrf.mxu0
        %v4710 = vadd.f32 0.0, %v4709
        %v4711 = vpop.f32.mrf.mxu0
        %v4712 = vadd.f32 0.0, %v4711
        %4713 = vmatmul.bf16.gmra.mxu0 %v4677
        %v4714 = vpop.f32.mrf.mxu0
        %v4715 = vadd.f32 0.0, %v4714
        %v4716 = vpop.f32.mrf.mxu0
        %v4717 = vadd.f32 0.0, %v4716
        %4718 = vmatmul.bf16.gmra.mxu0 %v4678
        %v4719 = vpop.f32.mrf.mxu0
        %v4720 = vadd.f32 0.0, %v4719
        %v4721 = vpop.f32.mrf.mxu0
        %v4722 = vadd.f32 0.0, %v4721
        %4723 = vmatmul.bf16.gmra.mxu0 %v4679
        %v4724 = vpop.f32.mrf.mxu0
        %v4725 = vadd.f32 0.0, %v4724
        %v4726 = vpop.f32.mrf.mxu0
        %v4727 = vadd.f32 0.0, %v4726
        %4728 = vdwg.mxu0
        %v4729 = vadd.f32 %v4633, %v4690
        %v4730 = vadd.f32 %v4635, %v4692
        %v4731 = vadd.f32 %v4638, %v4695
        %v4732 = vadd.f32 %v4640, %v4697
        %v4733 = vadd.f32 %v4643, %v4700
        %v4734 = vadd.f32 %v4645, %v4702
        %v4735 = vadd.f32 %v4648, %v4705
        %v4736 = vadd.f32 %v4650, %v4707
        %v4737 = vadd.f32 %v4653, %v4710
        %v4738 = vadd.f32 %v4655, %v4712
        %v4739 = vadd.f32 %v4658, %v4715
        %v4740 = vadd.f32 %v4660, %v4717
        %v4741 = vadd.f32 %v4663, %v4720
        %v4742 = vadd.f32 %v4665, %v4722
        %v4743 = vadd.f32 %v4668, %v4725
        %v4744 = vadd.f32 %v4670, %v4727
        %v4745 = vadd.f32 %v4729, %v3629
        %v4746 = vadd.f32 %v4730, %v3629
        %v4747 = vadd.f32 %v4731, %v3629
        %v4748 = vadd.f32 %v4732, %v3629
        %v4749 = vadd.f32 %v4733, %v3629
        %v4750 = vadd.f32 %v4734, %v3629
        %v4751 = vadd.f32 %v4735, %v3629
        %v4752 = vadd.f32 %v4736, %v3629
        %v4753 = vadd.f32 %v4737, %v3629
        %v4754 = vadd.f32 %v4738, %v3629
        %v4755 = vadd.f32 %v4739, %v3629
        %v4756 = vadd.f32 %v4740, %v3629
        %v4757 = vadd.f32 %v4741, %v3629
        %v4758 = vadd.f32 %v4742, %v3629
        %v4759 = vadd.f32 %v4743, %v3629
        %v4760 = vadd.f32 %v4744, %v3629
        %v4761 = vadd.f32 %v4542, %v4745
        %v4762 = vadd.f32 %v4543, %v4746
        %v4763 = vadd.f32 %v4544, %v4747
        %v4764 = vadd.f32 %v4545, %v4748
        %v4765 = vadd.f32 %v4546, %v4749
        %v4766 = vadd.f32 %v4547, %v4750
        %v4767 = vadd.f32 %v4548, %v4751
        %v4768 = vadd.f32 %v4549, %v4752
        %v4769 = vadd.f32 %v4550, %v4753
        %v4770 = vadd.f32 %v4551, %v4754
        %v4771 = vadd.f32 %v4552, %v4755
        %v4772 = vadd.f32 %v4553, %v4756
        %v4773 = vadd.f32 %v4554, %v4757
        %v4774 = vadd.f32 %v4555, %v4758
        %v4775 = vadd.f32 %v4556, %v4759
        %v4776 = vadd.f32 %v4557, %v4760
        %vm4777 = vcmp.ge.f32.partialorder %v4761, 1.0
        %vm4778 = vcmp.ge.f32.partialorder %v4762, 1.0
        %vm4779 = vcmp.ge.f32.partialorder %v4763, 1.0
        %vm4780 = vcmp.ge.f32.partialorder %v4764, 1.0
        %vm4781 = vcmp.ge.f32.partialorder %v4765, 1.0
        %vm4782 = vcmp.ge.f32.partialorder %v4766, 1.0
        %vm4783 = vcmp.ge.f32.partialorder %v4767, 1.0
        %vm4784 = vcmp.ge.f32.partialorder %v4768, 1.0
        %vm4785 = vcmp.ge.f32.partialorder %v4769, 1.0
        %vm4786 = vcmp.ge.f32.partialorder %v4770, 1.0
        %vm4787 = vcmp.ge.f32.partialorder %v4771, 1.0
        %vm4788 = vcmp.ge.f32.partialorder %v4772, 1.0
        %vm4789 = vcmp.ge.f32.partialorder %v4773, 1.0
        %vm4790 = vcmp.ge.f32.partialorder %v4774, 1.0
        %vm4791 = vcmp.ge.f32.partialorder %v4775, 1.0
        %vm4792 = vcmp.ge.f32.partialorder %v4776, 1.0
        %v4793 = vsel %vm4777, 1.0, 0.0
        %v4794 = vsel %vm4778, 1.0, 0.0
        %v4795 = vsel %vm4779, 1.0, 0.0
        %v4796 = vsel %vm4780, 1.0, 0.0
        %v4797 = vsel %vm4781, 1.0, 0.0
        %v4798 = vsel %vm4782, 1.0, 0.0
        %v4799 = vsel %vm4783, 1.0, 0.0
        %v4800 = vsel %vm4784, 1.0, 0.0
        %v4801 = vsel %vm4785, 1.0, 0.0
        %v4802 = vsel %vm4786, 1.0, 0.0
        %v4803 = vsel %vm4787, 1.0, 0.0
        %v4804 = vsel %vm4788, 1.0, 0.0
        %v4805 = vsel %vm4789, 1.0, 0.0
        %v4806 = vsel %vm4790, 1.0, 0.0
        %v4807 = vsel %vm4791, 1.0, 0.0
        %v4808 = vsel %vm4792, 1.0, 0.0
        %v4809 = vsel %vm4777, 0.0, %v4761
        %v4810 = vsel %vm4778, 0.0, %v4762
        %v4811 = vsel %vm4779, 0.0, %v4763
        %v4812 = vsel %vm4780, 0.0, %v4764
        %v4813 = vsel %vm4781, 0.0, %v4765
        %v4814 = vsel %vm4782, 0.0, %v4766
        %v4815 = vsel %vm4783, 0.0, %v4767
        %v4816 = vsel %vm4784, 0.0, %v4768
        %v4817 = vsel %vm4785, 0.0, %v4769
        %v4818 = vsel %vm4786, 0.0, %v4770
        %v4819 = vsel %vm4787, 0.0, %v4771
        %v4820 = vsel %vm4788, 0.0, %v4772
        %v4821 = vsel %vm4789, 0.0, %v4773
        %v4822 = vsel %vm4790, 0.0, %v4774
        %v4823 = vsel %vm4791, 0.0, %v4775
        %v4824 = vsel %vm4792, 0.0, %v4776
        %4825 = vst [vmem:[#allocation3] sm:$0xff] %v4809
        %4826 = vst [vmem:[#allocation3 + $0x8] sm:$0xff] %v4810
        %4827 = vst [vmem:[#allocation3 + $0x10] sm:$0xff] %v4811
        %4828 = vst [vmem:[#allocation3 + $0x18] sm:$0xff] %v4812
        %4829 = vst [vmem:[#allocation3 + $0x20] sm:$0xff] %v4813
        %4830 = vst [vmem:[#allocation3 + $0x28] sm:$0xff] %v4814
        %4831 = vst [vmem:[#allocation3 + $0x30] sm:$0xff] %v4815
        %4832 = vst [vmem:[#allocation3 + $0x38] sm:$0xff] %v4816
        %4833 = vst [vmem:[#allocation3 + $0x40] sm:$0xff] %v4817
        %4834 = vst [vmem:[#allocation3 + $0x48] sm:$0xff] %v4818
        %4835 = vst [vmem:[#allocation3 + $0x50] sm:$0xff] %v4819
        %4836 = vst [vmem:[#allocation3 + $0x58] sm:$0xff] %v4820
        %4837 = vst [vmem:[#allocation3 + $0x60] sm:$0xff] %v4821
        %4838 = vst [vmem:[#allocation3 + $0x68] sm:$0xff] %v4822
        %4839 = vst [vmem:[#allocation3 + $0x70] sm:$0xff] %v4823
        %4840 = vst [vmem:[#allocation3 + $0x78] sm:$0xff] %v4824
        %s4841 = scalar_lea.vmem %s284, 256 [#allocation5]
        %v4842 = vld [vmem:[%s4841] sm:$0xff]
        %v4843 = vld [vmem:[%s4841 + $0x8] sm:$0xff]
        %v4844 = vld [vmem:[%s4841 + $0x10] sm:$0xff]
        %v4845 = vld [vmem:[%s4841 + $0x18] sm:$0xff]
        %v4846 = vld [vmem:[%s4841 + $0x20] sm:$0xff]
        %v4847 = vld [vmem:[%s4841 + $0x28] sm:$0xff]
        %v4848 = vld [vmem:[%s4841 + $0x30] sm:$0xff]
        %v4849 = vld [vmem:[%s4841 + $0x38] sm:$0xff]
        %v4850 = vld [vmem:[%s4841 + $0x40] sm:$0xff]
        %v4851 = vld [vmem:[%s4841 + $0x48] sm:$0xff]
        %v4852 = vld [vmem:[%s4841 + $0x50] sm:$0xff]
        %v4853 = vld [vmem:[%s4841 + $0x58] sm:$0xff]
        %v4854 = vld [vmem:[%s4841 + $0x60] sm:$0xff]
        %v4855 = vld [vmem:[%s4841 + $0x68] sm:$0xff]
        %v4856 = vld [vmem:[%s4841 + $0x70] sm:$0xff]
        %v4857 = vld [vmem:[%s4841 + $0x78] sm:$0xff]
        %v4858 = vadd.f32 %v4793, %v4842
        %v4859 = vadd.f32 %v4794, %v4843
        %v4860 = vadd.f32 %v4795, %v4844
        %v4861 = vadd.f32 %v4796, %v4845
        %v4862 = vadd.f32 %v4797, %v4846
        %v4863 = vadd.f32 %v4798, %v4847
        %v4864 = vadd.f32 %v4799, %v4848
        %v4865 = vadd.f32 %v4800, %v4849
        %v4866 = vadd.f32 %v4801, %v4850
        %v4867 = vadd.f32 %v4802, %v4851
        %v4868 = vadd.f32 %v4803, %v4852
        %v4869 = vadd.f32 %v4804, %v4853
        %v4870 = vadd.f32 %v4805, %v4854
        %v4871 = vadd.f32 %v4806, %v4855
        %v4872 = vadd.f32 %v4807, %v4856
        %v4873 = vadd.f32 %v4808, %v4857
        %s4874 = scalar_lea.vmem %s321, 256 [#allocation11]
        %4875 = vst [vmem:[%s4874] sm:$0xff] %v4858
        %4876 = vst [vmem:[%s4874 + $0x8] sm:$0xff] %v4859
        %4877 = vst [vmem:[%s4874 + $0x10] sm:$0xff] %v4860
        %4878 = vst [vmem:[%s4874 + $0x18] sm:$0xff] %v4861
        %4879 = vst [vmem:[%s4874 + $0x20] sm:$0xff] %v4862
        %4880 = vst [vmem:[%s4874 + $0x28] sm:$0xff] %v4863
        %4881 = vst [vmem:[%s4874 + $0x30] sm:$0xff] %v4864
        %4882 = vst [vmem:[%s4874 + $0x38] sm:$0xff] %v4865
        %4883 = vst [vmem:[%s4874 + $0x40] sm:$0xff] %v4866
        %4884 = vst [vmem:[%s4874 + $0x48] sm:$0xff] %v4867
        %4885 = vst [vmem:[%s4874 + $0x50] sm:$0xff] %v4868
        %4886 = vst [vmem:[%s4874 + $0x58] sm:$0xff] %v4869
        %4887 = vst [vmem:[%s4874 + $0x60] sm:$0xff] %v4870
        %4888 = vst [vmem:[%s4874 + $0x68] sm:$0xff] %v4871
        %4889 = vst [vmem:[%s4874 + $0x70] sm:$0xff] %v4872
        %4890 = vst [vmem:[%s4874 + $0x78] sm:$0xff] %v4873
        %v4891 = vld [vmem:[#allocation2] sm:$0xff]
        %v4892 = vld [vmem:[#allocation2 + $0x8] sm:$0xff]
        %v4893 = vld [vmem:[#allocation2 + $0x10] sm:$0xff]
        %v4894 = vld [vmem:[#allocation2 + $0x18] sm:$0xff]
        %v4895 = vld [vmem:[#allocation2 + $0x20] sm:$0xff]
        %v4896 = vld [vmem:[#allocation2 + $0x28] sm:$0xff]
        %v4897 = vld [vmem:[#allocation2 + $0x30] sm:$0xff]
        %v4898 = vld [vmem:[#allocation2 + $0x38] sm:$0xff]
        %v4899 = vld [vmem:[#allocation2 + $0x40] sm:$0xff]
        %v4900 = vld [vmem:[#allocation2 + $0x48] sm:$0xff]
        %v4901 = vld [vmem:[#allocation2 + $0x50] sm:$0xff]
        %v4902 = vld [vmem:[#allocation2 + $0x58] sm:$0xff]
        %v4903 = vld [vmem:[#allocation2 + $0x60] sm:$0xff]
        %v4904 = vld [vmem:[#allocation2 + $0x68] sm:$0xff]
        %v4905 = vld [vmem:[#allocation2 + $0x70] sm:$0xff]
        %v4906 = vld [vmem:[#allocation2 + $0x78] sm:$0xff]
        %s4907 = scalar_lea.vmem [#allocation4], 384
        %v4908 = vld [vmem:[%s4907] sm:$0xff]
        %v4909 = vld [vmem:[%s4907 + $0x8] sm:$0xff]
        %v4910 = vld [vmem:[%s4907 + $0x10] sm:$0xff]
        %v4911 = vld [vmem:[%s4907 + $0x18] sm:$0xff]
        %v4912 = vld [vmem:[%s4907 + $0x20] sm:$0xff]
        %v4913 = vld [vmem:[%s4907 + $0x28] sm:$0xff]
        %v4914 = vld [vmem:[%s4907 + $0x30] sm:$0xff]
        %v4915 = vld [vmem:[%s4907 + $0x38] sm:$0xff]
        %v4916 = vld [vmem:[%s4907 + $0x40] sm:$0xff]
        %v4917 = vld [vmem:[%s4907 + $0x48] sm:$0xff]
        %v4918 = vld [vmem:[%s4907 + $0x50] sm:$0xff]
        %v4919 = vld [vmem:[%s4907 + $0x58] sm:$0xff]
        %v4920 = vld [vmem:[%s4907 + $0x60] sm:$0xff]
        %v4921 = vld [vmem:[%s4907 + $0x68] sm:$0xff]
        %v4922 = vld [vmem:[%s4907 + $0x70] sm:$0xff]
        %v4923 = vld [vmem:[%s4907 + $0x78] sm:$0xff]
        %v4924 = vadd.f32 %v4891, %v4908
        %v4925 = vadd.f32 %v4892, %v4909
        %v4926 = vadd.f32 %v4893, %v4910
        %v4927 = vadd.f32 %v4894, %v4911
        %v4928 = vadd.f32 %v4895, %v4912
        %v4929 = vadd.f32 %v4896, %v4913
        %v4930 = vadd.f32 %v4897, %v4914
        %v4931 = vadd.f32 %v4898, %v4915
        %v4932 = vadd.f32 %v4899, %v4916
        %v4933 = vadd.f32 %v4900, %v4917
        %v4934 = vadd.f32 %v4901, %v4918
        %v4935 = vadd.f32 %v4902, %v4919
        %v4936 = vadd.f32 %v4903, %v4920
        %v4937 = vadd.f32 %v4904, %v4921
        %v4938 = vadd.f32 %v4905, %v4922
        %v4939 = vadd.f32 %v4906, %v4923
        %vm4940 = vcmp.ge.f32.partialorder %v4924, 1.0
        %vm4941 = vcmp.ge.f32.partialorder %v4925, 1.0
        %vm4942 = vcmp.ge.f32.partialorder %v4926, 1.0
        %vm4943 = vcmp.ge.f32.partialorder %v4927, 1.0
        %vm4944 = vcmp.ge.f32.partialorder %v4928, 1.0
        %vm4945 = vcmp.ge.f32.partialorder %v4929, 1.0
        %vm4946 = vcmp.ge.f32.partialorder %v4930, 1.0
        %vm4947 = vcmp.ge.f32.partialorder %v4931, 1.0
        %vm4948 = vcmp.ge.f32.partialorder %v4932, 1.0
        %vm4949 = vcmp.ge.f32.partialorder %v4933, 1.0
        %vm4950 = vcmp.ge.f32.partialorder %v4934, 1.0
        %vm4951 = vcmp.ge.f32.partialorder %v4935, 1.0
        %vm4952 = vcmp.ge.f32.partialorder %v4936, 1.0
        %vm4953 = vcmp.ge.f32.partialorder %v4937, 1.0
        %vm4954 = vcmp.ge.f32.partialorder %v4938, 1.0
        %vm4955 = vcmp.ge.f32.partialorder %v4939, 1.0
        %v4956 = vsel %vm4940, 1.0, 0.0
        %v4957 = vsel %vm4941, 1.0, 0.0
        %v4958 = vsel %vm4942, 1.0, 0.0
        %v4959 = vsel %vm4943, 1.0, 0.0
        %v4960 = vsel %vm4944, 1.0, 0.0
        %v4961 = vsel %vm4945, 1.0, 0.0
        %v4962 = vsel %vm4946, 1.0, 0.0
        %v4963 = vsel %vm4947, 1.0, 0.0
        %v4964 = vsel %vm4948, 1.0, 0.0
        %v4965 = vsel %vm4949, 1.0, 0.0
        %v4966 = vsel %vm4950, 1.0, 0.0
        %v4967 = vsel %vm4951, 1.0, 0.0
        %v4968 = vsel %vm4952, 1.0, 0.0
        %v4969 = vsel %vm4953, 1.0, 0.0
        %v4970 = vsel %vm4954, 1.0, 0.0
        %v4971 = vsel %vm4955, 1.0, 0.0
        %v4972 = vsel %vm4940, 0.0, %v4924
        %v4973 = vsel %vm4941, 0.0, %v4925
        %v4974 = vsel %vm4942, 0.0, %v4926
        %v4975 = vsel %vm4943, 0.0, %v4927
        %v4976 = vsel %vm4944, 0.0, %v4928
        %v4977 = vsel %vm4945, 0.0, %v4929
        %v4978 = vsel %vm4946, 0.0, %v4930
        %v4979 = vsel %vm4947, 0.0, %v4931
        %v4980 = vsel %vm4948, 0.0, %v4932
        %v4981 = vsel %vm4949, 0.0, %v4933
        %v4982 = vsel %vm4950, 0.0, %v4934
        %v4983 = vsel %vm4951, 0.0, %v4935
        %v4984 = vsel %vm4952, 0.0, %v4936
        %v4985 = vsel %vm4953, 0.0, %v4937
        %v4986 = vsel %vm4954, 0.0, %v4938
        %v4987 = vsel %vm4955, 0.0, %v4939
        %4988 = vst [vmem:[#allocation2] sm:$0xff] %v4972
        %4989 = vst [vmem:[#allocation2 + $0x8] sm:$0xff] %v4973
        %4990 = vst [vmem:[#allocation2 + $0x10] sm:$0xff] %v4974
        %4991 = vst [vmem:[#allocation2 + $0x18] sm:$0xff] %v4975
        %4992 = vst [vmem:[#allocation2 + $0x20] sm:$0xff] %v4976
        %4993 = vst [vmem:[#allocation2 + $0x28] sm:$0xff] %v4977
        %4994 = vst [vmem:[#allocation2 + $0x30] sm:$0xff] %v4978
        %4995 = vst [vmem:[#allocation2 + $0x38] sm:$0xff] %v4979
        %4996 = vst [vmem:[#allocation2 + $0x40] sm:$0xff] %v4980
        %4997 = vst [vmem:[#allocation2 + $0x48] sm:$0xff] %v4981
        %4998 = vst [vmem:[#allocation2 + $0x50] sm:$0xff] %v4982
        %4999 = vst [vmem:[#allocation2 + $0x58] sm:$0xff] %v4983
        %5000 = vst [vmem:[#allocation2 + $0x60] sm:$0xff] %v4984
        %5001 = vst [vmem:[#allocation2 + $0x68] sm:$0xff] %v4985
        %5002 = vst [vmem:[#allocation2 + $0x70] sm:$0xff] %v4986
        %5003 = vst [vmem:[#allocation2 + $0x78] sm:$0xff] %v4987
        %v5004 = vrot.slane %v4956, 7
        %v5005 = vrot.slane %v4957, 7
        %v5006 = vrot.slane %v4958, 7
        %v5007 = vrot.slane %v4959, 7
        %v5008 = vrot.slane %v4960, 7
        %v5009 = vrot.slane %v4961, 7
        %v5010 = vrot.slane %v4962, 7
        %v5011 = vrot.slane %v4963, 7
        %v5012 = vrot.slane %v4964, 7
        %v5013 = vrot.slane %v4965, 7
        %v5014 = vrot.slane %v4966, 7
        %v5015 = vrot.slane %v4967, 7
        %v5016 = vrot.slane %v4968, 7
        %v5017 = vrot.slane %v4969, 7
        %v5018 = vrot.slane %v4970, 7
        %v5019 = vrot.slane %v4971, 7
        %v5020 = vsel %vm1553, %v5018, %v5019
        %v5021 = vsel %vm1553, %v5017, %v5018
        %v5022 = vsel %vm1553, %v5016, %v5017
        %v5023 = vsel %vm1553, %v5015, %v5016
        %v5024 = vsel %vm1553, %v5014, %v5015
        %v5025 = vsel %vm1553, %v5013, %v5014
        %v5026 = vsel %vm1553, %v5012, %v5013
        %v5027 = vsel %vm1553, %v5011, %v5012
        %v5028 = vsel %vm1553, %v5010, %v5011
        %v5029 = vsel %vm1553, %v5009, %v5010
        %v5030 = vsel %vm1553, %v5008, %v5009
        %v5031 = vsel %vm1553, %v5007, %v5008
        %v5032 = vsel %vm1553, %v5006, %v5007
        %v5033 = vsel %vm1553, %v5005, %v5006
        %v5034 = vsel %vm1553, %v5004, %v5005
        %v5035 = vsel %vm1553, %v5019, %v5004
        %v5036 = vsel %vm1682, 0.0, %v5035
        %v5037 = vsel %vm1683, 0.0, %v5034
        %v5038 = vsel %vm1684, 0.0, %v5033
        %v5039 = vsel %vm1685, 0.0, %v5032
        %v5040 = vsel %vm1686, 0.0, %v5031
        %v5041 = vsel %vm1687, 0.0, %v5030
        %v5042 = vsel %vm1688, 0.0, %v5029
        %v5043 = vsel %vm1689, 0.0, %v5028
        %v5044 = vsel %vm1690, 0.0, %v5027
        %v5045 = vsel %vm1691, 0.0, %v5026
        %v5046 = vsel %vm1692, 0.0, %v5025
        %v5047 = vsel %vm1693, 0.0, %v5024
        %v5048 = vsel %vm1694, 0.0, %v5023
        %v5049 = vsel %vm1695, 0.0, %v5022
        %v5050 = vsel %vm1696, 0.0, %v5021
        %v5051 = vsel %vm1697, 0.0, %v5020
        %v5052 = vrot.slane %v4956, 1
        %v5053 = vrot.slane %v4957, 1
        %v5054 = vrot.slane %v4958, 1
        %v5055 = vrot.slane %v4959, 1
        %v5056 = vrot.slane %v4960, 1
        %v5057 = vrot.slane %v4961, 1
        %v5058 = vrot.slane %v4962, 1
        %v5059 = vrot.slane %v4963, 1
        %v5060 = vrot.slane %v4964, 1
        %v5061 = vrot.slane %v4965, 1
        %v5062 = vrot.slane %v4966, 1
        %v5063 = vrot.slane %v4967, 1
        %v5064 = vrot.slane %v4968, 1
        %v5065 = vrot.slane %v4969, 1
        %v5066 = vrot.slane %v4970, 1
        %v5067 = vrot.slane %v4971, 1
        %v5068 = vsel %vm1874, %v5066, %v5067
        %v5069 = vsel %vm1874, %v5065, %v5066
        %v5070 = vsel %vm1874, %v5064, %v5065
        %v5071 = vsel %vm1874, %v5063, %v5064
        %v5072 = vsel %vm1874, %v5062, %v5063
        %v5073 = vsel %vm1874, %v5061, %v5062
        %v5074 = vsel %vm1874, %v5060, %v5061
        %v5075 = vsel %vm1874, %v5059, %v5060
        %v5076 = vsel %vm1874, %v5058, %v5059
        %v5077 = vsel %vm1874, %v5057, %v5058
        %v5078 = vsel %vm1874, %v5056, %v5057
        %v5079 = vsel %vm1874, %v5055, %v5056
        %v5080 = vsel %vm1874, %v5054, %v5055
        %v5081 = vsel %vm1874, %v5053, %v5054
        %v5082 = vsel %vm1874, %v5052, %v5053
        %v5083 = vsel %vm1874, %v5067, %v5052
        %v5084 = vsel %vm2003, 0.0, %v5082
        %v5085 = vsel %vm2004, 0.0, %v5081
        %v5086 = vsel %vm2005, 0.0, %v5080
        %v5087 = vsel %vm2006, 0.0, %v5079
        %v5088 = vsel %vm2007, 0.0, %v5078
        %v5089 = vsel %vm2008, 0.0, %v5077
        %v5090 = vsel %vm2009, 0.0, %v5076
        %v5091 = vsel %vm2010, 0.0, %v5075
        %v5092 = vsel %vm2011, 0.0, %v5074
        %v5093 = vsel %vm2012, 0.0, %v5073
        %v5094 = vsel %vm2013, 0.0, %v5072
        %v5095 = vsel %vm2014, 0.0, %v5071
        %v5096 = vsel %vm2015, 0.0, %v5070
        %v5097 = vsel %vm2016, 0.0, %v5069
        %v5098 = vsel %vm2017, 0.0, %v5068
        %v5099 = vsel %vm2018, 0.0, %v5083
        %v5100 = vld [vmem:[#allocation3] sm:$0xff]
        %v5101 = vld [vmem:[#allocation3 + $0x8] sm:$0xff]
        %v5102 = vld [vmem:[#allocation3 + $0x10] sm:$0xff]
        %v5103 = vld [vmem:[#allocation3 + $0x18] sm:$0xff]
        %v5104 = vld [vmem:[#allocation3 + $0x20] sm:$0xff]
        %v5105 = vld [vmem:[#allocation3 + $0x28] sm:$0xff]
        %v5106 = vld [vmem:[#allocation3 + $0x30] sm:$0xff]
        %v5107 = vld [vmem:[#allocation3 + $0x38] sm:$0xff]
        %v5108 = vld [vmem:[#allocation3 + $0x40] sm:$0xff]
        %v5109 = vld [vmem:[#allocation3 + $0x48] sm:$0xff]
        %v5110 = vld [vmem:[#allocation3 + $0x50] sm:$0xff]
        %v5111 = vld [vmem:[#allocation3 + $0x58] sm:$0xff]
        %v5112 = vld [vmem:[#allocation3 + $0x60] sm:$0xff]
        %v5113 = vld [vmem:[#allocation3 + $0x68] sm:$0xff]
        %v5114 = vld [vmem:[#allocation3 + $0x70] sm:$0xff]
        %v5115 = vld [vmem:[#allocation3 + $0x78] sm:$0xff]
        %v5116 = vpack.c.bf16 %v5037, %v5036
        %v5117 = vpack.c.bf16 %v5039, %v5038
        %v5118 = vpack.c.bf16 %v5041, %v5040
        %v5119 = vpack.c.bf16 %v5043, %v5042
        %v5120 = vpack.c.bf16 %v5045, %v5044
        %v5121 = vpack.c.bf16 %v5047, %v5046
        %v5122 = vpack.c.bf16 %v5049, %v5048
        %v5123 = vpack.c.bf16 %v5051, %v5050
        %v5124 = vpack.c.bf16 %v4957, %v4956
        %v5125 = vpack.c.bf16 %v4959, %v4958
        %v5126 = vpack.c.bf16 %v4961, %v4960
        %v5127 = vpack.c.bf16 %v4963, %v4962
        %v5128 = vpack.c.bf16 %v4965, %v4964
        %v5129 = vpack.c.bf16 %v4967, %v4966
        %v5130 = vpack.c.bf16 %v4969, %v4968
        %v5131 = vpack.c.bf16 %v4971, %v4970
        %5132 = vmatpush.bf16.msra.mxu0 %v3352
        %5133 = vmatpush.bf16.msra.mxu0 %v3351
        %5134 = vmatpush.bf16.msra.mxu0 %v3350
        %5135 = vmatpush.bf16.msra.mxu0 %v3349
        %5136 = vmatpush.bf16.msra.mxu0 %v3348
        %5137 = vmatpush.bf16.msra.mxu0 %v3347
        %5138 = vmatpush.bf16.msra.mxu0 %v3346
        %5139 = vmatpush.bf16.msra.mxu0 %v3345
        %5140 = vmatmul.bf16.gmra.mxu0 %v5124
        %v5141 = vpop.f32.mrf.mxu0
        %v5142 = vadd.f32 0.0, %v5141
        %v5143 = vpop.f32.mrf.mxu0
        %v5144 = vadd.f32 0.0, %v5143
        %5145 = vmatmul.bf16.gmra.mxu0 %v5125
        %v5146 = vpop.f32.mrf.mxu0
        %v5147 = vadd.f32 0.0, %v5146
        %v5148 = vpop.f32.mrf.mxu0
        %v5149 = vadd.f32 0.0, %v5148
        %5150 = vmatmul.bf16.gmra.mxu0 %v5126
        %v5151 = vpop.f32.mrf.mxu0
        %v5152 = vadd.f32 0.0, %v5151
        %v5153 = vpop.f32.mrf.mxu0
        %v5154 = vadd.f32 0.0, %v5153
        %5155 = vmatmul.bf16.gmra.mxu0 %v5127
        %v5156 = vpop.f32.mrf.mxu0
        %v5157 = vadd.f32 0.0, %v5156
        %v5158 = vpop.f32.mrf.mxu0
        %v5159 = vadd.f32 0.0, %v5158
        %5160 = vmatmul.bf16.gmra.mxu0 %v5128
        %v5161 = vpop.f32.mrf.mxu0
        %v5162 = vadd.f32 0.0, %v5161
        %v5163 = vpop.f32.mrf.mxu0
        %v5164 = vadd.f32 0.0, %v5163
        %5165 = vmatmul.bf16.gmra.mxu0 %v5129
        %v5166 = vpop.f32.mrf.mxu0
        %v5167 = vadd.f32 0.0, %v5166
        %v5168 = vpop.f32.mrf.mxu0
        %v5169 = vadd.f32 0.0, %v5168
        %5170 = vmatmul.bf16.gmra.mxu0 %v5130
        %v5171 = vpop.f32.mrf.mxu0
        %v5172 = vadd.f32 0.0, %v5171
        %v5173 = vpop.f32.mrf.mxu0
        %v5174 = vadd.f32 0.0, %v5173
        %5175 = vmatmul.bf16.gmra.mxu0 %v5131
        %v5176 = vpop.f32.mrf.mxu0
        %v5177 = vadd.f32 0.0, %v5176
        %v5178 = vpop.f32.mrf.mxu0
        %v5179 = vadd.f32 0.0, %v5178
        %5180 = vdwg.mxu0
        %5181 = vmatpush.bf16.msra.mxu0 %v3449
        %5182 = vmatpush.bf16.msra.mxu0 %v3448
        %5183 = vmatpush.bf16.msra.mxu0 %v3447
        %5184 = vmatpush.bf16.msra.mxu0 %v3446
        %5185 = vmatpush.bf16.msra.mxu0 %v3445
        %5186 = vmatpush.bf16.msra.mxu0 %v3444
        %5187 = vmatpush.bf16.msra.mxu0 %v3443
        %5188 = vmatpush.bf16.msra.mxu0 %v3442
        %5189 = vmatmul.bf16.gmra.mxu0 %v5116
        %v5190 = vpop.f32.mrf.mxu0
        %v5191 = vadd.f32 %v5142, %v5190
        %v5192 = vpop.f32.mrf.mxu0
        %v5193 = vadd.f32 %v5144, %v5192
        %5194 = vmatmul.bf16.gmra.mxu0 %v5117
        %v5195 = vpop.f32.mrf.mxu0
        %v5196 = vadd.f32 %v5147, %v5195
        %v5197 = vpop.f32.mrf.mxu0
        %v5198 = vadd.f32 %v5149, %v5197
        %5199 = vmatmul.bf16.gmra.mxu0 %v5118
        %v5200 = vpop.f32.mrf.mxu0
        %v5201 = vadd.f32 %v5152, %v5200
        %v5202 = vpop.f32.mrf.mxu0
        %v5203 = vadd.f32 %v5154, %v5202
        %5204 = vmatmul.bf16.gmra.mxu0 %v5119
        %v5205 = vpop.f32.mrf.mxu0
        %v5206 = vadd.f32 %v5157, %v5205
        %v5207 = vpop.f32.mrf.mxu0
        %v5208 = vadd.f32 %v5159, %v5207
        %5209 = vmatmul.bf16.gmra.mxu0 %v5120
        %v5210 = vpop.f32.mrf.mxu0
        %v5211 = vadd.f32 %v5162, %v5210
        %v5212 = vpop.f32.mrf.mxu0
        %v5213 = vadd.f32 %v5164, %v5212
        %5214 = vmatmul.bf16.gmra.mxu0 %v5121
        %v5215 = vpop.f32.mrf.mxu0
        %v5216 = vadd.f32 %v5167, %v5215
        %v5217 = vpop.f32.mrf.mxu0
        %v5218 = vadd.f32 %v5169, %v5217
        %5219 = vmatmul.bf16.gmra.mxu0 %v5122
        %v5220 = vpop.f32.mrf.mxu0
        %v5221 = vadd.f32 %v5172, %v5220
        %v5222 = vpop.f32.mrf.mxu0
        %v5223 = vadd.f32 %v5174, %v5222
        %5224 = vmatmul.bf16.gmra.mxu0 %v5123
        %v5225 = vpop.f32.mrf.mxu0
        %v5226 = vadd.f32 %v5177, %v5225
        %v5227 = vpop.f32.mrf.mxu0
        %v5228 = vadd.f32 %v5179, %v5227
        %5229 = vdwg.mxu0
        %v5230 = vpack.c.bf16 %v5085, %v5084
        %v5231 = vpack.c.bf16 %v5087, %v5086
        %v5232 = vpack.c.bf16 %v5089, %v5088
        %v5233 = vpack.c.bf16 %v5091, %v5090
        %v5234 = vpack.c.bf16 %v5093, %v5092
        %v5235 = vpack.c.bf16 %v5095, %v5094
        %v5236 = vpack.c.bf16 %v5097, %v5096
        %v5237 = vpack.c.bf16 %v5099, %v5098
        %5238 = vmatpush.bf16.msra.mxu0 %v3554
        %5239 = vmatpush.bf16.msra.mxu0 %v3553
        %5240 = vmatpush.bf16.msra.mxu0 %v3552
        %5241 = vmatpush.bf16.msra.mxu0 %v3551
        %5242 = vmatpush.bf16.msra.mxu0 %v3550
        %5243 = vmatpush.bf16.msra.mxu0 %v3549
        %5244 = vmatpush.bf16.msra.mxu0 %v3548
        %5245 = vmatpush.bf16.msra.mxu0 %v3547
        %5246 = vmatmul.bf16.gmra.mxu0 %v5230
        %v5247 = vpop.f32.mrf.mxu0
        %v5248 = vadd.f32 0.0, %v5247
        %v5249 = vpop.f32.mrf.mxu0
        %v5250 = vadd.f32 0.0, %v5249
        %5251 = vmatmul.bf16.gmra.mxu0 %v5231
        %v5252 = vpop.f32.mrf.mxu0
        %v5253 = vadd.f32 0.0, %v5252
        %v5254 = vpop.f32.mrf.mxu0
        %v5255 = vadd.f32 0.0, %v5254
        %5256 = vmatmul.bf16.gmra.mxu0 %v5232
        %v5257 = vpop.f32.mrf.mxu0
        %v5258 = vadd.f32 0.0, %v5257
        %v5259 = vpop.f32.mrf.mxu0
        %v5260 = vadd.f32 0.0, %v5259
        %5261 = vmatmul.bf16.gmra.mxu0 %v5233
        %v5262 = vpop.f32.mrf.mxu0
        %v5263 = vadd.f32 0.0, %v5262
        %v5264 = vpop.f32.mrf.mxu0
        %v5265 = vadd.f32 0.0, %v5264
        %5266 = vmatmul.bf16.gmra.mxu0 %v5234
        %v5267 = vpop.f32.mrf.mxu0
        %v5268 = vadd.f32 0.0, %v5267
        %v5269 = vpop.f32.mrf.mxu0
        %v5270 = vadd.f32 0.0, %v5269
        %5271 = vmatmul.bf16.gmra.mxu0 %v5235
        %v5272 = vpop.f32.mrf.mxu0
        %v5273 = vadd.f32 0.0, %v5272
        %v5274 = vpop.f32.mrf.mxu0
        %v5275 = vadd.f32 0.0, %v5274
        %5276 = vmatmul.bf16.gmra.mxu0 %v5236
        %v5277 = vpop.f32.mrf.mxu0
        %v5278 = vadd.f32 0.0, %v5277
        %v5279 = vpop.f32.mrf.mxu0
        %v5280 = vadd.f32 0.0, %v5279
        %5281 = vmatmul.bf16.gmra.mxu0 %v5237
        %v5282 = vpop.f32.mrf.mxu0
        %v5283 = vadd.f32 0.0, %v5282
        %v5284 = vpop.f32.mrf.mxu0
        %v5285 = vadd.f32 0.0, %v5284
        %5286 = vdwg.mxu0
        %v5287 = vadd.f32 %v5191, %v5248
        %v5288 = vadd.f32 %v5193, %v5250
        %v5289 = vadd.f32 %v5196, %v5253
        %v5290 = vadd.f32 %v5198, %v5255
        %v5291 = vadd.f32 %v5201, %v5258
        %v5292 = vadd.f32 %v5203, %v5260
        %v5293 = vadd.f32 %v5206, %v5263
        %v5294 = vadd.f32 %v5208, %v5265
        %v5295 = vadd.f32 %v5211, %v5268
        %v5296 = vadd.f32 %v5213, %v5270
        %v5297 = vadd.f32 %v5216, %v5273
        %v5298 = vadd.f32 %v5218, %v5275
        %v5299 = vadd.f32 %v5221, %v5278
        %v5300 = vadd.f32 %v5223, %v5280
        %v5301 = vadd.f32 %v5226, %v5283
        %v5302 = vadd.f32 %v5228, %v5285
        %v5303 = vadd.f32 %v5287, %v3629
        %v5304 = vadd.f32 %v5288, %v3629
        %v5305 = vadd.f32 %v5289, %v3629
        %v5306 = vadd.f32 %v5290, %v3629
        %v5307 = vadd.f32 %v5291, %v3629
        %v5308 = vadd.f32 %v5292, %v3629
        %v5309 = vadd.f32 %v5293, %v3629
        %v5310 = vadd.f32 %v5294, %v3629
        %v5311 = vadd.f32 %v5295, %v3629
        %v5312 = vadd.f32 %v5296, %v3629
        %v5313 = vadd.f32 %v5297, %v3629
        %v5314 = vadd.f32 %v5298, %v3629
        %v5315 = vadd.f32 %v5299, %v3629
        %v5316 = vadd.f32 %v5300, %v3629
        %v5317 = vadd.f32 %v5301, %v3629
        %v5318 = vadd.f32 %v5302, %v3629
        %v5319 = vadd.f32 %v5100, %v5303
        %v5320 = vadd.f32 %v5101, %v5304
        %v5321 = vadd.f32 %v5102, %v5305
        %v5322 = vadd.f32 %v5103, %v5306
        %v5323 = vadd.f32 %v5104, %v5307
        %v5324 = vadd.f32 %v5105, %v5308
        %v5325 = vadd.f32 %v5106, %v5309
        %v5326 = vadd.f32 %v5107, %v5310
        %v5327 = vadd.f32 %v5108, %v5311
        %v5328 = vadd.f32 %v5109, %v5312
        %v5329 = vadd.f32 %v5110, %v5313
        %v5330 = vadd.f32 %v5111, %v5314
        %v5331 = vadd.f32 %v5112, %v5315
        %v5332 = vadd.f32 %v5113, %v5316
        %v5333 = vadd.f32 %v5114, %v5317
        %v5334 = vadd.f32 %v5115, %v5318
        %vm5335 = vcmp.ge.f32.partialorder %v5319, 1.0
        %vm5336 = vcmp.ge.f32.partialorder %v5320, 1.0
        %vm5337 = vcmp.ge.f32.partialorder %v5321, 1.0
        %vm5338 = vcmp.ge.f32.partialorder %v5322, 1.0
        %vm5339 = vcmp.ge.f32.partialorder %v5323, 1.0
        %vm5340 = vcmp.ge.f32.partialorder %v5324, 1.0
        %vm5341 = vcmp.ge.f32.partialorder %v5325, 1.0
        %vm5342 = vcmp.ge.f32.partialorder %v5326, 1.0
        %vm5343 = vcmp.ge.f32.partialorder %v5327, 1.0
        %vm5344 = vcmp.ge.f32.partialorder %v5328, 1.0
        %vm5345 = vcmp.ge.f32.partialorder %v5329, 1.0
        %vm5346 = vcmp.ge.f32.partialorder %v5330, 1.0
        %vm5347 = vcmp.ge.f32.partialorder %v5331, 1.0
        %vm5348 = vcmp.ge.f32.partialorder %v5332, 1.0
        %vm5349 = vcmp.ge.f32.partialorder %v5333, 1.0
        %vm5350 = vcmp.ge.f32.partialorder %v5334, 1.0
        %v5351 = vsel %vm5335, 1.0, 0.0
        %v5352 = vsel %vm5336, 1.0, 0.0
        %v5353 = vsel %vm5337, 1.0, 0.0
        %v5354 = vsel %vm5338, 1.0, 0.0
        %v5355 = vsel %vm5339, 1.0, 0.0
        %v5356 = vsel %vm5340, 1.0, 0.0
        %v5357 = vsel %vm5341, 1.0, 0.0
        %v5358 = vsel %vm5342, 1.0, 0.0
        %v5359 = vsel %vm5343, 1.0, 0.0
        %v5360 = vsel %vm5344, 1.0, 0.0
        %v5361 = vsel %vm5345, 1.0, 0.0
        %v5362 = vsel %vm5346, 1.0, 0.0
        %v5363 = vsel %vm5347, 1.0, 0.0
        %v5364 = vsel %vm5348, 1.0, 0.0
        %v5365 = vsel %vm5349, 1.0, 0.0
        %v5366 = vsel %vm5350, 1.0, 0.0
        %v5367 = vsel %vm5335, 0.0, %v5319
        %v5368 = vsel %vm5336, 0.0, %v5320
        %v5369 = vsel %vm5337, 0.0, %v5321
        %v5370 = vsel %vm5338, 0.0, %v5322
        %v5371 = vsel %vm5339, 0.0, %v5323
        %v5372 = vsel %vm5340, 0.0, %v5324
        %v5373 = vsel %vm5341, 0.0, %v5325
        %v5374 = vsel %vm5342, 0.0, %v5326
        %v5375 = vsel %vm5343, 0.0, %v5327
        %v5376 = vsel %vm5344, 0.0, %v5328
        %v5377 = vsel %vm5345, 0.0, %v5329
        %v5378 = vsel %vm5346, 0.0, %v5330
        %v5379 = vsel %vm5347, 0.0, %v5331
        %v5380 = vsel %vm5348, 0.0, %v5332
        %v5381 = vsel %vm5349, 0.0, %v5333
        %v5382 = vsel %vm5350, 0.0, %v5334
        %5383 = vst [vmem:[#allocation3] sm:$0xff] %v5367
        %5384 = vst [vmem:[#allocation3 + $0x8] sm:$0xff] %v5368
        %5385 = vst [vmem:[#allocation3 + $0x10] sm:$0xff] %v5369
        %5386 = vst [vmem:[#allocation3 + $0x18] sm:$0xff] %v5370
        %5387 = vst [vmem:[#allocation3 + $0x20] sm:$0xff] %v5371
        %5388 = vst [vmem:[#allocation3 + $0x28] sm:$0xff] %v5372
        %5389 = vst [vmem:[#allocation3 + $0x30] sm:$0xff] %v5373
        %5390 = vst [vmem:[#allocation3 + $0x38] sm:$0xff] %v5374
        %5391 = vst [vmem:[#allocation3 + $0x40] sm:$0xff] %v5375
        %5392 = vst [vmem:[#allocation3 + $0x48] sm:$0xff] %v5376
        %5393 = vst [vmem:[#allocation3 + $0x50] sm:$0xff] %v5377
        %5394 = vst [vmem:[#allocation3 + $0x58] sm:$0xff] %v5378
        %5395 = vst [vmem:[#allocation3 + $0x60] sm:$0xff] %v5379
        %5396 = vst [vmem:[#allocation3 + $0x68] sm:$0xff] %v5380
        %5397 = vst [vmem:[#allocation3 + $0x70] sm:$0xff] %v5381
        %5398 = vst [vmem:[#allocation3 + $0x78] sm:$0xff] %v5382
        %s5399 = scalar_lea.vmem %s284, 384 [#allocation5]
        %v5400 = vld [vmem:[%s5399] sm:$0xff]
        %v5401 = vld [vmem:[%s5399 + $0x8] sm:$0xff]
        %v5402 = vld [vmem:[%s5399 + $0x10] sm:$0xff]
        %v5403 = vld [vmem:[%s5399 + $0x18] sm:$0xff]
        %v5404 = vld [vmem:[%s5399 + $0x20] sm:$0xff]
        %v5405 = vld [vmem:[%s5399 + $0x28] sm:$0xff]
        %v5406 = vld [vmem:[%s5399 + $0x30] sm:$0xff]
        %v5407 = vld [vmem:[%s5399 + $0x38] sm:$0xff]
        %v5408 = vld [vmem:[%s5399 + $0x40] sm:$0xff]
        %v5409 = vld [vmem:[%s5399 + $0x48] sm:$0xff]
        %v5410 = vld [vmem:[%s5399 + $0x50] sm:$0xff]
        %v5411 = vld [vmem:[%s5399 + $0x58] sm:$0xff]
        %v5412 = vld [vmem:[%s5399 + $0x60] sm:$0xff]
        %v5413 = vld [vmem:[%s5399 + $0x68] sm:$0xff]
        %v5414 = vld [vmem:[%s5399 + $0x70] sm:$0xff]
        %v5415 = vld [vmem:[%s5399 + $0x78] sm:$0xff]
        %v5416 = vadd.f32 %v5351, %v5400
        %v5417 = vadd.f32 %v5352, %v5401
        %v5418 = vadd.f32 %v5353, %v5402
        %v5419 = vadd.f32 %v5354, %v5403
        %v5420 = vadd.f32 %v5355, %v5404
        %v5421 = vadd.f32 %v5356, %v5405
        %v5422 = vadd.f32 %v5357, %v5406
        %v5423 = vadd.f32 %v5358, %v5407
        %v5424 = vadd.f32 %v5359, %v5408
        %v5425 = vadd.f32 %v5360, %v5409
        %v5426 = vadd.f32 %v5361, %v5410
        %v5427 = vadd.f32 %v5362, %v5411
        %v5428 = vadd.f32 %v5363, %v5412
        %v5429 = vadd.f32 %v5364, %v5413
        %v5430 = vadd.f32 %v5365, %v5414
        %v5431 = vadd.f32 %v5366, %v5415
        %s5432 = scalar_lea.vmem %s321, 384 [#allocation11]
        %5433 = vst [vmem:[%s5432] sm:$0xff] %v5416
        %5434 = vst [vmem:[%s5432 + $0x8] sm:$0xff] %v5417
        %5435 = vst [vmem:[%s5432 + $0x10] sm:$0xff] %v5418
        %5436 = vst [vmem:[%s5432 + $0x18] sm:$0xff] %v5419
        %5437 = vst [vmem:[%s5432 + $0x20] sm:$0xff] %v5420
        %5438 = vst [vmem:[%s5432 + $0x28] sm:$0xff] %v5421
        %5439 = vst [vmem:[%s5432 + $0x30] sm:$0xff] %v5422
        %5440 = vst [vmem:[%s5432 + $0x38] sm:$0xff] %v5423
        %5441 = vst [vmem:[%s5432 + $0x40] sm:$0xff] %v5424
        %5442 = vst [vmem:[%s5432 + $0x48] sm:$0xff] %v5425
        %5443 = vst [vmem:[%s5432 + $0x50] sm:$0xff] %v5426
        %5444 = vst [vmem:[%s5432 + $0x58] sm:$0xff] %v5427
        %5445 = vst [vmem:[%s5432 + $0x60] sm:$0xff] %v5428
        %5446 = vst [vmem:[%s5432 + $0x68] sm:$0xff] %v5429
        %5447 = vst [vmem:[%s5432 + $0x70] sm:$0xff] %v5430
        %5448 = vst [vmem:[%s5432 + $0x78] sm:$0xff] %v5431
        %s5449 = sand.u32 %s157, 1
        %s5450 = scalar_lea.sflag [#allocation7], %s5449
        %s5451 = sand.u32 %s157, 1
        %s5452 = smul.addr %s5451, 512
        %s5453 = scalar_lea.vmem [#allocation11], %s5452
        // Predicated region
        $region57: #{tpu_custom_call.1} parent=39 // pred_check
          %p5454 = pneg %p167
        $region58: #{tpu_custom_call.1} parent=39 // pred_check_branch
          %5456 = sbr.rel (%p5454) target = $region60
        $region59: #{tpu_custom_call.1} parent=39 // pred_region
          #allocation15 [shape = 'u32[6]{0}', space=smem, size = 0x18, scoped, tag = 'DMA stride descriptor']
          %s5457 = smul.u32 4, %s28
          %s5458 = smul.u32 16, %s27
          %5460 = vsyncadd %s5450, 0
          %s5461 = smul.addr %s5457, 32
          %s5462 = sadd.s32 %s5458, %s5461
          %s5463 = smul.addr %s5462, 8
          %s5464 = scalar_lea.hbm %s5, %s5463
          %s5466 = sshll.u32 1, 14
          %s5467 = sxor.u32 4294967295, %s5466
          %s5470 = sshll.u32 7, 18
          %s5471 = sxor.u32 4294967295, %s5470
          %s5472 = sand.u32 0, %s5471
          %s5474 = sor.u32 %s5472, 0
          %s5475 = sshll.u32 %s5453, 4
          %s5476 = int_to_ptr.vmem [resolvable:$true] %s5475
          %s5477 = sshll.u32 %s5464, 4
          %s5478 = int_to_ptr.hbm [resolvable:$true] %s5477
          %5484 = sst [smem:[#allocation15]] 2048
          %s5485 = scalar_lea.smem [#allocation15], 1
          %5486 = sst [smem:[%s5485]] 4096
          %s5487 = scalar_lea.smem [#allocation15], 2
          %5488 = sst [smem:[%s5487]] 16
          %s5489 = scalar_lea.smem [#allocation15], 3
          %5490 = sst [smem:[%s5489]] 128
          %s5491 = scalar_lea.smem [#allocation15], 4
          %5492 = sst [smem:[%s5491]] 128
          %s5493 = scalar_lea.smem [#allocation15], 5
          %5494 = sst [smem:[%s5493]] 8
          %5496 = dma.general %s5476, 8192, %s5478, %s5450, [#allocation14], [#allocation15], %s5474, 0
        $region60: #{tpu_custom_call.1} parent=39 // pred_fallthru
          _
      $region40: #{tpu_custom_call.1} parent=5 // pred_fallthru
        _
      %p5497 = scmp.le.s32.totalorder 2, %s18
      // Predicated region
      $region61: #{tpu_custom_call.1} parent=5 // pred_check
        %p5498 = pneg %p5497
      $region62: #{tpu_custom_call.1} parent=5 // pred_check_branch
        %5500 = sbr.rel (%p5498) target = $region64
      $region63: #{tpu_custom_call.1} parent=5 // pred_region
        %s5501 = ssub.s32 %s18, 2
        // Predicated region
        $region65: #{tpu_custom_call.1} parent=63 // pred_check
          %p5502 = pneg %p173
        $region66: #{tpu_custom_call.1} parent=63 // pred_check_branch
          %5504 = sbr.rel (%p5502) target = $region68
        $region67: #{tpu_custom_call.1} parent=63 // pred_region
          %s5505 = sand.u32 %s158, 1
          %s5506 = scalar_lea.sflag [#allocation7], %s5505
          %s5507 = sand.u32 %s158, 1
          %s5508 = smul.addr %s5507, 512
          %s5509 = scalar_lea.vmem [#allocation11], %s5508
          %5511 = dma.done %s5506, 8192
        $region68: #{tpu_custom_call.1} parent=63 // pred_fallthru
          _
      $region64: #{tpu_custom_call.1} parent=5 // pred_fallthru
        _
    $region6: #{tpu_custom_call.1} parent=1 // loop_footer
      %s22 = sadd.s32 1, %s18
    $region7: #{tpu_custom_call.1} parent=1 // loop_footer_branch
      %17 = sbr.rel target = $region3
    $region8: #{tpu_custom_call.1} parent=1 // loop_exit
      _
    %5512 = vsyncpa [#allocation6], 1
    %s5513 = scalar_lea.sflag [#allocation6], 1
    %5514 = vsyncpa %s5513, 1
    %5515 = vsyncpa [#allocation9], 1
    %5516 = vsyncpa [#allocation7], 1
    %s5517 = scalar_lea.sflag [#allocation7], 1
    %5518 = vsyncpa %s5517, 1

</llo_original>
